<compile_context>
chip_gen: v7x
topology: tpu7x:2x2x1
jax: 0.10.0
libtpu: 0.0.40
codegen_flags: <defaults>
</compile_context>

<pallas_src>
import functools
import math

import jax
import jax.numpy as jnp
from jax import lax
from jax.experimental import pallas as pl
from jax.experimental.pallas import tpu as pltpu


# ---------------- config (mirrors MemorySelfAttention's config) ----------------
B = 2                     # batch
T = 8                     # sequence length (== config.input_block_size)
N_EMBD = 32               # C
N_HEAD = 4
HEAD_DIM = N_EMBD // N_HEAD
SHORT_MEM = 4             # config.short_term_memory_size
LONG_MEM = 4              # sum(config.long_term_memory_size)
BLOCK_SIZE = 8            # config.block_size
DROPOUT = 0.0             # deterministic: dropout is identity
MASK_TOTAL = LONG_MEM + SHORT_MEM + BLOCK_SIZE
S_TOTAL = LONG_MEM + SHORT_MEM + T      # keys/values seen by attention
NEG_INF = -1e30                         # finite "-inf": no NaN even if a row were masked
SCALE = 1.0 / math.sqrt(HEAD_DIM)


# ---------------- fused Pallas kernel ----------------
def _fused_kernel(short_ref, x_ref, lk_ref, lv_ref,
                  wq_ref, wk_ref, wv_ref, bq_ref, bk_ref, bv_ref,
                  wproj_ref, bproj_ref, o_ref):
    """Fused MemorySelfAttention forward for `nb` batches (nb = leading block dim).

    short_ref : (nb, SHORT_MEM, C)     x_ref : (nb, T, C)
    lk_ref / lv_ref : (nb, LONG_MEM, C)   (head h in cols h*D:(h+1)*D)
    wq/wk/wv : (C, C), bq/bk/bv : (1, C)  (c_attn split per projection on the wrapper)
    wproj : (C, C), bproj : (1, C)
    o_ref : (nb, T, C)
    """
    nb = x_ref.shape[0]
    C, D = N_EMBD, HEAD_DIM
    dn = (((1,), (1,)), ((), ()))          # contract last dims: q @ k^T, no transpose

    # hoisted, shared across batches and heads (loaded once, no re-traced slices)
    wq, wk, wv = wq_ref[...], wk_ref[...], wv_ref[...]
    bq, bk, bv = bq_ref[...], bk_ref[...], bv_ref[...]
    bproj = bproj_ref[...]
    wp = [wproj_ref[h * D:(h + 1) * D, :] for h in range(N_HEAD)]

    # Additive causal mask for the x-vs-x score block, built once in-kernel (no mask DMA,
    # adds replace per-head vselects).  Long/short memory keys are fully visible to the
    # last-T query rows under the causal mask, so those segments need no mask at all.
    # TODO(synk): exact create_memory_mask definition unavailable; causal tril stand-in.
    row = lax.broadcasted_iota(jnp.int32, (T, T), 0)
    col = lax.broadcasted_iota(jnp.int32, (T, T), 1)
    mbias_x = jnp.where(col <= row, jnp.float32(0.0), jnp.float32(NEG_INF))

    outs = []
    for b in range(nb):                                   # static unroll (nb <= B == 2)
        x_b = x_ref[b]                                    # (T, C)
        s_b = short_ref[b]                                # (SHORT_MEM, C)
        lk_b = lk_ref[b]                                  # (LONG_MEM, C)
        lv_b = lv_ref[b]                                  # (LONG_MEM, C)

        # Per-batch c_attn, kept entirely in registers (no scratch round trip, and each
        # batch has its own values -> no WAR hazard serializing the unrolled batches).
        # Q is only computed for the x rows: the only query rows surviving y[:, -T:, :].
        q = jnp.dot(x_b, wq, preferred_element_type=jnp.float32) + bq     # (T, C)
        k_x = jnp.dot(x_b, wk, preferred_element_type=jnp.float32) + bk   # (T, C)
        v_x = jnp.dot(x_b, wv, preferred_element_type=jnp.float32) + bv   # (T, C)
        k_s = jnp.dot(s_b, wk, preferred_element_type=jnp.float32) + bk   # (SM, C)
        v_s = jnp.dot(s_b, wv, preferred_element_type=jnp.float32) + bv   # (SM, C)

        acc = jnp.zeros((T, C), jnp.float32)
        for h in range(N_HEAD):                           # static unroll, H == 4
            c0, c1 = h * D, (h + 1) * D
            qh = q[:, c0:c1] * SCALE                      # pre-scale (T,D), not (T,S)
            # three-segment scores: no K/V assembly buffers (avoids the misaligned
            # sublane-offset-4 stores of the previous version)
            s_l = lax.dot_general(qh, lk_b[:, c0:c1], dn,
                                  preferred_element_type=jnp.float32)           # (T, LM)
            s_s = lax.dot_general(qh, k_s[:, c0:c1], dn,
                                  preferred_element_type=jnp.float32)           # (T, SM)
            s_x = lax.dot_general(qh, k_x[:, c0:c1], dn,
                                  preferred_element_type=jnp.float32) + mbias_x  # (T, T)
            m = jnp.maximum(jnp.max(s_l, axis=-1, keepdims=True),
                            jnp.maximum(jnp.max(s_s, axis=-1, keepdims=True),
                                        jnp.max(s_x, axis=-1, keepdims=True)))
            p_l = jnp.exp(s_l - m)
            p_s = jnp.exp(s_s - m)
            p_x = jnp.exp(s_x - m)
            denom = (jnp.sum(p_l, axis=-1, keepdims=True)
                     + jnp.sum(p_s, axis=-1, keepdims=True)
                     + jnp.sum(p_x, axis=-1, keepdims=True))
            y_h = (jnp.dot(p_l, lv_b[:, c0:c1], preferred_element_type=jnp.float32)
                   + jnp.dot(p_s, v_s[:, c0:c1], preferred_element_type=jnp.float32)
                   + jnp.dot(p_x, v_x[:, c0:c1], preferred_element_type=jnp.float32))
            y_h = y_h * pl.reciprocal(denom, approx=False)     # exact 1/x normalization
            # fold c_proj in per head: concat_h(y_h) @ Wp == sum_h y_h @ Wp[hD:(h+1)D, :]
            acc = acc + jnp.dot(y_h, wp[h], preferred_element_type=jnp.float32)
        outs.append(acc + bproj)

    # single lane-dense store of the whole block (one epilogue store, not nb partials)
    o_ref[...] = jnp.stack(outs, axis=0).astype(o_ref.dtype)


# ---------------- forward (MemorySelfAttention.forward) ----------------
def _batches_per_block():
    # v7x has 2 TensorCores per chip -> shard the batch grid axis across them.
    # v5e/v6e have a single TC -> keep all batches in one grid step (a longer grid
    # there only adds per-step overhead).
    try:
        kind = jax.devices()[0].device_kind.lower()
    except Exception:
        kind = ""
    return 1 if ("7" in kind and B > 1) else B


@functools.partial(jax.jit, static_argnames=("nb",))
def _forward_impl(x, params, state, nb):
    Bx, Tx, Cx = x.shape
    short = state["short_term_memory"]                      # (B, SHORT_MEM, C)
    lk = state["long_k"].reshape(Bx, LONG_MEM, Cx)          # free contiguous collapse
    lv = state["long_v"].reshape(Bx, LONG_MEM, Cx)
    # split c_attn into Q/K/V weights (cheap XLA slices, outside the kernel)
    w_attn, b_attn = params["w_attn"], params["b_attn"]
    wq, wk, wv = w_attn[:, :Cx], w_attn[:, Cx:2 * Cx], w_attn[:, 2 * Cx:]
    bq = b_attn[:Cx].reshape(1, Cx)
    bk = b_attn[Cx:2 * Cx].reshape(1, Cx)
    bv = b_attn[2 * Cx:].reshape(1, Cx)
    bproj = params["b_proj"].reshape(1, Cx)
    # TODO(synk): state["long_q"] only feeds query rows discarded by y[:, -T:, :] (and the
    # stateful memory updates), so it is not needed here.
    # TODO(synk): reference discards apply_rotary_emb's return value (not in-place), and
    # long/short-term memory updates are stateful module mutations -> both omitted.
    # TODO(synk): on v5e, bf16 operands (f32 accumulate) would shave MXU per-push latency
    # if the surrounding model tolerates it; kept f32 here for numerical parity.

    batched = lambda rows: pl.BlockSpec((nb, rows, Cx), lambda i: (i, 0, 0))
    shared = lambda shape: pl.BlockSpec(shape, lambda i: (0,) * len(shape))

    y = pl.pallas_call(
        _fused_kernel,
        out_shape=jax.ShapeDtypeStruct((Bx, Tx, Cx), x.dtype),
        grid=(Bx // nb,),
        in_specs=[
            batched(SHORT_MEM), batched(Tx), batched(LONG_MEM), batched(LONG_MEM),
            shared((Cx, Cx)), shared((Cx, Cx)), shared((Cx, Cx)),
            shared((1, Cx)), shared((1, Cx)), shared((1, Cx)),
            shared((Cx, Cx)), shared((1, Cx)),
        ],
        out_specs=batched(Tx),
        compiler_params=pltpu.CompilerParams(dimension_semantics=("parallel",)),
    )(short, x, lk, lv, wq, wk, wv, bq, bk, bv, params["w_proj"], bproj)
    return y                                               # dropout == 0 -> identity


def memory_self_attention_forward(x, params, state):
    return _forward_impl(x, params, state, nb=_batches_per_block())


# ---------------- plain-JAX reference for validation ----------------
def reference_forward(x, params, state):
    Bx, Tx, Cx = x.shape

    def project(inp):
        out = inp @ params["w_attn"] + params["b_attn"]
        q, k, v = jnp.split(out, 3, axis=-1)
        rs = lambda t: t.reshape(t.shape[0], t.shape[1], N_HEAD, HEAD_DIM)
        return rs(q), rs(k), rs(v)

    qs, ks, vs = project(state["short_term_memory"])
    qx, kx, vx = project(x)
    q = jnp.concatenate([state["long_q"], qs, qx], axis=1).transpose(0, 2, 1, 3)
    k = jnp.concatenate([state["long_k"], ks, kx], axis=1).transpose(0, 2, 1, 3)
    v = jnp.concatenate([state["long_v"], vs, vx], axis=1).transpose(0, 2, 1, 3)
    S = q.shape[2]
    end_pos = LONG_MEM + SHORT_MEM + Tx
    start_pos = end_pos - S
    mask = state["bias"][start_pos:end_pos, start_pos:end_pos]
    att = (q @ jnp.swapaxes(k, -2, -1)) * (1.0 / math.sqrt(HEAD_DIM))
    att = jnp.where(mask[None, None] == 0, -jnp.inf, att)
    att = jax.nn.softmax(att, axis=-1)
    y = (att @ v).transpose(0, 2, 1, 3).reshape(Bx, S, Cx)[:, -Tx:, :]
    return y @ params["w_proj"] + params["b_proj"]


if __name__ == "__main__":
    key = jax.random.PRNGKey(0)
    ks = jax.random.split(key, 9)
    params = {
        "w_attn": 0.02 * jax.random.normal(ks[0], (N_EMBD, 3 * N_EMBD), jnp.float32),
        "b_attn": 0.02 * jax.random.normal(ks[1], (3 * N_EMBD,), jnp.float32),
        "w_proj": 0.02 * jax.random.normal(ks[2], (N_EMBD, N_EMBD), jnp.float32),
        "b_proj": 0.02 * jax.random.normal(ks[3], (N_EMBD,), jnp.float32),
    }
    state = {
        "short_term_memory": jax.random.normal(ks[4], (B, SHORT_MEM, N_EMBD), jnp.float32),
        "long_q": 0.5 * jax.random.normal(ks[5], (B, LONG_MEM, N_HEAD, HEAD_DIM), jnp.float32),
        "long_k": 0.5 * jax.random.normal(ks[6], (B, LONG_MEM, N_HEAD, HEAD_DIM), jnp.float32),
        "long_v": 0.5 * jax.random.normal(ks[7], (B, LONG_MEM, N_HEAD, HEAD_DIM), jnp.float32),
        # TODO(synk): exact create_memory_mask definition unavailable; causal tril stand-in.
        "bias": jnp.tril(jnp.ones((MASK_TOTAL, MASK_TOTAL), jnp.float32)),
    }
    x = jax.random.normal(ks[8], (B, T, N_EMBD), jnp.float32)

    y = memory_self_attention_forward(x, params, state)
    y = jax.block_until_ready(y)

    y_ref = reference_forward(x, params, state)
    assert y.shape == (B, T, N_EMBD), y.shape
    assert jnp.allclose(y, y_ref, atol=1e-3, rtol=1e-3), float(jnp.max(jnp.abs(y - y_ref)))
    print("KERNEL_OK")
</pallas_src>

<mosaic_0001>
module attributes {stable_mosaic.version = 11 : i64} {
  func.func @_fused_kernel(%arg0: i32, %arg1: memref<2x4x32xf32, #tpu.memory_space<vmem>>, %arg2: memref<2x8x32xf32, #tpu.memory_space<vmem>>, %arg3: memref<2x4x32xf32, #tpu.memory_space<vmem>>, %arg4: memref<2x4x32xf32, #tpu.memory_space<vmem>>, %arg5: memref<32x32xf32, #tpu.memory_space<vmem>>, %arg6: memref<32x32xf32, #tpu.memory_space<vmem>>, %arg7: memref<32x32xf32, #tpu.memory_space<vmem>>, %arg8: memref<1x32xf32, #tpu.memory_space<vmem>>, %arg9: memref<1x32xf32, #tpu.memory_space<vmem>>, %arg10: memref<1x32xf32, #tpu.memory_space<vmem>>, %arg11: memref<32x32xf32, #tpu.memory_space<vmem>>, %arg12: memref<1x32xf32, #tpu.memory_space<vmem>>, %arg13: memref<2x8x32xf32, #tpu.memory_space<vmem>>) attributes {dimension_semantics = [#tpu.dimension_semantics<parallel>], iteration_bounds = array<i64: 1>, scalar_prefetch = 0 : i64, scratch_operands = 0 : i64, tpu.core_type = #tpu.core_type<tc>, window_params = [{transform_indices = @transform_0, window_bounds = array<i64: 2, 4, 32>}, {transform_indices = @transform_1, window_bounds = array<i64: 2, 8, 32>}, {transform_indices = @transform_2, window_bounds = array<i64: 2, 4, 32>}, {transform_indices = @transform_3, window_bounds = array<i64: 2, 4, 32>}, {pipeline_mode = #tpu.pipeline_mode<synchronous>, transform_indices = @transform_4, window_bounds = array<i64: 32, 32>}, {pipeline_mode = #tpu.pipeline_mode<synchronous>, transform_indices = @transform_5, window_bounds = array<i64: 32, 32>}, {pipeline_mode = #tpu.pipeline_mode<synchronous>, transform_indices = @transform_6, window_bounds = array<i64: 32, 32>}, {pipeline_mode = #tpu.pipeline_mode<synchronous>, transform_indices = @transform_7, window_bounds = array<i64: 1, 32>}, {pipeline_mode = #tpu.pipeline_mode<synchronous>, transform_indices = @transform_8, window_bounds = array<i64: 1, 32>}, {pipeline_mode = #tpu.pipeline_mode<synchronous>, transform_indices = @transform_9, window_bounds = array<i64: 1, 32>}, {pipeline_mode = #tpu.pipeline_mode<synchronous>, transform_indices = @transform_10, window_bounds = array<i64: 32, 32>}, {pipeline_mode = #tpu.pipeline_mode<synchronous>, transform_indices = @transform_11, window_bounds = array<i64: 1, 32>}, {transform_indices = @transform_12, window_bounds = array<i64: 2, 8, 32>}]} {
    %c0 = arith.constant 0 : index
    %c0_0 = arith.constant 0 : index
    %0 = vector.load %arg5[%c0, %c0_0] : memref<32x32xf32, #tpu.memory_space<vmem>>, vector<32x32xf32>
    %c0_1 = arith.constant 0 : index
    %c0_2 = arith.constant 0 : index
    %1 = vector.load %arg6[%c0_1, %c0_2] : memref<32x32xf32, #tpu.memory_space<vmem>>, vector<32x32xf32>
    %c0_3 = arith.constant 0 : index
    %c0_4 = arith.constant 0 : index
    %2 = vector.load %arg7[%c0_3, %c0_4] : memref<32x32xf32, #tpu.memory_space<vmem>>, vector<32x32xf32>
    %c0_5 = arith.constant 0 : index
    %c0_6 = arith.constant 0 : index
    %3 = vector.load %arg8[%c0_5, %c0_6] : memref<1x32xf32, #tpu.memory_space<vmem>>, vector<1x32xf32>
    %c0_7 = arith.constant 0 : index
    %c0_8 = arith.constant 0 : index
    %4 = vector.load %arg9[%c0_7, %c0_8] : memref<1x32xf32, #tpu.memory_space<vmem>>, vector<1x32xf32>
    %c0_9 = arith.constant 0 : index
    %c0_10 = arith.constant 0 : index
    %5 = vector.load %arg10[%c0_9, %c0_10] : memref<1x32xf32, #tpu.memory_space<vmem>>, vector<1x32xf32>
    %c0_11 = arith.constant 0 : index
    %c0_12 = arith.constant 0 : index
    %6 = vector.load %arg12[%c0_11, %c0_12] : memref<1x32xf32, #tpu.memory_space<vmem>>, vector<1x32xf32>
    %c0_13 = arith.constant 0 : index
    %c0_14 = arith.constant 0 : index
    %7 = vector.load %arg11[%c0_13, %c0_14] : memref<32x32xf32, #tpu.memory_space<vmem>>, vector<8x32xf32>
    %c8 = arith.constant 8 : index
    %c0_15 = arith.constant 0 : index
    %8 = vector.load %arg11[%c8, %c0_15] : memref<32x32xf32, #tpu.memory_space<vmem>>, vector<8x32xf32>
    %c16 = arith.constant 16 : index
    %c0_16 = arith.constant 0 : index
    %9 = vector.load %arg11[%c16, %c0_16] : memref<32x32xf32, #tpu.memory_space<vmem>>, vector<8x32xf32>
    %c24 = arith.constant 24 : index
    %c0_17 = arith.constant 0 : index
    %10 = vector.load %arg11[%c24, %c0_17] : memref<32x32xf32, #tpu.memory_space<vmem>>, vector<8x32xf32>
    %11 = tpu.iota {dimensions = array<i32: 0>} : vector<8x8xi32>
    %12 = tpu.iota {dimensions = array<i32: 1>} : vector<8x8xi32>
    %13 = arith.cmpi sle, %12, %11 : vector<8x8xi32>
    %cst = arith.constant 0.000000e+00 : f32
    %cst_18 = arith.constant -1.000000e+30 : f32
    %14 = vector.broadcast %cst : f32 to vector<8x8xf32>
    %15 = vector.broadcast %cst_18 : f32 to vector<8x8xf32>
    %16 = arith.select %13, %14, %15 : vector<8x8xi1>, vector<8x8xf32>
    %c0_19 = arith.constant 0 : index
    %c0_20 = arith.constant 0 : index
    %c0_21 = arith.constant 0 : index
    %17 = vector.load %arg2[%c0_19, %c0_20, %c0_21] : memref<2x8x32xf32, #tpu.memory_space<vmem>>, vector<1x8x32xf32>
    %18 = vector.shape_cast %17 : vector<1x8x32xf32> to vector<8x32xf32>
    %c0_22 = arith.constant 0 : index
    %c0_23 = arith.constant 0 : index
    %c0_24 = arith.constant 0 : index
    %19 = vector.load %arg1[%c0_22, %c0_23, %c0_24] : memref<2x4x32xf32, #tpu.memory_space<vmem>>, vector<1x4x32xf32>
    %20 = vector.shape_cast %19 : vector<1x4x32xf32> to vector<4x32xf32>
    %c0_25 = arith.constant 0 : index
    %c0_26 = arith.constant 0 : index
    %c0_27 = arith.constant 0 : index
    %21 = vector.load %arg3[%c0_25, %c0_26, %c0_27] : memref<2x4x32xf32, #tpu.memory_space<vmem>>, vector<1x4x32xf32>
    %22 = vector.shape_cast %21 : vector<1x4x32xf32> to vector<4x32xf32>
    %c0_28 = arith.constant 0 : index
    %c0_29 = arith.constant 0 : index
    %c0_30 = arith.constant 0 : index
    %23 = vector.load %arg4[%c0_28, %c0_29, %c0_30] : memref<2x4x32xf32, #tpu.memory_space<vmem>>, vector<1x4x32xf32>
    %24 = vector.shape_cast %23 : vector<1x4x32xf32> to vector<4x32xf32>
    %cst_31 = arith.constant dense<0.000000e+00> : vector<8x32xf32>
    %25 = tpu.matmul %18, %0, %cst_31 {dimension_numbers = #tpu.dot_dimension_numbers<[1], [0], [0], [1], [0, 0, 1, 1], [], []>} : vector<8x32xf32>, vector<32x32xf32>, vector<8x32xf32> -> vector<8x32xf32>
    %26 = vector.broadcast %3 : vector<1x32xf32> to vector<8x32xf32>
    %27 = arith.addf %25, %26 : vector<8x32xf32>
    %cst_32 = arith.constant dense<0.000000e+00> : vector<8x32xf32>
    %28 = tpu.matmul %18, %1, %cst_32 {dimension_numbers = #tpu.dot_dimension_numbers<[1], [0], [0], [1], [0, 0, 1, 1], [], []>} : vector<8x32xf32>, vector<32x32xf32>, vector<8x32xf32> -> vector<8x32xf32>
    %29 = vector.broadcast %4 : vector<1x32xf32> to vector<8x32xf32>
    %30 = arith.addf %28, %29 : vector<8x32xf32>
    %cst_33 = arith.constant dense<0.000000e+00> : vector<8x32xf32>
    %31 = tpu.matmul %18, %2, %cst_33 {dimension_numbers = #tpu.dot_dimension_numbers<[1], [0], [0], [1], [0, 0, 1, 1], [], []>} : vector<8x32xf32>, vector<32x32xf32>, vector<8x32xf32> -> vector<8x32xf32>
    %32 = vector.broadcast %5 : vector<1x32xf32> to vector<8x32xf32>
    %33 = arith.addf %31, %32 : vector<8x32xf32>
    %cst_34 = arith.constant dense<0.000000e+00> : vector<4x32xf32>
    %34 = tpu.matmul %20, %1, %cst_34 {dimension_numbers = #tpu.dot_dimension_numbers<[1], [0], [0], [1], [0, 0, 1, 1], [], []>} : vector<4x32xf32>, vector<32x32xf32>, vector<4x32xf32> -> vector<4x32xf32>
    %35 = vector.broadcast %4 : vector<1x32xf32> to vector<4x32xf32>
    %36 = arith.addf %34, %35 : vector<4x32xf32>
    %cst_35 = arith.constant dense<0.000000e+00> : vector<4x32xf32>
    %37 = tpu.matmul %20, %2, %cst_35 {dimension_numbers = #tpu.dot_dimension_numbers<[1], [0], [0], [1], [0, 0, 1, 1], [], []>} : vector<4x32xf32>, vector<32x32xf32>, vector<4x32xf32> -> vector<4x32xf32>
    %38 = vector.broadcast %5 : vector<1x32xf32> to vector<4x32xf32>
    %39 = arith.addf %37, %38 : vector<4x32xf32>
    %cst_36 = arith.constant 0.000000e+00 : f32
    %40 = vector.broadcast %cst_36 : f32 to vector<8x32xf32>
    %41 = vector.extract_strided_slice %27 {offsets = [0, 0], sizes = [8, 8], strides = [1, 1]} : vector<8x32xf32> to vector<8x8xf32>
    %cst_37 = arith.constant 0.353553385 : f32
    %42 = vector.broadcast %cst_37 : f32 to vector<8x8xf32>
    %43 = arith.mulf %41, %42 : vector<8x8xf32>
    %44 = vector.extract_strided_slice %22 {offsets = [0, 0], sizes = [4, 8], strides = [1, 1]} : vector<4x32xf32> to vector<4x8xf32>
    %cst_38 = arith.constant dense<0.000000e+00> : vector<8x4xf32>
    %45 = tpu.matmul %43, %44, %cst_38 {dimension_numbers = #tpu.dot_dimension_numbers<[1], [1], [0], [0], [0, 0, 1, 0], [], []>} : vector<8x8xf32>, vector<4x8xf32>, vector<8x4xf32> -> vector<8x4xf32>
    %46 = vector.extract_strided_slice %36 {offsets = [0, 0], sizes = [4, 8], strides = [1, 1]} : vector<4x32xf32> to vector<4x8xf32>
    %cst_39 = arith.constant dense<0.000000e+00> : vector<8x4xf32>
    %47 = tpu.matmul %43, %46, %cst_39 {dimension_numbers = #tpu.dot_dimension_numbers<[1], [1], [0], [0], [0, 0, 1, 0], [], []>} : vector<8x8xf32>, vector<4x8xf32>, vector<8x4xf32> -> vector<8x4xf32>
    %48 = vector.extract_strided_slice %30 {offsets = [0, 0], sizes = [8, 8], strides = [1, 1]} : vector<8x32xf32> to vector<8x8xf32>
    %cst_40 = arith.constant dense<0.000000e+00> : vector<8x8xf32>
    %49 = tpu.matmul %43, %48, %cst_40 {dimension_numbers = #tpu.dot_dimension_numbers<[1], [1], [0], [0], [0, 0, 1, 0], [], []>} : vector<8x8xf32>, vector<8x8xf32>, vector<8x8xf32> -> vector<8x8xf32>
    %50 = arith.addf %49, %16 : vector<8x8xf32>
    %cst_41 = arith.constant dense<0xFF800000> : vector<8xf32>
    %51 = vector.multi_reduction <maximumf>, %45, %cst_41 [1] : vector<8x4xf32> to vector<8xf32>
    %52 = vector.shape_cast %51 : vector<8xf32> to vector<8x1xf32>
    %cst_42 = arith.constant dense<0xFF800000> : vector<8xf32>
    %53 = vector.multi_reduction <maximumf>, %47, %cst_42 [1] : vector<8x4xf32> to vector<8xf32>
    %54 = vector.shape_cast %53 : vector<8xf32> to vector<8x1xf32>
    %cst_43 = arith.constant dense<0xFF800000> : vector<8xf32>
    %55 = vector.multi_reduction <maximumf>, %50, %cst_43 [1] : vector<8x8xf32> to vector<8xf32>
    %56 = vector.shape_cast %55 : vector<8xf32> to vector<8x1xf32>
    %57 = arith.maximumf %54, %56 : vector<8x1xf32>
    %58 = arith.maximumf %52, %57 : vector<8x1xf32>
    %59 = vector.broadcast %58 : vector<8x1xf32> to vector<8x4xf32>
    %60 = arith.subf %45, %59 : vector<8x4xf32>
    %61 = math.exp %60 : vector<8x4xf32>
    %62 = vector.broadcast %58 : vector<8x1xf32> to vector<8x4xf32>
    %63 = arith.subf %47, %62 : vector<8x4xf32>
    %64 = math.exp %63 : vector<8x4xf32>
    %65 = vector.broadcast %58 : vector<8x1xf32> to vector<8x8xf32>
    %66 = arith.subf %50, %65 : vector<8x8xf32>
    %67 = math.exp %66 : vector<8x8xf32>
    %cst_44 = arith.constant dense<0.000000e+00> : vector<8xf32>
    %68 = vector.multi_reduction <add>, %61, %cst_44 [1] : vector<8x4xf32> to vector<8xf32>
    %69 = vector.shape_cast %68 : vector<8xf32> to vector<8x1xf32>
    %cst_45 = arith.constant dense<0.000000e+00> : vector<8xf32>
    %70 = vector.multi_reduction <add>, %64, %cst_45 [1] : vector<8x4xf32> to vector<8xf32>
    %71 = vector.shape_cast %70 : vector<8xf32> to vector<8x1xf32>
    %72 = arith.addf %69, %71 : vector<8x1xf32>
    %cst_46 = arith.constant dense<0.000000e+00> : vector<8xf32>
    %73 = vector.multi_reduction <add>, %67, %cst_46 [1] : vector<8x8xf32> to vector<8xf32>
    %74 = vector.shape_cast %73 : vector<8xf32> to vector<8x1xf32>
    %75 = arith.addf %72, %74 : vector<8x1xf32>
    %76 = vector.extract_strided_slice %24 {offsets = [0, 0], sizes = [4, 8], strides = [1, 1]} : vector<4x32xf32> to vector<4x8xf32>
    %cst_47 = arith.constant dense<0.000000e+00> : vector<8x8xf32>
    %77 = tpu.matmul %61, %76, %cst_47 {dimension_numbers = #tpu.dot_dimension_numbers<[1], [0], [0], [1], [0, 0, 1, 1], [], []>} : vector<8x4xf32>, vector<4x8xf32>, vector<8x8xf32> -> vector<8x8xf32>
    %78 = vector.extract_strided_slice %39 {offsets = [0, 0], sizes = [4, 8], strides = [1, 1]} : vector<4x32xf32> to vector<4x8xf32>
    %cst_48 = arith.constant dense<0.000000e+00> : vector<8x8xf32>
    %79 = tpu.matmul %64, %78, %cst_48 {dimension_numbers = #tpu.dot_dimension_numbers<[1], [0], [0], [1], [0, 0, 1, 1], [], []>} : vector<8x4xf32>, vector<4x8xf32>, vector<8x8xf32> -> vector<8x8xf32>
    %80 = arith.addf %77, %79 : vector<8x8xf32>
    %81 = vector.extract_strided_slice %33 {offsets = [0, 0], sizes = [8, 8], strides = [1, 1]} : vector<8x32xf32> to vector<8x8xf32>
    %cst_49 = arith.constant dense<0.000000e+00> : vector<8x8xf32>
    %82 = tpu.matmul %67, %81, %cst_49 {dimension_numbers = #tpu.dot_dimension_numbers<[1], [0], [0], [1], [0, 0, 1, 1], [], []>} : vector<8x8xf32>, vector<8x8xf32>, vector<8x8xf32> -> vector<8x8xf32>
    %83 = arith.addf %80, %82 : vector<8x8xf32>
    %84 = tpu.reciprocal %75 : vector<8x1xf32> -> vector<8x1xf32>
    %85 = vector.broadcast %84 : vector<8x1xf32> to vector<8x8xf32>
    %86 = arith.mulf %83, %85 : vector<8x8xf32>
    %cst_50 = arith.constant dense<0.000000e+00> : vector<8x32xf32>
    %87 = tpu.matmul %86, %7, %cst_50 {dimension_numbers = #tpu.dot_dimension_numbers<[1], [0], [0], [1], [0, 0, 1, 1], [], []>} : vector<8x8xf32>, vector<8x32xf32>, vector<8x32xf32> -> vector<8x32xf32>
    %88 = arith.addf %40, %87 : vector<8x32xf32>
    %89 = vector.extract_strided_slice %27 {offsets = [0, 8], sizes = [8, 8], strides = [1, 1]} : vector<8x32xf32> to vector<8x8xf32>
    %cst_51 = arith.constant 0.353553385 : f32
    %90 = vector.broadcast %cst_51 : f32 to vector<8x8xf32>
    %91 = arith.mulf %89, %90 : vector<8x8xf32>
    %92 = vector.extract_strided_slice %22 {offsets = [0, 8], sizes = [4, 8], strides = [1, 1]} : vector<4x32xf32> to vector<4x8xf32>
    %cst_52 = arith.constant dense<0.000000e+00> : vector<8x4xf32>
    %93 = tpu.matmul %91, %92, %cst_52 {dimension_numbers = #tpu.dot_dimension_numbers<[1], [1], [0], [0], [0, 0, 1, 0], [], []>} : vector<8x8xf32>, vector<4x8xf32>, vector<8x4xf32> -> vector<8x4xf32>
    %94 = vector.extract_strided_slice %36 {offsets = [0, 8], sizes = [4, 8], strides = [1, 1]} : vector<4x32xf32> to vector<4x8xf32>
    %cst_53 = arith.constant dense<0.000000e+00> : vector<8x4xf32>
    %95 = tpu.matmul %91, %94, %cst_53 {dimension_numbers = #tpu.dot_dimension_numbers<[1], [1], [0], [0], [0, 0, 1, 0], [], []>} : vector<8x8xf32>, vector<4x8xf32>, vector<8x4xf32> -> vector<8x4xf32>
    %96 = vector.extract_strided_slice %30 {offsets = [0, 8], sizes = [8, 8], strides = [1, 1]} : vector<8x32xf32> to vector<8x8xf32>
    %cst_54 = arith.constant dense<0.000000e+00> : vector<8x8xf32>
    %97 = tpu.matmul %91, %96, %cst_54 {dimension_numbers = #tpu.dot_dimension_numbers<[1], [1], [0], [0], [0, 0, 1, 0], [], []>} : vector<8x8xf32>, vector<8x8xf32>, vector<8x8xf32> -> vector<8x8xf32>
    %98 = arith.addf %97, %16 : vector<8x8xf32>
    %cst_55 = arith.constant dense<0xFF800000> : vector<8xf32>
    %99 = vector.multi_reduction <maximumf>, %93, %cst_55 [1] : vector<8x4xf32> to vector<8xf32>
    %100 = vector.shape_cast %99 : vector<8xf32> to vector<8x1xf32>
    %cst_56 = arith.constant dense<0xFF800000> : vector<8xf32>
    %101 = vector.multi_reduction <maximumf>, %95, %cst_56 [1] : vector<8x4xf32> to vector<8xf32>
    %102 = vector.shape_cast %101 : vector<8xf32> to vector<8x1xf32>
    %cst_57 = arith.constant dense<0xFF800000> : vector<8xf32>
    %103 = vector.multi_reduction <maximumf>, %98, %cst_57 [1] : vector<8x8xf32> to vector<8xf32>
    %104 = vector.shape_cast %103 : vector<8xf32> to vector<8x1xf32>
    %105 = arith.maximumf %102, %104 : vector<8x1xf32>
    %106 = arith.maximumf %100, %105 : vector<8x1xf32>
    %107 = vector.broadcast %106 : vector<8x1xf32> to vector<8x4xf32>
    %108 = arith.subf %93, %107 : vector<8x4xf32>
    %109 = math.exp %108 : vector<8x4xf32>
    %110 = vector.broadcast %106 : vector<8x1xf32> to vector<8x4xf32>
    %111 = arith.subf %95, %110 : vector<8x4xf32>
    %112 = math.exp %111 : vector<8x4xf32>
    %113 = vector.broadcast %106 : vector<8x1xf32> to vector<8x8xf32>
    %114 = arith.subf %98, %113 : vector<8x8xf32>
    %115 = math.exp %114 : vector<8x8xf32>
    %cst_58 = arith.constant dense<0.000000e+00> : vector<8xf32>
    %116 = vector.multi_reduction <add>, %109, %cst_58 [1] : vector<8x4xf32> to vector<8xf32>
    %117 = vector.shape_cast %116 : vector<8xf32> to vector<8x1xf32>
    %cst_59 = arith.constant dense<0.000000e+00> : vector<8xf32>
    %118 = vector.multi_reduction <add>, %112, %cst_59 [1] : vector<8x4xf32> to vector<8xf32>
    %119 = vector.shape_cast %118 : vector<8xf32> to vector<8x1xf32>
    %120 = arith.addf %117, %119 : vector<8x1xf32>
    %cst_60 = arith.constant dense<0.000000e+00> : vector<8xf32>
    %121 = vector.multi_reduction <add>, %115, %cst_60 [1] : vector<8x8xf32> to vector<8xf32>
    %122 = vector.shape_cast %121 : vector<8xf32> to vector<8x1xf32>
    %123 = arith.addf %120, %122 : vector<8x1xf32>
    %124 = vector.extract_strided_slice %24 {offsets = [0, 8], sizes = [4, 8], strides = [1, 1]} : vector<4x32xf32> to vector<4x8xf32>
    %cst_61 = arith.constant dense<0.000000e+00> : vector<8x8xf32>
    %125 = tpu.matmul %109, %124, %cst_61 {dimension_numbers = #tpu.dot_dimension_numbers<[1], [0], [0], [1], [0, 0, 1, 1], [], []>} : vector<8x4xf32>, vector<4x8xf32>, vector<8x8xf32> -> vector<8x8xf32>
    %126 = vector.extract_strided_slice %39 {offsets = [0, 8], sizes = [4, 8], strides = [1, 1]} : vector<4x32xf32> to vector<4x8xf32>
    %cst_62 = arith.constant dense<0.000000e+00> : vector<8x8xf32>
    %127 = tpu.matmul %112, %126, %cst_62 {dimension_numbers = #tpu.dot_dimension_numbers<[1], [0], [0], [1], [0, 0, 1, 1], [], []>} : vector<8x4xf32>, vector<4x8xf32>, vector<8x8xf32> -> vector<8x8xf32>
    %128 = arith.addf %125, %127 : vector<8x8xf32>
    %129 = vector.extract_strided_slice %33 {offsets = [0, 8], sizes = [8, 8], strides = [1, 1]} : vector<8x32xf32> to vector<8x8xf32>
    %cst_63 = arith.constant dense<0.000000e+00> : vector<8x8xf32>
    %130 = tpu.matmul %115, %129, %cst_63 {dimension_numbers = #tpu.dot_dimension_numbers<[1], [0], [0], [1], [0, 0, 1, 1], [], []>} : vector<8x8xf32>, vector<8x8xf32>, vector<8x8xf32> -> vector<8x8xf32>
    %131 = arith.addf %128, %130 : vector<8x8xf32>
    %132 = tpu.reciprocal %123 : vector<8x1xf32> -> vector<8x1xf32>
    %133 = vector.broadcast %132 : vector<8x1xf32> to vector<8x8xf32>
    %134 = arith.mulf %131, %133 : vector<8x8xf32>
    %cst_64 = arith.constant dense<0.000000e+00> : vector<8x32xf32>
    %135 = tpu.matmul %134, %8, %cst_64 {dimension_numbers = #tpu.dot_dimension_numbers<[1], [0], [0], [1], [0, 0, 1, 1], [], []>} : vector<8x8xf32>, vector<8x32xf32>, vector<8x32xf32> -> vector<8x32xf32>
    %136 = arith.addf %88, %135 : vector<8x32xf32>
    %137 = vector.extract_strided_slice %27 {offsets = [0, 16], sizes = [8, 8], strides = [1, 1]} : vector<8x32xf32> to vector<8x8xf32>
    %cst_65 = arith.constant 0.353553385 : f32
    %138 = vector.broadcast %cst_65 : f32 to vector<8x8xf32>
    %139 = arith.mulf %137, %138 : vector<8x8xf32>
    %140 = vector.extract_strided_slice %22 {offsets = [0, 16], sizes = [4, 8], strides = [1, 1]} : vector<4x32xf32> to vector<4x8xf32>
    %cst_66 = arith.constant dense<0.000000e+00> : vector<8x4xf32>
    %141 = tpu.matmul %139, %140, %cst_66 {dimension_numbers = #tpu.dot_dimension_numbers<[1], [1], [0], [0], [0, 0, 1, 0], [], []>} : vector<8x8xf32>, vector<4x8xf32>, vector<8x4xf32> -> vector<8x4xf32>
    %142 = vector.extract_strided_slice %36 {offsets = [0, 16], sizes = [4, 8], strides = [1, 1]} : vector<4x32xf32> to vector<4x8xf32>
    %cst_67 = arith.constant dense<0.000000e+00> : vector<8x4xf32>
    %143 = tpu.matmul %139, %142, %cst_67 {dimension_numbers = #tpu.dot_dimension_numbers<[1], [1], [0], [0], [0, 0, 1, 0], [], []>} : vector<8x8xf32>, vector<4x8xf32>, vector<8x4xf32> -> vector<8x4xf32>
    %144 = vector.extract_strided_slice %30 {offsets = [0, 16], sizes = [8, 8], strides = [1, 1]} : vector<8x32xf32> to vector<8x8xf32>
    %cst_68 = arith.constant dense<0.000000e+00> : vector<8x8xf32>
    %145 = tpu.matmul %139, %144, %cst_68 {dimension_numbers = #tpu.dot_dimension_numbers<[1], [1], [0], [0], [0, 0, 1, 0], [], []>} : vector<8x8xf32>, vector<8x8xf32>, vector<8x8xf32> -> vector<8x8xf32>
    %146 = arith.addf %145, %16 : vector<8x8xf32>
    %cst_69 = arith.constant dense<0xFF800000> : vector<8xf32>
    %147 = vector.multi_reduction <maximumf>, %141, %cst_69 [1] : vector<8x4xf32> to vector<8xf32>
    %148 = vector.shape_cast %147 : vector<8xf32> to vector<8x1xf32>
    %cst_70 = arith.constant dense<0xFF800000> : vector<8xf32>
    %149 = vector.multi_reduction <maximumf>, %143, %cst_70 [1] : vector<8x4xf32> to vector<8xf32>
    %150 = vector.shape_cast %149 : vector<8xf32> to vector<8x1xf32>
    %cst_71 = arith.constant dense<0xFF800000> : vector<8xf32>
    %151 = vector.multi_reduction <maximumf>, %146, %cst_71 [1] : vector<8x8xf32> to vector<8xf32>
    %152 = vector.shape_cast %151 : vector<8xf32> to vector<8x1xf32>
    %153 = arith.maximumf %150, %152 : vector<8x1xf32>
    %154 = arith.maximumf %148, %153 : vector<8x1xf32>
    %155 = vector.broadcast %154 : vector<8x1xf32> to vector<8x4xf32>
    %156 = arith.subf %141, %155 : vector<8x4xf32>
    %157 = math.exp %156 : vector<8x4xf32>
    %158 = vector.broadcast %154 : vector<8x1xf32> to vector<8x4xf32>
    %159 = arith.subf %143, %158 : vector<8x4xf32>
    %160 = math.exp %159 : vector<8x4xf32>
    %161 = vector.broadcast %154 : vector<8x1xf32> to vector<8x8xf32>
    %162 = arith.subf %146, %161 : vector<8x8xf32>
    %163 = math.exp %162 : vector<8x8xf32>
    %cst_72 = arith.constant dense<0.000000e+00> : vector<8xf32>
    %164 = vector.multi_reduction <add>, %157, %cst_72 [1] : vector<8x4xf32> to vector<8xf32>
    %165 = vector.shape_cast %164 : vector<8xf32> to vector<8x1xf32>
    %cst_73 = arith.constant dense<0.000000e+00> : vector<8xf32>
    %166 = vector.multi_reduction <add>, %160, %cst_73 [1] : vector<8x4xf32> to vector<8xf32>
    %167 = vector.shape_cast %166 : vector<8xf32> to vector<8x1xf32>
    %168 = arith.addf %165, %167 : vector<8x1xf32>
    %cst_74 = arith.constant dense<0.000000e+00> : vector<8xf32>
    %169 = vector.multi_reduction <add>, %163, %cst_74 [1] : vector<8x8xf32> to vector<8xf32>
    %170 = vector.shape_cast %169 : vector<8xf32> to vector<8x1xf32>
    %171 = arith.addf %168, %170 : vector<8x1xf32>
    %172 = vector.extract_strided_slice %24 {offsets = [0, 16], sizes = [4, 8], strides = [1, 1]} : vector<4x32xf32> to vector<4x8xf32>
    %cst_75 = arith.constant dense<0.000000e+00> : vector<8x8xf32>
    %173 = tpu.matmul %157, %172, %cst_75 {dimension_numbers = #tpu.dot_dimension_numbers<[1], [0], [0], [1], [0, 0, 1, 1], [], []>} : vector<8x4xf32>, vector<4x8xf32>, vector<8x8xf32> -> vector<8x8xf32>
    %174 = vector.extract_strided_slice %39 {offsets = [0, 16], sizes = [4, 8], strides = [1, 1]} : vector<4x32xf32> to vector<4x8xf32>
    %cst_76 = arith.constant dense<0.000000e+00> : vector<8x8xf32>
    %175 = tpu.matmul %160, %174, %cst_76 {dimension_numbers = #tpu.dot_dimension_numbers<[1], [0], [0], [1], [0, 0, 1, 1], [], []>} : vector<8x4xf32>, vector<4x8xf32>, vector<8x8xf32> -> vector<8x8xf32>
    %176 = arith.addf %173, %175 : vector<8x8xf32>
    %177 = vector.extract_strided_slice %33 {offsets = [0, 16], sizes = [8, 8], strides = [1, 1]} : vector<8x32xf32> to vector<8x8xf32>
    %cst_77 = arith.constant dense<0.000000e+00> : vector<8x8xf32>
    %178 = tpu.matmul %163, %177, %cst_77 {dimension_numbers = #tpu.dot_dimension_numbers<[1], [0], [0], [1], [0, 0, 1, 1], [], []>} : vector<8x8xf32>, vector<8x8xf32>, vector<8x8xf32> -> vector<8x8xf32>
    %179 = arith.addf %176, %178 : vector<8x8xf32>
    %180 = tpu.reciprocal %171 : vector<8x1xf32> -> vector<8x1xf32>
    %181 = vector.broadcast %180 : vector<8x1xf32> to vector<8x8xf32>
    %182 = arith.mulf %179, %181 : vector<8x8xf32>
    %cst_78 = arith.constant dense<0.000000e+00> : vector<8x32xf32>
    %183 = tpu.matmul %182, %9, %cst_78 {dimension_numbers = #tpu.dot_dimension_numbers<[1], [0], [0], [1], [0, 0, 1, 1], [], []>} : vector<8x8xf32>, vector<8x32xf32>, vector<8x32xf32> -> vector<8x32xf32>
    %184 = arith.addf %136, %183 : vector<8x32xf32>
    %185 = vector.extract_strided_slice %27 {offsets = [0, 24], sizes = [8, 8], strides = [1, 1]} : vector<8x32xf32> to vector<8x8xf32>
    %cst_79 = arith.constant 0.353553385 : f32
    %186 = vector.broadcast %cst_79 : f32 to vector<8x8xf32>
    %187 = arith.mulf %185, %186 : vector<8x8xf32>
    %188 = vector.extract_strided_slice %22 {offsets = [0, 24], sizes = [4, 8], strides = [1, 1]} : vector<4x32xf32> to vector<4x8xf32>
    %cst_80 = arith.constant dense<0.000000e+00> : vector<8x4xf32>
    %189 = tpu.matmul %187, %188, %cst_80 {dimension_numbers = #tpu.dot_dimension_numbers<[1], [1], [0], [0], [0, 0, 1, 0], [], []>} : vector<8x8xf32>, vector<4x8xf32>, vector<8x4xf32> -> vector<8x4xf32>
    %190 = vector.extract_strided_slice %36 {offsets = [0, 24], sizes = [4, 8], strides = [1, 1]} : vector<4x32xf32> to vector<4x8xf32>
    %cst_81 = arith.constant dense<0.000000e+00> : vector<8x4xf32>
    %191 = tpu.matmul %187, %190, %cst_81 {dimension_numbers = #tpu.dot_dimension_numbers<[1], [1], [0], [0], [0, 0, 1, 0], [], []>} : vector<8x8xf32>, vector<4x8xf32>, vector<8x4xf32> -> vector<8x4xf32>
    %192 = vector.extract_strided_slice %30 {offsets = [0, 24], sizes = [8, 8], strides = [1, 1]} : vector<8x32xf32> to vector<8x8xf32>
    %cst_82 = arith.constant dense<0.000000e+00> : vector<8x8xf32>
    %193 = tpu.matmul %187, %192, %cst_82 {dimension_numbers = #tpu.dot_dimension_numbers<[1], [1], [0], [0], [0, 0, 1, 0], [], []>} : vector<8x8xf32>, vector<8x8xf32>, vector<8x8xf32> -> vector<8x8xf32>
    %194 = arith.addf %193, %16 : vector<8x8xf32>
    %cst_83 = arith.constant dense<0xFF800000> : vector<8xf32>
    %195 = vector.multi_reduction <maximumf>, %189, %cst_83 [1] : vector<8x4xf32> to vector<8xf32>
    %196 = vector.shape_cast %195 : vector<8xf32> to vector<8x1xf32>
    %cst_84 = arith.constant dense<0xFF800000> : vector<8xf32>
    %197 = vector.multi_reduction <maximumf>, %191, %cst_84 [1] : vector<8x4xf32> to vector<8xf32>
    %198 = vector.shape_cast %197 : vector<8xf32> to vector<8x1xf32>
    %cst_85 = arith.constant dense<0xFF800000> : vector<8xf32>
    %199 = vector.multi_reduction <maximumf>, %194, %cst_85 [1] : vector<8x8xf32> to vector<8xf32>
    %200 = vector.shape_cast %199 : vector<8xf32> to vector<8x1xf32>
    %201 = arith.maximumf %198, %200 : vector<8x1xf32>
    %202 = arith.maximumf %196, %201 : vector<8x1xf32>
    %203 = vector.broadcast %202 : vector<8x1xf32> to vector<8x4xf32>
    %204 = arith.subf %189, %203 : vector<8x4xf32>
    %205 = math.exp %204 : vector<8x4xf32>
    %206 = vector.broadcast %202 : vector<8x1xf32> to vector<8x4xf32>
    %207 = arith.subf %191, %206 : vector<8x4xf32>
    %208 = math.exp %207 : vector<8x4xf32>
    %209 = vector.broadcast %202 : vector<8x1xf32> to vector<8x8xf32>
    %210 = arith.subf %194, %209 : vector<8x8xf32>
    %211 = math.exp %210 : vector<8x8xf32>
    %cst_86 = arith.constant dense<0.000000e+00> : vector<8xf32>
    %212 = vector.multi_reduction <add>, %205, %cst_86 [1] : vector<8x4xf32> to vector<8xf32>
    %213 = vector.shape_cast %212 : vector<8xf32> to vector<8x1xf32>
    %cst_87 = arith.constant dense<0.000000e+00> : vector<8xf32>
    %214 = vector.multi_reduction <add>, %208, %cst_87 [1] : vector<8x4xf32> to vector<8xf32>
    %215 = vector.shape_cast %214 : vector<8xf32> to vector<8x1xf32>
    %216 = arith.addf %213, %215 : vector<8x1xf32>
    %cst_88 = arith.constant dense<0.000000e+00> : vector<8xf32>
    %217 = vector.multi_reduction <add>, %211, %cst_88 [1] : vector<8x8xf32> to vector<8xf32>
    %218 = vector.shape_cast %217 : vector<8xf32> to vector<8x1xf32>
    %219 = arith.addf %216, %218 : vector<8x1xf32>
    %220 = vector.extract_strided_slice %24 {offsets = [0, 24], sizes = [4, 8], strides = [1, 1]} : vector<4x32xf32> to vector<4x8xf32>
    %cst_89 = arith.constant dense<0.000000e+00> : vector<8x8xf32>
    %221 = tpu.matmul %205, %220, %cst_89 {dimension_numbers = #tpu.dot_dimension_numbers<[1], [0], [0], [1], [0, 0, 1, 1], [], []>} : vector<8x4xf32>, vector<4x8xf32>, vector<8x8xf32> -> vector<8x8xf32>
    %222 = vector.extract_strided_slice %39 {offsets = [0, 24], sizes = [4, 8], strides = [1, 1]} : vector<4x32xf32> to vector<4x8xf32>
    %cst_90 = arith.constant dense<0.000000e+00> : vector<8x8xf32>
    %223 = tpu.matmul %208, %222, %cst_90 {dimension_numbers = #tpu.dot_dimension_numbers<[1], [0], [0], [1], [0, 0, 1, 1], [], []>} : vector<8x4xf32>, vector<4x8xf32>, vector<8x8xf32> -> vector<8x8xf32>
    %224 = arith.addf %221, %223 : vector<8x8xf32>
    %225 = vector.extract_strided_slice %33 {offsets = [0, 24], sizes = [8, 8], strides = [1, 1]} : vector<8x32xf32> to vector<8x8xf32>
    %cst_91 = arith.constant dense<0.000000e+00> : vector<8x8xf32>
    %226 = tpu.matmul %211, %225, %cst_91 {dimension_numbers = #tpu.dot_dimension_numbers<[1], [0], [0], [1], [0, 0, 1, 1], [], []>} : vector<8x8xf32>, vector<8x8xf32>, vector<8x8xf32> -> vector<8x8xf32>
    %227 = arith.addf %224, %226 : vector<8x8xf32>
    %228 = tpu.reciprocal %219 : vector<8x1xf32> -> vector<8x1xf32>
    %229 = vector.broadcast %228 : vector<8x1xf32> to vector<8x8xf32>
    %230 = arith.mulf %227, %229 : vector<8x8xf32>
    %cst_92 = arith.constant dense<0.000000e+00> : vector<8x32xf32>
    %231 = tpu.matmul %230, %10, %cst_92 {dimension_numbers = #tpu.dot_dimension_numbers<[1], [0], [0], [1], [0, 0, 1, 1], [], []>} : vector<8x8xf32>, vector<8x32xf32>, vector<8x32xf32> -> vector<8x32xf32>
    %232 = arith.addf %184, %231 : vector<8x32xf32>
    %233 = vector.broadcast %6 : vector<1x32xf32> to vector<8x32xf32>
    %234 = arith.addf %232, %233 : vector<8x32xf32>
    %c1 = arith.constant 1 : index
    %c0_93 = arith.constant 0 : index
    %c0_94 = arith.constant 0 : index
    %235 = vector.load %arg2[%c1, %c0_93, %c0_94] : memref<2x8x32xf32, #tpu.memory_space<vmem>>, vector<1x8x32xf32>
    %236 = vector.shape_cast %235 : vector<1x8x32xf32> to vector<8x32xf32>
    %c1_95 = arith.constant 1 : index
    %c0_96 = arith.constant 0 : index
    %c0_97 = arith.constant 0 : index
    %237 = vector.load %arg1[%c1_95, %c0_96, %c0_97] : memref<2x4x32xf32, #tpu.memory_space<vmem>>, vector<1x4x32xf32>
    %238 = vector.shape_cast %237 : vector<1x4x32xf32> to vector<4x32xf32>
    %c1_98 = arith.constant 1 : index
    %c0_99 = arith.constant 0 : index
    %c0_100 = arith.constant 0 : index
    %239 = vector.load %arg3[%c1_98, %c0_99, %c0_100] : memref<2x4x32xf32, #tpu.memory_space<vmem>>, vector<1x4x32xf32>
    %240 = vector.shape_cast %239 : vector<1x4x32xf32> to vector<4x32xf32>
    %c1_101 = arith.constant 1 : index
    %c0_102 = arith.constant 0 : index
    %c0_103 = arith.constant 0 : index
    %241 = vector.load %arg4[%c1_101, %c0_102, %c0_103] : memref<2x4x32xf32, #tpu.memory_space<vmem>>, vector<1x4x32xf32>
    %242 = vector.shape_cast %241 : vector<1x4x32xf32> to vector<4x32xf32>
    %cst_104 = arith.constant dense<0.000000e+00> : vector<8x32xf32>
    %243 = tpu.matmul %236, %0, %cst_104 {dimension_numbers = #tpu.dot_dimension_numbers<[1], [0], [0], [1], [0, 0, 1, 1], [], []>} : vector<8x32xf32>, vector<32x32xf32>, vector<8x32xf32> -> vector<8x32xf32>
    %244 = vector.broadcast %3 : vector<1x32xf32> to vector<8x32xf32>
    %245 = arith.addf %243, %244 : vector<8x32xf32>
    %cst_105 = arith.constant dense<0.000000e+00> : vector<8x32xf32>
    %246 = tpu.matmul %236, %1, %cst_105 {dimension_numbers = #tpu.dot_dimension_numbers<[1], [0], [0], [1], [0, 0, 1, 1], [], []>} : vector<8x32xf32>, vector<32x32xf32>, vector<8x32xf32> -> vector<8x32xf32>
    %247 = vector.broadcast %4 : vector<1x32xf32> to vector<8x32xf32>
    %248 = arith.addf %246, %247 : vector<8x32xf32>
    %cst_106 = arith.constant dense<0.000000e+00> : vector<8x32xf32>
    %249 = tpu.matmul %236, %2, %cst_106 {dimension_numbers = #tpu.dot_dimension_numbers<[1], [0], [0], [1], [0, 0, 1, 1], [], []>} : vector<8x32xf32>, vector<32x32xf32>, vector<8x32xf32> -> vector<8x32xf32>
    %250 = vector.broadcast %5 : vector<1x32xf32> to vector<8x32xf32>
    %251 = arith.addf %249, %250 : vector<8x32xf32>
    %cst_107 = arith.constant dense<0.000000e+00> : vector<4x32xf32>
    %252 = tpu.matmul %238, %1, %cst_107 {dimension_numbers = #tpu.dot_dimension_numbers<[1], [0], [0], [1], [0, 0, 1, 1], [], []>} : vector<4x32xf32>, vector<32x32xf32>, vector<4x32xf32> -> vector<4x32xf32>
    %253 = vector.broadcast %4 : vector<1x32xf32> to vector<4x32xf32>
    %254 = arith.addf %252, %253 : vector<4x32xf32>
    %cst_108 = arith.constant dense<0.000000e+00> : vector<4x32xf32>
    %255 = tpu.matmul %238, %2, %cst_108 {dimension_numbers = #tpu.dot_dimension_numbers<[1], [0], [0], [1], [0, 0, 1, 1], [], []>} : vector<4x32xf32>, vector<32x32xf32>, vector<4x32xf32> -> vector<4x32xf32>
    %256 = vector.broadcast %5 : vector<1x32xf32> to vector<4x32xf32>
    %257 = arith.addf %255, %256 : vector<4x32xf32>
    %cst_109 = arith.constant 0.000000e+00 : f32
    %258 = vector.broadcast %cst_109 : f32 to vector<8x32xf32>
    %259 = vector.extract_strided_slice %245 {offsets = [0, 0], sizes = [8, 8], strides = [1, 1]} : vector<8x32xf32> to vector<8x8xf32>
    %cst_110 = arith.constant 0.353553385 : f32
    %260 = vector.broadcast %cst_110 : f32 to vector<8x8xf32>
    %261 = arith.mulf %259, %260 : vector<8x8xf32>
    %262 = vector.extract_strided_slice %240 {offsets = [0, 0], sizes = [4, 8], strides = [1, 1]} : vector<4x32xf32> to vector<4x8xf32>
    %cst_111 = arith.constant dense<0.000000e+00> : vector<8x4xf32>
    %263 = tpu.matmul %261, %262, %cst_111 {dimension_numbers = #tpu.dot_dimension_numbers<[1], [1], [0], [0], [0, 0, 1, 0], [], []>} : vector<8x8xf32>, vector<4x8xf32>, vector<8x4xf32> -> vector<8x4xf32>
    %264 = vector.extract_strided_slice %254 {offsets = [0, 0], sizes = [4, 8], strides = [1, 1]} : vector<4x32xf32> to vector<4x8xf32>
    %cst_112 = arith.constant dense<0.000000e+00> : vector<8x4xf32>
    %265 = tpu.matmul %261, %264, %cst_112 {dimension_numbers = #tpu.dot_dimension_numbers<[1], [1], [0], [0], [0, 0, 1, 0], [], []>} : vector<8x8xf32>, vector<4x8xf32>, vector<8x4xf32> -> vector<8x4xf32>
    %266 = vector.extract_strided_slice %248 {offsets = [0, 0], sizes = [8, 8], strides = [1, 1]} : vector<8x32xf32> to vector<8x8xf32>
    %cst_113 = arith.constant dense<0.000000e+00> : vector<8x8xf32>
    %267 = tpu.matmul %261, %266, %cst_113 {dimension_numbers = #tpu.dot_dimension_numbers<[1], [1], [0], [0], [0, 0, 1, 0], [], []>} : vector<8x8xf32>, vector<8x8xf32>, vector<8x8xf32> -> vector<8x8xf32>
    %268 = arith.addf %267, %16 : vector<8x8xf32>
    %cst_114 = arith.constant dense<0xFF800000> : vector<8xf32>
    %269 = vector.multi_reduction <maximumf>, %263, %cst_114 [1] : vector<8x4xf32> to vector<8xf32>
    %270 = vector.shape_cast %269 : vector<8xf32> to vector<8x1xf32>
    %cst_115 = arith.constant dense<0xFF800000> : vector<8xf32>
    %271 = vector.multi_reduction <maximumf>, %265, %cst_115 [1] : vector<8x4xf32> to vector<8xf32>
    %272 = vector.shape_cast %271 : vector<8xf32> to vector<8x1xf32>
    %cst_116 = arith.constant dense<0xFF800000> : vector<8xf32>
    %273 = vector.multi_reduction <maximumf>, %268, %cst_116 [1] : vector<8x8xf32> to vector<8xf32>
    %274 = vector.shape_cast %273 : vector<8xf32> to vector<8x1xf32>
    %275 = arith.maximumf %272, %274 : vector<8x1xf32>
    %276 = arith.maximumf %270, %275 : vector<8x1xf32>
    %277 = vector.broadcast %276 : vector<8x1xf32> to vector<8x4xf32>
    %278 = arith.subf %263, %277 : vector<8x4xf32>
    %279 = math.exp %278 : vector<8x4xf32>
    %280 = vector.broadcast %276 : vector<8x1xf32> to vector<8x4xf32>
    %281 = arith.subf %265, %280 : vector<8x4xf32>
    %282 = math.exp %281 : vector<8x4xf32>
    %283 = vector.broadcast %276 : vector<8x1xf32> to vector<8x8xf32>
    %284 = arith.subf %268, %283 : vector<8x8xf32>
    %285 = math.exp %284 : vector<8x8xf32>
    %cst_117 = arith.constant dense<0.000000e+00> : vector<8xf32>
    %286 = vector.multi_reduction <add>, %279, %cst_117 [1] : vector<8x4xf32> to vector<8xf32>
    %287 = vector.shape_cast %286 : vector<8xf32> to vector<8x1xf32>
    %cst_118 = arith.constant dense<0.000000e+00> : vector<8xf32>
    %288 = vector.multi_reduction <add>, %282, %cst_118 [1] : vector<8x4xf32> to vector<8xf32>
    %289 = vector.shape_cast %288 : vector<8xf32> to vector<8x1xf32>
    %290 = arith.addf %287, %289 : vector<8x1xf32>
    %cst_119 = arith.constant dense<0.000000e+00> : vector<8xf32>
    %291 = vector.multi_reduction <add>, %285, %cst_119 [1] : vector<8x8xf32> to vector<8xf32>
    %292 = vector.shape_cast %291 : vector<8xf32> to vector<8x1xf32>
    %293 = arith.addf %290, %292 : vector<8x1xf32>
    %294 = vector.extract_strided_slice %242 {offsets = [0, 0], sizes = [4, 8], strides = [1, 1]} : vector<4x32xf32> to vector<4x8xf32>
    %cst_120 = arith.constant dense<0.000000e+00> : vector<8x8xf32>
    %295 = tpu.matmul %279, %294, %cst_120 {dimension_numbers = #tpu.dot_dimension_numbers<[1], [0], [0], [1], [0, 0, 1, 1], [], []>} : vector<8x4xf32>, vector<4x8xf32>, vector<8x8xf32> -> vector<8x8xf32>
    %296 = vector.extract_strided_slice %257 {offsets = [0, 0], sizes = [4, 8], strides = [1, 1]} : vector<4x32xf32> to vector<4x8xf32>
    %cst_121 = arith.constant dense<0.000000e+00> : vector<8x8xf32>
    %297 = tpu.matmul %282, %296, %cst_121 {dimension_numbers = #tpu.dot_dimension_numbers<[1], [0], [0], [1], [0, 0, 1, 1], [], []>} : vector<8x4xf32>, vector<4x8xf32>, vector<8x8xf32> -> vector<8x8xf32>
    %298 = arith.addf %295, %297 : vector<8x8xf32>
    %299 = vector.extract_strided_slice %251 {offsets = [0, 0], sizes = [8, 8], strides = [1, 1]} : vector<8x32xf32> to vector<8x8xf32>
    %cst_122 = arith.constant dense<0.000000e+00> : vector<8x8xf32>
    %300 = tpu.matmul %285, %299, %cst_122 {dimension_numbers = #tpu.dot_dimension_numbers<[1], [0], [0], [1], [0, 0, 1, 1], [], []>} : vector<8x8xf32>, vector<8x8xf32>, vector<8x8xf32> -> vector<8x8xf32>
    %301 = arith.addf %298, %300 : vector<8x8xf32>
    %302 = tpu.reciprocal %293 : vector<8x1xf32> -> vector<8x1xf32>
    %303 = vector.broadcast %302 : vector<8x1xf32> to vector<8x8xf32>
    %304 = arith.mulf %301, %303 : vector<8x8xf32>
    %cst_123 = arith.constant dense<0.000000e+00> : vector<8x32xf32>
    %305 = tpu.matmul %304, %7, %cst_123 {dimension_numbers = #tpu.dot_dimension_numbers<[1], [0], [0], [1], [0, 0, 1, 1], [], []>} : vector<8x8xf32>, vector<8x32xf32>, vector<8x32xf32> -> vector<8x32xf32>
    %306 = arith.addf %258, %305 : vector<8x32xf32>
    %307 = vector.extract_strided_slice %245 {offsets = [0, 8], sizes = [8, 8], strides = [1, 1]} : vector<8x32xf32> to vector<8x8xf32>
    %cst_124 = arith.constant 0.353553385 : f32
    %308 = vector.broadcast %cst_124 : f32 to vector<8x8xf32>
    %309 = arith.mulf %307, %308 : vector<8x8xf32>
    %310 = vector.extract_strided_slice %240 {offsets = [0, 8], sizes = [4, 8], strides = [1, 1]} : vector<4x32xf32> to vector<4x8xf32>
    %cst_125 = arith.constant dense<0.000000e+00> : vector<8x4xf32>
    %311 = tpu.matmul %309, %310, %cst_125 {dimension_numbers = #tpu.dot_dimension_numbers<[1], [1], [0], [0], [0, 0, 1, 0], [], []>} : vector<8x8xf32>, vector<4x8xf32>, vector<8x4xf32> -> vector<8x4xf32>
    %312 = vector.extract_strided_slice %254 {offsets = [0, 8], sizes = [4, 8], strides = [1, 1]} : vector<4x32xf32> to vector<4x8xf32>
    %cst_126 = arith.constant dense<0.000000e+00> : vector<8x4xf32>
    %313 = tpu.matmul %309, %312, %cst_126 {dimension_numbers = #tpu.dot_dimension_numbers<[1], [1], [0], [0], [0, 0, 1, 0], [], []>} : vector<8x8xf32>, vector<4x8xf32>, vector<8x4xf32> -> vector<8x4xf32>
    %314 = vector.extract_strided_slice %248 {offsets = [0, 8], sizes = [8, 8], strides = [1, 1]} : vector<8x32xf32> to vector<8x8xf32>
    %cst_127 = arith.constant dense<0.000000e+00> : vector<8x8xf32>
    %315 = tpu.matmul %309, %314, %cst_127 {dimension_numbers = #tpu.dot_dimension_numbers<[1], [1], [0], [0], [0, 0, 1, 0], [], []>} : vector<8x8xf32>, vector<8x8xf32>, vector<8x8xf32> -> vector<8x8xf32>
    %316 = arith.addf %315, %16 : vector<8x8xf32>
    %cst_128 = arith.constant dense<0xFF800000> : vector<8xf32>
    %317 = vector.multi_reduction <maximumf>, %311, %cst_128 [1] : vector<8x4xf32> to vector<8xf32>
    %318 = vector.shape_cast %317 : vector<8xf32> to vector<8x1xf32>
    %cst_129 = arith.constant dense<0xFF800000> : vector<8xf32>
    %319 = vector.multi_reduction <maximumf>, %313, %cst_129 [1] : vector<8x4xf32> to vector<8xf32>
    %320 = vector.shape_cast %319 : vector<8xf32> to vector<8x1xf32>
    %cst_130 = arith.constant dense<0xFF800000> : vector<8xf32>
    %321 = vector.multi_reduction <maximumf>, %316, %cst_130 [1] : vector<8x8xf32> to vector<8xf32>
    %322 = vector.shape_cast %321 : vector<8xf32> to vector<8x1xf32>
    %323 = arith.maximumf %320, %322 : vector<8x1xf32>
    %324 = arith.maximumf %318, %323 : vector<8x1xf32>
    %325 = vector.broadcast %324 : vector<8x1xf32> to vector<8x4xf32>
    %326 = arith.subf %311, %325 : vector<8x4xf32>
    %327 = math.exp %326 : vector<8x4xf32>
    %328 = vector.broadcast %324 : vector<8x1xf32> to vector<8x4xf32>
    %329 = arith.subf %313, %328 : vector<8x4xf32>
    %330 = math.exp %329 : vector<8x4xf32>
    %331 = vector.broadcast %324 : vector<8x1xf32> to vector<8x8xf32>
    %332 = arith.subf %316, %331 : vector<8x8xf32>
    %333 = math.exp %332 : vector<8x8xf32>
    %cst_131 = arith.constant dense<0.000000e+00> : vector<8xf32>
    %334 = vector.multi_reduction <add>, %327, %cst_131 [1] : vector<8x4xf32> to vector<8xf32>
    %335 = vector.shape_cast %334 : vector<8xf32> to vector<8x1xf32>
    %cst_132 = arith.constant dense<0.000000e+00> : vector<8xf32>
    %336 = vector.multi_reduction <add>, %330, %cst_132 [1] : vector<8x4xf32> to vector<8xf32>
    %337 = vector.shape_cast %336 : vector<8xf32> to vector<8x1xf32>
    %338 = arith.addf %335, %337 : vector<8x1xf32>
    %cst_133 = arith.constant dense<0.000000e+00> : vector<8xf32>
    %339 = vector.multi_reduction <add>, %333, %cst_133 [1] : vector<8x8xf32> to vector<8xf32>
    %340 = vector.shape_cast %339 : vector<8xf32> to vector<8x1xf32>
    %341 = arith.addf %338, %340 : vector<8x1xf32>
    %342 = vector.extract_strided_slice %242 {offsets = [0, 8], sizes = [4, 8], strides = [1, 1]} : vector<4x32xf32> to vector<4x8xf32>
    %cst_134 = arith.constant dense<0.000000e+00> : vector<8x8xf32>
    %343 = tpu.matmul %327, %342, %cst_134 {dimension_numbers = #tpu.dot_dimension_numbers<[1], [0], [0], [1], [0, 0, 1, 1], [], []>} : vector<8x4xf32>, vector<4x8xf32>, vector<8x8xf32> -> vector<8x8xf32>
    %344 = vector.extract_strided_slice %257 {offsets = [0, 8], sizes = [4, 8], strides = [1, 1]} : vector<4x32xf32> to vector<4x8xf32>
    %cst_135 = arith.constant dense<0.000000e+00> : vector<8x8xf32>
    %345 = tpu.matmul %330, %344, %cst_135 {dimension_numbers = #tpu.dot_dimension_numbers<[1], [0], [0], [1], [0, 0, 1, 1], [], []>} : vector<8x4xf32>, vector<4x8xf32>, vector<8x8xf32> -> vector<8x8xf32>
    %346 = arith.addf %343, %345 : vector<8x8xf32>
    %347 = vector.extract_strided_slice %251 {offsets = [0, 8], sizes = [8, 8], strides = [1, 1]} : vector<8x32xf32> to vector<8x8xf32>
    %cst_136 = arith.constant dense<0.000000e+00> : vector<8x8xf32>
    %348 = tpu.matmul %333, %347, %cst_136 {dimension_numbers = #tpu.dot_dimension_numbers<[1], [0], [0], [1], [0, 0, 1, 1], [], []>} : vector<8x8xf32>, vector<8x8xf32>, vector<8x8xf32> -> vector<8x8xf32>
    %349 = arith.addf %346, %348 : vector<8x8xf32>
    %350 = tpu.reciprocal %341 : vector<8x1xf32> -> vector<8x1xf32>
    %351 = vector.broadcast %350 : vector<8x1xf32> to vector<8x8xf32>
    %352 = arith.mulf %349, %351 : vector<8x8xf32>
    %cst_137 = arith.constant dense<0.000000e+00> : vector<8x32xf32>
    %353 = tpu.matmul %352, %8, %cst_137 {dimension_numbers = #tpu.dot_dimension_numbers<[1], [0], [0], [1], [0, 0, 1, 1], [], []>} : vector<8x8xf32>, vector<8x32xf32>, vector<8x32xf32> -> vector<8x32xf32>
    %354 = arith.addf %306, %353 : vector<8x32xf32>
    %355 = vector.extract_strided_slice %245 {offsets = [0, 16], sizes = [8, 8], strides = [1, 1]} : vector<8x32xf32> to vector<8x8xf32>
    %cst_138 = arith.constant 0.353553385 : f32
    %356 = vector.broadcast %cst_138 : f32 to vector<8x8xf32>
    %357 = arith.mulf %355, %356 : vector<8x8xf32>
    %358 = vector.extract_strided_slice %240 {offsets = [0, 16], sizes = [4, 8], strides = [1, 1]} : vector<4x32xf32> to vector<4x8xf32>
    %cst_139 = arith.constant dense<0.000000e+00> : vector<8x4xf32>
    %359 = tpu.matmul %357, %358, %cst_139 {dimension_numbers = #tpu.dot_dimension_numbers<[1], [1], [0], [0], [0, 0, 1, 0], [], []>} : vector<8x8xf32>, vector<4x8xf32>, vector<8x4xf32> -> vector<8x4xf32>
    %360 = vector.extract_strided_slice %254 {offsets = [0, 16], sizes = [4, 8], strides = [1, 1]} : vector<4x32xf32> to vector<4x8xf32>
    %cst_140 = arith.constant dense<0.000000e+00> : vector<8x4xf32>
    %361 = tpu.matmul %357, %360, %cst_140 {dimension_numbers = #tpu.dot_dimension_numbers<[1], [1], [0], [0], [0, 0, 1, 0], [], []>} : vector<8x8xf32>, vector<4x8xf32>, vector<8x4xf32> -> vector<8x4xf32>
    %362 = vector.extract_strided_slice %248 {offsets = [0, 16], sizes = [8, 8], strides = [1, 1]} : vector<8x32xf32> to vector<8x8xf32>
    %cst_141 = arith.constant dense<0.000000e+00> : vector<8x8xf32>
    %363 = tpu.matmul %357, %362, %cst_141 {dimension_numbers = #tpu.dot_dimension_numbers<[1], [1], [0], [0], [0, 0, 1, 0], [], []>} : vector<8x8xf32>, vector<8x8xf32>, vector<8x8xf32> -> vector<8x8xf32>
    %364 = arith.addf %363, %16 : vector<8x8xf32>
    %cst_142 = arith.constant dense<0xFF800000> : vector<8xf32>
    %365 = vector.multi_reduction <maximumf>, %359, %cst_142 [1] : vector<8x4xf32> to vector<8xf32>
    %366 = vector.shape_cast %365 : vector<8xf32> to vector<8x1xf32>
    %cst_143 = arith.constant dense<0xFF800000> : vector<8xf32>
    %367 = vector.multi_reduction <maximumf>, %361, %cst_143 [1] : vector<8x4xf32> to vector<8xf32>
    %368 = vector.shape_cast %367 : vector<8xf32> to vector<8x1xf32>
    %cst_144 = arith.constant dense<0xFF800000> : vector<8xf32>
    %369 = vector.multi_reduction <maximumf>, %364, %cst_144 [1] : vector<8x8xf32> to vector<8xf32>
    %370 = vector.shape_cast %369 : vector<8xf32> to vector<8x1xf32>
    %371 = arith.maximumf %368, %370 : vector<8x1xf32>
    %372 = arith.maximumf %366, %371 : vector<8x1xf32>
    %373 = vector.broadcast %372 : vector<8x1xf32> to vector<8x4xf32>
    %374 = arith.subf %359, %373 : vector<8x4xf32>
    %375 = math.exp %374 : vector<8x4xf32>
    %376 = vector.broadcast %372 : vector<8x1xf32> to vector<8x4xf32>
    %377 = arith.subf %361, %376 : vector<8x4xf32>
    %378 = math.exp %377 : vector<8x4xf32>
    %379 = vector.broadcast %372 : vector<8x1xf32> to vector<8x8xf32>
    %380 = arith.subf %364, %379 : vector<8x8xf32>
    %381 = math.exp %380 : vector<8x8xf32>
    %cst_145 = arith.constant dense<0.000000e+00> : vector<8xf32>
    %382 = vector.multi_reduction <add>, %375, %cst_145 [1] : vector<8x4xf32> to vector<8xf32>
    %383 = vector.shape_cast %382 : vector<8xf32> to vector<8x1xf32>
    %cst_146 = arith.constant dense<0.000000e+00> : vector<8xf32>
    %384 = vector.multi_reduction <add>, %378, %cst_146 [1] : vector<8x4xf32> to vector<8xf32>
    %385 = vector.shape_cast %384 : vector<8xf32> to vector<8x1xf32>
    %386 = arith.addf %383, %385 : vector<8x1xf32>
    %cst_147 = arith.constant dense<0.000000e+00> : vector<8xf32>
    %387 = vector.multi_reduction <add>, %381, %cst_147 [1] : vector<8x8xf32> to vector<8xf32>
    %388 = vector.shape_cast %387 : vector<8xf32> to vector<8x1xf32>
    %389 = arith.addf %386, %388 : vector<8x1xf32>
    %390 = vector.extract_strided_slice %242 {offsets = [0, 16], sizes = [4, 8], strides = [1, 1]} : vector<4x32xf32> to vector<4x8xf32>
    %cst_148 = arith.constant dense<0.000000e+00> : vector<8x8xf32>
    %391 = tpu.matmul %375, %390, %cst_148 {dimension_numbers = #tpu.dot_dimension_numbers<[1], [0], [0], [1], [0, 0, 1, 1], [], []>} : vector<8x4xf32>, vector<4x8xf32>, vector<8x8xf32> -> vector<8x8xf32>
    %392 = vector.extract_strided_slice %257 {offsets = [0, 16], sizes = [4, 8], strides = [1, 1]} : vector<4x32xf32> to vector<4x8xf32>
    %cst_149 = arith.constant dense<0.000000e+00> : vector<8x8xf32>
    %393 = tpu.matmul %378, %392, %cst_149 {dimension_numbers = #tpu.dot_dimension_numbers<[1], [0], [0], [1], [0, 0, 1, 1], [], []>} : vector<8x4xf32>, vector<4x8xf32>, vector<8x8xf32> -> vector<8x8xf32>
    %394 = arith.addf %391, %393 : vector<8x8xf32>
    %395 = vector.extract_strided_slice %251 {offsets = [0, 16], sizes = [8, 8], strides = [1, 1]} : vector<8x32xf32> to vector<8x8xf32>
    %cst_150 = arith.constant dense<0.000000e+00> : vector<8x8xf32>
    %396 = tpu.matmul %381, %395, %cst_150 {dimension_numbers = #tpu.dot_dimension_numbers<[1], [0], [0], [1], [0, 0, 1, 1], [], []>} : vector<8x8xf32>, vector<8x8xf32>, vector<8x8xf32> -> vector<8x8xf32>
    %397 = arith.addf %394, %396 : vector<8x8xf32>
    %398 = tpu.reciprocal %389 : vector<8x1xf32> -> vector<8x1xf32>
    %399 = vector.broadcast %398 : vector<8x1xf32> to vector<8x8xf32>
    %400 = arith.mulf %397, %399 : vector<8x8xf32>
    %cst_151 = arith.constant dense<0.000000e+00> : vector<8x32xf32>
    %401 = tpu.matmul %400, %9, %cst_151 {dimension_numbers = #tpu.dot_dimension_numbers<[1], [0], [0], [1], [0, 0, 1, 1], [], []>} : vector<8x8xf32>, vector<8x32xf32>, vector<8x32xf32> -> vector<8x32xf32>
    %402 = arith.addf %354, %401 : vector<8x32xf32>
    %403 = vector.extract_strided_slice %245 {offsets = [0, 24], sizes = [8, 8], strides = [1, 1]} : vector<8x32xf32> to vector<8x8xf32>
    %cst_152 = arith.constant 0.353553385 : f32
    %404 = vector.broadcast %cst_152 : f32 to vector<8x8xf32>
    %405 = arith.mulf %403, %404 : vector<8x8xf32>
    %406 = vector.extract_strided_slice %240 {offsets = [0, 24], sizes = [4, 8], strides = [1, 1]} : vector<4x32xf32> to vector<4x8xf32>
    %cst_153 = arith.constant dense<0.000000e+00> : vector<8x4xf32>
    %407 = tpu.matmul %405, %406, %cst_153 {dimension_numbers = #tpu.dot_dimension_numbers<[1], [1], [0], [0], [0, 0, 1, 0], [], []>} : vector<8x8xf32>, vector<4x8xf32>, vector<8x4xf32> -> vector<8x4xf32>
    %408 = vector.extract_strided_slice %254 {offsets = [0, 24], sizes = [4, 8], strides = [1, 1]} : vector<4x32xf32> to vector<4x8xf32>
    %cst_154 = arith.constant dense<0.000000e+00> : vector<8x4xf32>
    %409 = tpu.matmul %405, %408, %cst_154 {dimension_numbers = #tpu.dot_dimension_numbers<[1], [1], [0], [0], [0, 0, 1, 0], [], []>} : vector<8x8xf32>, vector<4x8xf32>, vector<8x4xf32> -> vector<8x4xf32>
    %410 = vector.extract_strided_slice %248 {offsets = [0, 24], sizes = [8, 8], strides = [1, 1]} : vector<8x32xf32> to vector<8x8xf32>
    %cst_155 = arith.constant dense<0.000000e+00> : vector<8x8xf32>
    %411 = tpu.matmul %405, %410, %cst_155 {dimension_numbers = #tpu.dot_dimension_numbers<[1], [1], [0], [0], [0, 0, 1, 0], [], []>} : vector<8x8xf32>, vector<8x8xf32>, vector<8x8xf32> -> vector<8x8xf32>
    %412 = arith.addf %411, %16 : vector<8x8xf32>
    %cst_156 = arith.constant dense<0xFF800000> : vector<8xf32>
    %413 = vector.multi_reduction <maximumf>, %407, %cst_156 [1] : vector<8x4xf32> to vector<8xf32>
    %414 = vector.shape_cast %413 : vector<8xf32> to vector<8x1xf32>
    %cst_157 = arith.constant dense<0xFF800000> : vector<8xf32>
    %415 = vector.multi_reduction <maximumf>, %409, %cst_157 [1] : vector<8x4xf32> to vector<8xf32>
    %416 = vector.shape_cast %415 : vector<8xf32> to vector<8x1xf32>
    %cst_158 = arith.constant dense<0xFF800000> : vector<8xf32>
    %417 = vector.multi_reduction <maximumf>, %412, %cst_158 [1] : vector<8x8xf32> to vector<8xf32>
    %418 = vector.shape_cast %417 : vector<8xf32> to vector<8x1xf32>
    %419 = arith.maximumf %416, %418 : vector<8x1xf32>
    %420 = arith.maximumf %414, %419 : vector<8x1xf32>
    %421 = vector.broadcast %420 : vector<8x1xf32> to vector<8x4xf32>
    %422 = arith.subf %407, %421 : vector<8x4xf32>
    %423 = math.exp %422 : vector<8x4xf32>
    %424 = vector.broadcast %420 : vector<8x1xf32> to vector<8x4xf32>
    %425 = arith.subf %409, %424 : vector<8x4xf32>
    %426 = math.exp %425 : vector<8x4xf32>
    %427 = vector.broadcast %420 : vector<8x1xf32> to vector<8x8xf32>
    %428 = arith.subf %412, %427 : vector<8x8xf32>
    %429 = math.exp %428 : vector<8x8xf32>
    %cst_159 = arith.constant dense<0.000000e+00> : vector<8xf32>
    %430 = vector.multi_reduction <add>, %423, %cst_159 [1] : vector<8x4xf32> to vector<8xf32>
    %431 = vector.shape_cast %430 : vector<8xf32> to vector<8x1xf32>
    %cst_160 = arith.constant dense<0.000000e+00> : vector<8xf32>
    %432 = vector.multi_reduction <add>, %426, %cst_160 [1] : vector<8x4xf32> to vector<8xf32>
    %433 = vector.shape_cast %432 : vector<8xf32> to vector<8x1xf32>
    %434 = arith.addf %431, %433 : vector<8x1xf32>
    %cst_161 = arith.constant dense<0.000000e+00> : vector<8xf32>
    %435 = vector.multi_reduction <add>, %429, %cst_161 [1] : vector<8x8xf32> to vector<8xf32>
    %436 = vector.shape_cast %435 : vector<8xf32> to vector<8x1xf32>
    %437 = arith.addf %434, %436 : vector<8x1xf32>
    %438 = vector.extract_strided_slice %242 {offsets = [0, 24], sizes = [4, 8], strides = [1, 1]} : vector<4x32xf32> to vector<4x8xf32>
    %cst_162 = arith.constant dense<0.000000e+00> : vector<8x8xf32>
    %439 = tpu.matmul %423, %438, %cst_162 {dimension_numbers = #tpu.dot_dimension_numbers<[1], [0], [0], [1], [0, 0, 1, 1], [], []>} : vector<8x4xf32>, vector<4x8xf32>, vector<8x8xf32> -> vector<8x8xf32>
    %440 = vector.extract_strided_slice %257 {offsets = [0, 24], sizes = [4, 8], strides = [1, 1]} : vector<4x32xf32> to vector<4x8xf32>
    %cst_163 = arith.constant dense<0.000000e+00> : vector<8x8xf32>
    %441 = tpu.matmul %426, %440, %cst_163 {dimension_numbers = #tpu.dot_dimension_numbers<[1], [0], [0], [1], [0, 0, 1, 1], [], []>} : vector<8x4xf32>, vector<4x8xf32>, vector<8x8xf32> -> vector<8x8xf32>
    %442 = arith.addf %439, %441 : vector<8x8xf32>
    %443 = vector.extract_strided_slice %251 {offsets = [0, 24], sizes = [8, 8], strides = [1, 1]} : vector<8x32xf32> to vector<8x8xf32>
    %cst_164 = arith.constant dense<0.000000e+00> : vector<8x8xf32>
    %444 = tpu.matmul %429, %443, %cst_164 {dimension_numbers = #tpu.dot_dimension_numbers<[1], [0], [0], [1], [0, 0, 1, 1], [], []>} : vector<8x8xf32>, vector<8x8xf32>, vector<8x8xf32> -> vector<8x8xf32>
    %445 = arith.addf %442, %444 : vector<8x8xf32>
    %446 = tpu.reciprocal %437 : vector<8x1xf32> -> vector<8x1xf32>
    %447 = vector.broadcast %446 : vector<8x1xf32> to vector<8x8xf32>
    %448 = arith.mulf %445, %447 : vector<8x8xf32>
    %cst_165 = arith.constant dense<0.000000e+00> : vector<8x32xf32>
    %449 = tpu.matmul %448, %10, %cst_165 {dimension_numbers = #tpu.dot_dimension_numbers<[1], [0], [0], [1], [0, 0, 1, 1], [], []>} : vector<8x8xf32>, vector<8x32xf32>, vector<8x32xf32> -> vector<8x32xf32>
    %450 = arith.addf %402, %449 : vector<8x32xf32>
    %451 = vector.broadcast %6 : vector<1x32xf32> to vector<8x32xf32>
    %452 = arith.addf %450, %451 : vector<8x32xf32>
    %453 = vector.shape_cast %234 : vector<8x32xf32> to vector<1x8x32xf32>
    %454 = vector.shape_cast %452 : vector<8x32xf32> to vector<1x8x32xf32>
    %455 = tpu.concatenate %453, %454 in 0 : vector<1x8x32xf32>, vector<1x8x32xf32> -> vector<2x8x32xf32>
    %c0_166 = arith.constant 0 : index
    %c0_167 = arith.constant 0 : index
    %c0_168 = arith.constant 0 : index
    %456 = vector.load %arg13[%c0_166, %c0_167, %c0_168] : memref<2x8x32xf32, #tpu.memory_space<vmem>>, vector<2x8x32xf32>
    tpu.vector_store %arg13[%c0_166, %c0_167, %c0_168], %455 {strides = array<i32>} : memref<2x8x32xf32, #tpu.memory_space<vmem>>, vector<2x8x32xf32>,
    return
  }
  func.func @transform_0(%arg0: i32) -> (i32, i32, i32) {
    %c0_i32 = arith.constant 0 : i32
    %c0_i32_0 = arith.constant 0 : i32
    %c0_i32_1 = arith.constant 0 : i32
    return %arg0, %c0_i32, %c0_i32_0 : i32, i32, i32
  }
  func.func @transform_1(%arg0: i32) -> (i32, i32, i32) {
    %c0_i32 = arith.constant 0 : i32
    %c0_i32_0 = arith.constant 0 : i32
    %c0_i32_1 = arith.constant 0 : i32
    return %arg0, %c0_i32, %c0_i32_0 : i32, i32, i32
  }
  func.func @transform_2(%arg0: i32) -> (i32, i32, i32) {
    %c0_i32 = arith.constant 0 : i32
    %c0_i32_0 = arith.constant 0 : i32
    %c0_i32_1 = arith.constant 0 : i32
    return %arg0, %c0_i32, %c0_i32_0 : i32, i32, i32
  }
  func.func @transform_3(%arg0: i32) -> (i32, i32, i32) {
    %c0_i32 = arith.constant 0 : i32
    %c0_i32_0 = arith.constant 0 : i32
    %c0_i32_1 = arith.constant 0 : i32
    return %arg0, %c0_i32, %c0_i32_0 : i32, i32, i32
  }
  func.func @transform_4(%arg0: i32) -> (i32, i32) {
    %c0_i32 = arith.constant 0 : i32
    %c0_i32_0 = arith.constant 0 : i32
    %c0_i32_1 = arith.constant 0 : i32
    return %c0_i32, %c0_i32_0 : i32, i32
  }
  func.func @transform_5(%arg0: i32) -> (i32, i32) {
    %c0_i32 = arith.constant 0 : i32
    %c0_i32_0 = arith.constant 0 : i32
    %c0_i32_1 = arith.constant 0 : i32
    return %c0_i32, %c0_i32_0 : i32, i32
  }
  func.func @transform_6(%arg0: i32) -> (i32, i32) {
    %c0_i32 = arith.constant 0 : i32
    %c0_i32_0 = arith.constant 0 : i32
    %c0_i32_1 = arith.constant 0 : i32
    return %c0_i32, %c0_i32_0 : i32, i32
  }
  func.func @transform_7(%arg0: i32) -> (i32, i32) {
    %c0_i32 = arith.constant 0 : i32
    %c0_i32_0 = arith.constant 0 : i32
    %c0_i32_1 = arith.constant 0 : i32
    return %c0_i32, %c0_i32_0 : i32, i32
  }
  func.func @transform_8(%arg0: i32) -> (i32, i32) {
    %c0_i32 = arith.constant 0 : i32
    %c0_i32_0 = arith.constant 0 : i32
    %c0_i32_1 = arith.constant 0 : i32
    return %c0_i32, %c0_i32_0 : i32, i32
  }
  func.func @transform_9(%arg0: i32) -> (i32, i32) {
    %c0_i32 = arith.constant 0 : i32
    %c0_i32_0 = arith.constant 0 : i32
    %c0_i32_1 = arith.constant 0 : i32
    return %c0_i32, %c0_i32_0 : i32, i32
  }
  func.func @transform_10(%arg0: i32) -> (i32, i32) {
    %c0_i32 = arith.constant 0 : i32
    %c0_i32_0 = arith.constant 0 : i32
    %c0_i32_1 = arith.constant 0 : i32
    return %c0_i32, %c0_i32_0 : i32, i32
  }
  func.func @transform_11(%arg0: i32) -> (i32, i32) {
    %c0_i32 = arith.constant 0 : i32
    %c0_i32_0 = arith.constant 0 : i32
    %c0_i32_1 = arith.constant 0 : i32
    return %c0_i32, %c0_i32_0 : i32, i32
  }
  func.func @transform_12(%arg0: i32) -> (i32, i32, i32) {
    %c0_i32 = arith.constant 0 : i32
    %c0_i32_0 = arith.constant 0 : i32
    %c0_i32_1 = arith.constant 0 : i32
    return %arg0, %c0_i32, %c0_i32_0 : i32, i32, i32
  }
}

</mosaic_0001>

<llo_original>
// kernel: _forward_impl.1
$region0: #{_forward_impl.1}
  #allocation0 [shape = 'u32[]', space=smem, size = 0x4, offset = 0x4, fixed_abs, tag = 'smem constant byte address 0x4 - core index']
  #allocation1 [shape = 'u32[144,128]{1,0:T(1,128)}', space=vmem, size = 0x12000, scoped, tag = 'internal scratch']
  %s0 = inlined_call_operand.vmem [shape: f32[2,4,32], index: 0, kind: input, shape index: {}]
  %s1 = inlined_call_operand.vmem [shape: f32[2,8,32], index: 1, kind: input, shape index: {}]
  %s2 = inlined_call_operand.vmem [shape: f32[2,4,32], index: 2, kind: input, shape index: {}]
  %s3 = inlined_call_operand.vmem [shape: f32[2,4,32], index: 3, kind: input, shape index: {}]
  %s4 = inlined_call_operand.vmem [shape: f32[32,32], index: 4, kind: input, shape index: {}]
  %s5 = inlined_call_operand.vmem [shape: f32[32,32], index: 5, kind: input, shape index: {}]
  %s6 = inlined_call_operand.vmem [shape: f32[32,32], index: 6, kind: input, shape index: {}]
  %s7 = inlined_call_operand.vmem [shape: f32[1,32], index: 7, kind: input, shape index: {}]
  %s8 = inlined_call_operand.vmem [shape: f32[1,32], index: 8, kind: input, shape index: {}]
  %s9 = inlined_call_operand.vmem [shape: f32[1,32], index: 9, kind: input, shape index: {}]
  %s10 = inlined_call_operand.vmem [shape: f32[32,32], index: 10, kind: input, shape index: {}]
  %s11 = inlined_call_operand.vmem [shape: f32[1,32], index: 11, kind: input, shape index: {}]
  %s12 = inlined_call_operand.hbm [shape: f32[2,8,32], index: 12, kind: output, shape index: {}]
  %s13 = sld [smem:[#allocation0]]
  $region58: #{_forward_impl.1} parent=0
    _
  %s15 = ssub.s32 1, %s13
  %s16 = scalar_select 0, %s15, %s13
  $region1: #{_forward_impl.1} parent=0
    #allocation2 [shape = 'u8[8192]{0}', space=vmem, size = 0x2000, scoped, tag = 'output window, operand 0, single buffered']
    #allocation3 [shape = 's32[1]{0}', space=sflag, size = 0x4, scoped, tag = 'scoped memory for _forward_impl.1']
    %17 = vsyncpa [#allocation3], 0
    // Predicated region
    $region2: #{_forward_impl.1} parent=1 // pred_check
      _
    $region3: #{_forward_impl.1} parent=1 // pred_check_branch
      %19 = sbr.rel (0) target = $region5
    $region4: #{_forward_impl.1} parent=1 // pred_region
      _
    $region5: #{_forward_impl.1} parent=1 // pred_fallthru
      _
    // Predicated region
    $region6: #{_forward_impl.1} parent=1 // pred_check
      _
    $region7: #{_forward_impl.1} parent=1 // pred_check_branch
      %21 = sbr.rel (0) target = $region9
    $region8: #{_forward_impl.1} parent=1 // pred_region
      _
    $region9: #{_forward_impl.1} parent=1 // pred_fallthru
      _
    // Predicated region
    $region10: #{_forward_impl.1} parent=1 // pred_check
      _
    $region11: #{_forward_impl.1} parent=1 // pred_check_branch
      %23 = sbr.rel (0) target = $region13
    $region12: #{_forward_impl.1} parent=1 // pred_region
      _
    $region13: #{_forward_impl.1} parent=1 // pred_fallthru
      _
    // Predicated region
    $region14: #{_forward_impl.1} parent=1 // pred_check
      _
    $region15: #{_forward_impl.1} parent=1 // pred_check_branch
      %25 = sbr.rel (0) target = $region17
    $region16: #{_forward_impl.1} parent=1 // pred_region
      _
    $region17: #{_forward_impl.1} parent=1 // pred_fallthru
      _
    // Predicated region
    $region18: #{_forward_impl.1} parent=1 // pred_check
      _
    $region19: #{_forward_impl.1} parent=1 // pred_check_branch
      %27 = sbr.rel (0) target = $region21
    $region20: #{_forward_impl.1} parent=1 // pred_region
      _
    $region21: #{_forward_impl.1} parent=1 // pred_fallthru
      _
    // Predicated region
    $region22: #{_forward_impl.1} parent=1 // pred_check
      _
    $region23: #{_forward_impl.1} parent=1 // pred_check_branch
      %29 = sbr.rel (0) target = $region25
    $region24: #{_forward_impl.1} parent=1 // pred_region
      _
    $region25: #{_forward_impl.1} parent=1 // pred_fallthru
      _
    // Predicated region
    $region26: #{_forward_impl.1} parent=1 // pred_check
      _
    $region27: #{_forward_impl.1} parent=1 // pred_check_branch
      %31 = sbr.rel (0) target = $region29
    $region28: #{_forward_impl.1} parent=1 // pred_region
      _
    $region29: #{_forward_impl.1} parent=1 // pred_fallthru
      _
    // Predicated region
    $region30: #{_forward_impl.1} parent=1 // pred_check
      _
    $region31: #{_forward_impl.1} parent=1 // pred_check_branch
      %33 = sbr.rel (0) target = $region33
    $region32: #{_forward_impl.1} parent=1 // pred_region
      _
    $region33: #{_forward_impl.1} parent=1 // pred_fallthru
      _
    // Predicated region
    $region34: #{_forward_impl.1} parent=1 // pred_check
      _
    $region35: #{_forward_impl.1} parent=1 // pred_check_branch
      %35 = sbr.rel (0) target = $region37
    $region36: #{_forward_impl.1} parent=1 // pred_region
      _
    $region37: #{_forward_impl.1} parent=1 // pred_fallthru
      _
    // Predicated region
    $region38: #{_forward_impl.1} parent=1 // pred_check
      _
    $region39: #{_forward_impl.1} parent=1 // pred_check_branch
      %37 = sbr.rel (0) target = $region41
    $region40: #{_forward_impl.1} parent=1 // pred_region
      _
    $region41: #{_forward_impl.1} parent=1 // pred_fallthru
      _
    // Predicated region
    $region42: #{_forward_impl.1} parent=1 // pred_check
      _
    $region43: #{_forward_impl.1} parent=1 // pred_check_branch
      %39 = sbr.rel (0) target = $region45
    $region44: #{_forward_impl.1} parent=1 // pred_region
      _
    $region45: #{_forward_impl.1} parent=1 // pred_fallthru
      _
    // Predicated region
    $region46: #{_forward_impl.1} parent=1 // pred_check
      _
    $region47: #{_forward_impl.1} parent=1 // pred_check_branch
      %41 = sbr.rel (0) target = $region49
    $region48: #{_forward_impl.1} parent=1 // pred_region
      _
    $region49: #{_forward_impl.1} parent=1 // pred_fallthru
      _
    %v42 = vld [vmem:[%s4] sm:$0xff]
    %v43 = vld [vmem:[%s4 + $0x8] sm:$0xff]
    %v44 = vld [vmem:[%s4 + $0x10] sm:$0xff]
    %v45 = vld [vmem:[%s4 + $0x18] sm:$0xff]
    %v46 = vld [vmem:[%s5] sm:$0xff]
    %v47 = vld [vmem:[%s5 + $0x8] sm:$0xff]
    %v48 = vld [vmem:[%s5 + $0x10] sm:$0xff]
    %v49 = vld [vmem:[%s5 + $0x18] sm:$0xff]
    %v50 = vld [vmem:[%s6] sm:$0xff]
    %v51 = vld [vmem:[%s6 + $0x8] sm:$0xff]
    %v52 = vld [vmem:[%s6 + $0x10] sm:$0xff]
    %v53 = vld [vmem:[%s6 + $0x18] sm:$0xff]
    %v54 = vld [vmem:[%s7] sm:$0x1]
    %v55 = vld [vmem:[%s8] sm:$0x1]
    %v56 = vld [vmem:[%s9] sm:$0x1]
    %v57 = vld [vmem:[%s11] sm:$0x1]
    %v58 = vld [vmem:[%s10] sm:$0xff]
    %v59 = vld [vmem:[%s10 + $0x8] sm:$0xff]
    %v60 = vld [vmem:[%s10 + $0x10] sm:$0xff]
    %v61 = vld [vmem:[%s10 + $0x18] sm:$0xff]
    %v62 = vlaneseq
    %v63 = vshrl.u32 %v62, 7
    %v64 = vlaneseq
    %v65 = vand.u32 %v64, 127
    %vm66 = vcmp.le.s32.totalorder %v65, %v63
    %v67 = vsel %vm66, 0.0, -1e+30
    %v68 = vld [vmem:[%s1] sm:$0xff]
    %v69 = vld [vmem:[%s0] sm:$0xf]
    %v70 = vld [vmem:[%s2] sm:$0xf]
    %v71 = vld [vmem:[%s3] sm:$0xf]
    %v73 = vlaneseq
    %v74 = vshrl.u32 %v73, 7
    %v75 = vsub.s32 0, %v74
    %v76 = vrot.slane %v54, %v75
    %vm78 = vcmask 261120
    %v80 = vsel %vm78, %v68, 0
    %82 = vmatprep.subr.mxu0 0.0
    %83 = vmatpush1.msra.mxu0 %v42
    %84 = vmatprep.subr.mxu0 0.0
    %85 = vmatpush1.msra.mxu0 %v43
    %86 = vmatprep.subr.mxu0 0.0
    %87 = vmatpush1.msra.mxu0 %v44
    %88 = vmatprep.subr.mxu0 0.0
    %89 = vmatpush1.msra.mxu0 %v45
    %90 = vmatprep.subr.mxu0 0.0
    %91 = vmatpush1.msra.mxu0 0.0
    %92 = vmatprep.subr.mxu0 0.0
    %93 = vmatpush1.msra.mxu0 0.0
    %94 = vmatprep.subr.mxu0 0.0
    %95 = vmatpush1.msra.mxu0 0.0
    %96 = vmatprep.subr.mxu0 0.0
    %97 = vmatpush1.msra.mxu0 0.0
    %98 = vmatprep.subr.mxu0 0.0
    %99 = vmatpush1.msra.mxu0 0.0
    %100 = vmatprep.subr.mxu0 0.0
    %101 = vmatpush1.msra.mxu0 0.0
    %102 = vmatprep.subr.mxu0 0.0
    %103 = vmatpush1.msra.mxu0 0.0
    %104 = vmatprep.subr.mxu0 0.0
    %105 = vmatpush1.msra.mxu0 0.0
    %106 = vmatprep.subr.mxu0 0.0
    %107 = vmatpush1.msra.mxu0 0.0
    %108 = vmatprep.subr.mxu0 0.0
    %109 = vmatpush1.msra.mxu0 0.0
    %110 = vmatprep.subr.mxu0 0.0
    %111 = vmatpush1.msra.mxu0 0.0
    %112 = vmatprep.subr.mxu0 0.0
    %113 = vmatpush1.msra.mxu0 0.0
    %114 = vmatprep.subr.mxu0 0.0
    %115 = vmatpush1.msra.mxu0 0.0
    %116 = vmatprep.subr.mxu0 0.0
    %117 = vmatpush1.msra.mxu0 0.0
    %118 = vmatprep.subr.mxu0 0.0
    %119 = vmatpush1.msra.mxu0 0.0
    %120 = vmatprep.subr.mxu0 0.0
    %121 = vmatpush1.msra.mxu0 0.0
    %122 = vmatprep.subr.mxu0 0.0
    %123 = vmatpush1.msra.mxu0 0.0
    %124 = vmatprep.subr.mxu0 0.0
    %125 = vmatpush1.msra.mxu0 0.0
    %126 = vmatprep.subr.mxu0 0.0
    %127 = vmatpush1.msra.mxu0 0.0
    %128 = vmatprep.subr.mxu0 0.0
    %129 = vmatpush1.msra.mxu0 0.0
    %130 = vmatprep.subr.mxu0 0.0
    %131 = vmatpush1.msra.mxu0 0.0
    %132 = vmatprep.subr.mxu0 0.0
    %133 = vmatpush1.msra.mxu0 0.0
    %134 = vmatprep.subr.mxu0 0.0
    %135 = vmatpush1.msra.mxu0 0.0
    %136 = vmatprep.subr.mxu0 0.0
    %137 = vmatpush1.msra.mxu0 0.0
    %138 = vmatprep.subr.mxu0 0.0
    %139 = vmatpush1.msra.mxu0 0.0
    %140 = vmatprep.subr.mxu0 0.0
    %141 = vmatpush1.msra.mxu0 0.0
    %142 = vmatprep.subr.mxu0 0.0
    %143 = vmatpush1.msra.mxu0 0.0
    %144 = vmatprep.subr.mxu0 0.0
    %145 = vmatpush1.msra.mxu0 0.0
    %146 = vmatprep.mubr.f32.mxu0 0.0
    %147 = vmatmul.mubr.f32.gmra.mrb[0].mxu0 %v80
    %v148 = vpop.f32.mrb[0].mxu0
    %v149 = vadd.f32 %v76, %v148
    %v150 = vpop.f32.mrb[0].mxu0
    %151 = vdwg.mxu0
    %v153 = vlaneseq
    %v154 = vshrl.u32 %v153, 7
    %v155 = vsub.s32 0, %v154
    %v156 = vrot.slane %v55, %v155
    %158 = vmatprep.subr.mxu0 0.0
    %159 = vmatpush1.msra.mxu0 %v46
    %160 = vmatprep.subr.mxu0 0.0
    %161 = vmatpush1.msra.mxu0 %v47
    %162 = vmatprep.subr.mxu0 0.0
    %163 = vmatpush1.msra.mxu0 %v48
    %164 = vmatprep.subr.mxu0 0.0
    %165 = vmatpush1.msra.mxu0 %v49
    %166 = vmatprep.subr.mxu0 0.0
    %167 = vmatpush1.msra.mxu0 0.0
    %168 = vmatprep.subr.mxu0 0.0
    %169 = vmatpush1.msra.mxu0 0.0
    %170 = vmatprep.subr.mxu0 0.0
    %171 = vmatpush1.msra.mxu0 0.0
    %172 = vmatprep.subr.mxu0 0.0
    %173 = vmatpush1.msra.mxu0 0.0
    %174 = vmatprep.subr.mxu0 0.0
    %175 = vmatpush1.msra.mxu0 0.0
    %176 = vmatprep.subr.mxu0 0.0
    %177 = vmatpush1.msra.mxu0 0.0
    %178 = vmatprep.subr.mxu0 0.0
    %179 = vmatpush1.msra.mxu0 0.0
    %180 = vmatprep.subr.mxu0 0.0
    %181 = vmatpush1.msra.mxu0 0.0
    %182 = vmatprep.subr.mxu0 0.0
    %183 = vmatpush1.msra.mxu0 0.0
    %184 = vmatprep.subr.mxu0 0.0
    %185 = vmatpush1.msra.mxu0 0.0
    %186 = vmatprep.subr.mxu0 0.0
    %187 = vmatpush1.msra.mxu0 0.0
    %188 = vmatprep.subr.mxu0 0.0
    %189 = vmatpush1.msra.mxu0 0.0
    %190 = vmatprep.subr.mxu0 0.0
    %191 = vmatpush1.msra.mxu0 0.0
    %192 = vmatprep.subr.mxu0 0.0
    %193 = vmatpush1.msra.mxu0 0.0
    %194 = vmatprep.subr.mxu0 0.0
    %195 = vmatpush1.msra.mxu0 0.0
    %196 = vmatprep.subr.mxu0 0.0
    %197 = vmatpush1.msra.mxu0 0.0
    %198 = vmatprep.subr.mxu0 0.0
    %199 = vmatpush1.msra.mxu0 0.0
    %200 = vmatprep.subr.mxu0 0.0
    %201 = vmatpush1.msra.mxu0 0.0
    %202 = vmatprep.subr.mxu0 0.0
    %203 = vmatpush1.msra.mxu0 0.0
    %204 = vmatprep.subr.mxu0 0.0
    %205 = vmatpush1.msra.mxu0 0.0
    %206 = vmatprep.subr.mxu0 0.0
    %207 = vmatpush1.msra.mxu0 0.0
    %208 = vmatprep.subr.mxu0 0.0
    %209 = vmatpush1.msra.mxu0 0.0
    %210 = vmatprep.subr.mxu0 0.0
    %211 = vmatpush1.msra.mxu0 0.0
    %212 = vmatprep.subr.mxu0 0.0
    %213 = vmatpush1.msra.mxu0 0.0
    %214 = vmatprep.subr.mxu0 0.0
    %215 = vmatpush1.msra.mxu0 0.0
    %216 = vmatprep.subr.mxu0 0.0
    %217 = vmatpush1.msra.mxu0 0.0
    %218 = vmatprep.subr.mxu0 0.0
    %219 = vmatpush1.msra.mxu0 0.0
    %220 = vmatprep.subr.mxu0 0.0
    %221 = vmatpush1.msra.mxu0 0.0
    %222 = vmatprep.mubr.f32.mxu0 0.0
    %223 = vmatmul.mubr.f32.gmra.mrb[0].mxu0 %v80
    %v224 = vpop.f32.mrb[0].mxu0
    %v225 = vadd.f32 %v156, %v224
    %v226 = vpop.f32.mrb[0].mxu0
    %227 = vdwg.mxu0
    %v229 = vlaneseq
    %v230 = vshrl.u32 %v229, 7
    %v231 = vsub.s32 0, %v230
    %v232 = vrot.slane %v56, %v231
    %234 = vmatprep.subr.mxu0 0.0
    %235 = vmatpush1.msra.mxu0 %v50
    %236 = vmatprep.subr.mxu0 0.0
    %237 = vmatpush1.msra.mxu0 %v51
    %238 = vmatprep.subr.mxu0 0.0
    %239 = vmatpush1.msra.mxu0 %v52
    %240 = vmatprep.subr.mxu0 0.0
    %241 = vmatpush1.msra.mxu0 %v53
    %242 = vmatprep.subr.mxu0 0.0
    %243 = vmatpush1.msra.mxu0 0.0
    %244 = vmatprep.subr.mxu0 0.0
    %245 = vmatpush1.msra.mxu0 0.0
    %246 = vmatprep.subr.mxu0 0.0
    %247 = vmatpush1.msra.mxu0 0.0
    %248 = vmatprep.subr.mxu0 0.0
    %249 = vmatpush1.msra.mxu0 0.0
    %250 = vmatprep.subr.mxu0 0.0
    %251 = vmatpush1.msra.mxu0 0.0
    %252 = vmatprep.subr.mxu0 0.0
    %253 = vmatpush1.msra.mxu0 0.0
    %254 = vmatprep.subr.mxu0 0.0
    %255 = vmatpush1.msra.mxu0 0.0
    %256 = vmatprep.subr.mxu0 0.0
    %257 = vmatpush1.msra.mxu0 0.0
    %258 = vmatprep.subr.mxu0 0.0
    %259 = vmatpush1.msra.mxu0 0.0
    %260 = vmatprep.subr.mxu0 0.0
    %261 = vmatpush1.msra.mxu0 0.0
    %262 = vmatprep.subr.mxu0 0.0
    %263 = vmatpush1.msra.mxu0 0.0
    %264 = vmatprep.subr.mxu0 0.0
    %265 = vmatpush1.msra.mxu0 0.0
    %266 = vmatprep.subr.mxu0 0.0
    %267 = vmatpush1.msra.mxu0 0.0
    %268 = vmatprep.subr.mxu0 0.0
    %269 = vmatpush1.msra.mxu0 0.0
    %270 = vmatprep.subr.mxu0 0.0
    %271 = vmatpush1.msra.mxu0 0.0
    %272 = vmatprep.subr.mxu0 0.0
    %273 = vmatpush1.msra.mxu0 0.0
    %274 = vmatprep.subr.mxu0 0.0
    %275 = vmatpush1.msra.mxu0 0.0
    %276 = vmatprep.subr.mxu0 0.0
    %277 = vmatpush1.msra.mxu0 0.0
    %278 = vmatprep.subr.mxu0 0.0
    %279 = vmatpush1.msra.mxu0 0.0
    %280 = vmatprep.subr.mxu0 0.0
    %281 = vmatpush1.msra.mxu0 0.0
    %282 = vmatprep.subr.mxu0 0.0
    %283 = vmatpush1.msra.mxu0 0.0
    %284 = vmatprep.subr.mxu0 0.0
    %285 = vmatpush1.msra.mxu0 0.0
    %286 = vmatprep.subr.mxu0 0.0
    %287 = vmatpush1.msra.mxu0 0.0
    %288 = vmatprep.subr.mxu0 0.0
    %289 = vmatpush1.msra.mxu0 0.0
    %290 = vmatprep.subr.mxu0 0.0
    %291 = vmatpush1.msra.mxu0 0.0
    %292 = vmatprep.subr.mxu0 0.0
    %293 = vmatpush1.msra.mxu0 0.0
    %294 = vmatprep.subr.mxu0 0.0
    %295 = vmatpush1.msra.mxu0 0.0
    %296 = vmatprep.subr.mxu0 0.0
    %297 = vmatpush1.msra.mxu0 0.0
    %298 = vmatprep.mubr.f32.mxu0 0.0
    %299 = vmatmul.mubr.f32.gmra.mrb[0].mxu0 %v80
    %v300 = vpop.f32.mrb[0].mxu0
    %v301 = vadd.f32 %v232, %v300
    %v302 = vpop.f32.mrb[0].mxu0
    %303 = vdwg.mxu0
    %v305 = vsel %vm78, %v69, 0
    %307 = vmatprep.subr.mxu0 0.0
    %308 = vmatpush1.msra.mxu0 %v46
    %309 = vmatprep.subr.mxu0 0.0
    %310 = vmatpush1.msra.mxu0 %v47
    %311 = vmatprep.subr.mxu0 0.0
    %312 = vmatpush1.msra.mxu0 %v48
    %313 = vmatprep.subr.mxu0 0.0
    %314 = vmatpush1.msra.mxu0 %v49
    %315 = vmatprep.subr.mxu0 0.0
    %316 = vmatpush1.msra.mxu0 0.0
    %317 = vmatprep.subr.mxu0 0.0
    %318 = vmatpush1.msra.mxu0 0.0
    %319 = vmatprep.subr.mxu0 0.0
    %320 = vmatpush1.msra.mxu0 0.0
    %321 = vmatprep.subr.mxu0 0.0
    %322 = vmatpush1.msra.mxu0 0.0
    %323 = vmatprep.subr.mxu0 0.0
    %324 = vmatpush1.msra.mxu0 0.0
    %325 = vmatprep.subr.mxu0 0.0
    %326 = vmatpush1.msra.mxu0 0.0
    %327 = vmatprep.subr.mxu0 0.0
    %328 = vmatpush1.msra.mxu0 0.0
    %329 = vmatprep.subr.mxu0 0.0
    %330 = vmatpush1.msra.mxu0 0.0
    %331 = vmatprep.subr.mxu0 0.0
    %332 = vmatpush1.msra.mxu0 0.0
    %333 = vmatprep.subr.mxu0 0.0
    %334 = vmatpush1.msra.mxu0 0.0
    %335 = vmatprep.subr.mxu0 0.0
    %336 = vmatpush1.msra.mxu0 0.0
    %337 = vmatprep.subr.mxu0 0.0
    %338 = vmatpush1.msra.mxu0 0.0
    %339 = vmatprep.subr.mxu0 0.0
    %340 = vmatpush1.msra.mxu0 0.0
    %341 = vmatprep.subr.mxu0 0.0
    %342 = vmatpush1.msra.mxu0 0.0
    %343 = vmatprep.subr.mxu0 0.0
    %344 = vmatpush1.msra.mxu0 0.0
    %345 = vmatprep.subr.mxu0 0.0
    %346 = vmatpush1.msra.mxu0 0.0
    %347 = vmatprep.subr.mxu0 0.0
    %348 = vmatpush1.msra.mxu0 0.0
    %349 = vmatprep.subr.mxu0 0.0
    %350 = vmatpush1.msra.mxu0 0.0
    %351 = vmatprep.subr.mxu0 0.0
    %352 = vmatpush1.msra.mxu0 0.0
    %353 = vmatprep.subr.mxu0 0.0
    %354 = vmatpush1.msra.mxu0 0.0
    %355 = vmatprep.subr.mxu0 0.0
    %356 = vmatpush1.msra.mxu0 0.0
    %357 = vmatprep.subr.mxu0 0.0
    %358 = vmatpush1.msra.mxu0 0.0
    %359 = vmatprep.subr.mxu0 0.0
    %360 = vmatpush1.msra.mxu0 0.0
    %361 = vmatprep.subr.mxu0 0.0
    %362 = vmatpush1.msra.mxu0 0.0
    %363 = vmatprep.subr.mxu0 0.0
    %364 = vmatpush1.msra.mxu0 0.0
    %365 = vmatprep.subr.mxu0 0.0
    %366 = vmatpush1.msra.mxu0 0.0
    %367 = vmatprep.subr.mxu0 0.0
    %368 = vmatpush1.msra.mxu0 0.0
    %369 = vmatprep.subr.mxu0 0.0
    %370 = vmatpush1.msra.mxu0 0.0
    %371 = vmatprep.mubr.f32.mxu0 0.0
    %372 = vmatmul.mubr.f32.gmra.mrb[0].mxu0 %v305
    %v373 = vpop.f32.mrb[0].mxu0
    %v374 = vadd.f32 %v156, %v373
    %v375 = vpop.f32.mrb[0].mxu0
    %376 = vdwg.mxu0
    %377 = vmatprep.subr.mxu0 0.0
    %378 = vmatpush1.msra.mxu0 %v50
    %379 = vmatprep.subr.mxu0 0.0
    %380 = vmatpush1.msra.mxu0 %v51
    %381 = vmatprep.subr.mxu0 0.0
    %382 = vmatpush1.msra.mxu0 %v52
    %383 = vmatprep.subr.mxu0 0.0
    %384 = vmatpush1.msra.mxu0 %v53
    %385 = vmatprep.subr.mxu0 0.0
    %386 = vmatpush1.msra.mxu0 0.0
    %387 = vmatprep.subr.mxu0 0.0
    %388 = vmatpush1.msra.mxu0 0.0
    %389 = vmatprep.subr.mxu0 0.0
    %390 = vmatpush1.msra.mxu0 0.0
    %391 = vmatprep.subr.mxu0 0.0
    %392 = vmatpush1.msra.mxu0 0.0
    %393 = vmatprep.subr.mxu0 0.0
    %394 = vmatpush1.msra.mxu0 0.0
    %395 = vmatprep.subr.mxu0 0.0
    %396 = vmatpush1.msra.mxu0 0.0
    %397 = vmatprep.subr.mxu0 0.0
    %398 = vmatpush1.msra.mxu0 0.0
    %399 = vmatprep.subr.mxu0 0.0
    %400 = vmatpush1.msra.mxu0 0.0
    %401 = vmatprep.subr.mxu0 0.0
    %402 = vmatpush1.msra.mxu0 0.0
    %403 = vmatprep.subr.mxu0 0.0
    %404 = vmatpush1.msra.mxu0 0.0
    %405 = vmatprep.subr.mxu0 0.0
    %406 = vmatpush1.msra.mxu0 0.0
    %407 = vmatprep.subr.mxu0 0.0
    %408 = vmatpush1.msra.mxu0 0.0
    %409 = vmatprep.subr.mxu0 0.0
    %410 = vmatpush1.msra.mxu0 0.0
    %411 = vmatprep.subr.mxu0 0.0
    %412 = vmatpush1.msra.mxu0 0.0
    %413 = vmatprep.subr.mxu0 0.0
    %414 = vmatpush1.msra.mxu0 0.0
    %415 = vmatprep.subr.mxu0 0.0
    %416 = vmatpush1.msra.mxu0 0.0
    %417 = vmatprep.subr.mxu0 0.0
    %418 = vmatpush1.msra.mxu0 0.0
    %419 = vmatprep.subr.mxu0 0.0
    %420 = vmatpush1.msra.mxu0 0.0
    %421 = vmatprep.subr.mxu0 0.0
    %422 = vmatpush1.msra.mxu0 0.0
    %423 = vmatprep.subr.mxu0 0.0
    %424 = vmatpush1.msra.mxu0 0.0
    %425 = vmatprep.subr.mxu0 0.0
    %426 = vmatpush1.msra.mxu0 0.0
    %427 = vmatprep.subr.mxu0 0.0
    %428 = vmatpush1.msra.mxu0 0.0
    %429 = vmatprep.subr.mxu0 0.0
    %430 = vmatpush1.msra.mxu0 0.0
    %431 = vmatprep.subr.mxu0 0.0
    %432 = vmatpush1.msra.mxu0 0.0
    %433 = vmatprep.subr.mxu0 0.0
    %434 = vmatpush1.msra.mxu0 0.0
    %435 = vmatprep.subr.mxu0 0.0
    %436 = vmatpush1.msra.mxu0 0.0
    %437 = vmatprep.subr.mxu0 0.0
    %438 = vmatpush1.msra.mxu0 0.0
    %439 = vmatprep.subr.mxu0 0.0
    %440 = vmatpush1.msra.mxu0 0.0
    %441 = vmatprep.mubr.f32.mxu0 0.0
    %442 = vmatmul.mubr.f32.gmra.mrb[0].mxu0 %v305
    %v443 = vpop.f32.mrb[0].mxu0
    %v444 = vadd.f32 %v232, %v443
    %v445 = vpop.f32.mrb[0].mxu0
    %446 = vdwg.mxu0
    %v447 = vmul.f32 %v149, 0.35355338
    %vm448 = vcmask 64512
    %v450 = vsel %vm448, %v447, 0
    %v453 = vsel %vm448, %v70, 0
    %455 = vmatprep.subr.mxu0 0.0
    %456 = vmatpush1.xpose.msra.mxu0 %v453
    %457 = vmatprep.subr.mxu0 0.0
    %458 = vmatpush1.xpose.msra.mxu0 0.0
    %459 = vmatprep.subr.mxu0 0.0
    %460 = vmatpush1.xpose.msra.mxu0 0.0
    %461 = vmatprep.subr.mxu0 0.0
    %462 = vmatpush1.xpose.msra.mxu0 0.0
    %463 = vmatprep.subr.mxu0 0.0
    %464 = vmatpush1.xpose.msra.mxu0 0.0
    %465 = vmatprep.subr.mxu0 0.0
    %466 = vmatpush1.xpose.msra.mxu0 0.0
    %467 = vmatprep.subr.mxu0 0.0
    %468 = vmatpush1.xpose.msra.mxu0 0.0
    %469 = vmatprep.subr.mxu0 0.0
    %470 = vmatpush1.xpose.msra.mxu0 0.0
    %471 = vmatprep.subr.mxu0 0.0
    %472 = vmatpush1.xpose.msra.mxu0 0.0
    %473 = vmatprep.subr.mxu0 0.0
    %474 = vmatpush1.xpose.msra.mxu0 0.0
    %475 = vmatprep.subr.mxu0 0.0
    %476 = vmatpush1.xpose.msra.mxu0 0.0
    %477 = vmatprep.subr.mxu0 0.0
    %478 = vmatpush1.xpose.msra.mxu0 0.0
    %479 = vmatprep.subr.mxu0 0.0
    %480 = vmatpush1.xpose.msra.mxu0 0.0
    %481 = vmatprep.subr.mxu0 0.0
    %482 = vmatpush1.xpose.msra.mxu0 0.0
    %483 = vmatprep.subr.mxu0 0.0
    %484 = vmatpush1.xpose.msra.mxu0 0.0
    %485 = vmatprep.subr.mxu0 0.0
    %486 = vmatpush1.xpose.msra.mxu0 0.0
    %487 = vmatprep.subr.mxu0 0.0
    %488 = vmatpush1.xpose.msra.mxu0 0.0
    %489 = vmatprep.subr.mxu0 0.0
    %490 = vmatpush1.xpose.msra.mxu0 0.0
    %491 = vmatprep.subr.mxu0 0.0
    %492 = vmatpush1.xpose.msra.mxu0 0.0
    %493 = vmatprep.subr.mxu0 0.0
    %494 = vmatpush1.xpose.msra.mxu0 0.0
    %495 = vmatprep.subr.mxu0 0.0
    %496 = vmatpush1.xpose.msra.mxu0 0.0
    %497 = vmatprep.subr.mxu0 0.0
    %498 = vmatpush1.xpose.msra.mxu0 0.0
    %499 = vmatprep.subr.mxu0 0.0
    %500 = vmatpush1.xpose.msra.mxu0 0.0
    %501 = vmatprep.subr.mxu0 0.0
    %502 = vmatpush1.xpose.msra.mxu0 0.0
    %503 = vmatprep.subr.mxu0 0.0
    %504 = vmatpush1.xpose.msra.mxu0 0.0
    %505 = vmatprep.subr.mxu0 0.0
    %506 = vmatpush1.xpose.msra.mxu0 0.0
    %507 = vmatprep.subr.mxu0 0.0
    %508 = vmatpush1.xpose.msra.mxu0 0.0
    %509 = vmatprep.subr.mxu0 0.0
    %510 = vmatpush1.xpose.msra.mxu0 0.0
    %511 = vmatprep.subr.mxu0 0.0
    %512 = vmatpush1.xpose.msra.mxu0 0.0
    %513 = vmatprep.subr.mxu0 0.0
    %514 = vmatpush1.xpose.msra.mxu0 0.0
    %515 = vmatprep.subr.mxu0 0.0
    %516 = vmatpush1.xpose.msra.mxu0 0.0
    %517 = vmatprep.subr.mxu0 0.0
    %518 = vmatpush1.xpose.msra.mxu0 0.0
    %519 = vmatprep.mubr.f32.mxu0 0.0
    %520 = vmatmul.mubr.f32.gmra.mrb[0].mxu0 %v450
    %v521 = vpop.f32.mrb[0].mxu0
    %v522 = vadd.f32 0.0, %v521
    %v523 = vpop.f32.mrb[0].mxu0
    %524 = vdwg.mxu0
    %v526 = vsel %vm448, %v374, 0
    %528 = vmatprep.subr.mxu0 0.0
    %529 = vmatpush1.xpose.msra.mxu0 %v526
    %530 = vmatprep.subr.mxu0 0.0
    %531 = vmatpush1.xpose.msra.mxu0 0.0
    %532 = vmatprep.subr.mxu0 0.0
    %533 = vmatpush1.xpose.msra.mxu0 0.0
    %534 = vmatprep.subr.mxu0 0.0
    %535 = vmatpush1.xpose.msra.mxu0 0.0
    %536 = vmatprep.subr.mxu0 0.0
    %537 = vmatpush1.xpose.msra.mxu0 0.0
    %538 = vmatprep.subr.mxu0 0.0
    %539 = vmatpush1.xpose.msra.mxu0 0.0
    %540 = vmatprep.subr.mxu0 0.0
    %541 = vmatpush1.xpose.msra.mxu0 0.0
    %542 = vmatprep.subr.mxu0 0.0
    %543 = vmatpush1.xpose.msra.mxu0 0.0
    %544 = vmatprep.subr.mxu0 0.0
    %545 = vmatpush1.xpose.msra.mxu0 0.0
    %546 = vmatprep.subr.mxu0 0.0
    %547 = vmatpush1.xpose.msra.mxu0 0.0
    %548 = vmatprep.subr.mxu0 0.0
    %549 = vmatpush1.xpose.msra.mxu0 0.0
    %550 = vmatprep.subr.mxu0 0.0
    %551 = vmatpush1.xpose.msra.mxu0 0.0
    %552 = vmatprep.subr.mxu0 0.0
    %553 = vmatpush1.xpose.msra.mxu0 0.0
    %554 = vmatprep.subr.mxu0 0.0
    %555 = vmatpush1.xpose.msra.mxu0 0.0
    %556 = vmatprep.subr.mxu0 0.0
    %557 = vmatpush1.xpose.msra.mxu0 0.0
    %558 = vmatprep.subr.mxu0 0.0
    %559 = vmatpush1.xpose.msra.mxu0 0.0
    %560 = vmatprep.subr.mxu0 0.0
    %561 = vmatpush1.xpose.msra.mxu0 0.0
    %562 = vmatprep.subr.mxu0 0.0
    %563 = vmatpush1.xpose.msra.mxu0 0.0
    %564 = vmatprep.subr.mxu0 0.0
    %565 = vmatpush1.xpose.msra.mxu0 0.0
    %566 = vmatprep.subr.mxu0 0.0
    %567 = vmatpush1.xpose.msra.mxu0 0.0
    %568 = vmatprep.subr.mxu0 0.0
    %569 = vmatpush1.xpose.msra.mxu0 0.0
    %570 = vmatprep.subr.mxu0 0.0
    %571 = vmatpush1.xpose.msra.mxu0 0.0
    %572 = vmatprep.subr.mxu0 0.0
    %573 = vmatpush1.xpose.msra.mxu0 0.0
    %574 = vmatprep.subr.mxu0 0.0
    %575 = vmatpush1.xpose.msra.mxu0 0.0
    %576 = vmatprep.subr.mxu0 0.0
    %577 = vmatpush1.xpose.msra.mxu0 0.0
    %578 = vmatprep.subr.mxu0 0.0
    %579 = vmatpush1.xpose.msra.mxu0 0.0
    %580 = vmatprep.subr.mxu0 0.0
    %581 = vmatpush1.xpose.msra.mxu0 0.0
    %582 = vmatprep.subr.mxu0 0.0
    %583 = vmatpush1.xpose.msra.mxu0 0.0
    %584 = vmatprep.subr.mxu0 0.0
    %585 = vmatpush1.xpose.msra.mxu0 0.0
    %586 = vmatprep.subr.mxu0 0.0
    %587 = vmatpush1.xpose.msra.mxu0 0.0
    %588 = vmatprep.subr.mxu0 0.0
    %589 = vmatpush1.xpose.msra.mxu0 0.0
    %590 = vmatprep.subr.mxu0 0.0
    %591 = vmatpush1.xpose.msra.mxu0 0.0
    %592 = vmatprep.mubr.f32.mxu0 0.0
    %593 = vmatmul.mubr.f32.gmra.mrb[0].mxu0 %v450
    %v594 = vpop.f32.mrb[0].mxu0
    %v595 = vadd.f32 0.0, %v594
    %v596 = vpop.f32.mrb[0].mxu0
    %597 = vdwg.mxu0
    %v599 = vsel %vm448, %v225, 0
    %601 = vmatprep.subr.mxu0 0.0
    %602 = vmatpush1.xpose.msra.mxu0 %v599
    %603 = vmatprep.subr.mxu0 0.0
    %604 = vmatpush1.xpose.msra.mxu0 0.0
    %605 = vmatprep.subr.mxu0 0.0
    %606 = vmatpush1.xpose.msra.mxu0 0.0
    %607 = vmatprep.subr.mxu0 0.0
    %608 = vmatpush1.xpose.msra.mxu0 0.0
    %609 = vmatprep.subr.mxu0 0.0
    %610 = vmatpush1.xpose.msra.mxu0 0.0
    %611 = vmatprep.subr.mxu0 0.0
    %612 = vmatpush1.xpose.msra.mxu0 0.0
    %613 = vmatprep.subr.mxu0 0.0
    %614 = vmatpush1.xpose.msra.mxu0 0.0
    %615 = vmatprep.subr.mxu0 0.0
    %616 = vmatpush1.xpose.msra.mxu0 0.0
    %617 = vmatprep.subr.mxu0 0.0
    %618 = vmatpush1.xpose.msra.mxu0 0.0
    %619 = vmatprep.subr.mxu0 0.0
    %620 = vmatpush1.xpose.msra.mxu0 0.0
    %621 = vmatprep.subr.mxu0 0.0
    %622 = vmatpush1.xpose.msra.mxu0 0.0
    %623 = vmatprep.subr.mxu0 0.0
    %624 = vmatpush1.xpose.msra.mxu0 0.0
    %625 = vmatprep.subr.mxu0 0.0
    %626 = vmatpush1.xpose.msra.mxu0 0.0
    %627 = vmatprep.subr.mxu0 0.0
    %628 = vmatpush1.xpose.msra.mxu0 0.0
    %629 = vmatprep.subr.mxu0 0.0
    %630 = vmatpush1.xpose.msra.mxu0 0.0
    %631 = vmatprep.subr.mxu0 0.0
    %632 = vmatpush1.xpose.msra.mxu0 0.0
    %633 = vmatprep.subr.mxu0 0.0
    %634 = vmatpush1.xpose.msra.mxu0 0.0
    %635 = vmatprep.subr.mxu0 0.0
    %636 = vmatpush1.xpose.msra.mxu0 0.0
    %637 = vmatprep.subr.mxu0 0.0
    %638 = vmatpush1.xpose.msra.mxu0 0.0
    %639 = vmatprep.subr.mxu0 0.0
    %640 = vmatpush1.xpose.msra.mxu0 0.0
    %641 = vmatprep.subr.mxu0 0.0
    %642 = vmatpush1.xpose.msra.mxu0 0.0
    %643 = vmatprep.subr.mxu0 0.0
    %644 = vmatpush1.xpose.msra.mxu0 0.0
    %645 = vmatprep.subr.mxu0 0.0
    %646 = vmatpush1.xpose.msra.mxu0 0.0
    %647 = vmatprep.subr.mxu0 0.0
    %648 = vmatpush1.xpose.msra.mxu0 0.0
    %649 = vmatprep.subr.mxu0 0.0
    %650 = vmatpush1.xpose.msra.mxu0 0.0
    %651 = vmatprep.subr.mxu0 0.0
    %652 = vmatpush1.xpose.msra.mxu0 0.0
    %653 = vmatprep.subr.mxu0 0.0
    %654 = vmatpush1.xpose.msra.mxu0 0.0
    %655 = vmatprep.subr.mxu0 0.0
    %656 = vmatpush1.xpose.msra.mxu0 0.0
    %657 = vmatprep.subr.mxu0 0.0
    %658 = vmatpush1.xpose.msra.mxu0 0.0
    %659 = vmatprep.subr.mxu0 0.0
    %660 = vmatpush1.xpose.msra.mxu0 0.0
    %661 = vmatprep.subr.mxu0 0.0
    %662 = vmatpush1.xpose.msra.mxu0 0.0
    %663 = vmatprep.subr.mxu0 0.0
    %664 = vmatpush1.xpose.msra.mxu0 0.0
    %665 = vmatprep.mubr.f32.mxu0 0.0
    %666 = vmatmul.mubr.f32.gmra.mrb[0].mxu0 %v450
    %v667 = vpop.f32.mrb[0].mxu0
    %v668 = vadd.f32 %v67, %v667
    %v669 = vpop.f32.mrb[0].mxu0
    %670 = vdwg.mxu0
    %vm671 = vcmask 31744
    %v672 = vsel %vm671, %v522, -inf
    %673 = vmax.xlane.f32.xlu0 %v672
    %v674 = vpop.xlane.xlu0 %673
    %v675 = vsel %vm671, %v595, -inf
    %676 = vmax.xlane.f32.xlu0 %v675
    %v677 = vpop.xlane.xlu0 %676
    %v678 = vsel %vm448, %v668, -inf
    %679 = vmax.xlane.f32.xlu0 %v678
    %v680 = vpop.xlane.xlu0 %679
    %v681 = vmax.f32 %v677, %v680
    %v682 = vmax.f32 %v674, %v681
    %v683 = vsub.f32 %v522, %v682
    %v684 = vmul.f32 %v683, 1.442695
    %v685 = vpow.pop %v684
    %v686 = vsub.f32 %v595, %v682
    %v687 = vmul.f32 %v686, 1.442695
    %v688 = vpow.pop %v687
    %v689 = vsub.f32 %v668, %v682
    %v690 = vmul.f32 %v689, 1.442695
    %v691 = vpow.pop %v690
    %v692 = vsel %vm671, %v685, 0.0
    %693 = vadd.xlane.f32.xlu0 %v692
    %v694 = vpop.xlane.xlu0 %693
    %v695 = vsel %vm671, %v688, 0.0
    %696 = vadd.xlane.f32.xlu0 %v695
    %v697 = vpop.xlane.xlu0 %696
    %v698 = vadd.f32 %v694, %v697
    %v699 = vsel %vm448, %v691, 0.0
    %700 = vadd.xlane.f32.xlu0 %v699
    %v701 = vpop.xlane.xlu0 %700
    %v702 = vadd.f32 %v698, %v701
    %v704 = vsel %vm671, %v688, 0
    %vm706 = vcmask 1043456
    %v708 = vsel %vm706, %v444, 0
    %710 = vmatprep.subr.mxu0 0.0
    %711 = vmatpush1.msra.mxu0 %v708
    %712 = vmatprep.subr.mxu0 0.0
    %713 = vmatpush1.msra.mxu0 0.0
    %714 = vmatprep.subr.mxu0 0.0
    %715 = vmatpush1.msra.mxu0 0.0
    %716 = vmatprep.subr.mxu0 0.0
    %717 = vmatpush1.msra.mxu0 0.0
    %718 = vmatprep.subr.mxu0 0.0
    %719 = vmatpush1.msra.mxu0 0.0
    %720 = vmatprep.subr.mxu0 0.0
    %721 = vmatpush1.msra.mxu0 0.0
    %722 = vmatprep.subr.mxu0 0.0
    %723 = vmatpush1.msra.mxu0 0.0
    %724 = vmatprep.subr.mxu0 0.0
    %725 = vmatpush1.msra.mxu0 0.0
    %726 = vmatprep.subr.mxu0 0.0
    %727 = vmatpush1.msra.mxu0 0.0
    %728 = vmatprep.subr.mxu0 0.0
    %729 = vmatpush1.msra.mxu0 0.0
    %730 = vmatprep.subr.mxu0 0.0
    %731 = vmatpush1.msra.mxu0 0.0
    %732 = vmatprep.subr.mxu0 0.0
    %733 = vmatpush1.msra.mxu0 0.0
    %734 = vmatprep.subr.mxu0 0.0
    %735 = vmatpush1.msra.mxu0 0.0
    %736 = vmatprep.subr.mxu0 0.0
    %737 = vmatpush1.msra.mxu0 0.0
    %738 = vmatprep.subr.mxu0 0.0
    %739 = vmatpush1.msra.mxu0 0.0
    %740 = vmatprep.subr.mxu0 0.0
    %741 = vmatpush1.msra.mxu0 0.0
    %742 = vmatprep.subr.mxu0 0.0
    %743 = vmatpush1.msra.mxu0 0.0
    %744 = vmatprep.subr.mxu0 0.0
    %745 = vmatpush1.msra.mxu0 0.0
    %746 = vmatprep.subr.mxu0 0.0
    %747 = vmatpush1.msra.mxu0 0.0
    %748 = vmatprep.subr.mxu0 0.0
    %749 = vmatpush1.msra.mxu0 0.0
    %750 = vmatprep.subr.mxu0 0.0
    %751 = vmatpush1.msra.mxu0 0.0
    %752 = vmatprep.subr.mxu0 0.0
    %753 = vmatpush1.msra.mxu0 0.0
    %754 = vmatprep.subr.mxu0 0.0
    %755 = vmatpush1.msra.mxu0 0.0
    %756 = vmatprep.subr.mxu0 0.0
    %757 = vmatpush1.msra.mxu0 0.0
    %758 = vmatprep.subr.mxu0 0.0
    %759 = vmatpush1.msra.mxu0 0.0
    %760 = vmatprep.subr.mxu0 0.0
    %761 = vmatpush1.msra.mxu0 0.0
    %762 = vmatprep.subr.mxu0 0.0
    %763 = vmatpush1.msra.mxu0 0.0
    %764 = vmatprep.subr.mxu0 0.0
    %765 = vmatpush1.msra.mxu0 0.0
    %766 = vmatprep.subr.mxu0 0.0
    %767 = vmatpush1.msra.mxu0 0.0
    %768 = vmatprep.subr.mxu0 0.0
    %769 = vmatpush1.msra.mxu0 0.0
    %770 = vmatprep.subr.mxu0 0.0
    %771 = vmatpush1.msra.mxu0 0.0
    %772 = vmatprep.subr.mxu0 0.0
    %773 = vmatpush1.msra.mxu0 0.0
    %774 = vmatprep.mubr.f32.mxu0 0.0
    %775 = vmatmul.mubr.f32.gmra.mrb[0].mxu0 %v704
    %v776 = vpop.f32.mrb[0].mxu0
    %v777 = vadd.f32 0.0, %v776
    %v778 = vpop.f32.mrb[0].mxu0
    %779 = vdwg.mxu0
    %v781 = vsel %vm671, %v685, 0
    %v784 = vsel %vm706, %v71, 0
    %786 = vmatprep.subr.mxu0 0.0
    %787 = vmatpush1.msra.mxu0 %v784
    %788 = vmatprep.subr.mxu0 0.0
    %789 = vmatpush1.msra.mxu0 0.0
    %790 = vmatprep.subr.mxu0 0.0
    %791 = vmatpush1.msra.mxu0 0.0
    %792 = vmatprep.subr.mxu0 0.0
    %793 = vmatpush1.msra.mxu0 0.0
    %794 = vmatprep.subr.mxu0 0.0
    %795 = vmatpush1.msra.mxu0 0.0
    %796 = vmatprep.subr.mxu0 0.0
    %797 = vmatpush1.msra.mxu0 0.0
    %798 = vmatprep.subr.mxu0 0.0
    %799 = vmatpush1.msra.mxu0 0.0
    %800 = vmatprep.subr.mxu0 0.0
    %801 = vmatpush1.msra.mxu0 0.0
    %802 = vmatprep.subr.mxu0 0.0
    %803 = vmatpush1.msra.mxu0 0.0
    %804 = vmatprep.subr.mxu0 0.0
    %805 = vmatpush1.msra.mxu0 0.0
    %806 = vmatprep.subr.mxu0 0.0
    %807 = vmatpush1.msra.mxu0 0.0
    %808 = vmatprep.subr.mxu0 0.0
    %809 = vmatpush1.msra.mxu0 0.0
    %810 = vmatprep.subr.mxu0 0.0
    %811 = vmatpush1.msra.mxu0 0.0
    %812 = vmatprep.subr.mxu0 0.0
    %813 = vmatpush1.msra.mxu0 0.0
    %814 = vmatprep.subr.mxu0 0.0
    %815 = vmatpush1.msra.mxu0 0.0
    %816 = vmatprep.subr.mxu0 0.0
    %817 = vmatpush1.msra.mxu0 0.0
    %818 = vmatprep.subr.mxu0 0.0
    %819 = vmatpush1.msra.mxu0 0.0
    %820 = vmatprep.subr.mxu0 0.0
    %821 = vmatpush1.msra.mxu0 0.0
    %822 = vmatprep.subr.mxu0 0.0
    %823 = vmatpush1.msra.mxu0 0.0
    %824 = vmatprep.subr.mxu0 0.0
    %825 = vmatpush1.msra.mxu0 0.0
    %826 = vmatprep.subr.mxu0 0.0
    %827 = vmatpush1.msra.mxu0 0.0
    %828 = vmatprep.subr.mxu0 0.0
    %829 = vmatpush1.msra.mxu0 0.0
    %830 = vmatprep.subr.mxu0 0.0
    %831 = vmatpush1.msra.mxu0 0.0
    %832 = vmatprep.subr.mxu0 0.0
    %833 = vmatpush1.msra.mxu0 0.0
    %834 = vmatprep.subr.mxu0 0.0
    %835 = vmatpush1.msra.mxu0 0.0
    %836 = vmatprep.subr.mxu0 0.0
    %837 = vmatpush1.msra.mxu0 0.0
    %838 = vmatprep.subr.mxu0 0.0
    %839 = vmatpush1.msra.mxu0 0.0
    %840 = vmatprep.subr.mxu0 0.0
    %841 = vmatpush1.msra.mxu0 0.0
    %842 = vmatprep.subr.mxu0 0.0
    %843 = vmatpush1.msra.mxu0 0.0
    %844 = vmatprep.subr.mxu0 0.0
    %845 = vmatpush1.msra.mxu0 0.0
    %846 = vmatprep.subr.mxu0 0.0
    %847 = vmatpush1.msra.mxu0 0.0
    %848 = vmatprep.subr.mxu0 0.0
    %849 = vmatpush1.msra.mxu0 0.0
    %850 = vmatprep.mubr.f32.mxu0 0.0
    %851 = vmatmul.mubr.f32.gmra.mrb[0].mxu0 %v781
    %v852 = vpop.f32.mrb[0].mxu0
    %v853 = vadd.f32 %v777, %v852
    %v854 = vpop.f32.mrb[0].mxu0
    %855 = vdwg.mxu0
    %v857 = vsel %vm448, %v691, 0
    %859 = vmatprep.subr.mxu0 0.0
    %860 = vmatpush1.msra.mxu0 %v301
    %861 = vmatprep.subr.mxu0 0.0
    %862 = vmatpush1.msra.mxu0 0.0
    %863 = vmatprep.subr.mxu0 0.0
    %864 = vmatpush1.msra.mxu0 0.0
    %865 = vmatprep.subr.mxu0 0.0
    %866 = vmatpush1.msra.mxu0 0.0
    %867 = vmatprep.subr.mxu0 0.0
    %868 = vmatpush1.msra.mxu0 0.0
    %869 = vmatprep.subr.mxu0 0.0
    %870 = vmatpush1.msra.mxu0 0.0
    %871 = vmatprep.subr.mxu0 0.0
    %872 = vmatpush1.msra.mxu0 0.0
    %873 = vmatprep.subr.mxu0 0.0
    %874 = vmatpush1.msra.mxu0 0.0
    %875 = vmatprep.subr.mxu0 0.0
    %876 = vmatpush1.msra.mxu0 0.0
    %877 = vmatprep.subr.mxu0 0.0
    %878 = vmatpush1.msra.mxu0 0.0
    %879 = vmatprep.subr.mxu0 0.0
    %880 = vmatpush1.msra.mxu0 0.0
    %881 = vmatprep.subr.mxu0 0.0
    %882 = vmatpush1.msra.mxu0 0.0
    %883 = vmatprep.subr.mxu0 0.0
    %884 = vmatpush1.msra.mxu0 0.0
    %885 = vmatprep.subr.mxu0 0.0
    %886 = vmatpush1.msra.mxu0 0.0
    %887 = vmatprep.subr.mxu0 0.0
    %888 = vmatpush1.msra.mxu0 0.0
    %889 = vmatprep.subr.mxu0 0.0
    %890 = vmatpush1.msra.mxu0 0.0
    %891 = vmatprep.subr.mxu0 0.0
    %892 = vmatpush1.msra.mxu0 0.0
    %893 = vmatprep.subr.mxu0 0.0
    %894 = vmatpush1.msra.mxu0 0.0
    %895 = vmatprep.subr.mxu0 0.0
    %896 = vmatpush1.msra.mxu0 0.0
    %897 = vmatprep.subr.mxu0 0.0
    %898 = vmatpush1.msra.mxu0 0.0
    %899 = vmatprep.subr.mxu0 0.0
    %900 = vmatpush1.msra.mxu0 0.0
    %901 = vmatprep.subr.mxu0 0.0
    %902 = vmatpush1.msra.mxu0 0.0
    %903 = vmatprep.subr.mxu0 0.0
    %904 = vmatpush1.msra.mxu0 0.0
    %905 = vmatprep.subr.mxu0 0.0
    %906 = vmatpush1.msra.mxu0 0.0
    %907 = vmatprep.subr.mxu0 0.0
    %908 = vmatpush1.msra.mxu0 0.0
    %909 = vmatprep.subr.mxu0 0.0
    %910 = vmatpush1.msra.mxu0 0.0
    %911 = vmatprep.subr.mxu0 0.0
    %912 = vmatpush1.msra.mxu0 0.0
    %913 = vmatprep.subr.mxu0 0.0
    %914 = vmatpush1.msra.mxu0 0.0
    %915 = vmatprep.subr.mxu0 0.0
    %916 = vmatpush1.msra.mxu0 0.0
    %917 = vmatprep.subr.mxu0 0.0
    %918 = vmatpush1.msra.mxu0 0.0
    %919 = vmatprep.subr.mxu0 0.0
    %920 = vmatpush1.msra.mxu0 0.0
    %921 = vmatprep.subr.mxu0 0.0
    %922 = vmatpush1.msra.mxu0 0.0
    %923 = vmatprep.mubr.f32.mxu0 0.0
    %924 = vmatmul.mubr.f32.gmra.mrb[0].mxu0 %v857
    %v925 = vpop.f32.mrb[0].mxu0
    %v926 = vadd.f32 0.0, %v925
    %v927 = vpop.f32.mrb[0].mxu0
    %928 = vdwg.mxu0
    %v929 = vadd.f32 %v853, %v926
    %v930 = vrcp.pop %v702
    %v931 = vmul.f32 %v929, %v930
    %932 = vrot.lane.b32.xlu0 %v447, 120
    %v933 = vpop.permute.xlu0 %932
    %934 = vrot.lane.b32.xlu0 %v70, 120
    %v935 = vpop.permute.xlu0 %934
    %v936 = vsel %vm448, %v933, 0
    %v938 = vsel %vm448, %v935, 0
    %940 = vmatprep.subr.mxu0 0.0
    %941 = vmatpush1.xpose.msra.mxu0 %v938
    %942 = vmatprep.subr.mxu0 0.0
    %943 = vmatpush1.xpose.msra.mxu0 0.0
    %944 = vmatprep.subr.mxu0 0.0
    %945 = vmatpush1.xpose.msra.mxu0 0.0
    %946 = vmatprep.subr.mxu0 0.0
    %947 = vmatpush1.xpose.msra.mxu0 0.0
    %948 = vmatprep.subr.mxu0 0.0
    %949 = vmatpush1.xpose.msra.mxu0 0.0
    %950 = vmatprep.subr.mxu0 0.0
    %951 = vmatpush1.xpose.msra.mxu0 0.0
    %952 = vmatprep.subr.mxu0 0.0
    %953 = vmatpush1.xpose.msra.mxu0 0.0
    %954 = vmatprep.subr.mxu0 0.0
    %955 = vmatpush1.xpose.msra.mxu0 0.0
    %956 = vmatprep.subr.mxu0 0.0
    %957 = vmatpush1.xpose.msra.mxu0 0.0
    %958 = vmatprep.subr.mxu0 0.0
    %959 = vmatpush1.xpose.msra.mxu0 0.0
    %960 = vmatprep.subr.mxu0 0.0
    %961 = vmatpush1.xpose.msra.mxu0 0.0
    %962 = vmatprep.subr.mxu0 0.0
    %963 = vmatpush1.xpose.msra.mxu0 0.0
    %964 = vmatprep.subr.mxu0 0.0
    %965 = vmatpush1.xpose.msra.mxu0 0.0
    %966 = vmatprep.subr.mxu0 0.0
    %967 = vmatpush1.xpose.msra.mxu0 0.0
    %968 = vmatprep.subr.mxu0 0.0
    %969 = vmatpush1.xpose.msra.mxu0 0.0
    %970 = vmatprep.subr.mxu0 0.0
    %971 = vmatpush1.xpose.msra.mxu0 0.0
    %972 = vmatprep.subr.mxu0 0.0
    %973 = vmatpush1.xpose.msra.mxu0 0.0
    %974 = vmatprep.subr.mxu0 0.0
    %975 = vmatpush1.xpose.msra.mxu0 0.0
    %976 = vmatprep.subr.mxu0 0.0
    %977 = vmatpush1.xpose.msra.mxu0 0.0
    %978 = vmatprep.subr.mxu0 0.0
    %979 = vmatpush1.xpose.msra.mxu0 0.0
    %980 = vmatprep.subr.mxu0 0.0
    %981 = vmatpush1.xpose.msra.mxu0 0.0
    %982 = vmatprep.subr.mxu0 0.0
    %983 = vmatpush1.xpose.msra.mxu0 0.0
    %984 = vmatprep.subr.mxu0 0.0
    %985 = vmatpush1.xpose.msra.mxu0 0.0
    %986 = vmatprep.subr.mxu0 0.0
    %987 = vmatpush1.xpose.msra.mxu0 0.0
    %988 = vmatprep.subr.mxu0 0.0
    %989 = vmatpush1.xpose.msra.mxu0 0.0
    %990 = vmatprep.subr.mxu0 0.0
    %991 = vmatpush1.xpose.msra.mxu0 0.0
    %992 = vmatprep.subr.mxu0 0.0
    %993 = vmatpush1.xpose.msra.mxu0 0.0
    %994 = vmatprep.subr.mxu0 0.0
    %995 = vmatpush1.xpose.msra.mxu0 0.0
    %996 = vmatprep.subr.mxu0 0.0
    %997 = vmatpush1.xpose.msra.mxu0 0.0
    %998 = vmatprep.subr.mxu0 0.0
    %999 = vmatpush1.xpose.msra.mxu0 0.0
    %1000 = vmatprep.subr.mxu0 0.0
    %1001 = vmatpush1.xpose.msra.mxu0 0.0
    %1002 = vmatprep.subr.mxu0 0.0
    %1003 = vmatpush1.xpose.msra.mxu0 0.0
    %1004 = vmatprep.mubr.f32.mxu0 0.0
    %1005 = vmatmul.mubr.f32.gmra.mrb[0].mxu0 %v936
    %v1006 = vpop.f32.mrb[0].mxu0
    %v1007 = vadd.f32 0.0, %v1006
    %v1008 = vpop.f32.mrb[0].mxu0
    %1009 = vdwg.mxu0
    %1010 = vrot.lane.b32.xlu0 %v374, 120
    %v1011 = vpop.permute.xlu0 %1010
    %v1012 = vsel %vm448, %v1011, 0
    %1014 = vmatprep.subr.mxu0 0.0
    %1015 = vmatpush1.xpose.msra.mxu0 %v1012
    %1016 = vmatprep.subr.mxu0 0.0
    %1017 = vmatpush1.xpose.msra.mxu0 0.0
    %1018 = vmatprep.subr.mxu0 0.0
    %1019 = vmatpush1.xpose.msra.mxu0 0.0
    %1020 = vmatprep.subr.mxu0 0.0
    %1021 = vmatpush1.xpose.msra.mxu0 0.0
    %1022 = vmatprep.subr.mxu0 0.0
    %1023 = vmatpush1.xpose.msra.mxu0 0.0
    %1024 = vmatprep.subr.mxu0 0.0
    %1025 = vmatpush1.xpose.msra.mxu0 0.0
    %1026 = vmatprep.subr.mxu0 0.0
    %1027 = vmatpush1.xpose.msra.mxu0 0.0
    %1028 = vmatprep.subr.mxu0 0.0
    %1029 = vmatpush1.xpose.msra.mxu0 0.0
    %1030 = vmatprep.subr.mxu0 0.0
    %1031 = vmatpush1.xpose.msra.mxu0 0.0
    %1032 = vmatprep.subr.mxu0 0.0
    %1033 = vmatpush1.xpose.msra.mxu0 0.0
    %1034 = vmatprep.subr.mxu0 0.0
    %1035 = vmatpush1.xpose.msra.mxu0 0.0
    %1036 = vmatprep.subr.mxu0 0.0
    %1037 = vmatpush1.xpose.msra.mxu0 0.0
    %1038 = vmatprep.subr.mxu0 0.0
    %1039 = vmatpush1.xpose.msra.mxu0 0.0
    %1040 = vmatprep.subr.mxu0 0.0
    %1041 = vmatpush1.xpose.msra.mxu0 0.0
    %1042 = vmatprep.subr.mxu0 0.0
    %1043 = vmatpush1.xpose.msra.mxu0 0.0
    %1044 = vmatprep.subr.mxu0 0.0
    %1045 = vmatpush1.xpose.msra.mxu0 0.0
    %1046 = vmatprep.subr.mxu0 0.0
    %1047 = vmatpush1.xpose.msra.mxu0 0.0
    %1048 = vmatprep.subr.mxu0 0.0
    %1049 = vmatpush1.xpose.msra.mxu0 0.0
    %1050 = vmatprep.subr.mxu0 0.0
    %1051 = vmatpush1.xpose.msra.mxu0 0.0
    %1052 = vmatprep.subr.mxu0 0.0
    %1053 = vmatpush1.xpose.msra.mxu0 0.0
    %1054 = vmatprep.subr.mxu0 0.0
    %1055 = vmatpush1.xpose.msra.mxu0 0.0
    %1056 = vmatprep.subr.mxu0 0.0
    %1057 = vmatpush1.xpose.msra.mxu0 0.0
    %1058 = vmatprep.subr.mxu0 0.0
    %1059 = vmatpush1.xpose.msra.mxu0 0.0
    %1060 = vmatprep.subr.mxu0 0.0
    %1061 = vmatpush1.xpose.msra.mxu0 0.0
    %1062 = vmatprep.subr.mxu0 0.0
    %1063 = vmatpush1.xpose.msra.mxu0 0.0
    %1064 = vmatprep.subr.mxu0 0.0
    %1065 = vmatpush1.xpose.msra.mxu0 0.0
    %1066 = vmatprep.subr.mxu0 0.0
    %1067 = vmatpush1.xpose.msra.mxu0 0.0
    %1068 = vmatprep.subr.mxu0 0.0
    %1069 = vmatpush1.xpose.msra.mxu0 0.0
    %1070 = vmatprep.subr.mxu0 0.0
    %1071 = vmatpush1.xpose.msra.mxu0 0.0
    %1072 = vmatprep.subr.mxu0 0.0
    %1073 = vmatpush1.xpose.msra.mxu0 0.0
    %1074 = vmatprep.subr.mxu0 0.0
    %1075 = vmatpush1.xpose.msra.mxu0 0.0
    %1076 = vmatprep.subr.mxu0 0.0
    %1077 = vmatpush1.xpose.msra.mxu0 0.0
    %1078 = vmatprep.mubr.f32.mxu0 0.0
    %1079 = vmatmul.mubr.f32.gmra.mrb[0].mxu0 %v936
    %v1080 = vpop.f32.mrb[0].mxu0
    %v1081 = vadd.f32 0.0, %v1080
    %v1082 = vpop.f32.mrb[0].mxu0
    %1083 = vdwg.mxu0
    %1084 = vrot.lane.b32.xlu0 %v225, 120
    %v1085 = vpop.permute.xlu0 %1084
    %v1086 = vsel %vm448, %v1085, 0
    %1088 = vmatprep.subr.mxu0 0.0
    %1089 = vmatpush1.xpose.msra.mxu0 %v1086
    %1090 = vmatprep.subr.mxu0 0.0
    %1091 = vmatpush1.xpose.msra.mxu0 0.0
    %1092 = vmatprep.subr.mxu0 0.0
    %1093 = vmatpush1.xpose.msra.mxu0 0.0
    %1094 = vmatprep.subr.mxu0 0.0
    %1095 = vmatpush1.xpose.msra.mxu0 0.0
    %1096 = vmatprep.subr.mxu0 0.0
    %1097 = vmatpush1.xpose.msra.mxu0 0.0
    %1098 = vmatprep.subr.mxu0 0.0
    %1099 = vmatpush1.xpose.msra.mxu0 0.0
    %1100 = vmatprep.subr.mxu0 0.0
    %1101 = vmatpush1.xpose.msra.mxu0 0.0
    %1102 = vmatprep.subr.mxu0 0.0
    %1103 = vmatpush1.xpose.msra.mxu0 0.0
    %1104 = vmatprep.subr.mxu0 0.0
    %1105 = vmatpush1.xpose.msra.mxu0 0.0
    %1106 = vmatprep.subr.mxu0 0.0
    %1107 = vmatpush1.xpose.msra.mxu0 0.0
    %1108 = vmatprep.subr.mxu0 0.0
    %1109 = vmatpush1.xpose.msra.mxu0 0.0
    %1110 = vmatprep.subr.mxu0 0.0
    %1111 = vmatpush1.xpose.msra.mxu0 0.0
    %1112 = vmatprep.subr.mxu0 0.0
    %1113 = vmatpush1.xpose.msra.mxu0 0.0
    %1114 = vmatprep.subr.mxu0 0.0
    %1115 = vmatpush1.xpose.msra.mxu0 0.0
    %1116 = vmatprep.subr.mxu0 0.0
    %1117 = vmatpush1.xpose.msra.mxu0 0.0
    %1118 = vmatprep.subr.mxu0 0.0
    %1119 = vmatpush1.xpose.msra.mxu0 0.0
    %1120 = vmatprep.subr.mxu0 0.0
    %1121 = vmatpush1.xpose.msra.mxu0 0.0
    %1122 = vmatprep.subr.mxu0 0.0
    %1123 = vmatpush1.xpose.msra.mxu0 0.0
    %1124 = vmatprep.subr.mxu0 0.0
    %1125 = vmatpush1.xpose.msra.mxu0 0.0
    %1126 = vmatprep.subr.mxu0 0.0
    %1127 = vmatpush1.xpose.msra.mxu0 0.0
    %1128 = vmatprep.subr.mxu0 0.0
    %1129 = vmatpush1.xpose.msra.mxu0 0.0
    %1130 = vmatprep.subr.mxu0 0.0
    %1131 = vmatpush1.xpose.msra.mxu0 0.0
    %1132 = vmatprep.subr.mxu0 0.0
    %1133 = vmatpush1.xpose.msra.mxu0 0.0
    %1134 = vmatprep.subr.mxu0 0.0
    %1135 = vmatpush1.xpose.msra.mxu0 0.0
    %1136 = vmatprep.subr.mxu0 0.0
    %1137 = vmatpush1.xpose.msra.mxu0 0.0
    %1138 = vmatprep.subr.mxu0 0.0
    %1139 = vmatpush1.xpose.msra.mxu0 0.0
    %1140 = vmatprep.subr.mxu0 0.0
    %1141 = vmatpush1.xpose.msra.mxu0 0.0
    %1142 = vmatprep.subr.mxu0 0.0
    %1143 = vmatpush1.xpose.msra.mxu0 0.0
    %1144 = vmatprep.subr.mxu0 0.0
    %1145 = vmatpush1.xpose.msra.mxu0 0.0
    %1146 = vmatprep.subr.mxu0 0.0
    %1147 = vmatpush1.xpose.msra.mxu0 0.0
    %1148 = vmatprep.subr.mxu0 0.0
    %1149 = vmatpush1.xpose.msra.mxu0 0.0
    %1150 = vmatprep.subr.mxu0 0.0
    %1151 = vmatpush1.xpose.msra.mxu0 0.0
    %1152 = vmatprep.mubr.f32.mxu0 0.0
    %1153 = vmatmul.mubr.f32.gmra.mrb[0].mxu0 %v936
    %v1154 = vpop.f32.mrb[0].mxu0
    %v1155 = vadd.f32 %v67, %v1154
    %v1156 = vpop.f32.mrb[0].mxu0
    %1157 = vdwg.mxu0
    %v1158 = vsel %vm671, %v1007, -inf
    %1159 = vmax.xlane.f32.xlu0 %v1158
    %v1160 = vpop.xlane.xlu0 %1159
    %v1161 = vsel %vm671, %v1081, -inf
    %1162 = vmax.xlane.f32.xlu0 %v1161
    %v1163 = vpop.xlane.xlu0 %1162
    %v1164 = vsel %vm448, %v1155, -inf
    %1165 = vmax.xlane.f32.xlu0 %v1164
    %v1166 = vpop.xlane.xlu0 %1165
    %v1167 = vmax.f32 %v1163, %v1166
    %v1168 = vmax.f32 %v1160, %v1167
    %v1169 = vsub.f32 %v1007, %v1168
    %v1170 = vmul.f32 %v1169, 1.442695
    %v1171 = vpow.pop %v1170
    %v1172 = vsub.f32 %v1081, %v1168
    %v1173 = vmul.f32 %v1172, 1.442695
    %v1174 = vpow.pop %v1173
    %v1175 = vsub.f32 %v1155, %v1168
    %v1176 = vmul.f32 %v1175, 1.442695
    %v1177 = vpow.pop %v1176
    %v1178 = vsel %vm671, %v1171, 0.0
    %1179 = vadd.xlane.f32.xlu0 %v1178
    %v1180 = vpop.xlane.xlu0 %1179
    %v1181 = vsel %vm671, %v1174, 0.0
    %1182 = vadd.xlane.f32.xlu0 %v1181
    %v1183 = vpop.xlane.xlu0 %1182
    %v1184 = vadd.f32 %v1180, %v1183
    %v1185 = vsel %vm448, %v1177, 0.0
    %1186 = vadd.xlane.f32.xlu0 %v1185
    %v1187 = vpop.xlane.xlu0 %1186
    %v1188 = vadd.f32 %v1184, %v1187
    %1189 = vrot.lane.b32.xlu0 %v444, 120
    %v1190 = vpop.permute.xlu0 %1189
    %v1192 = vsel %vm671, %v1174, 0
    %v1194 = vsel %vm706, %v1190, 0
    %1196 = vmatprep.subr.mxu0 0.0
    %1197 = vmatpush1.msra.mxu0 %v1194
    %1198 = vmatprep.subr.mxu0 0.0
    %1199 = vmatpush1.msra.mxu0 0.0
    %1200 = vmatprep.subr.mxu0 0.0
    %1201 = vmatpush1.msra.mxu0 0.0
    %1202 = vmatprep.subr.mxu0 0.0
    %1203 = vmatpush1.msra.mxu0 0.0
    %1204 = vmatprep.subr.mxu0 0.0
    %1205 = vmatpush1.msra.mxu0 0.0
    %1206 = vmatprep.subr.mxu0 0.0
    %1207 = vmatpush1.msra.mxu0 0.0
    %1208 = vmatprep.subr.mxu0 0.0
    %1209 = vmatpush1.msra.mxu0 0.0
    %1210 = vmatprep.subr.mxu0 0.0
    %1211 = vmatpush1.msra.mxu0 0.0
    %1212 = vmatprep.subr.mxu0 0.0
    %1213 = vmatpush1.msra.mxu0 0.0
    %1214 = vmatprep.subr.mxu0 0.0
    %1215 = vmatpush1.msra.mxu0 0.0
    %1216 = vmatprep.subr.mxu0 0.0
    %1217 = vmatpush1.msra.mxu0 0.0
    %1218 = vmatprep.subr.mxu0 0.0
    %1219 = vmatpush1.msra.mxu0 0.0
    %1220 = vmatprep.subr.mxu0 0.0
    %1221 = vmatpush1.msra.mxu0 0.0
    %1222 = vmatprep.subr.mxu0 0.0
    %1223 = vmatpush1.msra.mxu0 0.0
    %1224 = vmatprep.subr.mxu0 0.0
    %1225 = vmatpush1.msra.mxu0 0.0
    %1226 = vmatprep.subr.mxu0 0.0
    %1227 = vmatpush1.msra.mxu0 0.0
    %1228 = vmatprep.subr.mxu0 0.0
    %1229 = vmatpush1.msra.mxu0 0.0
    %1230 = vmatprep.subr.mxu0 0.0
    %1231 = vmatpush1.msra.mxu0 0.0
    %1232 = vmatprep.subr.mxu0 0.0
    %1233 = vmatpush1.msra.mxu0 0.0
    %1234 = vmatprep.subr.mxu0 0.0
    %1235 = vmatpush1.msra.mxu0 0.0
    %1236 = vmatprep.subr.mxu0 0.0
    %1237 = vmatpush1.msra.mxu0 0.0
    %1238 = vmatprep.subr.mxu0 0.0
    %1239 = vmatpush1.msra.mxu0 0.0
    %1240 = vmatprep.subr.mxu0 0.0
    %1241 = vmatpush1.msra.mxu0 0.0
    %1242 = vmatprep.subr.mxu0 0.0
    %1243 = vmatpush1.msra.mxu0 0.0
    %1244 = vmatprep.subr.mxu0 0.0
    %1245 = vmatpush1.msra.mxu0 0.0
    %1246 = vmatprep.subr.mxu0 0.0
    %1247 = vmatpush1.msra.mxu0 0.0
    %1248 = vmatprep.subr.mxu0 0.0
    %1249 = vmatpush1.msra.mxu0 0.0
    %1250 = vmatprep.subr.mxu0 0.0
    %1251 = vmatpush1.msra.mxu0 0.0
    %1252 = vmatprep.subr.mxu0 0.0
    %1253 = vmatpush1.msra.mxu0 0.0
    %1254 = vmatprep.subr.mxu0 0.0
    %1255 = vmatpush1.msra.mxu0 0.0
    %1256 = vmatprep.subr.mxu0 0.0
    %1257 = vmatpush1.msra.mxu0 0.0
    %1258 = vmatprep.subr.mxu0 0.0
    %1259 = vmatpush1.msra.mxu0 0.0
    %1260 = vmatprep.mubr.f32.mxu0 0.0
    %1261 = vmatmul.mubr.f32.gmra.mrb[0].mxu0 %v1192
    %v1262 = vpop.f32.mrb[0].mxu0
    %v1263 = vadd.f32 0.0, %v1262
    %v1264 = vpop.f32.mrb[0].mxu0
    %1265 = vdwg.mxu0
    %1266 = vrot.lane.b32.xlu0 %v71, 120
    %v1267 = vpop.permute.xlu0 %1266
    %v1269 = vsel %vm671, %v1171, 0
    %v1271 = vsel %vm706, %v1267, 0
    %1273 = vmatprep.subr.mxu0 0.0
    %1274 = vmatpush1.msra.mxu0 %v1271
    %1275 = vmatprep.subr.mxu0 0.0
    %1276 = vmatpush1.msra.mxu0 0.0
    %1277 = vmatprep.subr.mxu0 0.0
    %1278 = vmatpush1.msra.mxu0 0.0
    %1279 = vmatprep.subr.mxu0 0.0
    %1280 = vmatpush1.msra.mxu0 0.0
    %1281 = vmatprep.subr.mxu0 0.0
    %1282 = vmatpush1.msra.mxu0 0.0
    %1283 = vmatprep.subr.mxu0 0.0
    %1284 = vmatpush1.msra.mxu0 0.0
    %1285 = vmatprep.subr.mxu0 0.0
    %1286 = vmatpush1.msra.mxu0 0.0
    %1287 = vmatprep.subr.mxu0 0.0
    %1288 = vmatpush1.msra.mxu0 0.0
    %1289 = vmatprep.subr.mxu0 0.0
    %1290 = vmatpush1.msra.mxu0 0.0
    %1291 = vmatprep.subr.mxu0 0.0
    %1292 = vmatpush1.msra.mxu0 0.0
    %1293 = vmatprep.subr.mxu0 0.0
    %1294 = vmatpush1.msra.mxu0 0.0
    %1295 = vmatprep.subr.mxu0 0.0
    %1296 = vmatpush1.msra.mxu0 0.0
    %1297 = vmatprep.subr.mxu0 0.0
    %1298 = vmatpush1.msra.mxu0 0.0
    %1299 = vmatprep.subr.mxu0 0.0
    %1300 = vmatpush1.msra.mxu0 0.0
    %1301 = vmatprep.subr.mxu0 0.0
    %1302 = vmatpush1.msra.mxu0 0.0
    %1303 = vmatprep.subr.mxu0 0.0
    %1304 = vmatpush1.msra.mxu0 0.0
    %1305 = vmatprep.subr.mxu0 0.0
    %1306 = vmatpush1.msra.mxu0 0.0
    %1307 = vmatprep.subr.mxu0 0.0
    %1308 = vmatpush1.msra.mxu0 0.0
    %1309 = vmatprep.subr.mxu0 0.0
    %1310 = vmatpush1.msra.mxu0 0.0
    %1311 = vmatprep.subr.mxu0 0.0
    %1312 = vmatpush1.msra.mxu0 0.0
    %1313 = vmatprep.subr.mxu0 0.0
    %1314 = vmatpush1.msra.mxu0 0.0
    %1315 = vmatprep.subr.mxu0 0.0
    %1316 = vmatpush1.msra.mxu0 0.0
    %1317 = vmatprep.subr.mxu0 0.0
    %1318 = vmatpush1.msra.mxu0 0.0
    %1319 = vmatprep.subr.mxu0 0.0
    %1320 = vmatpush1.msra.mxu0 0.0
    %1321 = vmatprep.subr.mxu0 0.0
    %1322 = vmatpush1.msra.mxu0 0.0
    %1323 = vmatprep.subr.mxu0 0.0
    %1324 = vmatpush1.msra.mxu0 0.0
    %1325 = vmatprep.subr.mxu0 0.0
    %1326 = vmatpush1.msra.mxu0 0.0
    %1327 = vmatprep.subr.mxu0 0.0
    %1328 = vmatpush1.msra.mxu0 0.0
    %1329 = vmatprep.subr.mxu0 0.0
    %1330 = vmatpush1.msra.mxu0 0.0
    %1331 = vmatprep.subr.mxu0 0.0
    %1332 = vmatpush1.msra.mxu0 0.0
    %1333 = vmatprep.subr.mxu0 0.0
    %1334 = vmatpush1.msra.mxu0 0.0
    %1335 = vmatprep.subr.mxu0 0.0
    %1336 = vmatpush1.msra.mxu0 0.0
    %1337 = vmatprep.mubr.f32.mxu0 0.0
    %1338 = vmatmul.mubr.f32.gmra.mrb[0].mxu0 %v1269
    %v1339 = vpop.f32.mrb[0].mxu0
    %v1340 = vadd.f32 %v1263, %v1339
    %v1341 = vpop.f32.mrb[0].mxu0
    %1342 = vdwg.mxu0
    %1344 = vrot.lane.b32.xlu0 %v301, 120
    %v1345 = vpop.permute.xlu0 %1344
    %v1348 = vsel %vm448, %v1177, 0
    %1350 = vmatprep.subr.mxu0 0.0
    %1351 = vmatpush1.msra.mxu0 %v1345
    %1352 = vmatprep.subr.mxu0 0.0
    %1353 = vmatpush1.msra.mxu0 0.0
    %1354 = vmatprep.subr.mxu0 0.0
    %1355 = vmatpush1.msra.mxu0 0.0
    %1356 = vmatprep.subr.mxu0 0.0
    %1357 = vmatpush1.msra.mxu0 0.0
    %1358 = vmatprep.subr.mxu0 0.0
    %1359 = vmatpush1.msra.mxu0 0.0
    %1360 = vmatprep.subr.mxu0 0.0
    %1361 = vmatpush1.msra.mxu0 0.0
    %1362 = vmatprep.subr.mxu0 0.0
    %1363 = vmatpush1.msra.mxu0 0.0
    %1364 = vmatprep.subr.mxu0 0.0
    %1365 = vmatpush1.msra.mxu0 0.0
    %1366 = vmatprep.subr.mxu0 0.0
    %1367 = vmatpush1.msra.mxu0 0.0
    %1368 = vmatprep.subr.mxu0 0.0
    %1369 = vmatpush1.msra.mxu0 0.0
    %1370 = vmatprep.subr.mxu0 0.0
    %1371 = vmatpush1.msra.mxu0 0.0
    %1372 = vmatprep.subr.mxu0 0.0
    %1373 = vmatpush1.msra.mxu0 0.0
    %1374 = vmatprep.subr.mxu0 0.0
    %1375 = vmatpush1.msra.mxu0 0.0
    %1376 = vmatprep.subr.mxu0 0.0
    %1377 = vmatpush1.msra.mxu0 0.0
    %1378 = vmatprep.subr.mxu0 0.0
    %1379 = vmatpush1.msra.mxu0 0.0
    %1380 = vmatprep.subr.mxu0 0.0
    %1381 = vmatpush1.msra.mxu0 0.0
    %1382 = vmatprep.subr.mxu0 0.0
    %1383 = vmatpush1.msra.mxu0 0.0
    %1384 = vmatprep.subr.mxu0 0.0
    %1385 = vmatpush1.msra.mxu0 0.0
    %1386 = vmatprep.subr.mxu0 0.0
    %1387 = vmatpush1.msra.mxu0 0.0
    %1388 = vmatprep.subr.mxu0 0.0
    %1389 = vmatpush1.msra.mxu0 0.0
    %1390 = vmatprep.subr.mxu0 0.0
    %1391 = vmatpush1.msra.mxu0 0.0
    %1392 = vmatprep.subr.mxu0 0.0
    %1393 = vmatpush1.msra.mxu0 0.0
    %1394 = vmatprep.subr.mxu0 0.0
    %1395 = vmatpush1.msra.mxu0 0.0
    %1396 = vmatprep.subr.mxu0 0.0
    %1397 = vmatpush1.msra.mxu0 0.0
    %1398 = vmatprep.subr.mxu0 0.0
    %1399 = vmatpush1.msra.mxu0 0.0
    %1400 = vmatprep.subr.mxu0 0.0
    %1401 = vmatpush1.msra.mxu0 0.0
    %1402 = vmatprep.subr.mxu0 0.0
    %1403 = vmatpush1.msra.mxu0 0.0
    %1404 = vmatprep.subr.mxu0 0.0
    %1405 = vmatpush1.msra.mxu0 0.0
    %1406 = vmatprep.subr.mxu0 0.0
    %1407 = vmatpush1.msra.mxu0 0.0
    %1408 = vmatprep.subr.mxu0 0.0
    %1409 = vmatpush1.msra.mxu0 0.0
    %1410 = vmatprep.subr.mxu0 0.0
    %1411 = vmatpush1.msra.mxu0 0.0
    %1412 = vmatprep.subr.mxu0 0.0
    %1413 = vmatpush1.msra.mxu0 0.0
    %1414 = vmatprep.mubr.f32.mxu0 0.0
    %1415 = vmatmul.mubr.f32.gmra.mrb[0].mxu0 %v1348
    %v1416 = vpop.f32.mrb[0].mxu0
    %v1417 = vadd.f32 0.0, %v1416
    %v1418 = vpop.f32.mrb[0].mxu0
    %1419 = vdwg.mxu0
    %v1420 = vadd.f32 %v1340, %v1417
    %v1421 = vrcp.pop %v1188
    %v1422 = vmul.f32 %v1420, %v1421
    %v1424 = vsel %vm448, %v1422, 0
    %1426 = vmatprep.subr.mxu0 0.0
    %1427 = vmatpush1.msra.mxu0 %v59
    %1428 = vmatprep.subr.mxu0 0.0
    %1429 = vmatpush1.msra.mxu0 0.0
    %1430 = vmatprep.subr.mxu0 0.0
    %1431 = vmatpush1.msra.mxu0 0.0
    %1432 = vmatprep.subr.mxu0 0.0
    %1433 = vmatpush1.msra.mxu0 0.0
    %1434 = vmatprep.subr.mxu0 0.0
    %1435 = vmatpush1.msra.mxu0 0.0
    %1436 = vmatprep.subr.mxu0 0.0
    %1437 = vmatpush1.msra.mxu0 0.0
    %1438 = vmatprep.subr.mxu0 0.0
    %1439 = vmatpush1.msra.mxu0 0.0
    %1440 = vmatprep.subr.mxu0 0.0
    %1441 = vmatpush1.msra.mxu0 0.0
    %1442 = vmatprep.subr.mxu0 0.0
    %1443 = vmatpush1.msra.mxu0 0.0
    %1444 = vmatprep.subr.mxu0 0.0
    %1445 = vmatpush1.msra.mxu0 0.0
    %1446 = vmatprep.subr.mxu0 0.0
    %1447 = vmatpush1.msra.mxu0 0.0
    %1448 = vmatprep.subr.mxu0 0.0
    %1449 = vmatpush1.msra.mxu0 0.0
    %1450 = vmatprep.subr.mxu0 0.0
    %1451 = vmatpush1.msra.mxu0 0.0
    %1452 = vmatprep.subr.mxu0 0.0
    %1453 = vmatpush1.msra.mxu0 0.0
    %1454 = vmatprep.subr.mxu0 0.0
    %1455 = vmatpush1.msra.mxu0 0.0
    %1456 = vmatprep.subr.mxu0 0.0
    %1457 = vmatpush1.msra.mxu0 0.0
    %1458 = vmatprep.subr.mxu0 0.0
    %1459 = vmatpush1.msra.mxu0 0.0
    %1460 = vmatprep.subr.mxu0 0.0
    %1461 = vmatpush1.msra.mxu0 0.0
    %1462 = vmatprep.subr.mxu0 0.0
    %1463 = vmatpush1.msra.mxu0 0.0
    %1464 = vmatprep.subr.mxu0 0.0
    %1465 = vmatpush1.msra.mxu0 0.0
    %1466 = vmatprep.subr.mxu0 0.0
    %1467 = vmatpush1.msra.mxu0 0.0
    %1468 = vmatprep.subr.mxu0 0.0
    %1469 = vmatpush1.msra.mxu0 0.0
    %1470 = vmatprep.subr.mxu0 0.0
    %1471 = vmatpush1.msra.mxu0 0.0
    %1472 = vmatprep.subr.mxu0 0.0
    %1473 = vmatpush1.msra.mxu0 0.0
    %1474 = vmatprep.subr.mxu0 0.0
    %1475 = vmatpush1.msra.mxu0 0.0
    %1476 = vmatprep.subr.mxu0 0.0
    %1477 = vmatpush1.msra.mxu0 0.0
    %1478 = vmatprep.subr.mxu0 0.0
    %1479 = vmatpush1.msra.mxu0 0.0
    %1480 = vmatprep.subr.mxu0 0.0
    %1481 = vmatpush1.msra.mxu0 0.0
    %1482 = vmatprep.subr.mxu0 0.0
    %1483 = vmatpush1.msra.mxu0 0.0
    %1484 = vmatprep.subr.mxu0 0.0
    %1485 = vmatpush1.msra.mxu0 0.0
    %1486 = vmatprep.subr.mxu0 0.0
    %1487 = vmatpush1.msra.mxu0 0.0
    %1488 = vmatprep.subr.mxu0 0.0
    %1489 = vmatpush1.msra.mxu0 0.0
    %1490 = vmatprep.mubr.f32.mxu0 0.0
    %1491 = vmatmul.mubr.f32.gmra.mrb[0].mxu0 %v1424
    %v1492 = vpop.f32.mrb[0].mxu0
    %v1493 = vadd.f32 0.0, %v1492
    %v1494 = vpop.f32.mrb[0].mxu0
    %1495 = vdwg.mxu0
    %v1497 = vsel %vm448, %v931, 0
    %1499 = vmatprep.subr.mxu0 0.0
    %1500 = vmatpush1.msra.mxu0 %v58
    %1501 = vmatprep.subr.mxu0 0.0
    %1502 = vmatpush1.msra.mxu0 0.0
    %1503 = vmatprep.subr.mxu0 0.0
    %1504 = vmatpush1.msra.mxu0 0.0
    %1505 = vmatprep.subr.mxu0 0.0
    %1506 = vmatpush1.msra.mxu0 0.0
    %1507 = vmatprep.subr.mxu0 0.0
    %1508 = vmatpush1.msra.mxu0 0.0
    %1509 = vmatprep.subr.mxu0 0.0
    %1510 = vmatpush1.msra.mxu0 0.0
    %1511 = vmatprep.subr.mxu0 0.0
    %1512 = vmatpush1.msra.mxu0 0.0
    %1513 = vmatprep.subr.mxu0 0.0
    %1514 = vmatpush1.msra.mxu0 0.0
    %1515 = vmatprep.subr.mxu0 0.0
    %1516 = vmatpush1.msra.mxu0 0.0
    %1517 = vmatprep.subr.mxu0 0.0
    %1518 = vmatpush1.msra.mxu0 0.0
    %1519 = vmatprep.subr.mxu0 0.0
    %1520 = vmatpush1.msra.mxu0 0.0
    %1521 = vmatprep.subr.mxu0 0.0
    %1522 = vmatpush1.msra.mxu0 0.0
    %1523 = vmatprep.subr.mxu0 0.0
    %1524 = vmatpush1.msra.mxu0 0.0
    %1525 = vmatprep.subr.mxu0 0.0
    %1526 = vmatpush1.msra.mxu0 0.0
    %1527 = vmatprep.subr.mxu0 0.0
    %1528 = vmatpush1.msra.mxu0 0.0
    %1529 = vmatprep.subr.mxu0 0.0
    %1530 = vmatpush1.msra.mxu0 0.0
    %1531 = vmatprep.subr.mxu0 0.0
    %1532 = vmatpush1.msra.mxu0 0.0
    %1533 = vmatprep.subr.mxu0 0.0
    %1534 = vmatpush1.msra.mxu0 0.0
    %1535 = vmatprep.subr.mxu0 0.0
    %1536 = vmatpush1.msra.mxu0 0.0
    %1537 = vmatprep.subr.mxu0 0.0
    %1538 = vmatpush1.msra.mxu0 0.0
    %1539 = vmatprep.subr.mxu0 0.0
    %1540 = vmatpush1.msra.mxu0 0.0
    %1541 = vmatprep.subr.mxu0 0.0
    %1542 = vmatpush1.msra.mxu0 0.0
    %1543 = vmatprep.subr.mxu0 0.0
    %1544 = vmatpush1.msra.mxu0 0.0
    %1545 = vmatprep.subr.mxu0 0.0
    %1546 = vmatpush1.msra.mxu0 0.0
    %1547 = vmatprep.subr.mxu0 0.0
    %1548 = vmatpush1.msra.mxu0 0.0
    %1549 = vmatprep.subr.mxu0 0.0
    %1550 = vmatpush1.msra.mxu0 0.0
    %1551 = vmatprep.subr.mxu0 0.0
    %1552 = vmatpush1.msra.mxu0 0.0
    %1553 = vmatprep.subr.mxu0 0.0
    %1554 = vmatpush1.msra.mxu0 0.0
    %1555 = vmatprep.subr.mxu0 0.0
    %1556 = vmatpush1.msra.mxu0 0.0
    %1557 = vmatprep.subr.mxu0 0.0
    %1558 = vmatpush1.msra.mxu0 0.0
    %1559 = vmatprep.subr.mxu0 0.0
    %1560 = vmatpush1.msra.mxu0 0.0
    %1561 = vmatprep.subr.mxu0 0.0
    %1562 = vmatpush1.msra.mxu0 0.0
    %1563 = vmatprep.mubr.f32.mxu0 0.0
    %1564 = vmatmul.mubr.f32.gmra.mrb[0].mxu0 %v1497
    %v1565 = vpop.f32.mrb[0].mxu0
    %v1566 = vadd.f32 %v1493, %v1565
    %v1567 = vpop.f32.mrb[0].mxu0
    %1568 = vdwg.mxu0
    %1569 = vrot.lane.b32.xlu0 %v447, 112
    %v1570 = vpop.permute.xlu0 %1569
    %1571 = vrot.lane.b32.xlu0 %v70, 112
    %v1572 = vpop.permute.xlu0 %1571
    %v1573 = vsel %vm448, %v1570, 0
    %v1575 = vsel %vm448, %v1572, 0
    %1577 = vmatprep.subr.mxu0 0.0
    %1578 = vmatpush1.xpose.msra.mxu0 %v1575
    %1579 = vmatprep.subr.mxu0 0.0
    %1580 = vmatpush1.xpose.msra.mxu0 0.0
    %1581 = vmatprep.subr.mxu0 0.0
    %1582 = vmatpush1.xpose.msra.mxu0 0.0
    %1583 = vmatprep.subr.mxu0 0.0
    %1584 = vmatpush1.xpose.msra.mxu0 0.0
    %1585 = vmatprep.subr.mxu0 0.0
    %1586 = vmatpush1.xpose.msra.mxu0 0.0
    %1587 = vmatprep.subr.mxu0 0.0
    %1588 = vmatpush1.xpose.msra.mxu0 0.0
    %1589 = vmatprep.subr.mxu0 0.0
    %1590 = vmatpush1.xpose.msra.mxu0 0.0
    %1591 = vmatprep.subr.mxu0 0.0
    %1592 = vmatpush1.xpose.msra.mxu0 0.0
    %1593 = vmatprep.subr.mxu0 0.0
    %1594 = vmatpush1.xpose.msra.mxu0 0.0
    %1595 = vmatprep.subr.mxu0 0.0
    %1596 = vmatpush1.xpose.msra.mxu0 0.0
    %1597 = vmatprep.subr.mxu0 0.0
    %1598 = vmatpush1.xpose.msra.mxu0 0.0
    %1599 = vmatprep.subr.mxu0 0.0
    %1600 = vmatpush1.xpose.msra.mxu0 0.0
    %1601 = vmatprep.subr.mxu0 0.0
    %1602 = vmatpush1.xpose.msra.mxu0 0.0
    %1603 = vmatprep.subr.mxu0 0.0
    %1604 = vmatpush1.xpose.msra.mxu0 0.0
    %1605 = vmatprep.subr.mxu0 0.0
    %1606 = vmatpush1.xpose.msra.mxu0 0.0
    %1607 = vmatprep.subr.mxu0 0.0
    %1608 = vmatpush1.xpose.msra.mxu0 0.0
    %1609 = vmatprep.subr.mxu0 0.0
    %1610 = vmatpush1.xpose.msra.mxu0 0.0
    %1611 = vmatprep.subr.mxu0 0.0
    %1612 = vmatpush1.xpose.msra.mxu0 0.0
    %1613 = vmatprep.subr.mxu0 0.0
    %1614 = vmatpush1.xpose.msra.mxu0 0.0
    %1615 = vmatprep.subr.mxu0 0.0
    %1616 = vmatpush1.xpose.msra.mxu0 0.0
    %1617 = vmatprep.subr.mxu0 0.0
    %1618 = vmatpush1.xpose.msra.mxu0 0.0
    %1619 = vmatprep.subr.mxu0 0.0
    %1620 = vmatpush1.xpose.msra.mxu0 0.0
    %1621 = vmatprep.subr.mxu0 0.0
    %1622 = vmatpush1.xpose.msra.mxu0 0.0
    %1623 = vmatprep.subr.mxu0 0.0
    %1624 = vmatpush1.xpose.msra.mxu0 0.0
    %1625 = vmatprep.subr.mxu0 0.0
    %1626 = vmatpush1.xpose.msra.mxu0 0.0
    %1627 = vmatprep.subr.mxu0 0.0
    %1628 = vmatpush1.xpose.msra.mxu0 0.0
    %1629 = vmatprep.subr.mxu0 0.0
    %1630 = vmatpush1.xpose.msra.mxu0 0.0
    %1631 = vmatprep.subr.mxu0 0.0
    %1632 = vmatpush1.xpose.msra.mxu0 0.0
    %1633 = vmatprep.subr.mxu0 0.0
    %1634 = vmatpush1.xpose.msra.mxu0 0.0
    %1635 = vmatprep.subr.mxu0 0.0
    %1636 = vmatpush1.xpose.msra.mxu0 0.0
    %1637 = vmatprep.subr.mxu0 0.0
    %1638 = vmatpush1.xpose.msra.mxu0 0.0
    %1639 = vmatprep.subr.mxu0 0.0
    %1640 = vmatpush1.xpose.msra.mxu0 0.0
    %1641 = vmatprep.mubr.f32.mxu0 0.0
    %1642 = vmatmul.mubr.f32.gmra.mrb[0].mxu0 %v1573
    %v1643 = vpop.f32.mrb[0].mxu0
    %v1644 = vadd.f32 0.0, %v1643
    %v1645 = vpop.f32.mrb[0].mxu0
    %1646 = vdwg.mxu0
    %1647 = vrot.lane.b32.xlu0 %v374, 112
    %v1648 = vpop.permute.xlu0 %1647
    %v1649 = vsel %vm448, %v1648, 0
    %1651 = vmatprep.subr.mxu0 0.0
    %1652 = vmatpush1.xpose.msra.mxu0 %v1649
    %1653 = vmatprep.subr.mxu0 0.0
    %1654 = vmatpush1.xpose.msra.mxu0 0.0
    %1655 = vmatprep.subr.mxu0 0.0
    %1656 = vmatpush1.xpose.msra.mxu0 0.0
    %1657 = vmatprep.subr.mxu0 0.0
    %1658 = vmatpush1.xpose.msra.mxu0 0.0
    %1659 = vmatprep.subr.mxu0 0.0
    %1660 = vmatpush1.xpose.msra.mxu0 0.0
    %1661 = vmatprep.subr.mxu0 0.0
    %1662 = vmatpush1.xpose.msra.mxu0 0.0
    %1663 = vmatprep.subr.mxu0 0.0
    %1664 = vmatpush1.xpose.msra.mxu0 0.0
    %1665 = vmatprep.subr.mxu0 0.0
    %1666 = vmatpush1.xpose.msra.mxu0 0.0
    %1667 = vmatprep.subr.mxu0 0.0
    %1668 = vmatpush1.xpose.msra.mxu0 0.0
    %1669 = vmatprep.subr.mxu0 0.0
    %1670 = vmatpush1.xpose.msra.mxu0 0.0
    %1671 = vmatprep.subr.mxu0 0.0
    %1672 = vmatpush1.xpose.msra.mxu0 0.0
    %1673 = vmatprep.subr.mxu0 0.0
    %1674 = vmatpush1.xpose.msra.mxu0 0.0
    %1675 = vmatprep.subr.mxu0 0.0
    %1676 = vmatpush1.xpose.msra.mxu0 0.0
    %1677 = vmatprep.subr.mxu0 0.0
    %1678 = vmatpush1.xpose.msra.mxu0 0.0
    %1679 = vmatprep.subr.mxu0 0.0
    %1680 = vmatpush1.xpose.msra.mxu0 0.0
    %1681 = vmatprep.subr.mxu0 0.0
    %1682 = vmatpush1.xpose.msra.mxu0 0.0
    %1683 = vmatprep.subr.mxu0 0.0
    %1684 = vmatpush1.xpose.msra.mxu0 0.0
    %1685 = vmatprep.subr.mxu0 0.0
    %1686 = vmatpush1.xpose.msra.mxu0 0.0
    %1687 = vmatprep.subr.mxu0 0.0
    %1688 = vmatpush1.xpose.msra.mxu0 0.0
    %1689 = vmatprep.subr.mxu0 0.0
    %1690 = vmatpush1.xpose.msra.mxu0 0.0
    %1691 = vmatprep.subr.mxu0 0.0
    %1692 = vmatpush1.xpose.msra.mxu0 0.0
    %1693 = vmatprep.subr.mxu0 0.0
    %1694 = vmatpush1.xpose.msra.mxu0 0.0
    %1695 = vmatprep.subr.mxu0 0.0
    %1696 = vmatpush1.xpose.msra.mxu0 0.0
    %1697 = vmatprep.subr.mxu0 0.0
    %1698 = vmatpush1.xpose.msra.mxu0 0.0
    %1699 = vmatprep.subr.mxu0 0.0
    %1700 = vmatpush1.xpose.msra.mxu0 0.0
    %1701 = vmatprep.subr.mxu0 0.0
    %1702 = vmatpush1.xpose.msra.mxu0 0.0
    %1703 = vmatprep.subr.mxu0 0.0
    %1704 = vmatpush1.xpose.msra.mxu0 0.0
    %1705 = vmatprep.subr.mxu0 0.0
    %1706 = vmatpush1.xpose.msra.mxu0 0.0
    %1707 = vmatprep.subr.mxu0 0.0
    %1708 = vmatpush1.xpose.msra.mxu0 0.0
    %1709 = vmatprep.subr.mxu0 0.0
    %1710 = vmatpush1.xpose.msra.mxu0 0.0
    %1711 = vmatprep.subr.mxu0 0.0
    %1712 = vmatpush1.xpose.msra.mxu0 0.0
    %1713 = vmatprep.subr.mxu0 0.0
    %1714 = vmatpush1.xpose.msra.mxu0 0.0
    %1715 = vmatprep.mubr.f32.mxu0 0.0
    %1716 = vmatmul.mubr.f32.gmra.mrb[0].mxu0 %v1573
    %v1717 = vpop.f32.mrb[0].mxu0
    %v1718 = vadd.f32 0.0, %v1717
    %v1719 = vpop.f32.mrb[0].mxu0
    %1720 = vdwg.mxu0
    %1721 = vrot.lane.b32.xlu0 %v225, 112
    %v1722 = vpop.permute.xlu0 %1721
    %v1723 = vsel %vm448, %v1722, 0
    %1725 = vmatprep.subr.mxu0 0.0
    %1726 = vmatpush1.xpose.msra.mxu0 %v1723
    %1727 = vmatprep.subr.mxu0 0.0
    %1728 = vmatpush1.xpose.msra.mxu0 0.0
    %1729 = vmatprep.subr.mxu0 0.0
    %1730 = vmatpush1.xpose.msra.mxu0 0.0
    %1731 = vmatprep.subr.mxu0 0.0
    %1732 = vmatpush1.xpose.msra.mxu0 0.0
    %1733 = vmatprep.subr.mxu0 0.0
    %1734 = vmatpush1.xpose.msra.mxu0 0.0
    %1735 = vmatprep.subr.mxu0 0.0
    %1736 = vmatpush1.xpose.msra.mxu0 0.0
    %1737 = vmatprep.subr.mxu0 0.0
    %1738 = vmatpush1.xpose.msra.mxu0 0.0
    %1739 = vmatprep.subr.mxu0 0.0
    %1740 = vmatpush1.xpose.msra.mxu0 0.0
    %1741 = vmatprep.subr.mxu0 0.0
    %1742 = vmatpush1.xpose.msra.mxu0 0.0
    %1743 = vmatprep.subr.mxu0 0.0
    %1744 = vmatpush1.xpose.msra.mxu0 0.0
    %1745 = vmatprep.subr.mxu0 0.0
    %1746 = vmatpush1.xpose.msra.mxu0 0.0
    %1747 = vmatprep.subr.mxu0 0.0
    %1748 = vmatpush1.xpose.msra.mxu0 0.0
    %1749 = vmatprep.subr.mxu0 0.0
    %1750 = vmatpush1.xpose.msra.mxu0 0.0
    %1751 = vmatprep.subr.mxu0 0.0
    %1752 = vmatpush1.xpose.msra.mxu0 0.0
    %1753 = vmatprep.subr.mxu0 0.0
    %1754 = vmatpush1.xpose.msra.mxu0 0.0
    %1755 = vmatprep.subr.mxu0 0.0
    %1756 = vmatpush1.xpose.msra.mxu0 0.0
    %1757 = vmatprep.subr.mxu0 0.0
    %1758 = vmatpush1.xpose.msra.mxu0 0.0
    %1759 = vmatprep.subr.mxu0 0.0
    %1760 = vmatpush1.xpose.msra.mxu0 0.0
    %1761 = vmatprep.subr.mxu0 0.0
    %1762 = vmatpush1.xpose.msra.mxu0 0.0
    %1763 = vmatprep.subr.mxu0 0.0
    %1764 = vmatpush1.xpose.msra.mxu0 0.0
    %1765 = vmatprep.subr.mxu0 0.0
    %1766 = vmatpush1.xpose.msra.mxu0 0.0
    %1767 = vmatprep.subr.mxu0 0.0
    %1768 = vmatpush1.xpose.msra.mxu0 0.0
    %1769 = vmatprep.subr.mxu0 0.0
    %1770 = vmatpush1.xpose.msra.mxu0 0.0
    %1771 = vmatprep.subr.mxu0 0.0
    %1772 = vmatpush1.xpose.msra.mxu0 0.0
    %1773 = vmatprep.subr.mxu0 0.0
    %1774 = vmatpush1.xpose.msra.mxu0 0.0
    %1775 = vmatprep.subr.mxu0 0.0
    %1776 = vmatpush1.xpose.msra.mxu0 0.0
    %1777 = vmatprep.subr.mxu0 0.0
    %1778 = vmatpush1.xpose.msra.mxu0 0.0
    %1779 = vmatprep.subr.mxu0 0.0
    %1780 = vmatpush1.xpose.msra.mxu0 0.0
    %1781 = vmatprep.subr.mxu0 0.0
    %1782 = vmatpush1.xpose.msra.mxu0 0.0
    %1783 = vmatprep.subr.mxu0 0.0
    %1784 = vmatpush1.xpose.msra.mxu0 0.0
    %1785 = vmatprep.subr.mxu0 0.0
    %1786 = vmatpush1.xpose.msra.mxu0 0.0
    %1787 = vmatprep.subr.mxu0 0.0
    %1788 = vmatpush1.xpose.msra.mxu0 0.0
    %1789 = vmatprep.mubr.f32.mxu0 0.0
    %1790 = vmatmul.mubr.f32.gmra.mrb[0].mxu0 %v1573
    %v1791 = vpop.f32.mrb[0].mxu0
    %v1792 = vadd.f32 %v67, %v1791
    %v1793 = vpop.f32.mrb[0].mxu0
    %1794 = vdwg.mxu0
    %v1795 = vsel %vm671, %v1644, -inf
    %1796 = vmax.xlane.f32.xlu0 %v1795
    %v1797 = vpop.xlane.xlu0 %1796
    %v1798 = vsel %vm671, %v1718, -inf
    %1799 = vmax.xlane.f32.xlu0 %v1798
    %v1800 = vpop.xlane.xlu0 %1799
    %v1801 = vsel %vm448, %v1792, -inf
    %1802 = vmax.xlane.f32.xlu0 %v1801
    %v1803 = vpop.xlane.xlu0 %1802
    %v1804 = vmax.f32 %v1800, %v1803
    %v1805 = vmax.f32 %v1797, %v1804
    %v1806 = vsub.f32 %v1644, %v1805
    %v1807 = vmul.f32 %v1806, 1.442695
    %v1808 = vpow.pop %v1807
    %v1809 = vsub.f32 %v1718, %v1805
    %v1810 = vmul.f32 %v1809, 1.442695
    %v1811 = vpow.pop %v1810
    %v1812 = vsub.f32 %v1792, %v1805
    %v1813 = vmul.f32 %v1812, 1.442695
    %v1814 = vpow.pop %v1813
    %v1815 = vsel %vm671, %v1808, 0.0
    %1816 = vadd.xlane.f32.xlu0 %v1815
    %v1817 = vpop.xlane.xlu0 %1816
    %v1818 = vsel %vm671, %v1811, 0.0
    %1819 = vadd.xlane.f32.xlu0 %v1818
    %v1820 = vpop.xlane.xlu0 %1819
    %v1821 = vadd.f32 %v1817, %v1820
    %v1822 = vsel %vm448, %v1814, 0.0
    %1823 = vadd.xlane.f32.xlu0 %v1822
    %v1824 = vpop.xlane.xlu0 %1823
    %v1825 = vadd.f32 %v1821, %v1824
    %1826 = vrot.lane.b32.xlu0 %v444, 112
    %v1827 = vpop.permute.xlu0 %1826
    %v1829 = vsel %vm671, %v1811, 0
    %v1831 = vsel %vm706, %v1827, 0
    %1833 = vmatprep.subr.mxu0 0.0
    %1834 = vmatpush1.msra.mxu0 %v1831
    %1835 = vmatprep.subr.mxu0 0.0
    %1836 = vmatpush1.msra.mxu0 0.0
    %1837 = vmatprep.subr.mxu0 0.0
    %1838 = vmatpush1.msra.mxu0 0.0
    %1839 = vmatprep.subr.mxu0 0.0
    %1840 = vmatpush1.msra.mxu0 0.0
    %1841 = vmatprep.subr.mxu0 0.0
    %1842 = vmatpush1.msra.mxu0 0.0
    %1843 = vmatprep.subr.mxu0 0.0
    %1844 = vmatpush1.msra.mxu0 0.0
    %1845 = vmatprep.subr.mxu0 0.0
    %1846 = vmatpush1.msra.mxu0 0.0
    %1847 = vmatprep.subr.mxu0 0.0
    %1848 = vmatpush1.msra.mxu0 0.0
    %1849 = vmatprep.subr.mxu0 0.0
    %1850 = vmatpush1.msra.mxu0 0.0
    %1851 = vmatprep.subr.mxu0 0.0
    %1852 = vmatpush1.msra.mxu0 0.0
    %1853 = vmatprep.subr.mxu0 0.0
    %1854 = vmatpush1.msra.mxu0 0.0
    %1855 = vmatprep.subr.mxu0 0.0
    %1856 = vmatpush1.msra.mxu0 0.0
    %1857 = vmatprep.subr.mxu0 0.0
    %1858 = vmatpush1.msra.mxu0 0.0
    %1859 = vmatprep.subr.mxu0 0.0
    %1860 = vmatpush1.msra.mxu0 0.0
    %1861 = vmatprep.subr.mxu0 0.0
    %1862 = vmatpush1.msra.mxu0 0.0
    %1863 = vmatprep.subr.mxu0 0.0
    %1864 = vmatpush1.msra.mxu0 0.0
    %1865 = vmatprep.subr.mxu0 0.0
    %1866 = vmatpush1.msra.mxu0 0.0
    %1867 = vmatprep.subr.mxu0 0.0
    %1868 = vmatpush1.msra.mxu0 0.0
    %1869 = vmatprep.subr.mxu0 0.0
    %1870 = vmatpush1.msra.mxu0 0.0
    %1871 = vmatprep.subr.mxu0 0.0
    %1872 = vmatpush1.msra.mxu0 0.0
    %1873 = vmatprep.subr.mxu0 0.0
    %1874 = vmatpush1.msra.mxu0 0.0
    %1875 = vmatprep.subr.mxu0 0.0
    %1876 = vmatpush1.msra.mxu0 0.0
    %1877 = vmatprep.subr.mxu0 0.0
    %1878 = vmatpush1.msra.mxu0 0.0
    %1879 = vmatprep.subr.mxu0 0.0
    %1880 = vmatpush1.msra.mxu0 0.0
    %1881 = vmatprep.subr.mxu0 0.0
    %1882 = vmatpush1.msra.mxu0 0.0
    %1883 = vmatprep.subr.mxu0 0.0
    %1884 = vmatpush1.msra.mxu0 0.0
    %1885 = vmatprep.subr.mxu0 0.0
    %1886 = vmatpush1.msra.mxu0 0.0
    %1887 = vmatprep.subr.mxu0 0.0
    %1888 = vmatpush1.msra.mxu0 0.0
    %1889 = vmatprep.subr.mxu0 0.0
    %1890 = vmatpush1.msra.mxu0 0.0
    %1891 = vmatprep.subr.mxu0 0.0
    %1892 = vmatpush1.msra.mxu0 0.0
    %1893 = vmatprep.subr.mxu0 0.0
    %1894 = vmatpush1.msra.mxu0 0.0
    %1895 = vmatprep.subr.mxu0 0.0
    %1896 = vmatpush1.msra.mxu0 0.0
    %1897 = vmatprep.mubr.f32.mxu0 0.0
    %1898 = vmatmul.mubr.f32.gmra.mrb[0].mxu0 %v1829
    %v1899 = vpop.f32.mrb[0].mxu0
    %v1900 = vadd.f32 0.0, %v1899
    %v1901 = vpop.f32.mrb[0].mxu0
    %1902 = vdwg.mxu0
    %1903 = vrot.lane.b32.xlu0 %v71, 112
    %v1904 = vpop.permute.xlu0 %1903
    %v1906 = vsel %vm671, %v1808, 0
    %v1908 = vsel %vm706, %v1904, 0
    %1910 = vmatprep.subr.mxu0 0.0
    %1911 = vmatpush1.msra.mxu0 %v1908
    %1912 = vmatprep.subr.mxu0 0.0
    %1913 = vmatpush1.msra.mxu0 0.0
    %1914 = vmatprep.subr.mxu0 0.0
    %1915 = vmatpush1.msra.mxu0 0.0
    %1916 = vmatprep.subr.mxu0 0.0
    %1917 = vmatpush1.msra.mxu0 0.0
    %1918 = vmatprep.subr.mxu0 0.0
    %1919 = vmatpush1.msra.mxu0 0.0
    %1920 = vmatprep.subr.mxu0 0.0
    %1921 = vmatpush1.msra.mxu0 0.0
    %1922 = vmatprep.subr.mxu0 0.0
    %1923 = vmatpush1.msra.mxu0 0.0
    %1924 = vmatprep.subr.mxu0 0.0
    %1925 = vmatpush1.msra.mxu0 0.0
    %1926 = vmatprep.subr.mxu0 0.0
    %1927 = vmatpush1.msra.mxu0 0.0
    %1928 = vmatprep.subr.mxu0 0.0
    %1929 = vmatpush1.msra.mxu0 0.0
    %1930 = vmatprep.subr.mxu0 0.0
    %1931 = vmatpush1.msra.mxu0 0.0
    %1932 = vmatprep.subr.mxu0 0.0
    %1933 = vmatpush1.msra.mxu0 0.0
    %1934 = vmatprep.subr.mxu0 0.0
    %1935 = vmatpush1.msra.mxu0 0.0
    %1936 = vmatprep.subr.mxu0 0.0
    %1937 = vmatpush1.msra.mxu0 0.0
    %1938 = vmatprep.subr.mxu0 0.0
    %1939 = vmatpush1.msra.mxu0 0.0
    %1940 = vmatprep.subr.mxu0 0.0
    %1941 = vmatpush1.msra.mxu0 0.0
    %1942 = vmatprep.subr.mxu0 0.0
    %1943 = vmatpush1.msra.mxu0 0.0
    %1944 = vmatprep.subr.mxu0 0.0
    %1945 = vmatpush1.msra.mxu0 0.0
    %1946 = vmatprep.subr.mxu0 0.0
    %1947 = vmatpush1.msra.mxu0 0.0
    %1948 = vmatprep.subr.mxu0 0.0
    %1949 = vmatpush1.msra.mxu0 0.0
    %1950 = vmatprep.subr.mxu0 0.0
    %1951 = vmatpush1.msra.mxu0 0.0
    %1952 = vmatprep.subr.mxu0 0.0
    %1953 = vmatpush1.msra.mxu0 0.0
    %1954 = vmatprep.subr.mxu0 0.0
    %1955 = vmatpush1.msra.mxu0 0.0
    %1956 = vmatprep.subr.mxu0 0.0
    %1957 = vmatpush1.msra.mxu0 0.0
    %1958 = vmatprep.subr.mxu0 0.0
    %1959 = vmatpush1.msra.mxu0 0.0
    %1960 = vmatprep.subr.mxu0 0.0
    %1961 = vmatpush1.msra.mxu0 0.0
    %1962 = vmatprep.subr.mxu0 0.0
    %1963 = vmatpush1.msra.mxu0 0.0
    %1964 = vmatprep.subr.mxu0 0.0
    %1965 = vmatpush1.msra.mxu0 0.0
    %1966 = vmatprep.subr.mxu0 0.0
    %1967 = vmatpush1.msra.mxu0 0.0
    %1968 = vmatprep.subr.mxu0 0.0
    %1969 = vmatpush1.msra.mxu0 0.0
    %1970 = vmatprep.subr.mxu0 0.0
    %1971 = vmatpush1.msra.mxu0 0.0
    %1972 = vmatprep.subr.mxu0 0.0
    %1973 = vmatpush1.msra.mxu0 0.0
    %1974 = vmatprep.mubr.f32.mxu0 0.0
    %1975 = vmatmul.mubr.f32.gmra.mrb[0].mxu0 %v1906
    %v1976 = vpop.f32.mrb[0].mxu0
    %v1977 = vadd.f32 %v1900, %v1976
    %v1978 = vpop.f32.mrb[0].mxu0
    %1979 = vdwg.mxu0
    %1980 = vrot.lane.b32.xlu0 %v301, 112
    %v1981 = vpop.permute.xlu0 %1980
    %v1984 = vsel %vm448, %v1814, 0
    %1986 = vmatprep.subr.mxu0 0.0
    %1987 = vmatpush1.msra.mxu0 %v1981
    %1988 = vmatprep.subr.mxu0 0.0
    %1989 = vmatpush1.msra.mxu0 0.0
    %1990 = vmatprep.subr.mxu0 0.0
    %1991 = vmatpush1.msra.mxu0 0.0
    %1992 = vmatprep.subr.mxu0 0.0
    %1993 = vmatpush1.msra.mxu0 0.0
    %1994 = vmatprep.subr.mxu0 0.0
    %1995 = vmatpush1.msra.mxu0 0.0
    %1996 = vmatprep.subr.mxu0 0.0
    %1997 = vmatpush1.msra.mxu0 0.0
    %1998 = vmatprep.subr.mxu0 0.0
    %1999 = vmatpush1.msra.mxu0 0.0
    %2000 = vmatprep.subr.mxu0 0.0
    %2001 = vmatpush1.msra.mxu0 0.0
    %2002 = vmatprep.subr.mxu0 0.0
    %2003 = vmatpush1.msra.mxu0 0.0
    %2004 = vmatprep.subr.mxu0 0.0
    %2005 = vmatpush1.msra.mxu0 0.0
    %2006 = vmatprep.subr.mxu0 0.0
    %2007 = vmatpush1.msra.mxu0 0.0
    %2008 = vmatprep.subr.mxu0 0.0
    %2009 = vmatpush1.msra.mxu0 0.0
    %2010 = vmatprep.subr.mxu0 0.0
    %2011 = vmatpush1.msra.mxu0 0.0
    %2012 = vmatprep.subr.mxu0 0.0
    %2013 = vmatpush1.msra.mxu0 0.0
    %2014 = vmatprep.subr.mxu0 0.0
    %2015 = vmatpush1.msra.mxu0 0.0
    %2016 = vmatprep.subr.mxu0 0.0
    %2017 = vmatpush1.msra.mxu0 0.0
    %2018 = vmatprep.subr.mxu0 0.0
    %2019 = vmatpush1.msra.mxu0 0.0
    %2020 = vmatprep.subr.mxu0 0.0
    %2021 = vmatpush1.msra.mxu0 0.0
    %2022 = vmatprep.subr.mxu0 0.0
    %2023 = vmatpush1.msra.mxu0 0.0
    %2024 = vmatprep.subr.mxu0 0.0
    %2025 = vmatpush1.msra.mxu0 0.0
    %2026 = vmatprep.subr.mxu0 0.0
    %2027 = vmatpush1.msra.mxu0 0.0
    %2028 = vmatprep.subr.mxu0 0.0
    %2029 = vmatpush1.msra.mxu0 0.0
    %2030 = vmatprep.subr.mxu0 0.0
    %2031 = vmatpush1.msra.mxu0 0.0
    %2032 = vmatprep.subr.mxu0 0.0
    %2033 = vmatpush1.msra.mxu0 0.0
    %2034 = vmatprep.subr.mxu0 0.0
    %2035 = vmatpush1.msra.mxu0 0.0
    %2036 = vmatprep.subr.mxu0 0.0
    %2037 = vmatpush1.msra.mxu0 0.0
    %2038 = vmatprep.subr.mxu0 0.0
    %2039 = vmatpush1.msra.mxu0 0.0
    %2040 = vmatprep.subr.mxu0 0.0
    %2041 = vmatpush1.msra.mxu0 0.0
    %2042 = vmatprep.subr.mxu0 0.0
    %2043 = vmatpush1.msra.mxu0 0.0
    %2044 = vmatprep.subr.mxu0 0.0
    %2045 = vmatpush1.msra.mxu0 0.0
    %2046 = vmatprep.subr.mxu0 0.0
    %2047 = vmatpush1.msra.mxu0 0.0
    %2048 = vmatprep.subr.mxu0 0.0
    %2049 = vmatpush1.msra.mxu0 0.0
    %2050 = vmatprep.mubr.f32.mxu0 0.0
    %2051 = vmatmul.mubr.f32.gmra.mrb[0].mxu0 %v1984
    %v2052 = vpop.f32.mrb[0].mxu0
    %v2053 = vadd.f32 0.0, %v2052
    %v2054 = vpop.f32.mrb[0].mxu0
    %2055 = vdwg.mxu0
    %v2056 = vadd.f32 %v1977, %v2053
    %v2057 = vrcp.pop %v1825
    %v2058 = vmul.f32 %v2056, %v2057
    %v2060 = vsel %vm448, %v2058, 0
    %2062 = vmatprep.subr.mxu0 0.0
    %2063 = vmatpush1.msra.mxu0 %v60
    %2064 = vmatprep.subr.mxu0 0.0
    %2065 = vmatpush1.msra.mxu0 0.0
    %2066 = vmatprep.subr.mxu0 0.0
    %2067 = vmatpush1.msra.mxu0 0.0
    %2068 = vmatprep.subr.mxu0 0.0
    %2069 = vmatpush1.msra.mxu0 0.0
    %2070 = vmatprep.subr.mxu0 0.0
    %2071 = vmatpush1.msra.mxu0 0.0
    %2072 = vmatprep.subr.mxu0 0.0
    %2073 = vmatpush1.msra.mxu0 0.0
    %2074 = vmatprep.subr.mxu0 0.0
    %2075 = vmatpush1.msra.mxu0 0.0
    %2076 = vmatprep.subr.mxu0 0.0
    %2077 = vmatpush1.msra.mxu0 0.0
    %2078 = vmatprep.subr.mxu0 0.0
    %2079 = vmatpush1.msra.mxu0 0.0
    %2080 = vmatprep.subr.mxu0 0.0
    %2081 = vmatpush1.msra.mxu0 0.0
    %2082 = vmatprep.subr.mxu0 0.0
    %2083 = vmatpush1.msra.mxu0 0.0
    %2084 = vmatprep.subr.mxu0 0.0
    %2085 = vmatpush1.msra.mxu0 0.0
    %2086 = vmatprep.subr.mxu0 0.0
    %2087 = vmatpush1.msra.mxu0 0.0
    %2088 = vmatprep.subr.mxu0 0.0
    %2089 = vmatpush1.msra.mxu0 0.0
    %2090 = vmatprep.subr.mxu0 0.0
    %2091 = vmatpush1.msra.mxu0 0.0
    %2092 = vmatprep.subr.mxu0 0.0
    %2093 = vmatpush1.msra.mxu0 0.0
    %2094 = vmatprep.subr.mxu0 0.0
    %2095 = vmatpush1.msra.mxu0 0.0
    %2096 = vmatprep.subr.mxu0 0.0
    %2097 = vmatpush1.msra.mxu0 0.0
    %2098 = vmatprep.subr.mxu0 0.0
    %2099 = vmatpush1.msra.mxu0 0.0
    %2100 = vmatprep.subr.mxu0 0.0
    %2101 = vmatpush1.msra.mxu0 0.0
    %2102 = vmatprep.subr.mxu0 0.0
    %2103 = vmatpush1.msra.mxu0 0.0
    %2104 = vmatprep.subr.mxu0 0.0
    %2105 = vmatpush1.msra.mxu0 0.0
    %2106 = vmatprep.subr.mxu0 0.0
    %2107 = vmatpush1.msra.mxu0 0.0
    %2108 = vmatprep.subr.mxu0 0.0
    %2109 = vmatpush1.msra.mxu0 0.0
    %2110 = vmatprep.subr.mxu0 0.0
    %2111 = vmatpush1.msra.mxu0 0.0
    %2112 = vmatprep.subr.mxu0 0.0
    %2113 = vmatpush1.msra.mxu0 0.0
    %2114 = vmatprep.subr.mxu0 0.0
    %2115 = vmatpush1.msra.mxu0 0.0
    %2116 = vmatprep.subr.mxu0 0.0
    %2117 = vmatpush1.msra.mxu0 0.0
    %2118 = vmatprep.subr.mxu0 0.0
    %2119 = vmatpush1.msra.mxu0 0.0
    %2120 = vmatprep.subr.mxu0 0.0
    %2121 = vmatpush1.msra.mxu0 0.0
    %2122 = vmatprep.subr.mxu0 0.0
    %2123 = vmatpush1.msra.mxu0 0.0
    %2124 = vmatprep.subr.mxu0 0.0
    %2125 = vmatpush1.msra.mxu0 0.0
    %2126 = vmatprep.mubr.f32.mxu0 0.0
    %2127 = vmatmul.mubr.f32.gmra.mrb[0].mxu0 %v2060
    %v2128 = vpop.f32.mrb[0].mxu0
    %v2129 = vadd.f32 0.0, %v2128
    %v2130 = vpop.f32.mrb[0].mxu0
    %2131 = vdwg.mxu0
    %v2132 = vadd.f32 %v1566, %v2129
    %2133 = vrot.lane.b32.xlu0 %v447, 104
    %v2134 = vpop.permute.xlu0 %2133
    %2135 = vrot.lane.b32.xlu0 %v70, 104
    %v2136 = vpop.permute.xlu0 %2135
    %v2137 = vsel %vm448, %v2134, 0
    %v2139 = vsel %vm448, %v2136, 0
    %2141 = vmatprep.subr.mxu0 0.0
    %2142 = vmatpush1.xpose.msra.mxu0 %v2139
    %2143 = vmatprep.subr.mxu0 0.0
    %2144 = vmatpush1.xpose.msra.mxu0 0.0
    %2145 = vmatprep.subr.mxu0 0.0
    %2146 = vmatpush1.xpose.msra.mxu0 0.0
    %2147 = vmatprep.subr.mxu0 0.0
    %2148 = vmatpush1.xpose.msra.mxu0 0.0
    %2149 = vmatprep.subr.mxu0 0.0
    %2150 = vmatpush1.xpose.msra.mxu0 0.0
    %2151 = vmatprep.subr.mxu0 0.0
    %2152 = vmatpush1.xpose.msra.mxu0 0.0
    %2153 = vmatprep.subr.mxu0 0.0
    %2154 = vmatpush1.xpose.msra.mxu0 0.0
    %2155 = vmatprep.subr.mxu0 0.0
    %2156 = vmatpush1.xpose.msra.mxu0 0.0
    %2157 = vmatprep.subr.mxu0 0.0
    %2158 = vmatpush1.xpose.msra.mxu0 0.0
    %2159 = vmatprep.subr.mxu0 0.0
    %2160 = vmatpush1.xpose.msra.mxu0 0.0
    %2161 = vmatprep.subr.mxu0 0.0
    %2162 = vmatpush1.xpose.msra.mxu0 0.0
    %2163 = vmatprep.subr.mxu0 0.0
    %2164 = vmatpush1.xpose.msra.mxu0 0.0
    %2165 = vmatprep.subr.mxu0 0.0
    %2166 = vmatpush1.xpose.msra.mxu0 0.0
    %2167 = vmatprep.subr.mxu0 0.0
    %2168 = vmatpush1.xpose.msra.mxu0 0.0
    %2169 = vmatprep.subr.mxu0 0.0
    %2170 = vmatpush1.xpose.msra.mxu0 0.0
    %2171 = vmatprep.subr.mxu0 0.0
    %2172 = vmatpush1.xpose.msra.mxu0 0.0
    %2173 = vmatprep.subr.mxu0 0.0
    %2174 = vmatpush1.xpose.msra.mxu0 0.0
    %2175 = vmatprep.subr.mxu0 0.0
    %2176 = vmatpush1.xpose.msra.mxu0 0.0
    %2177 = vmatprep.subr.mxu0 0.0
    %2178 = vmatpush1.xpose.msra.mxu0 0.0
    %2179 = vmatprep.subr.mxu0 0.0
    %2180 = vmatpush1.xpose.msra.mxu0 0.0
    %2181 = vmatprep.subr.mxu0 0.0
    %2182 = vmatpush1.xpose.msra.mxu0 0.0
    %2183 = vmatprep.subr.mxu0 0.0
    %2184 = vmatpush1.xpose.msra.mxu0 0.0
    %2185 = vmatprep.subr.mxu0 0.0
    %2186 = vmatpush1.xpose.msra.mxu0 0.0
    %2187 = vmatprep.subr.mxu0 0.0
    %2188 = vmatpush1.xpose.msra.mxu0 0.0
    %2189 = vmatprep.subr.mxu0 0.0
    %2190 = vmatpush1.xpose.msra.mxu0 0.0
    %2191 = vmatprep.subr.mxu0 0.0
    %2192 = vmatpush1.xpose.msra.mxu0 0.0
    %2193 = vmatprep.subr.mxu0 0.0
    %2194 = vmatpush1.xpose.msra.mxu0 0.0
    %2195 = vmatprep.subr.mxu0 0.0
    %2196 = vmatpush1.xpose.msra.mxu0 0.0
    %2197 = vmatprep.subr.mxu0 0.0
    %2198 = vmatpush1.xpose.msra.mxu0 0.0
    %2199 = vmatprep.subr.mxu0 0.0
    %2200 = vmatpush1.xpose.msra.mxu0 0.0
    %2201 = vmatprep.subr.mxu0 0.0
    %2202 = vmatpush1.xpose.msra.mxu0 0.0
    %2203 = vmatprep.subr.mxu0 0.0
    %2204 = vmatpush1.xpose.msra.mxu0 0.0
    %2205 = vmatprep.mubr.f32.mxu0 0.0
    %2206 = vmatmul.mubr.f32.gmra.mrb[0].mxu0 %v2137
    %v2207 = vpop.f32.mrb[0].mxu0
    %v2208 = vadd.f32 0.0, %v2207
    %v2209 = vpop.f32.mrb[0].mxu0
    %2210 = vdwg.mxu0
    %2211 = vrot.lane.b32.xlu0 %v374, 104
    %v2212 = vpop.permute.xlu0 %2211
    %v2213 = vsel %vm448, %v2212, 0
    %2215 = vmatprep.subr.mxu0 0.0
    %2216 = vmatpush1.xpose.msra.mxu0 %v2213
    %2217 = vmatprep.subr.mxu0 0.0
    %2218 = vmatpush1.xpose.msra.mxu0 0.0
    %2219 = vmatprep.subr.mxu0 0.0
    %2220 = vmatpush1.xpose.msra.mxu0 0.0
    %2221 = vmatprep.subr.mxu0 0.0
    %2222 = vmatpush1.xpose.msra.mxu0 0.0
    %2223 = vmatprep.subr.mxu0 0.0
    %2224 = vmatpush1.xpose.msra.mxu0 0.0
    %2225 = vmatprep.subr.mxu0 0.0
    %2226 = vmatpush1.xpose.msra.mxu0 0.0
    %2227 = vmatprep.subr.mxu0 0.0
    %2228 = vmatpush1.xpose.msra.mxu0 0.0
    %2229 = vmatprep.subr.mxu0 0.0
    %2230 = vmatpush1.xpose.msra.mxu0 0.0
    %2231 = vmatprep.subr.mxu0 0.0
    %2232 = vmatpush1.xpose.msra.mxu0 0.0
    %2233 = vmatprep.subr.mxu0 0.0
    %2234 = vmatpush1.xpose.msra.mxu0 0.0
    %2235 = vmatprep.subr.mxu0 0.0
    %2236 = vmatpush1.xpose.msra.mxu0 0.0
    %2237 = vmatprep.subr.mxu0 0.0
    %2238 = vmatpush1.xpose.msra.mxu0 0.0
    %2239 = vmatprep.subr.mxu0 0.0
    %2240 = vmatpush1.xpose.msra.mxu0 0.0
    %2241 = vmatprep.subr.mxu0 0.0
    %2242 = vmatpush1.xpose.msra.mxu0 0.0
    %2243 = vmatprep.subr.mxu0 0.0
    %2244 = vmatpush1.xpose.msra.mxu0 0.0
    %2245 = vmatprep.subr.mxu0 0.0
    %2246 = vmatpush1.xpose.msra.mxu0 0.0
    %2247 = vmatprep.subr.mxu0 0.0
    %2248 = vmatpush1.xpose.msra.mxu0 0.0
    %2249 = vmatprep.subr.mxu0 0.0
    %2250 = vmatpush1.xpose.msra.mxu0 0.0
    %2251 = vmatprep.subr.mxu0 0.0
    %2252 = vmatpush1.xpose.msra.mxu0 0.0
    %2253 = vmatprep.subr.mxu0 0.0
    %2254 = vmatpush1.xpose.msra.mxu0 0.0
    %2255 = vmatprep.subr.mxu0 0.0
    %2256 = vmatpush1.xpose.msra.mxu0 0.0
    %2257 = vmatprep.subr.mxu0 0.0
    %2258 = vmatpush1.xpose.msra.mxu0 0.0
    %2259 = vmatprep.subr.mxu0 0.0
    %2260 = vmatpush1.xpose.msra.mxu0 0.0
    %2261 = vmatprep.subr.mxu0 0.0
    %2262 = vmatpush1.xpose.msra.mxu0 0.0
    %2263 = vmatprep.subr.mxu0 0.0
    %2264 = vmatpush1.xpose.msra.mxu0 0.0
    %2265 = vmatprep.subr.mxu0 0.0
    %2266 = vmatpush1.xpose.msra.mxu0 0.0
    %2267 = vmatprep.subr.mxu0 0.0
    %2268 = vmatpush1.xpose.msra.mxu0 0.0
    %2269 = vmatprep.subr.mxu0 0.0
    %2270 = vmatpush1.xpose.msra.mxu0 0.0
    %2271 = vmatprep.subr.mxu0 0.0
    %2272 = vmatpush1.xpose.msra.mxu0 0.0
    %2273 = vmatprep.subr.mxu0 0.0
    %2274 = vmatpush1.xpose.msra.mxu0 0.0
    %2275 = vmatprep.subr.mxu0 0.0
    %2276 = vmatpush1.xpose.msra.mxu0 0.0
    %2277 = vmatprep.subr.mxu0 0.0
    %2278 = vmatpush1.xpose.msra.mxu0 0.0
    %2279 = vmatprep.mubr.f32.mxu0 0.0
    %2280 = vmatmul.mubr.f32.gmra.mrb[0].mxu0 %v2137
    %v2281 = vpop.f32.mrb[0].mxu0
    %v2282 = vadd.f32 0.0, %v2281
    %v2283 = vpop.f32.mrb[0].mxu0
    %2284 = vdwg.mxu0
    %2285 = vrot.lane.b32.xlu0 %v225, 104
    %v2286 = vpop.permute.xlu0 %2285
    %v2287 = vsel %vm448, %v2286, 0
    %2289 = vmatprep.subr.mxu0 0.0
    %2290 = vmatpush1.xpose.msra.mxu0 %v2287
    %2291 = vmatprep.subr.mxu0 0.0
    %2292 = vmatpush1.xpose.msra.mxu0 0.0
    %2293 = vmatprep.subr.mxu0 0.0
    %2294 = vmatpush1.xpose.msra.mxu0 0.0
    %2295 = vmatprep.subr.mxu0 0.0
    %2296 = vmatpush1.xpose.msra.mxu0 0.0
    %2297 = vmatprep.subr.mxu0 0.0
    %2298 = vmatpush1.xpose.msra.mxu0 0.0
    %2299 = vmatprep.subr.mxu0 0.0
    %2300 = vmatpush1.xpose.msra.mxu0 0.0
    %2301 = vmatprep.subr.mxu0 0.0
    %2302 = vmatpush1.xpose.msra.mxu0 0.0
    %2303 = vmatprep.subr.mxu0 0.0
    %2304 = vmatpush1.xpose.msra.mxu0 0.0
    %2305 = vmatprep.subr.mxu0 0.0
    %2306 = vmatpush1.xpose.msra.mxu0 0.0
    %2307 = vmatprep.subr.mxu0 0.0
    %2308 = vmatpush1.xpose.msra.mxu0 0.0
    %2309 = vmatprep.subr.mxu0 0.0
    %2310 = vmatpush1.xpose.msra.mxu0 0.0
    %2311 = vmatprep.subr.mxu0 0.0
    %2312 = vmatpush1.xpose.msra.mxu0 0.0
    %2313 = vmatprep.subr.mxu0 0.0
    %2314 = vmatpush1.xpose.msra.mxu0 0.0
    %2315 = vmatprep.subr.mxu0 0.0
    %2316 = vmatpush1.xpose.msra.mxu0 0.0
    %2317 = vmatprep.subr.mxu0 0.0
    %2318 = vmatpush1.xpose.msra.mxu0 0.0
    %2319 = vmatprep.subr.mxu0 0.0
    %2320 = vmatpush1.xpose.msra.mxu0 0.0
    %2321 = vmatprep.subr.mxu0 0.0
    %2322 = vmatpush1.xpose.msra.mxu0 0.0
    %2323 = vmatprep.subr.mxu0 0.0
    %2324 = vmatpush1.xpose.msra.mxu0 0.0
    %2325 = vmatprep.subr.mxu0 0.0
    %2326 = vmatpush1.xpose.msra.mxu0 0.0
    %2327 = vmatprep.subr.mxu0 0.0
    %2328 = vmatpush1.xpose.msra.mxu0 0.0
    %2329 = vmatprep.subr.mxu0 0.0
    %2330 = vmatpush1.xpose.msra.mxu0 0.0
    %2331 = vmatprep.subr.mxu0 0.0
    %2332 = vmatpush1.xpose.msra.mxu0 0.0
    %2333 = vmatprep.subr.mxu0 0.0
    %2334 = vmatpush1.xpose.msra.mxu0 0.0
    %2335 = vmatprep.subr.mxu0 0.0
    %2336 = vmatpush1.xpose.msra.mxu0 0.0
    %2337 = vmatprep.subr.mxu0 0.0
    %2338 = vmatpush1.xpose.msra.mxu0 0.0
    %2339 = vmatprep.subr.mxu0 0.0
    %2340 = vmatpush1.xpose.msra.mxu0 0.0
    %2341 = vmatprep.subr.mxu0 0.0
    %2342 = vmatpush1.xpose.msra.mxu0 0.0
    %2343 = vmatprep.subr.mxu0 0.0
    %2344 = vmatpush1.xpose.msra.mxu0 0.0
    %2345 = vmatprep.subr.mxu0 0.0
    %2346 = vmatpush1.xpose.msra.mxu0 0.0
    %2347 = vmatprep.subr.mxu0 0.0
    %2348 = vmatpush1.xpose.msra.mxu0 0.0
    %2349 = vmatprep.subr.mxu0 0.0
    %2350 = vmatpush1.xpose.msra.mxu0 0.0
    %2351 = vmatprep.subr.mxu0 0.0
    %2352 = vmatpush1.xpose.msra.mxu0 0.0
    %2353 = vmatprep.mubr.f32.mxu0 0.0
    %2354 = vmatmul.mubr.f32.gmra.mrb[0].mxu0 %v2137
    %v2355 = vpop.f32.mrb[0].mxu0
    %v2356 = vadd.f32 %v67, %v2355
    %v2357 = vpop.f32.mrb[0].mxu0
    %2358 = vdwg.mxu0
    %v2359 = vsel %vm671, %v2208, -inf
    %2360 = vmax.xlane.f32.xlu0 %v2359
    %v2361 = vpop.xlane.xlu0 %2360
    %v2362 = vsel %vm671, %v2282, -inf
    %2363 = vmax.xlane.f32.xlu0 %v2362
    %v2364 = vpop.xlane.xlu0 %2363
    %v2365 = vsel %vm448, %v2356, -inf
    %2366 = vmax.xlane.f32.xlu0 %v2365
    %v2367 = vpop.xlane.xlu0 %2366
    %v2368 = vmax.f32 %v2364, %v2367
    %v2369 = vmax.f32 %v2361, %v2368
    %v2370 = vsub.f32 %v2208, %v2369
    %v2371 = vmul.f32 %v2370, 1.442695
    %v2372 = vpow.pop %v2371
    %v2373 = vsub.f32 %v2282, %v2369
    %v2374 = vmul.f32 %v2373, 1.442695
    %v2375 = vpow.pop %v2374
    %v2376 = vsub.f32 %v2356, %v2369
    %v2377 = vmul.f32 %v2376, 1.442695
    %v2378 = vpow.pop %v2377
    %v2379 = vsel %vm671, %v2372, 0.0
    %2380 = vadd.xlane.f32.xlu0 %v2379
    %v2381 = vpop.xlane.xlu0 %2380
    %v2382 = vsel %vm671, %v2375, 0.0
    %2383 = vadd.xlane.f32.xlu0 %v2382
    %v2384 = vpop.xlane.xlu0 %2383
    %v2385 = vadd.f32 %v2381, %v2384
    %v2386 = vsel %vm448, %v2378, 0.0
    %2387 = vadd.xlane.f32.xlu0 %v2386
    %v2388 = vpop.xlane.xlu0 %2387
    %v2389 = vadd.f32 %v2385, %v2388
    %2390 = vrot.lane.b32.xlu0 %v444, 104
    %v2391 = vpop.permute.xlu0 %2390
    %v2393 = vsel %vm671, %v2375, 0
    %v2395 = vsel %vm706, %v2391, 0
    %2397 = vmatprep.subr.mxu0 0.0
    %2398 = vmatpush1.msra.mxu0 %v2395
    %2399 = vmatprep.subr.mxu0 0.0
    %2400 = vmatpush1.msra.mxu0 0.0
    %2401 = vmatprep.subr.mxu0 0.0
    %2402 = vmatpush1.msra.mxu0 0.0
    %2403 = vmatprep.subr.mxu0 0.0
    %2404 = vmatpush1.msra.mxu0 0.0
    %2405 = vmatprep.subr.mxu0 0.0
    %2406 = vmatpush1.msra.mxu0 0.0
    %2407 = vmatprep.subr.mxu0 0.0
    %2408 = vmatpush1.msra.mxu0 0.0
    %2409 = vmatprep.subr.mxu0 0.0
    %2410 = vmatpush1.msra.mxu0 0.0
    %2411 = vmatprep.subr.mxu0 0.0
    %2412 = vmatpush1.msra.mxu0 0.0
    %2413 = vmatprep.subr.mxu0 0.0
    %2414 = vmatpush1.msra.mxu0 0.0
    %2415 = vmatprep.subr.mxu0 0.0
    %2416 = vmatpush1.msra.mxu0 0.0
    %2417 = vmatprep.subr.mxu0 0.0
    %2418 = vmatpush1.msra.mxu0 0.0
    %2419 = vmatprep.subr.mxu0 0.0
    %2420 = vmatpush1.msra.mxu0 0.0
    %2421 = vmatprep.subr.mxu0 0.0
    %2422 = vmatpush1.msra.mxu0 0.0
    %2423 = vmatprep.subr.mxu0 0.0
    %2424 = vmatpush1.msra.mxu0 0.0
    %2425 = vmatprep.subr.mxu0 0.0
    %2426 = vmatpush1.msra.mxu0 0.0
    %2427 = vmatprep.subr.mxu0 0.0
    %2428 = vmatpush1.msra.mxu0 0.0
    %2429 = vmatprep.subr.mxu0 0.0
    %2430 = vmatpush1.msra.mxu0 0.0
    %2431 = vmatprep.subr.mxu0 0.0
    %2432 = vmatpush1.msra.mxu0 0.0
    %2433 = vmatprep.subr.mxu0 0.0
    %2434 = vmatpush1.msra.mxu0 0.0
    %2435 = vmatprep.subr.mxu0 0.0
    %2436 = vmatpush1.msra.mxu0 0.0
    %2437 = vmatprep.subr.mxu0 0.0
    %2438 = vmatpush1.msra.mxu0 0.0
    %2439 = vmatprep.subr.mxu0 0.0
    %2440 = vmatpush1.msra.mxu0 0.0
    %2441 = vmatprep.subr.mxu0 0.0
    %2442 = vmatpush1.msra.mxu0 0.0
    %2443 = vmatprep.subr.mxu0 0.0
    %2444 = vmatpush1.msra.mxu0 0.0
    %2445 = vmatprep.subr.mxu0 0.0
    %2446 = vmatpush1.msra.mxu0 0.0
    %2447 = vmatprep.subr.mxu0 0.0
    %2448 = vmatpush1.msra.mxu0 0.0
    %2449 = vmatprep.subr.mxu0 0.0
    %2450 = vmatpush1.msra.mxu0 0.0
    %2451 = vmatprep.subr.mxu0 0.0
    %2452 = vmatpush1.msra.mxu0 0.0
    %2453 = vmatprep.subr.mxu0 0.0
    %2454 = vmatpush1.msra.mxu0 0.0
    %2455 = vmatprep.subr.mxu0 0.0
    %2456 = vmatpush1.msra.mxu0 0.0
    %2457 = vmatprep.subr.mxu0 0.0
    %2458 = vmatpush1.msra.mxu0 0.0
    %2459 = vmatprep.subr.mxu0 0.0
    %2460 = vmatpush1.msra.mxu0 0.0
    %2461 = vmatprep.mubr.f32.mxu0 0.0
    %2462 = vmatmul.mubr.f32.gmra.mrb[0].mxu0 %v2393
    %v2463 = vpop.f32.mrb[0].mxu0
    %v2464 = vadd.f32 0.0, %v2463
    %v2465 = vpop.f32.mrb[0].mxu0
    %2466 = vdwg.mxu0
    %2467 = vrot.lane.b32.xlu0 %v71, 104
    %v2468 = vpop.permute.xlu0 %2467
    %v2470 = vsel %vm671, %v2372, 0
    %v2472 = vsel %vm706, %v2468, 0
    %2474 = vmatprep.subr.mxu0 0.0
    %2475 = vmatpush1.msra.mxu0 %v2472
    %2476 = vmatprep.subr.mxu0 0.0
    %2477 = vmatpush1.msra.mxu0 0.0
    %2478 = vmatprep.subr.mxu0 0.0
    %2479 = vmatpush1.msra.mxu0 0.0
    %2480 = vmatprep.subr.mxu0 0.0
    %2481 = vmatpush1.msra.mxu0 0.0
    %2482 = vmatprep.subr.mxu0 0.0
    %2483 = vmatpush1.msra.mxu0 0.0
    %2484 = vmatprep.subr.mxu0 0.0
    %2485 = vmatpush1.msra.mxu0 0.0
    %2486 = vmatprep.subr.mxu0 0.0
    %2487 = vmatpush1.msra.mxu0 0.0
    %2488 = vmatprep.subr.mxu0 0.0
    %2489 = vmatpush1.msra.mxu0 0.0
    %2490 = vmatprep.subr.mxu0 0.0
    %2491 = vmatpush1.msra.mxu0 0.0
    %2492 = vmatprep.subr.mxu0 0.0
    %2493 = vmatpush1.msra.mxu0 0.0
    %2494 = vmatprep.subr.mxu0 0.0
    %2495 = vmatpush1.msra.mxu0 0.0
    %2496 = vmatprep.subr.mxu0 0.0
    %2497 = vmatpush1.msra.mxu0 0.0
    %2498 = vmatprep.subr.mxu0 0.0
    %2499 = vmatpush1.msra.mxu0 0.0
    %2500 = vmatprep.subr.mxu0 0.0
    %2501 = vmatpush1.msra.mxu0 0.0
    %2502 = vmatprep.subr.mxu0 0.0
    %2503 = vmatpush1.msra.mxu0 0.0
    %2504 = vmatprep.subr.mxu0 0.0
    %2505 = vmatpush1.msra.mxu0 0.0
    %2506 = vmatprep.subr.mxu0 0.0
    %2507 = vmatpush1.msra.mxu0 0.0
    %2508 = vmatprep.subr.mxu0 0.0
    %2509 = vmatpush1.msra.mxu0 0.0
    %2510 = vmatprep.subr.mxu0 0.0
    %2511 = vmatpush1.msra.mxu0 0.0
    %2512 = vmatprep.subr.mxu0 0.0
    %2513 = vmatpush1.msra.mxu0 0.0
    %2514 = vmatprep.subr.mxu0 0.0
    %2515 = vmatpush1.msra.mxu0 0.0
    %2516 = vmatprep.subr.mxu0 0.0
    %2517 = vmatpush1.msra.mxu0 0.0
    %2518 = vmatprep.subr.mxu0 0.0
    %2519 = vmatpush1.msra.mxu0 0.0
    %2520 = vmatprep.subr.mxu0 0.0
    %2521 = vmatpush1.msra.mxu0 0.0
    %2522 = vmatprep.subr.mxu0 0.0
    %2523 = vmatpush1.msra.mxu0 0.0
    %2524 = vmatprep.subr.mxu0 0.0
    %2525 = vmatpush1.msra.mxu0 0.0
    %2526 = vmatprep.subr.mxu0 0.0
    %2527 = vmatpush1.msra.mxu0 0.0
    %2528 = vmatprep.subr.mxu0 0.0
    %2529 = vmatpush1.msra.mxu0 0.0
    %2530 = vmatprep.subr.mxu0 0.0
    %2531 = vmatpush1.msra.mxu0 0.0
    %2532 = vmatprep.subr.mxu0 0.0
    %2533 = vmatpush1.msra.mxu0 0.0
    %2534 = vmatprep.subr.mxu0 0.0
    %2535 = vmatpush1.msra.mxu0 0.0
    %2536 = vmatprep.subr.mxu0 0.0
    %2537 = vmatpush1.msra.mxu0 0.0
    %2538 = vmatprep.mubr.f32.mxu0 0.0
    %2539 = vmatmul.mubr.f32.gmra.mrb[0].mxu0 %v2470
    %v2540 = vpop.f32.mrb[0].mxu0
    %v2541 = vadd.f32 %v2464, %v2540
    %v2542 = vpop.f32.mrb[0].mxu0
    %2543 = vdwg.mxu0
    %2544 = vrot.lane.b32.xlu0 %v301, 104
    %v2545 = vpop.permute.xlu0 %2544
    %v2548 = vsel %vm448, %v2378, 0
    %2550 = vmatprep.subr.mxu0 0.0
    %2551 = vmatpush1.msra.mxu0 %v2545
    %2552 = vmatprep.subr.mxu0 0.0
    %2553 = vmatpush1.msra.mxu0 0.0
    %2554 = vmatprep.subr.mxu0 0.0
    %2555 = vmatpush1.msra.mxu0 0.0
    %2556 = vmatprep.subr.mxu0 0.0
    %2557 = vmatpush1.msra.mxu0 0.0
    %2558 = vmatprep.subr.mxu0 0.0
    %2559 = vmatpush1.msra.mxu0 0.0
    %2560 = vmatprep.subr.mxu0 0.0
    %2561 = vmatpush1.msra.mxu0 0.0
    %2562 = vmatprep.subr.mxu0 0.0
    %2563 = vmatpush1.msra.mxu0 0.0
    %2564 = vmatprep.subr.mxu0 0.0
    %2565 = vmatpush1.msra.mxu0 0.0
    %2566 = vmatprep.subr.mxu0 0.0
    %2567 = vmatpush1.msra.mxu0 0.0
    %2568 = vmatprep.subr.mxu0 0.0
    %2569 = vmatpush1.msra.mxu0 0.0
    %2570 = vmatprep.subr.mxu0 0.0
    %2571 = vmatpush1.msra.mxu0 0.0
    %2572 = vmatprep.subr.mxu0 0.0
    %2573 = vmatpush1.msra.mxu0 0.0
    %2574 = vmatprep.subr.mxu0 0.0
    %2575 = vmatpush1.msra.mxu0 0.0
    %2576 = vmatprep.subr.mxu0 0.0
    %2577 = vmatpush1.msra.mxu0 0.0
    %2578 = vmatprep.subr.mxu0 0.0
    %2579 = vmatpush1.msra.mxu0 0.0
    %2580 = vmatprep.subr.mxu0 0.0
    %2581 = vmatpush1.msra.mxu0 0.0
    %2582 = vmatprep.subr.mxu0 0.0
    %2583 = vmatpush1.msra.mxu0 0.0
    %2584 = vmatprep.subr.mxu0 0.0
    %2585 = vmatpush1.msra.mxu0 0.0
    %2586 = vmatprep.subr.mxu0 0.0
    %2587 = vmatpush1.msra.mxu0 0.0
    %2588 = vmatprep.subr.mxu0 0.0
    %2589 = vmatpush1.msra.mxu0 0.0
    %2590 = vmatprep.subr.mxu0 0.0
    %2591 = vmatpush1.msra.mxu0 0.0
    %2592 = vmatprep.subr.mxu0 0.0
    %2593 = vmatpush1.msra.mxu0 0.0
    %2594 = vmatprep.subr.mxu0 0.0
    %2595 = vmatpush1.msra.mxu0 0.0
    %2596 = vmatprep.subr.mxu0 0.0
    %2597 = vmatpush1.msra.mxu0 0.0
    %2598 = vmatprep.subr.mxu0 0.0
    %2599 = vmatpush1.msra.mxu0 0.0
    %2600 = vmatprep.subr.mxu0 0.0
    %2601 = vmatpush1.msra.mxu0 0.0
    %2602 = vmatprep.subr.mxu0 0.0
    %2603 = vmatpush1.msra.mxu0 0.0
    %2604 = vmatprep.subr.mxu0 0.0
    %2605 = vmatpush1.msra.mxu0 0.0
    %2606 = vmatprep.subr.mxu0 0.0
    %2607 = vmatpush1.msra.mxu0 0.0
    %2608 = vmatprep.subr.mxu0 0.0
    %2609 = vmatpush1.msra.mxu0 0.0
    %2610 = vmatprep.subr.mxu0 0.0
    %2611 = vmatpush1.msra.mxu0 0.0
    %2612 = vmatprep.subr.mxu0 0.0
    %2613 = vmatpush1.msra.mxu0 0.0
    %2614 = vmatprep.mubr.f32.mxu0 0.0
    %2615 = vmatmul.mubr.f32.gmra.mrb[0].mxu0 %v2548
    %v2616 = vpop.f32.mrb[0].mxu0
    %v2617 = vadd.f32 0.0, %v2616
    %v2618 = vpop.f32.mrb[0].mxu0
    %2619 = vdwg.mxu0
    %v2620 = vadd.f32 %v2541, %v2617
    %v2621 = vrcp.pop %v2389
    %v2622 = vmul.f32 %v2620, %v2621
    %v2624 = vsel %vm448, %v2622, 0
    %2626 = vmatprep.subr.mxu0 0.0
    %2627 = vmatpush1.msra.mxu0 %v61
    %2628 = vmatprep.subr.mxu0 0.0
    %2629 = vmatpush1.msra.mxu0 0.0
    %2630 = vmatprep.subr.mxu0 0.0
    %2631 = vmatpush1.msra.mxu0 0.0
    %2632 = vmatprep.subr.mxu0 0.0
    %2633 = vmatpush1.msra.mxu0 0.0
    %2634 = vmatprep.subr.mxu0 0.0
    %2635 = vmatpush1.msra.mxu0 0.0
    %2636 = vmatprep.subr.mxu0 0.0
    %2637 = vmatpush1.msra.mxu0 0.0
    %2638 = vmatprep.subr.mxu0 0.0
    %2639 = vmatpush1.msra.mxu0 0.0
    %2640 = vmatprep.subr.mxu0 0.0
    %2641 = vmatpush1.msra.mxu0 0.0
    %2642 = vmatprep.subr.mxu0 0.0
    %2643 = vmatpush1.msra.mxu0 0.0
    %2644 = vmatprep.subr.mxu0 0.0
    %2645 = vmatpush1.msra.mxu0 0.0
    %2646 = vmatprep.subr.mxu0 0.0
    %2647 = vmatpush1.msra.mxu0 0.0
    %2648 = vmatprep.subr.mxu0 0.0
    %2649 = vmatpush1.msra.mxu0 0.0
    %2650 = vmatprep.subr.mxu0 0.0
    %2651 = vmatpush1.msra.mxu0 0.0
    %2652 = vmatprep.subr.mxu0 0.0
    %2653 = vmatpush1.msra.mxu0 0.0
    %2654 = vmatprep.subr.mxu0 0.0
    %2655 = vmatpush1.msra.mxu0 0.0
    %2656 = vmatprep.subr.mxu0 0.0
    %2657 = vmatpush1.msra.mxu0 0.0
    %2658 = vmatprep.subr.mxu0 0.0
    %2659 = vmatpush1.msra.mxu0 0.0
    %2660 = vmatprep.subr.mxu0 0.0
    %2661 = vmatpush1.msra.mxu0 0.0
    %2662 = vmatprep.subr.mxu0 0.0
    %2663 = vmatpush1.msra.mxu0 0.0
    %2664 = vmatprep.subr.mxu0 0.0
    %2665 = vmatpush1.msra.mxu0 0.0
    %2666 = vmatprep.subr.mxu0 0.0
    %2667 = vmatpush1.msra.mxu0 0.0
    %2668 = vmatprep.subr.mxu0 0.0
    %2669 = vmatpush1.msra.mxu0 0.0
    %2670 = vmatprep.subr.mxu0 0.0
    %2671 = vmatpush1.msra.mxu0 0.0
    %2672 = vmatprep.subr.mxu0 0.0
    %2673 = vmatpush1.msra.mxu0 0.0
    %2674 = vmatprep.subr.mxu0 0.0
    %2675 = vmatpush1.msra.mxu0 0.0
    %2676 = vmatprep.subr.mxu0 0.0
    %2677 = vmatpush1.msra.mxu0 0.0
    %2678 = vmatprep.subr.mxu0 0.0
    %2679 = vmatpush1.msra.mxu0 0.0
    %2680 = vmatprep.subr.mxu0 0.0
    %2681 = vmatpush1.msra.mxu0 0.0
    %2682 = vmatprep.subr.mxu0 0.0
    %2683 = vmatpush1.msra.mxu0 0.0
    %2684 = vmatprep.subr.mxu0 0.0
    %2685 = vmatpush1.msra.mxu0 0.0
    %2686 = vmatprep.subr.mxu0 0.0
    %2687 = vmatpush1.msra.mxu0 0.0
    %2688 = vmatprep.subr.mxu0 0.0
    %2689 = vmatpush1.msra.mxu0 0.0
    %2690 = vmatprep.mubr.f32.mxu0 0.0
    %2691 = vmatmul.mubr.f32.gmra.mrb[0].mxu0 %v2624
    %v2692 = vpop.f32.mrb[0].mxu0
    %v2693 = vadd.f32 0.0, %v2692
    %v2694 = vpop.f32.mrb[0].mxu0
    %2695 = vdwg.mxu0
    %v2696 = vadd.f32 %v2132, %v2693
    %v2698 = vlaneseq
    %v2699 = vshrl.u32 %v2698, 7
    %v2700 = vsub.s32 0, %v2699
    %v2701 = vrot.slane %v57, %v2700
    %v2703 = vadd.f32 %v2696, %v2701
    %s2704 = scalar_lea.vmem %s1, 8
    %v2705 = vld [vmem:[%s2704] sm:$0xff]
    %s2706 = scalar_lea.vmem %s0, 4
    %v2707 = vld [vmem:[%s2706] sm:$0xf]
    %s2708 = scalar_lea.vmem %s2, 4
    %v2709 = vld [vmem:[%s2708] sm:$0xf]
    %s2710 = scalar_lea.vmem %s3, 4
    %v2711 = vld [vmem:[%s2710] sm:$0xf]
    %v2713 = vsel %vm78, %v2705, 0
    %2715 = vmatprep.subr.mxu0 0.0
    %2716 = vmatpush1.msra.mxu0 %v42
    %2717 = vmatprep.subr.mxu0 0.0
    %2718 = vmatpush1.msra.mxu0 %v43
    %2719 = vmatprep.subr.mxu0 0.0
    %2720 = vmatpush1.msra.mxu0 %v44
    %2721 = vmatprep.subr.mxu0 0.0
    %2722 = vmatpush1.msra.mxu0 %v45
    %2723 = vmatprep.subr.mxu0 0.0
    %2724 = vmatpush1.msra.mxu0 0.0
    %2725 = vmatprep.subr.mxu0 0.0
    %2726 = vmatpush1.msra.mxu0 0.0
    %2727 = vmatprep.subr.mxu0 0.0
    %2728 = vmatpush1.msra.mxu0 0.0
    %2729 = vmatprep.subr.mxu0 0.0
    %2730 = vmatpush1.msra.mxu0 0.0
    %2731 = vmatprep.subr.mxu0 0.0
    %2732 = vmatpush1.msra.mxu0 0.0
    %2733 = vmatprep.subr.mxu0 0.0
    %2734 = vmatpush1.msra.mxu0 0.0
    %2735 = vmatprep.subr.mxu0 0.0
    %2736 = vmatpush1.msra.mxu0 0.0
    %2737 = vmatprep.subr.mxu0 0.0
    %2738 = vmatpush1.msra.mxu0 0.0
    %2739 = vmatprep.subr.mxu0 0.0
    %2740 = vmatpush1.msra.mxu0 0.0
    %2741 = vmatprep.subr.mxu0 0.0
    %2742 = vmatpush1.msra.mxu0 0.0
    %2743 = vmatprep.subr.mxu0 0.0
    %2744 = vmatpush1.msra.mxu0 0.0
    %2745 = vmatprep.subr.mxu0 0.0
    %2746 = vmatpush1.msra.mxu0 0.0
    %2747 = vmatprep.subr.mxu0 0.0
    %2748 = vmatpush1.msra.mxu0 0.0
    %2749 = vmatprep.subr.mxu0 0.0
    %2750 = vmatpush1.msra.mxu0 0.0
    %2751 = vmatprep.subr.mxu0 0.0
    %2752 = vmatpush1.msra.mxu0 0.0
    %2753 = vmatprep.subr.mxu0 0.0
    %2754 = vmatpush1.msra.mxu0 0.0
    %2755 = vmatprep.subr.mxu0 0.0
    %2756 = vmatpush1.msra.mxu0 0.0
    %2757 = vmatprep.subr.mxu0 0.0
    %2758 = vmatpush1.msra.mxu0 0.0
    %2759 = vmatprep.subr.mxu0 0.0
    %2760 = vmatpush1.msra.mxu0 0.0
    %2761 = vmatprep.subr.mxu0 0.0
    %2762 = vmatpush1.msra.mxu0 0.0
    %2763 = vmatprep.subr.mxu0 0.0
    %2764 = vmatpush1.msra.mxu0 0.0
    %2765 = vmatprep.subr.mxu0 0.0
    %2766 = vmatpush1.msra.mxu0 0.0
    %2767 = vmatprep.subr.mxu0 0.0
    %2768 = vmatpush1.msra.mxu0 0.0
    %2769 = vmatprep.subr.mxu0 0.0
    %2770 = vmatpush1.msra.mxu0 0.0
    %2771 = vmatprep.subr.mxu0 0.0
    %2772 = vmatpush1.msra.mxu0 0.0
    %2773 = vmatprep.subr.mxu0 0.0
    %2774 = vmatpush1.msra.mxu0 0.0
    %2775 = vmatprep.subr.mxu0 0.0
    %2776 = vmatpush1.msra.mxu0 0.0
    %2777 = vmatprep.subr.mxu0 0.0
    %2778 = vmatpush1.msra.mxu0 0.0
    %2779 = vmatprep.mubr.f32.mxu0 0.0
    %2780 = vmatmul.mubr.f32.gmra.mrb[0].mxu0 %v2713
    %v2781 = vpop.f32.mrb[0].mxu0
    %v2782 = vadd.f32 %v76, %v2781
    %v2783 = vpop.f32.mrb[0].mxu0
    %2784 = vdwg.mxu0
    %2785 = vmatprep.subr.mxu0 0.0
    %2786 = vmatpush1.msra.mxu0 %v46
    %2787 = vmatprep.subr.mxu0 0.0
    %2788 = vmatpush1.msra.mxu0 %v47
    %2789 = vmatprep.subr.mxu0 0.0
    %2790 = vmatpush1.msra.mxu0 %v48
    %2791 = vmatprep.subr.mxu0 0.0
    %2792 = vmatpush1.msra.mxu0 %v49
    %2793 = vmatprep.subr.mxu0 0.0
    %2794 = vmatpush1.msra.mxu0 0.0
    %2795 = vmatprep.subr.mxu0 0.0
    %2796 = vmatpush1.msra.mxu0 0.0
    %2797 = vmatprep.subr.mxu0 0.0
    %2798 = vmatpush1.msra.mxu0 0.0
    %2799 = vmatprep.subr.mxu0 0.0
    %2800 = vmatpush1.msra.mxu0 0.0
    %2801 = vmatprep.subr.mxu0 0.0
    %2802 = vmatpush1.msra.mxu0 0.0
    %2803 = vmatprep.subr.mxu0 0.0
    %2804 = vmatpush1.msra.mxu0 0.0
    %2805 = vmatprep.subr.mxu0 0.0
    %2806 = vmatpush1.msra.mxu0 0.0
    %2807 = vmatprep.subr.mxu0 0.0
    %2808 = vmatpush1.msra.mxu0 0.0
    %2809 = vmatprep.subr.mxu0 0.0
    %2810 = vmatpush1.msra.mxu0 0.0
    %2811 = vmatprep.subr.mxu0 0.0
    %2812 = vmatpush1.msra.mxu0 0.0
    %2813 = vmatprep.subr.mxu0 0.0
    %2814 = vmatpush1.msra.mxu0 0.0
    %2815 = vmatprep.subr.mxu0 0.0
    %2816 = vmatpush1.msra.mxu0 0.0
    %2817 = vmatprep.subr.mxu0 0.0
    %2818 = vmatpush1.msra.mxu0 0.0
    %2819 = vmatprep.subr.mxu0 0.0
    %2820 = vmatpush1.msra.mxu0 0.0
    %2821 = vmatprep.subr.mxu0 0.0
    %2822 = vmatpush1.msra.mxu0 0.0
    %2823 = vmatprep.subr.mxu0 0.0
    %2824 = vmatpush1.msra.mxu0 0.0
    %2825 = vmatprep.subr.mxu0 0.0
    %2826 = vmatpush1.msra.mxu0 0.0
    %2827 = vmatprep.subr.mxu0 0.0
    %2828 = vmatpush1.msra.mxu0 0.0
    %2829 = vmatprep.subr.mxu0 0.0
    %2830 = vmatpush1.msra.mxu0 0.0
    %2831 = vmatprep.subr.mxu0 0.0
    %2832 = vmatpush1.msra.mxu0 0.0
    %2833 = vmatprep.subr.mxu0 0.0
    %2834 = vmatpush1.msra.mxu0 0.0
    %2835 = vmatprep.subr.mxu0 0.0
    %2836 = vmatpush1.msra.mxu0 0.0
    %2837 = vmatprep.subr.mxu0 0.0
    %2838 = vmatpush1.msra.mxu0 0.0
    %2839 = vmatprep.subr.mxu0 0.0
    %2840 = vmatpush1.msra.mxu0 0.0
    %2841 = vmatprep.subr.mxu0 0.0
    %2842 = vmatpush1.msra.mxu0 0.0
    %2843 = vmatprep.subr.mxu0 0.0
    %2844 = vmatpush1.msra.mxu0 0.0
    %2845 = vmatprep.subr.mxu0 0.0
    %2846 = vmatpush1.msra.mxu0 0.0
    %2847 = vmatprep.subr.mxu0 0.0
    %2848 = vmatpush1.msra.mxu0 0.0
    %2849 = vmatprep.mubr.f32.mxu0 0.0
    %2850 = vmatmul.mubr.f32.gmra.mrb[0].mxu0 %v2713
    %v2851 = vpop.f32.mrb[0].mxu0
    %v2852 = vadd.f32 %v156, %v2851
    %v2853 = vpop.f32.mrb[0].mxu0
    %2854 = vdwg.mxu0
    %2855 = vmatprep.subr.mxu0 0.0
    %2856 = vmatpush1.msra.mxu0 %v50
    %2857 = vmatprep.subr.mxu0 0.0
    %2858 = vmatpush1.msra.mxu0 %v51
    %2859 = vmatprep.subr.mxu0 0.0
    %2860 = vmatpush1.msra.mxu0 %v52
    %2861 = vmatprep.subr.mxu0 0.0
    %2862 = vmatpush1.msra.mxu0 %v53
    %2863 = vmatprep.subr.mxu0 0.0
    %2864 = vmatpush1.msra.mxu0 0.0
    %2865 = vmatprep.subr.mxu0 0.0
    %2866 = vmatpush1.msra.mxu0 0.0
    %2867 = vmatprep.subr.mxu0 0.0
    %2868 = vmatpush1.msra.mxu0 0.0
    %2869 = vmatprep.subr.mxu0 0.0
    %2870 = vmatpush1.msra.mxu0 0.0
    %2871 = vmatprep.subr.mxu0 0.0
    %2872 = vmatpush1.msra.mxu0 0.0
    %2873 = vmatprep.subr.mxu0 0.0
    %2874 = vmatpush1.msra.mxu0 0.0
    %2875 = vmatprep.subr.mxu0 0.0
    %2876 = vmatpush1.msra.mxu0 0.0
    %2877 = vmatprep.subr.mxu0 0.0
    %2878 = vmatpush1.msra.mxu0 0.0
    %2879 = vmatprep.subr.mxu0 0.0
    %2880 = vmatpush1.msra.mxu0 0.0
    %2881 = vmatprep.subr.mxu0 0.0
    %2882 = vmatpush1.msra.mxu0 0.0
    %2883 = vmatprep.subr.mxu0 0.0
    %2884 = vmatpush1.msra.mxu0 0.0
    %2885 = vmatprep.subr.mxu0 0.0
    %2886 = vmatpush1.msra.mxu0 0.0
    %2887 = vmatprep.subr.mxu0 0.0
    %2888 = vmatpush1.msra.mxu0 0.0
    %2889 = vmatprep.subr.mxu0 0.0
    %2890 = vmatpush1.msra.mxu0 0.0
    %2891 = vmatprep.subr.mxu0 0.0
    %2892 = vmatpush1.msra.mxu0 0.0
    %2893 = vmatprep.subr.mxu0 0.0
    %2894 = vmatpush1.msra.mxu0 0.0
    %2895 = vmatprep.subr.mxu0 0.0
    %2896 = vmatpush1.msra.mxu0 0.0
    %2897 = vmatprep.subr.mxu0 0.0
    %2898 = vmatpush1.msra.mxu0 0.0
    %2899 = vmatprep.subr.mxu0 0.0
    %2900 = vmatpush1.msra.mxu0 0.0
    %2901 = vmatprep.subr.mxu0 0.0
    %2902 = vmatpush1.msra.mxu0 0.0
    %2903 = vmatprep.subr.mxu0 0.0
    %2904 = vmatpush1.msra.mxu0 0.0
    %2905 = vmatprep.subr.mxu0 0.0
    %2906 = vmatpush1.msra.mxu0 0.0
    %2907 = vmatprep.subr.mxu0 0.0
    %2908 = vmatpush1.msra.mxu0 0.0
    %2909 = vmatprep.subr.mxu0 0.0
    %2910 = vmatpush1.msra.mxu0 0.0
    %2911 = vmatprep.subr.mxu0 0.0
    %2912 = vmatpush1.msra.mxu0 0.0
    %2913 = vmatprep.subr.mxu0 0.0
    %2914 = vmatpush1.msra.mxu0 0.0
    %2915 = vmatprep.subr.mxu0 0.0
    %2916 = vmatpush1.msra.mxu0 0.0
    %2917 = vmatprep.subr.mxu0 0.0
    %2918 = vmatpush1.msra.mxu0 0.0
    %2919 = vmatprep.mubr.f32.mxu0 0.0
    %2920 = vmatmul.mubr.f32.gmra.mrb[0].mxu0 %v2713
    %v2921 = vpop.f32.mrb[0].mxu0
    %v2922 = vadd.f32 %v232, %v2921
    %v2923 = vpop.f32.mrb[0].mxu0
    %2924 = vdwg.mxu0
    %v2926 = vsel %vm78, %v2707, 0
    %2928 = vmatprep.subr.mxu0 0.0
    %2929 = vmatpush1.msra.mxu0 %v46
    %2930 = vmatprep.subr.mxu0 0.0
    %2931 = vmatpush1.msra.mxu0 %v47
    %2932 = vmatprep.subr.mxu0 0.0
    %2933 = vmatpush1.msra.mxu0 %v48
    %2934 = vmatprep.subr.mxu0 0.0
    %2935 = vmatpush1.msra.mxu0 %v49
    %2936 = vmatprep.subr.mxu0 0.0
    %2937 = vmatpush1.msra.mxu0 0.0
    %2938 = vmatprep.subr.mxu0 0.0
    %2939 = vmatpush1.msra.mxu0 0.0
    %2940 = vmatprep.subr.mxu0 0.0
    %2941 = vmatpush1.msra.mxu0 0.0
    %2942 = vmatprep.subr.mxu0 0.0
    %2943 = vmatpush1.msra.mxu0 0.0
    %2944 = vmatprep.subr.mxu0 0.0
    %2945 = vmatpush1.msra.mxu0 0.0
    %2946 = vmatprep.subr.mxu0 0.0
    %2947 = vmatpush1.msra.mxu0 0.0
    %2948 = vmatprep.subr.mxu0 0.0
    %2949 = vmatpush1.msra.mxu0 0.0
    %2950 = vmatprep.subr.mxu0 0.0
    %2951 = vmatpush1.msra.mxu0 0.0
    %2952 = vmatprep.subr.mxu0 0.0
    %2953 = vmatpush1.msra.mxu0 0.0
    %2954 = vmatprep.subr.mxu0 0.0
    %2955 = vmatpush1.msra.mxu0 0.0
    %2956 = vmatprep.subr.mxu0 0.0
    %2957 = vmatpush1.msra.mxu0 0.0
    %2958 = vmatprep.subr.mxu0 0.0
    %2959 = vmatpush1.msra.mxu0 0.0
    %2960 = vmatprep.subr.mxu0 0.0
    %2961 = vmatpush1.msra.mxu0 0.0
    %2962 = vmatprep.subr.mxu0 0.0
    %2963 = vmatpush1.msra.mxu0 0.0
    %2964 = vmatprep.subr.mxu0 0.0
    %2965 = vmatpush1.msra.mxu0 0.0
    %2966 = vmatprep.subr.mxu0 0.0
    %2967 = vmatpush1.msra.mxu0 0.0
    %2968 = vmatprep.subr.mxu0 0.0
    %2969 = vmatpush1.msra.mxu0 0.0
    %2970 = vmatprep.subr.mxu0 0.0
    %2971 = vmatpush1.msra.mxu0 0.0
    %2972 = vmatprep.subr.mxu0 0.0
    %2973 = vmatpush1.msra.mxu0 0.0
    %2974 = vmatprep.subr.mxu0 0.0
    %2975 = vmatpush1.msra.mxu0 0.0
    %2976 = vmatprep.subr.mxu0 0.0
    %2977 = vmatpush1.msra.mxu0 0.0
    %2978 = vmatprep.subr.mxu0 0.0
    %2979 = vmatpush1.msra.mxu0 0.0
    %2980 = vmatprep.subr.mxu0 0.0
    %2981 = vmatpush1.msra.mxu0 0.0
    %2982 = vmatprep.subr.mxu0 0.0
    %2983 = vmatpush1.msra.mxu0 0.0
    %2984 = vmatprep.subr.mxu0 0.0
    %2985 = vmatpush1.msra.mxu0 0.0
    %2986 = vmatprep.subr.mxu0 0.0
    %2987 = vmatpush1.msra.mxu0 0.0
    %2988 = vmatprep.subr.mxu0 0.0
    %2989 = vmatpush1.msra.mxu0 0.0
    %2990 = vmatprep.subr.mxu0 0.0
    %2991 = vmatpush1.msra.mxu0 0.0
    %2992 = vmatprep.mubr.f32.mxu0 0.0
    %2993 = vmatmul.mubr.f32.gmra.mrb[0].mxu0 %v2926
    %v2994 = vpop.f32.mrb[0].mxu0
    %v2995 = vadd.f32 %v156, %v2994
    %v2996 = vpop.f32.mrb[0].mxu0
    %2997 = vdwg.mxu0
    %2998 = vmatprep.subr.mxu0 0.0
    %2999 = vmatpush1.msra.mxu0 %v50
    %3000 = vmatprep.subr.mxu0 0.0
    %3001 = vmatpush1.msra.mxu0 %v51
    %3002 = vmatprep.subr.mxu0 0.0
    %3003 = vmatpush1.msra.mxu0 %v52
    %3004 = vmatprep.subr.mxu0 0.0
    %3005 = vmatpush1.msra.mxu0 %v53
    %3006 = vmatprep.subr.mxu0 0.0
    %3007 = vmatpush1.msra.mxu0 0.0
    %3008 = vmatprep.subr.mxu0 0.0
    %3009 = vmatpush1.msra.mxu0 0.0
    %3010 = vmatprep.subr.mxu0 0.0
    %3011 = vmatpush1.msra.mxu0 0.0
    %3012 = vmatprep.subr.mxu0 0.0
    %3013 = vmatpush1.msra.mxu0 0.0
    %3014 = vmatprep.subr.mxu0 0.0
    %3015 = vmatpush1.msra.mxu0 0.0
    %3016 = vmatprep.subr.mxu0 0.0
    %3017 = vmatpush1.msra.mxu0 0.0
    %3018 = vmatprep.subr.mxu0 0.0
    %3019 = vmatpush1.msra.mxu0 0.0
    %3020 = vmatprep.subr.mxu0 0.0
    %3021 = vmatpush1.msra.mxu0 0.0
    %3022 = vmatprep.subr.mxu0 0.0
    %3023 = vmatpush1.msra.mxu0 0.0
    %3024 = vmatprep.subr.mxu0 0.0
    %3025 = vmatpush1.msra.mxu0 0.0
    %3026 = vmatprep.subr.mxu0 0.0
    %3027 = vmatpush1.msra.mxu0 0.0
    %3028 = vmatprep.subr.mxu0 0.0
    %3029 = vmatpush1.msra.mxu0 0.0
    %3030 = vmatprep.subr.mxu0 0.0
    %3031 = vmatpush1.msra.mxu0 0.0
    %3032 = vmatprep.subr.mxu0 0.0
    %3033 = vmatpush1.msra.mxu0 0.0
    %3034 = vmatprep.subr.mxu0 0.0
    %3035 = vmatpush1.msra.mxu0 0.0
    %3036 = vmatprep.subr.mxu0 0.0
    %3037 = vmatpush1.msra.mxu0 0.0
    %3038 = vmatprep.subr.mxu0 0.0
    %3039 = vmatpush1.msra.mxu0 0.0
    %3040 = vmatprep.subr.mxu0 0.0
    %3041 = vmatpush1.msra.mxu0 0.0
    %3042 = vmatprep.subr.mxu0 0.0
    %3043 = vmatpush1.msra.mxu0 0.0
    %3044 = vmatprep.subr.mxu0 0.0
    %3045 = vmatpush1.msra.mxu0 0.0
    %3046 = vmatprep.subr.mxu0 0.0
    %3047 = vmatpush1.msra.mxu0 0.0
    %3048 = vmatprep.subr.mxu0 0.0
    %3049 = vmatpush1.msra.mxu0 0.0
    %3050 = vmatprep.subr.mxu0 0.0
    %3051 = vmatpush1.msra.mxu0 0.0
    %3052 = vmatprep.subr.mxu0 0.0
    %3053 = vmatpush1.msra.mxu0 0.0
    %3054 = vmatprep.subr.mxu0 0.0
    %3055 = vmatpush1.msra.mxu0 0.0
    %3056 = vmatprep.subr.mxu0 0.0
    %3057 = vmatpush1.msra.mxu0 0.0
    %3058 = vmatprep.subr.mxu0 0.0
    %3059 = vmatpush1.msra.mxu0 0.0
    %3060 = vmatprep.subr.mxu0 0.0
    %3061 = vmatpush1.msra.mxu0 0.0
    %3062 = vmatprep.mubr.f32.mxu0 0.0
    %3063 = vmatmul.mubr.f32.gmra.mrb[0].mxu0 %v2926
    %v3064 = vpop.f32.mrb[0].mxu0
    %v3065 = vadd.f32 %v232, %v3064
    %v3066 = vpop.f32.mrb[0].mxu0
    %3067 = vdwg.mxu0
    %v3068 = vmul.f32 %v2782, 0.35355338
    %v3070 = vsel %vm448, %v3068, 0
    %v3073 = vsel %vm448, %v2709, 0
    %3075 = vmatprep.subr.mxu0 0.0
    %3076 = vmatpush1.xpose.msra.mxu0 %v3073
    %3077 = vmatprep.subr.mxu0 0.0
    %3078 = vmatpush1.xpose.msra.mxu0 0.0
    %3079 = vmatprep.subr.mxu0 0.0
    %3080 = vmatpush1.xpose.msra.mxu0 0.0
    %3081 = vmatprep.subr.mxu0 0.0
    %3082 = vmatpush1.xpose.msra.mxu0 0.0
    %3083 = vmatprep.subr.mxu0 0.0
    %3084 = vmatpush1.xpose.msra.mxu0 0.0
    %3085 = vmatprep.subr.mxu0 0.0
    %3086 = vmatpush1.xpose.msra.mxu0 0.0
    %3087 = vmatprep.subr.mxu0 0.0
    %3088 = vmatpush1.xpose.msra.mxu0 0.0
    %3089 = vmatprep.subr.mxu0 0.0
    %3090 = vmatpush1.xpose.msra.mxu0 0.0
    %3091 = vmatprep.subr.mxu0 0.0
    %3092 = vmatpush1.xpose.msra.mxu0 0.0
    %3093 = vmatprep.subr.mxu0 0.0
    %3094 = vmatpush1.xpose.msra.mxu0 0.0
    %3095 = vmatprep.subr.mxu0 0.0
    %3096 = vmatpush1.xpose.msra.mxu0 0.0
    %3097 = vmatprep.subr.mxu0 0.0
    %3098 = vmatpush1.xpose.msra.mxu0 0.0
    %3099 = vmatprep.subr.mxu0 0.0
    %3100 = vmatpush1.xpose.msra.mxu0 0.0
    %3101 = vmatprep.subr.mxu0 0.0
    %3102 = vmatpush1.xpose.msra.mxu0 0.0
    %3103 = vmatprep.subr.mxu0 0.0
    %3104 = vmatpush1.xpose.msra.mxu0 0.0
    %3105 = vmatprep.subr.mxu0 0.0
    %3106 = vmatpush1.xpose.msra.mxu0 0.0
    %3107 = vmatprep.subr.mxu0 0.0
    %3108 = vmatpush1.xpose.msra.mxu0 0.0
    %3109 = vmatprep.subr.mxu0 0.0
    %3110 = vmatpush1.xpose.msra.mxu0 0.0
    %3111 = vmatprep.subr.mxu0 0.0
    %3112 = vmatpush1.xpose.msra.mxu0 0.0
    %3113 = vmatprep.subr.mxu0 0.0
    %3114 = vmatpush1.xpose.msra.mxu0 0.0
    %3115 = vmatprep.subr.mxu0 0.0
    %3116 = vmatpush1.xpose.msra.mxu0 0.0
    %3117 = vmatprep.subr.mxu0 0.0
    %3118 = vmatpush1.xpose.msra.mxu0 0.0
    %3119 = vmatprep.subr.mxu0 0.0
    %3120 = vmatpush1.xpose.msra.mxu0 0.0
    %3121 = vmatprep.subr.mxu0 0.0
    %3122 = vmatpush1.xpose.msra.mxu0 0.0
    %3123 = vmatprep.subr.mxu0 0.0
    %3124 = vmatpush1.xpose.msra.mxu0 0.0
    %3125 = vmatprep.subr.mxu0 0.0
    %3126 = vmatpush1.xpose.msra.mxu0 0.0
    %3127 = vmatprep.subr.mxu0 0.0
    %3128 = vmatpush1.xpose.msra.mxu0 0.0
    %3129 = vmatprep.subr.mxu0 0.0
    %3130 = vmatpush1.xpose.msra.mxu0 0.0
    %3131 = vmatprep.subr.mxu0 0.0
    %3132 = vmatpush1.xpose.msra.mxu0 0.0
    %3133 = vmatprep.subr.mxu0 0.0
    %3134 = vmatpush1.xpose.msra.mxu0 0.0
    %3135 = vmatprep.subr.mxu0 0.0
    %3136 = vmatpush1.xpose.msra.mxu0 0.0
    %3137 = vmatprep.subr.mxu0 0.0
    %3138 = vmatpush1.xpose.msra.mxu0 0.0
    %3139 = vmatprep.mubr.f32.mxu0 0.0
    %3140 = vmatmul.mubr.f32.gmra.mrb[0].mxu0 %v3070
    %v3141 = vpop.f32.mrb[0].mxu0
    %v3142 = vadd.f32 0.0, %v3141
    %v3143 = vpop.f32.mrb[0].mxu0
    %3144 = vdwg.mxu0
    %v3146 = vsel %vm448, %v2995, 0
    %3148 = vmatprep.subr.mxu0 0.0
    %3149 = vmatpush1.xpose.msra.mxu0 %v3146
    %3150 = vmatprep.subr.mxu0 0.0
    %3151 = vmatpush1.xpose.msra.mxu0 0.0
    %3152 = vmatprep.subr.mxu0 0.0
    %3153 = vmatpush1.xpose.msra.mxu0 0.0
    %3154 = vmatprep.subr.mxu0 0.0
    %3155 = vmatpush1.xpose.msra.mxu0 0.0
    %3156 = vmatprep.subr.mxu0 0.0
    %3157 = vmatpush1.xpose.msra.mxu0 0.0
    %3158 = vmatprep.subr.mxu0 0.0
    %3159 = vmatpush1.xpose.msra.mxu0 0.0
    %3160 = vmatprep.subr.mxu0 0.0
    %3161 = vmatpush1.xpose.msra.mxu0 0.0
    %3162 = vmatprep.subr.mxu0 0.0
    %3163 = vmatpush1.xpose.msra.mxu0 0.0
    %3164 = vmatprep.subr.mxu0 0.0
    %3165 = vmatpush1.xpose.msra.mxu0 0.0
    %3166 = vmatprep.subr.mxu0 0.0
    %3167 = vmatpush1.xpose.msra.mxu0 0.0
    %3168 = vmatprep.subr.mxu0 0.0
    %3169 = vmatpush1.xpose.msra.mxu0 0.0
    %3170 = vmatprep.subr.mxu0 0.0
    %3171 = vmatpush1.xpose.msra.mxu0 0.0
    %3172 = vmatprep.subr.mxu0 0.0
    %3173 = vmatpush1.xpose.msra.mxu0 0.0
    %3174 = vmatprep.subr.mxu0 0.0
    %3175 = vmatpush1.xpose.msra.mxu0 0.0
    %3176 = vmatprep.subr.mxu0 0.0
    %3177 = vmatpush1.xpose.msra.mxu0 0.0
    %3178 = vmatprep.subr.mxu0 0.0
    %3179 = vmatpush1.xpose.msra.mxu0 0.0
    %3180 = vmatprep.subr.mxu0 0.0
    %3181 = vmatpush1.xpose.msra.mxu0 0.0
    %3182 = vmatprep.subr.mxu0 0.0
    %3183 = vmatpush1.xpose.msra.mxu0 0.0
    %3184 = vmatprep.subr.mxu0 0.0
    %3185 = vmatpush1.xpose.msra.mxu0 0.0
    %3186 = vmatprep.subr.mxu0 0.0
    %3187 = vmatpush1.xpose.msra.mxu0 0.0
    %3188 = vmatprep.subr.mxu0 0.0
    %3189 = vmatpush1.xpose.msra.mxu0 0.0
    %3190 = vmatprep.subr.mxu0 0.0
    %3191 = vmatpush1.xpose.msra.mxu0 0.0
    %3192 = vmatprep.subr.mxu0 0.0
    %3193 = vmatpush1.xpose.msra.mxu0 0.0
    %3194 = vmatprep.subr.mxu0 0.0
    %3195 = vmatpush1.xpose.msra.mxu0 0.0
    %3196 = vmatprep.subr.mxu0 0.0
    %3197 = vmatpush1.xpose.msra.mxu0 0.0
    %3198 = vmatprep.subr.mxu0 0.0
    %3199 = vmatpush1.xpose.msra.mxu0 0.0
    %3200 = vmatprep.subr.mxu0 0.0
    %3201 = vmatpush1.xpose.msra.mxu0 0.0
    %3202 = vmatprep.subr.mxu0 0.0
    %3203 = vmatpush1.xpose.msra.mxu0 0.0
    %3204 = vmatprep.subr.mxu0 0.0
    %3205 = vmatpush1.xpose.msra.mxu0 0.0
    %3206 = vmatprep.subr.mxu0 0.0
    %3207 = vmatpush1.xpose.msra.mxu0 0.0
    %3208 = vmatprep.subr.mxu0 0.0
    %3209 = vmatpush1.xpose.msra.mxu0 0.0
    %3210 = vmatprep.subr.mxu0 0.0
    %3211 = vmatpush1.xpose.msra.mxu0 0.0
    %3212 = vmatprep.mubr.f32.mxu0 0.0
    %3213 = vmatmul.mubr.f32.gmra.mrb[0].mxu0 %v3070
    %v3214 = vpop.f32.mrb[0].mxu0
    %v3215 = vadd.f32 0.0, %v3214
    %v3216 = vpop.f32.mrb[0].mxu0
    %3217 = vdwg.mxu0
    %v3219 = vsel %vm448, %v2852, 0
    %3221 = vmatprep.subr.mxu0 0.0
    %3222 = vmatpush1.xpose.msra.mxu0 %v3219
    %3223 = vmatprep.subr.mxu0 0.0
    %3224 = vmatpush1.xpose.msra.mxu0 0.0
    %3225 = vmatprep.subr.mxu0 0.0
    %3226 = vmatpush1.xpose.msra.mxu0 0.0
    %3227 = vmatprep.subr.mxu0 0.0
    %3228 = vmatpush1.xpose.msra.mxu0 0.0
    %3229 = vmatprep.subr.mxu0 0.0
    %3230 = vmatpush1.xpose.msra.mxu0 0.0
    %3231 = vmatprep.subr.mxu0 0.0
    %3232 = vmatpush1.xpose.msra.mxu0 0.0
    %3233 = vmatprep.subr.mxu0 0.0
    %3234 = vmatpush1.xpose.msra.mxu0 0.0
    %3235 = vmatprep.subr.mxu0 0.0
    %3236 = vmatpush1.xpose.msra.mxu0 0.0
    %3237 = vmatprep.subr.mxu0 0.0
    %3238 = vmatpush1.xpose.msra.mxu0 0.0
    %3239 = vmatprep.subr.mxu0 0.0
    %3240 = vmatpush1.xpose.msra.mxu0 0.0
    %3241 = vmatprep.subr.mxu0 0.0
    %3242 = vmatpush1.xpose.msra.mxu0 0.0
    %3243 = vmatprep.subr.mxu0 0.0
    %3244 = vmatpush1.xpose.msra.mxu0 0.0
    %3245 = vmatprep.subr.mxu0 0.0
    %3246 = vmatpush1.xpose.msra.mxu0 0.0
    %3247 = vmatprep.subr.mxu0 0.0
    %3248 = vmatpush1.xpose.msra.mxu0 0.0
    %3249 = vmatprep.subr.mxu0 0.0
    %3250 = vmatpush1.xpose.msra.mxu0 0.0
    %3251 = vmatprep.subr.mxu0 0.0
    %3252 = vmatpush1.xpose.msra.mxu0 0.0
    %3253 = vmatprep.subr.mxu0 0.0
    %3254 = vmatpush1.xpose.msra.mxu0 0.0
    %3255 = vmatprep.subr.mxu0 0.0
    %3256 = vmatpush1.xpose.msra.mxu0 0.0
    %3257 = vmatprep.subr.mxu0 0.0
    %3258 = vmatpush1.xpose.msra.mxu0 0.0
    %3259 = vmatprep.subr.mxu0 0.0
    %3260 = vmatpush1.xpose.msra.mxu0 0.0
    %3261 = vmatprep.subr.mxu0 0.0
    %3262 = vmatpush1.xpose.msra.mxu0 0.0
    %3263 = vmatprep.subr.mxu0 0.0
    %3264 = vmatpush1.xpose.msra.mxu0 0.0
    %3265 = vmatprep.subr.mxu0 0.0
    %3266 = vmatpush1.xpose.msra.mxu0 0.0
    %3267 = vmatprep.subr.mxu0 0.0
    %3268 = vmatpush1.xpose.msra.mxu0 0.0
    %3269 = vmatprep.subr.mxu0 0.0
    %3270 = vmatpush1.xpose.msra.mxu0 0.0
    %3271 = vmatprep.subr.mxu0 0.0
    %3272 = vmatpush1.xpose.msra.mxu0 0.0
    %3273 = vmatprep.subr.mxu0 0.0
    %3274 = vmatpush1.xpose.msra.mxu0 0.0
    %3275 = vmatprep.subr.mxu0 0.0
    %3276 = vmatpush1.xpose.msra.mxu0 0.0
    %3277 = vmatprep.subr.mxu0 0.0
    %3278 = vmatpush1.xpose.msra.mxu0 0.0
    %3279 = vmatprep.subr.mxu0 0.0
    %3280 = vmatpush1.xpose.msra.mxu0 0.0
    %3281 = vmatprep.subr.mxu0 0.0
    %3282 = vmatpush1.xpose.msra.mxu0 0.0
    %3283 = vmatprep.subr.mxu0 0.0
    %3284 = vmatpush1.xpose.msra.mxu0 0.0
    %3285 = vmatprep.mubr.f32.mxu0 0.0
    %3286 = vmatmul.mubr.f32.gmra.mrb[0].mxu0 %v3070
    %v3287 = vpop.f32.mrb[0].mxu0
    %v3288 = vadd.f32 %v67, %v3287
    %v3289 = vpop.f32.mrb[0].mxu0
    %3290 = vdwg.mxu0
    %v3291 = vsel %vm671, %v3142, -inf
    %3292 = vmax.xlane.f32.xlu0 %v3291
    %v3293 = vpop.xlane.xlu0 %3292
    %v3294 = vsel %vm671, %v3215, -inf
    %3295 = vmax.xlane.f32.xlu0 %v3294
    %v3296 = vpop.xlane.xlu0 %3295
    %v3297 = vsel %vm448, %v3288, -inf
    %3298 = vmax.xlane.f32.xlu0 %v3297
    %v3299 = vpop.xlane.xlu0 %3298
    %v3300 = vmax.f32 %v3296, %v3299
    %v3301 = vmax.f32 %v3293, %v3300
    %v3302 = vsub.f32 %v3142, %v3301
    %v3303 = vmul.f32 %v3302, 1.442695
    %v3304 = vpow.pop %v3303
    %v3305 = vsub.f32 %v3215, %v3301
    %v3306 = vmul.f32 %v3305, 1.442695
    %v3307 = vpow.pop %v3306
    %v3308 = vsub.f32 %v3288, %v3301
    %v3309 = vmul.f32 %v3308, 1.442695
    %v3310 = vpow.pop %v3309
    %v3311 = vsel %vm671, %v3304, 0.0
    %3312 = vadd.xlane.f32.xlu0 %v3311
    %v3313 = vpop.xlane.xlu0 %3312
    %v3314 = vsel %vm671, %v3307, 0.0
    %3315 = vadd.xlane.f32.xlu0 %v3314
    %v3316 = vpop.xlane.xlu0 %3315
    %v3317 = vadd.f32 %v3313, %v3316
    %v3318 = vsel %vm448, %v3310, 0.0
    %3319 = vadd.xlane.f32.xlu0 %v3318
    %v3320 = vpop.xlane.xlu0 %3319
    %v3321 = vadd.f32 %v3317, %v3320
    %v3323 = vsel %vm671, %v3307, 0
    %v3326 = vsel %vm706, %v3065, 0
    %3328 = vmatprep.subr.mxu0 0.0
    %3329 = vmatpush1.msra.mxu0 %v3326
    %3330 = vmatprep.subr.mxu0 0.0
    %3331 = vmatpush1.msra.mxu0 0.0
    %3332 = vmatprep.subr.mxu0 0.0
    %3333 = vmatpush1.msra.mxu0 0.0
    %3334 = vmatprep.subr.mxu0 0.0
    %3335 = vmatpush1.msra.mxu0 0.0
    %3336 = vmatprep.subr.mxu0 0.0
    %3337 = vmatpush1.msra.mxu0 0.0
    %3338 = vmatprep.subr.mxu0 0.0
    %3339 = vmatpush1.msra.mxu0 0.0
    %3340 = vmatprep.subr.mxu0 0.0
    %3341 = vmatpush1.msra.mxu0 0.0
    %3342 = vmatprep.subr.mxu0 0.0
    %3343 = vmatpush1.msra.mxu0 0.0
    %3344 = vmatprep.subr.mxu0 0.0
    %3345 = vmatpush1.msra.mxu0 0.0
    %3346 = vmatprep.subr.mxu0 0.0
    %3347 = vmatpush1.msra.mxu0 0.0
    %3348 = vmatprep.subr.mxu0 0.0
    %3349 = vmatpush1.msra.mxu0 0.0
    %3350 = vmatprep.subr.mxu0 0.0
    %3351 = vmatpush1.msra.mxu0 0.0
    %3352 = vmatprep.subr.mxu0 0.0
    %3353 = vmatpush1.msra.mxu0 0.0
    %3354 = vmatprep.subr.mxu0 0.0
    %3355 = vmatpush1.msra.mxu0 0.0
    %3356 = vmatprep.subr.mxu0 0.0
    %3357 = vmatpush1.msra.mxu0 0.0
    %3358 = vmatprep.subr.mxu0 0.0
    %3359 = vmatpush1.msra.mxu0 0.0
    %3360 = vmatprep.subr.mxu0 0.0
    %3361 = vmatpush1.msra.mxu0 0.0
    %3362 = vmatprep.subr.mxu0 0.0
    %3363 = vmatpush1.msra.mxu0 0.0
    %3364 = vmatprep.subr.mxu0 0.0
    %3365 = vmatpush1.msra.mxu0 0.0
    %3366 = vmatprep.subr.mxu0 0.0
    %3367 = vmatpush1.msra.mxu0 0.0
    %3368 = vmatprep.subr.mxu0 0.0
    %3369 = vmatpush1.msra.mxu0 0.0
    %3370 = vmatprep.subr.mxu0 0.0
    %3371 = vmatpush1.msra.mxu0 0.0
    %3372 = vmatprep.subr.mxu0 0.0
    %3373 = vmatpush1.msra.mxu0 0.0
    %3374 = vmatprep.subr.mxu0 0.0
    %3375 = vmatpush1.msra.mxu0 0.0
    %3376 = vmatprep.subr.mxu0 0.0
    %3377 = vmatpush1.msra.mxu0 0.0
    %3378 = vmatprep.subr.mxu0 0.0
    %3379 = vmatpush1.msra.mxu0 0.0
    %3380 = vmatprep.subr.mxu0 0.0
    %3381 = vmatpush1.msra.mxu0 0.0
    %3382 = vmatprep.subr.mxu0 0.0
    %3383 = vmatpush1.msra.mxu0 0.0
    %3384 = vmatprep.subr.mxu0 0.0
    %3385 = vmatpush1.msra.mxu0 0.0
    %3386 = vmatprep.subr.mxu0 0.0
    %3387 = vmatpush1.msra.mxu0 0.0
    %3388 = vmatprep.subr.mxu0 0.0
    %3389 = vmatpush1.msra.mxu0 0.0
    %3390 = vmatprep.subr.mxu0 0.0
    %3391 = vmatpush1.msra.mxu0 0.0
    %3392 = vmatprep.mubr.f32.mxu0 0.0
    %3393 = vmatmul.mubr.f32.gmra.mrb[0].mxu0 %v3323
    %v3394 = vpop.f32.mrb[0].mxu0
    %v3395 = vadd.f32 0.0, %v3394
    %v3396 = vpop.f32.mrb[0].mxu0
    %3397 = vdwg.mxu0
    %v3399 = vsel %vm671, %v3304, 0
    %v3402 = vsel %vm706, %v2711, 0
    %3404 = vmatprep.subr.mxu0 0.0
    %3405 = vmatpush1.msra.mxu0 %v3402
    %3406 = vmatprep.subr.mxu0 0.0
    %3407 = vmatpush1.msra.mxu0 0.0
    %3408 = vmatprep.subr.mxu0 0.0
    %3409 = vmatpush1.msra.mxu0 0.0
    %3410 = vmatprep.subr.mxu0 0.0
    %3411 = vmatpush1.msra.mxu0 0.0
    %3412 = vmatprep.subr.mxu0 0.0
    %3413 = vmatpush1.msra.mxu0 0.0
    %3414 = vmatprep.subr.mxu0 0.0
    %3415 = vmatpush1.msra.mxu0 0.0
    %3416 = vmatprep.subr.mxu0 0.0
    %3417 = vmatpush1.msra.mxu0 0.0
    %3418 = vmatprep.subr.mxu0 0.0
    %3419 = vmatpush1.msra.mxu0 0.0
    %3420 = vmatprep.subr.mxu0 0.0
    %3421 = vmatpush1.msra.mxu0 0.0
    %3422 = vmatprep.subr.mxu0 0.0
    %3423 = vmatpush1.msra.mxu0 0.0
    %3424 = vmatprep.subr.mxu0 0.0
    %3425 = vmatpush1.msra.mxu0 0.0
    %3426 = vmatprep.subr.mxu0 0.0
    %3427 = vmatpush1.msra.mxu0 0.0
    %3428 = vmatprep.subr.mxu0 0.0
    %3429 = vmatpush1.msra.mxu0 0.0
    %3430 = vmatprep.subr.mxu0 0.0
    %3431 = vmatpush1.msra.mxu0 0.0
    %3432 = vmatprep.subr.mxu0 0.0
    %3433 = vmatpush1.msra.mxu0 0.0
    %3434 = vmatprep.subr.mxu0 0.0
    %3435 = vmatpush1.msra.mxu0 0.0
    %3436 = vmatprep.subr.mxu0 0.0
    %3437 = vmatpush1.msra.mxu0 0.0
    %3438 = vmatprep.subr.mxu0 0.0
    %3439 = vmatpush1.msra.mxu0 0.0
    %3440 = vmatprep.subr.mxu0 0.0
    %3441 = vmatpush1.msra.mxu0 0.0
    %3442 = vmatprep.subr.mxu0 0.0
    %3443 = vmatpush1.msra.mxu0 0.0
    %3444 = vmatprep.subr.mxu0 0.0
    %3445 = vmatpush1.msra.mxu0 0.0
    %3446 = vmatprep.subr.mxu0 0.0
    %3447 = vmatpush1.msra.mxu0 0.0
    %3448 = vmatprep.subr.mxu0 0.0
    %3449 = vmatpush1.msra.mxu0 0.0
    %3450 = vmatprep.subr.mxu0 0.0
    %3451 = vmatpush1.msra.mxu0 0.0
    %3452 = vmatprep.subr.mxu0 0.0
    %3453 = vmatpush1.msra.mxu0 0.0
    %3454 = vmatprep.subr.mxu0 0.0
    %3455 = vmatpush1.msra.mxu0 0.0
    %3456 = vmatprep.subr.mxu0 0.0
    %3457 = vmatpush1.msra.mxu0 0.0
    %3458 = vmatprep.subr.mxu0 0.0
    %3459 = vmatpush1.msra.mxu0 0.0
    %3460 = vmatprep.subr.mxu0 0.0
    %3461 = vmatpush1.msra.mxu0 0.0
    %3462 = vmatprep.subr.mxu0 0.0
    %3463 = vmatpush1.msra.mxu0 0.0
    %3464 = vmatprep.subr.mxu0 0.0
    %3465 = vmatpush1.msra.mxu0 0.0
    %3466 = vmatprep.subr.mxu0 0.0
    %3467 = vmatpush1.msra.mxu0 0.0
    %3468 = vmatprep.mubr.f32.mxu0 0.0
    %3469 = vmatmul.mubr.f32.gmra.mrb[0].mxu0 %v3399
    %v3470 = vpop.f32.mrb[0].mxu0
    %v3471 = vadd.f32 %v3395, %v3470
    %v3472 = vpop.f32.mrb[0].mxu0
    %3473 = vdwg.mxu0
    %v3475 = vsel %vm448, %v3310, 0
    %3477 = vmatprep.subr.mxu0 0.0
    %3478 = vmatpush1.msra.mxu0 %v2922
    %3479 = vmatprep.subr.mxu0 0.0
    %3480 = vmatpush1.msra.mxu0 0.0
    %3481 = vmatprep.subr.mxu0 0.0
    %3482 = vmatpush1.msra.mxu0 0.0
    %3483 = vmatprep.subr.mxu0 0.0
    %3484 = vmatpush1.msra.mxu0 0.0
    %3485 = vmatprep.subr.mxu0 0.0
    %3486 = vmatpush1.msra.mxu0 0.0
    %3487 = vmatprep.subr.mxu0 0.0
    %3488 = vmatpush1.msra.mxu0 0.0
    %3489 = vmatprep.subr.mxu0 0.0
    %3490 = vmatpush1.msra.mxu0 0.0
    %3491 = vmatprep.subr.mxu0 0.0
    %3492 = vmatpush1.msra.mxu0 0.0
    %3493 = vmatprep.subr.mxu0 0.0
    %3494 = vmatpush1.msra.mxu0 0.0
    %3495 = vmatprep.subr.mxu0 0.0
    %3496 = vmatpush1.msra.mxu0 0.0
    %3497 = vmatprep.subr.mxu0 0.0
    %3498 = vmatpush1.msra.mxu0 0.0
    %3499 = vmatprep.subr.mxu0 0.0
    %3500 = vmatpush1.msra.mxu0 0.0
    %3501 = vmatprep.subr.mxu0 0.0
    %3502 = vmatpush1.msra.mxu0 0.0
    %3503 = vmatprep.subr.mxu0 0.0
    %3504 = vmatpush1.msra.mxu0 0.0
    %3505 = vmatprep.subr.mxu0 0.0
    %3506 = vmatpush1.msra.mxu0 0.0
    %3507 = vmatprep.subr.mxu0 0.0
    %3508 = vmatpush1.msra.mxu0 0.0
    %3509 = vmatprep.subr.mxu0 0.0
    %3510 = vmatpush1.msra.mxu0 0.0
    %3511 = vmatprep.subr.mxu0 0.0
    %3512 = vmatpush1.msra.mxu0 0.0
    %3513 = vmatprep.subr.mxu0 0.0
    %3514 = vmatpush1.msra.mxu0 0.0
    %3515 = vmatprep.subr.mxu0 0.0
    %3516 = vmatpush1.msra.mxu0 0.0
    %3517 = vmatprep.subr.mxu0 0.0
    %3518 = vmatpush1.msra.mxu0 0.0
    %3519 = vmatprep.subr.mxu0 0.0
    %3520 = vmatpush1.msra.mxu0 0.0
    %3521 = vmatprep.subr.mxu0 0.0
    %3522 = vmatpush1.msra.mxu0 0.0
    %3523 = vmatprep.subr.mxu0 0.0
    %3524 = vmatpush1.msra.mxu0 0.0
    %3525 = vmatprep.subr.mxu0 0.0
    %3526 = vmatpush1.msra.mxu0 0.0
    %3527 = vmatprep.subr.mxu0 0.0
    %3528 = vmatpush1.msra.mxu0 0.0
    %3529 = vmatprep.subr.mxu0 0.0
    %3530 = vmatpush1.msra.mxu0 0.0
    %3531 = vmatprep.subr.mxu0 0.0
    %3532 = vmatpush1.msra.mxu0 0.0
    %3533 = vmatprep.subr.mxu0 0.0
    %3534 = vmatpush1.msra.mxu0 0.0
    %3535 = vmatprep.subr.mxu0 0.0
    %3536 = vmatpush1.msra.mxu0 0.0
    %3537 = vmatprep.subr.mxu0 0.0
    %3538 = vmatpush1.msra.mxu0 0.0
    %3539 = vmatprep.subr.mxu0 0.0
    %3540 = vmatpush1.msra.mxu0 0.0
    %3541 = vmatprep.mubr.f32.mxu0 0.0
    %3542 = vmatmul.mubr.f32.gmra.mrb[0].mxu0 %v3475
    %v3543 = vpop.f32.mrb[0].mxu0
    %v3544 = vadd.f32 0.0, %v3543
    %v3545 = vpop.f32.mrb[0].mxu0
    %3546 = vdwg.mxu0
    %v3547 = vadd.f32 %v3471, %v3544
    %v3548 = vrcp.pop %v3321
    %v3549 = vmul.f32 %v3547, %v3548
    %3550 = vrot.lane.b32.xlu0 %v3068, 120
    %v3551 = vpop.permute.xlu0 %3550
    %3552 = vrot.lane.b32.xlu0 %v2709, 120
    %v3553 = vpop.permute.xlu0 %3552
    %v3554 = vsel %vm448, %v3551, 0
    %v3556 = vsel %vm448, %v3553, 0
    %3558 = vmatprep.subr.mxu0 0.0
    %3559 = vmatpush1.xpose.msra.mxu0 %v3556
    %3560 = vmatprep.subr.mxu0 0.0
    %3561 = vmatpush1.xpose.msra.mxu0 0.0
    %3562 = vmatprep.subr.mxu0 0.0
    %3563 = vmatpush1.xpose.msra.mxu0 0.0
    %3564 = vmatprep.subr.mxu0 0.0
    %3565 = vmatpush1.xpose.msra.mxu0 0.0
    %3566 = vmatprep.subr.mxu0 0.0
    %3567 = vmatpush1.xpose.msra.mxu0 0.0
    %3568 = vmatprep.subr.mxu0 0.0
    %3569 = vmatpush1.xpose.msra.mxu0 0.0
    %3570 = vmatprep.subr.mxu0 0.0
    %3571 = vmatpush1.xpose.msra.mxu0 0.0
    %3572 = vmatprep.subr.mxu0 0.0
    %3573 = vmatpush1.xpose.msra.mxu0 0.0
    %3574 = vmatprep.subr.mxu0 0.0
    %3575 = vmatpush1.xpose.msra.mxu0 0.0
    %3576 = vmatprep.subr.mxu0 0.0
    %3577 = vmatpush1.xpose.msra.mxu0 0.0
    %3578 = vmatprep.subr.mxu0 0.0
    %3579 = vmatpush1.xpose.msra.mxu0 0.0
    %3580 = vmatprep.subr.mxu0 0.0
    %3581 = vmatpush1.xpose.msra.mxu0 0.0
    %3582 = vmatprep.subr.mxu0 0.0
    %3583 = vmatpush1.xpose.msra.mxu0 0.0
    %3584 = vmatprep.subr.mxu0 0.0
    %3585 = vmatpush1.xpose.msra.mxu0 0.0
    %3586 = vmatprep.subr.mxu0 0.0
    %3587 = vmatpush1.xpose.msra.mxu0 0.0
    %3588 = vmatprep.subr.mxu0 0.0
    %3589 = vmatpush1.xpose.msra.mxu0 0.0
    %3590 = vmatprep.subr.mxu0 0.0
    %3591 = vmatpush1.xpose.msra.mxu0 0.0
    %3592 = vmatprep.subr.mxu0 0.0
    %3593 = vmatpush1.xpose.msra.mxu0 0.0
    %3594 = vmatprep.subr.mxu0 0.0
    %3595 = vmatpush1.xpose.msra.mxu0 0.0
    %3596 = vmatprep.subr.mxu0 0.0
    %3597 = vmatpush1.xpose.msra.mxu0 0.0
    %3598 = vmatprep.subr.mxu0 0.0
    %3599 = vmatpush1.xpose.msra.mxu0 0.0
    %3600 = vmatprep.subr.mxu0 0.0
    %3601 = vmatpush1.xpose.msra.mxu0 0.0
    %3602 = vmatprep.subr.mxu0 0.0
    %3603 = vmatpush1.xpose.msra.mxu0 0.0
    %3604 = vmatprep.subr.mxu0 0.0
    %3605 = vmatpush1.xpose.msra.mxu0 0.0
    %3606 = vmatprep.subr.mxu0 0.0
    %3607 = vmatpush1.xpose.msra.mxu0 0.0
    %3608 = vmatprep.subr.mxu0 0.0
    %3609 = vmatpush1.xpose.msra.mxu0 0.0
    %3610 = vmatprep.subr.mxu0 0.0
    %3611 = vmatpush1.xpose.msra.mxu0 0.0
    %3612 = vmatprep.subr.mxu0 0.0
    %3613 = vmatpush1.xpose.msra.mxu0 0.0
    %3614 = vmatprep.subr.mxu0 0.0
    %3615 = vmatpush1.xpose.msra.mxu0 0.0
    %3616 = vmatprep.subr.mxu0 0.0
    %3617 = vmatpush1.xpose.msra.mxu0 0.0
    %3618 = vmatprep.subr.mxu0 0.0
    %3619 = vmatpush1.xpose.msra.mxu0 0.0
    %3620 = vmatprep.subr.mxu0 0.0
    %3621 = vmatpush1.xpose.msra.mxu0 0.0
    %3622 = vmatprep.mubr.f32.mxu0 0.0
    %3623 = vmatmul.mubr.f32.gmra.mrb[0].mxu0 %v3554
    %v3624 = vpop.f32.mrb[0].mxu0
    %v3625 = vadd.f32 0.0, %v3624
    %v3626 = vpop.f32.mrb[0].mxu0
    %3627 = vdwg.mxu0
    %3628 = vrot.lane.b32.xlu0 %v2995, 120
    %v3629 = vpop.permute.xlu0 %3628
    %v3630 = vsel %vm448, %v3629, 0
    %3632 = vmatprep.subr.mxu0 0.0
    %3633 = vmatpush1.xpose.msra.mxu0 %v3630
    %3634 = vmatprep.subr.mxu0 0.0
    %3635 = vmatpush1.xpose.msra.mxu0 0.0
    %3636 = vmatprep.subr.mxu0 0.0
    %3637 = vmatpush1.xpose.msra.mxu0 0.0
    %3638 = vmatprep.subr.mxu0 0.0
    %3639 = vmatpush1.xpose.msra.mxu0 0.0
    %3640 = vmatprep.subr.mxu0 0.0
    %3641 = vmatpush1.xpose.msra.mxu0 0.0
    %3642 = vmatprep.subr.mxu0 0.0
    %3643 = vmatpush1.xpose.msra.mxu0 0.0
    %3644 = vmatprep.subr.mxu0 0.0
    %3645 = vmatpush1.xpose.msra.mxu0 0.0
    %3646 = vmatprep.subr.mxu0 0.0
    %3647 = vmatpush1.xpose.msra.mxu0 0.0
    %3648 = vmatprep.subr.mxu0 0.0
    %3649 = vmatpush1.xpose.msra.mxu0 0.0
    %3650 = vmatprep.subr.mxu0 0.0
    %3651 = vmatpush1.xpose.msra.mxu0 0.0
    %3652 = vmatprep.subr.mxu0 0.0
    %3653 = vmatpush1.xpose.msra.mxu0 0.0
    %3654 = vmatprep.subr.mxu0 0.0
    %3655 = vmatpush1.xpose.msra.mxu0 0.0
    %3656 = vmatprep.subr.mxu0 0.0
    %3657 = vmatpush1.xpose.msra.mxu0 0.0
    %3658 = vmatprep.subr.mxu0 0.0
    %3659 = vmatpush1.xpose.msra.mxu0 0.0
    %3660 = vmatprep.subr.mxu0 0.0
    %3661 = vmatpush1.xpose.msra.mxu0 0.0
    %3662 = vmatprep.subr.mxu0 0.0
    %3663 = vmatpush1.xpose.msra.mxu0 0.0
    %3664 = vmatprep.subr.mxu0 0.0
    %3665 = vmatpush1.xpose.msra.mxu0 0.0
    %3666 = vmatprep.subr.mxu0 0.0
    %3667 = vmatpush1.xpose.msra.mxu0 0.0
    %3668 = vmatprep.subr.mxu0 0.0
    %3669 = vmatpush1.xpose.msra.mxu0 0.0
    %3670 = vmatprep.subr.mxu0 0.0
    %3671 = vmatpush1.xpose.msra.mxu0 0.0
    %3672 = vmatprep.subr.mxu0 0.0
    %3673 = vmatpush1.xpose.msra.mxu0 0.0
    %3674 = vmatprep.subr.mxu0 0.0
    %3675 = vmatpush1.xpose.msra.mxu0 0.0
    %3676 = vmatprep.subr.mxu0 0.0
    %3677 = vmatpush1.xpose.msra.mxu0 0.0
    %3678 = vmatprep.subr.mxu0 0.0
    %3679 = vmatpush1.xpose.msra.mxu0 0.0
    %3680 = vmatprep.subr.mxu0 0.0
    %3681 = vmatpush1.xpose.msra.mxu0 0.0
    %3682 = vmatprep.subr.mxu0 0.0
    %3683 = vmatpush1.xpose.msra.mxu0 0.0
    %3684 = vmatprep.subr.mxu0 0.0
    %3685 = vmatpush1.xpose.msra.mxu0 0.0
    %3686 = vmatprep.subr.mxu0 0.0
    %3687 = vmatpush1.xpose.msra.mxu0 0.0
    %3688 = vmatprep.subr.mxu0 0.0
    %3689 = vmatpush1.xpose.msra.mxu0 0.0
    %3690 = vmatprep.subr.mxu0 0.0
    %3691 = vmatpush1.xpose.msra.mxu0 0.0
    %3692 = vmatprep.subr.mxu0 0.0
    %3693 = vmatpush1.xpose.msra.mxu0 0.0
    %3694 = vmatprep.subr.mxu0 0.0
    %3695 = vmatpush1.xpose.msra.mxu0 0.0
    %3696 = vmatprep.mubr.f32.mxu0 0.0
    %3697 = vmatmul.mubr.f32.gmra.mrb[0].mxu0 %v3554
    %v3698 = vpop.f32.mrb[0].mxu0
    %v3699 = vadd.f32 0.0, %v3698
    %v3700 = vpop.f32.mrb[0].mxu0
    %3701 = vdwg.mxu0
    %3702 = vrot.lane.b32.xlu0 %v2852, 120
    %v3703 = vpop.permute.xlu0 %3702
    %v3704 = vsel %vm448, %v3703, 0
    %3706 = vmatprep.subr.mxu0 0.0
    %3707 = vmatpush1.xpose.msra.mxu0 %v3704
    %3708 = vmatprep.subr.mxu0 0.0
    %3709 = vmatpush1.xpose.msra.mxu0 0.0
    %3710 = vmatprep.subr.mxu0 0.0
    %3711 = vmatpush1.xpose.msra.mxu0 0.0
    %3712 = vmatprep.subr.mxu0 0.0
    %3713 = vmatpush1.xpose.msra.mxu0 0.0
    %3714 = vmatprep.subr.mxu0 0.0
    %3715 = vmatpush1.xpose.msra.mxu0 0.0
    %3716 = vmatprep.subr.mxu0 0.0
    %3717 = vmatpush1.xpose.msra.mxu0 0.0
    %3718 = vmatprep.subr.mxu0 0.0
    %3719 = vmatpush1.xpose.msra.mxu0 0.0
    %3720 = vmatprep.subr.mxu0 0.0
    %3721 = vmatpush1.xpose.msra.mxu0 0.0
    %3722 = vmatprep.subr.mxu0 0.0
    %3723 = vmatpush1.xpose.msra.mxu0 0.0
    %3724 = vmatprep.subr.mxu0 0.0
    %3725 = vmatpush1.xpose.msra.mxu0 0.0
    %3726 = vmatprep.subr.mxu0 0.0
    %3727 = vmatpush1.xpose.msra.mxu0 0.0
    %3728 = vmatprep.subr.mxu0 0.0
    %3729 = vmatpush1.xpose.msra.mxu0 0.0
    %3730 = vmatprep.subr.mxu0 0.0
    %3731 = vmatpush1.xpose.msra.mxu0 0.0
    %3732 = vmatprep.subr.mxu0 0.0
    %3733 = vmatpush1.xpose.msra.mxu0 0.0
    %3734 = vmatprep.subr.mxu0 0.0
    %3735 = vmatpush1.xpose.msra.mxu0 0.0
    %3736 = vmatprep.subr.mxu0 0.0
    %3737 = vmatpush1.xpose.msra.mxu0 0.0
    %3738 = vmatprep.subr.mxu0 0.0
    %3739 = vmatpush1.xpose.msra.mxu0 0.0
    %3740 = vmatprep.subr.mxu0 0.0
    %3741 = vmatpush1.xpose.msra.mxu0 0.0
    %3742 = vmatprep.subr.mxu0 0.0
    %3743 = vmatpush1.xpose.msra.mxu0 0.0
    %3744 = vmatprep.subr.mxu0 0.0
    %3745 = vmatpush1.xpose.msra.mxu0 0.0
    %3746 = vmatprep.subr.mxu0 0.0
    %3747 = vmatpush1.xpose.msra.mxu0 0.0
    %3748 = vmatprep.subr.mxu0 0.0
    %3749 = vmatpush1.xpose.msra.mxu0 0.0
    %3750 = vmatprep.subr.mxu0 0.0
    %3751 = vmatpush1.xpose.msra.mxu0 0.0
    %3752 = vmatprep.subr.mxu0 0.0
    %3753 = vmatpush1.xpose.msra.mxu0 0.0
    %3754 = vmatprep.subr.mxu0 0.0
    %3755 = vmatpush1.xpose.msra.mxu0 0.0
    %3756 = vmatprep.subr.mxu0 0.0
    %3757 = vmatpush1.xpose.msra.mxu0 0.0
    %3758 = vmatprep.subr.mxu0 0.0
    %3759 = vmatpush1.xpose.msra.mxu0 0.0
    %3760 = vmatprep.subr.mxu0 0.0
    %3761 = vmatpush1.xpose.msra.mxu0 0.0
    %3762 = vmatprep.subr.mxu0 0.0
    %3763 = vmatpush1.xpose.msra.mxu0 0.0
    %3764 = vmatprep.subr.mxu0 0.0
    %3765 = vmatpush1.xpose.msra.mxu0 0.0
    %3766 = vmatprep.subr.mxu0 0.0
    %3767 = vmatpush1.xpose.msra.mxu0 0.0
    %3768 = vmatprep.subr.mxu0 0.0
    %3769 = vmatpush1.xpose.msra.mxu0 0.0
    %3770 = vmatprep.mubr.f32.mxu0 0.0
    %3771 = vmatmul.mubr.f32.gmra.mrb[0].mxu0 %v3554
    %v3772 = vpop.f32.mrb[0].mxu0
    %v3773 = vadd.f32 %v67, %v3772
    %v3774 = vpop.f32.mrb[0].mxu0
    %3775 = vdwg.mxu0
    %v3776 = vsel %vm671, %v3625, -inf
    %3777 = vmax.xlane.f32.xlu0 %v3776
    %v3778 = vpop.xlane.xlu0 %3777
    %v3779 = vsel %vm671, %v3699, -inf
    %3780 = vmax.xlane.f32.xlu0 %v3779
    %v3781 = vpop.xlane.xlu0 %3780
    %v3782 = vsel %vm448, %v3773, -inf
    %3783 = vmax.xlane.f32.xlu0 %v3782
    %v3784 = vpop.xlane.xlu0 %3783
    %v3785 = vmax.f32 %v3781, %v3784
    %v3786 = vmax.f32 %v3778, %v3785
    %v3787 = vsub.f32 %v3625, %v3786
    %v3788 = vmul.f32 %v3787, 1.442695
    %v3789 = vpow.pop %v3788
    %v3790 = vsub.f32 %v3699, %v3786
    %v3791 = vmul.f32 %v3790, 1.442695
    %v3792 = vpow.pop %v3791
    %v3793 = vsub.f32 %v3773, %v3786
    %v3794 = vmul.f32 %v3793, 1.442695
    %v3795 = vpow.pop %v3794
    %v3796 = vsel %vm671, %v3789, 0.0
    %3797 = vadd.xlane.f32.xlu0 %v3796
    %v3798 = vpop.xlane.xlu0 %3797
    %v3799 = vsel %vm671, %v3792, 0.0
    %3800 = vadd.xlane.f32.xlu0 %v3799
    %v3801 = vpop.xlane.xlu0 %3800
    %v3802 = vadd.f32 %v3798, %v3801
    %v3803 = vsel %vm448, %v3795, 0.0
    %3804 = vadd.xlane.f32.xlu0 %v3803
    %v3805 = vpop.xlane.xlu0 %3804
    %v3806 = vadd.f32 %v3802, %v3805
    %3807 = vrot.lane.b32.xlu0 %v3065, 120
    %v3808 = vpop.permute.xlu0 %3807
    %v3810 = vsel %vm671, %v3792, 0
    %v3812 = vsel %vm706, %v3808, 0
    %3814 = vmatprep.subr.mxu0 0.0
    %3815 = vmatpush1.msra.mxu0 %v3812
    %3816 = vmatprep.subr.mxu0 0.0
    %3817 = vmatpush1.msra.mxu0 0.0
    %3818 = vmatprep.subr.mxu0 0.0
    %3819 = vmatpush1.msra.mxu0 0.0
    %3820 = vmatprep.subr.mxu0 0.0
    %3821 = vmatpush1.msra.mxu0 0.0
    %3822 = vmatprep.subr.mxu0 0.0
    %3823 = vmatpush1.msra.mxu0 0.0
    %3824 = vmatprep.subr.mxu0 0.0
    %3825 = vmatpush1.msra.mxu0 0.0
    %3826 = vmatprep.subr.mxu0 0.0
    %3827 = vmatpush1.msra.mxu0 0.0
    %3828 = vmatprep.subr.mxu0 0.0
    %3829 = vmatpush1.msra.mxu0 0.0
    %3830 = vmatprep.subr.mxu0 0.0
    %3831 = vmatpush1.msra.mxu0 0.0
    %3832 = vmatprep.subr.mxu0 0.0
    %3833 = vmatpush1.msra.mxu0 0.0
    %3834 = vmatprep.subr.mxu0 0.0
    %3835 = vmatpush1.msra.mxu0 0.0
    %3836 = vmatprep.subr.mxu0 0.0
    %3837 = vmatpush1.msra.mxu0 0.0
    %3838 = vmatprep.subr.mxu0 0.0
    %3839 = vmatpush1.msra.mxu0 0.0
    %3840 = vmatprep.subr.mxu0 0.0
    %3841 = vmatpush1.msra.mxu0 0.0
    %3842 = vmatprep.subr.mxu0 0.0
    %3843 = vmatpush1.msra.mxu0 0.0
    %3844 = vmatprep.subr.mxu0 0.0
    %3845 = vmatpush1.msra.mxu0 0.0
    %3846 = vmatprep.subr.mxu0 0.0
    %3847 = vmatpush1.msra.mxu0 0.0
    %3848 = vmatprep.subr.mxu0 0.0
    %3849 = vmatpush1.msra.mxu0 0.0
    %3850 = vmatprep.subr.mxu0 0.0
    %3851 = vmatpush1.msra.mxu0 0.0
    %3852 = vmatprep.subr.mxu0 0.0
    %3853 = vmatpush1.msra.mxu0 0.0
    %3854 = vmatprep.subr.mxu0 0.0
    %3855 = vmatpush1.msra.mxu0 0.0
    %3856 = vmatprep.subr.mxu0 0.0
    %3857 = vmatpush1.msra.mxu0 0.0
    %3858 = vmatprep.subr.mxu0 0.0
    %3859 = vmatpush1.msra.mxu0 0.0
    %3860 = vmatprep.subr.mxu0 0.0
    %3861 = vmatpush1.msra.mxu0 0.0
    %3862 = vmatprep.subr.mxu0 0.0
    %3863 = vmatpush1.msra.mxu0 0.0
    %3864 = vmatprep.subr.mxu0 0.0
    %3865 = vmatpush1.msra.mxu0 0.0
    %3866 = vmatprep.subr.mxu0 0.0
    %3867 = vmatpush1.msra.mxu0 0.0
    %3868 = vmatprep.subr.mxu0 0.0
    %3869 = vmatpush1.msra.mxu0 0.0
    %3870 = vmatprep.subr.mxu0 0.0
    %3871 = vmatpush1.msra.mxu0 0.0
    %3872 = vmatprep.subr.mxu0 0.0
    %3873 = vmatpush1.msra.mxu0 0.0
    %3874 = vmatprep.subr.mxu0 0.0
    %3875 = vmatpush1.msra.mxu0 0.0
    %3876 = vmatprep.subr.mxu0 0.0
    %3877 = vmatpush1.msra.mxu0 0.0
    %3878 = vmatprep.mubr.f32.mxu0 0.0
    %3879 = vmatmul.mubr.f32.gmra.mrb[0].mxu0 %v3810
    %v3880 = vpop.f32.mrb[0].mxu0
    %v3881 = vadd.f32 0.0, %v3880
    %v3882 = vpop.f32.mrb[0].mxu0
    %3883 = vdwg.mxu0
    %3884 = vrot.lane.b32.xlu0 %v2711, 120
    %v3885 = vpop.permute.xlu0 %3884
    %v3887 = vsel %vm671, %v3789, 0
    %v3889 = vsel %vm706, %v3885, 0
    %3891 = vmatprep.subr.mxu0 0.0
    %3892 = vmatpush1.msra.mxu0 %v3889
    %3893 = vmatprep.subr.mxu0 0.0
    %3894 = vmatpush1.msra.mxu0 0.0
    %3895 = vmatprep.subr.mxu0 0.0
    %3896 = vmatpush1.msra.mxu0 0.0
    %3897 = vmatprep.subr.mxu0 0.0
    %3898 = vmatpush1.msra.mxu0 0.0
    %3899 = vmatprep.subr.mxu0 0.0
    %3900 = vmatpush1.msra.mxu0 0.0
    %3901 = vmatprep.subr.mxu0 0.0
    %3902 = vmatpush1.msra.mxu0 0.0
    %3903 = vmatprep.subr.mxu0 0.0
    %3904 = vmatpush1.msra.mxu0 0.0
    %3905 = vmatprep.subr.mxu0 0.0
    %3906 = vmatpush1.msra.mxu0 0.0
    %3907 = vmatprep.subr.mxu0 0.0
    %3908 = vmatpush1.msra.mxu0 0.0
    %3909 = vmatprep.subr.mxu0 0.0
    %3910 = vmatpush1.msra.mxu0 0.0
    %3911 = vmatprep.subr.mxu0 0.0
    %3912 = vmatpush1.msra.mxu0 0.0
    %3913 = vmatprep.subr.mxu0 0.0
    %3914 = vmatpush1.msra.mxu0 0.0
    %3915 = vmatprep.subr.mxu0 0.0
    %3916 = vmatpush1.msra.mxu0 0.0
    %3917 = vmatprep.subr.mxu0 0.0
    %3918 = vmatpush1.msra.mxu0 0.0
    %3919 = vmatprep.subr.mxu0 0.0
    %3920 = vmatpush1.msra.mxu0 0.0
    %3921 = vmatprep.subr.mxu0 0.0
    %3922 = vmatpush1.msra.mxu0 0.0
    %3923 = vmatprep.subr.mxu0 0.0
    %3924 = vmatpush1.msra.mxu0 0.0
    %3925 = vmatprep.subr.mxu0 0.0
    %3926 = vmatpush1.msra.mxu0 0.0
    %3927 = vmatprep.subr.mxu0 0.0
    %3928 = vmatpush1.msra.mxu0 0.0
    %3929 = vmatprep.subr.mxu0 0.0
    %3930 = vmatpush1.msra.mxu0 0.0
    %3931 = vmatprep.subr.mxu0 0.0
    %3932 = vmatpush1.msra.mxu0 0.0
    %3933 = vmatprep.subr.mxu0 0.0
    %3934 = vmatpush1.msra.mxu0 0.0
    %3935 = vmatprep.subr.mxu0 0.0
    %3936 = vmatpush1.msra.mxu0 0.0
    %3937 = vmatprep.subr.mxu0 0.0
    %3938 = vmatpush1.msra.mxu0 0.0
    %3939 = vmatprep.subr.mxu0 0.0
    %3940 = vmatpush1.msra.mxu0 0.0
    %3941 = vmatprep.subr.mxu0 0.0
    %3942 = vmatpush1.msra.mxu0 0.0
    %3943 = vmatprep.subr.mxu0 0.0
    %3944 = vmatpush1.msra.mxu0 0.0
    %3945 = vmatprep.subr.mxu0 0.0
    %3946 = vmatpush1.msra.mxu0 0.0
    %3947 = vmatprep.subr.mxu0 0.0
    %3948 = vmatpush1.msra.mxu0 0.0
    %3949 = vmatprep.subr.mxu0 0.0
    %3950 = vmatpush1.msra.mxu0 0.0
    %3951 = vmatprep.subr.mxu0 0.0
    %3952 = vmatpush1.msra.mxu0 0.0
    %3953 = vmatprep.subr.mxu0 0.0
    %3954 = vmatpush1.msra.mxu0 0.0
    %3955 = vmatprep.mubr.f32.mxu0 0.0
    %3956 = vmatmul.mubr.f32.gmra.mrb[0].mxu0 %v3887
    %v3957 = vpop.f32.mrb[0].mxu0
    %v3958 = vadd.f32 %v3881, %v3957
    %v3959 = vpop.f32.mrb[0].mxu0
    %3960 = vdwg.mxu0
    %3962 = vrot.lane.b32.xlu0 %v2922, 120
    %v3963 = vpop.permute.xlu0 %3962
    %v3966 = vsel %vm448, %v3795, 0
    %3968 = vmatprep.subr.mxu0 0.0
    %3969 = vmatpush1.msra.mxu0 %v3963
    %3970 = vmatprep.subr.mxu0 0.0
    %3971 = vmatpush1.msra.mxu0 0.0
    %3972 = vmatprep.subr.mxu0 0.0
    %3973 = vmatpush1.msra.mxu0 0.0
    %3974 = vmatprep.subr.mxu0 0.0
    %3975 = vmatpush1.msra.mxu0 0.0
    %3976 = vmatprep.subr.mxu0 0.0
    %3977 = vmatpush1.msra.mxu0 0.0
    %3978 = vmatprep.subr.mxu0 0.0
    %3979 = vmatpush1.msra.mxu0 0.0
    %3980 = vmatprep.subr.mxu0 0.0
    %3981 = vmatpush1.msra.mxu0 0.0
    %3982 = vmatprep.subr.mxu0 0.0
    %3983 = vmatpush1.msra.mxu0 0.0
    %3984 = vmatprep.subr.mxu0 0.0
    %3985 = vmatpush1.msra.mxu0 0.0
    %3986 = vmatprep.subr.mxu0 0.0
    %3987 = vmatpush1.msra.mxu0 0.0
    %3988 = vmatprep.subr.mxu0 0.0
    %3989 = vmatpush1.msra.mxu0 0.0
    %3990 = vmatprep.subr.mxu0 0.0
    %3991 = vmatpush1.msra.mxu0 0.0
    %3992 = vmatprep.subr.mxu0 0.0
    %3993 = vmatpush1.msra.mxu0 0.0
    %3994 = vmatprep.subr.mxu0 0.0
    %3995 = vmatpush1.msra.mxu0 0.0
    %3996 = vmatprep.subr.mxu0 0.0
    %3997 = vmatpush1.msra.mxu0 0.0
    %3998 = vmatprep.subr.mxu0 0.0
    %3999 = vmatpush1.msra.mxu0 0.0
    %4000 = vmatprep.subr.mxu0 0.0
    %4001 = vmatpush1.msra.mxu0 0.0
    %4002 = vmatprep.subr.mxu0 0.0
    %4003 = vmatpush1.msra.mxu0 0.0
    %4004 = vmatprep.subr.mxu0 0.0
    %4005 = vmatpush1.msra.mxu0 0.0
    %4006 = vmatprep.subr.mxu0 0.0
    %4007 = vmatpush1.msra.mxu0 0.0
    %4008 = vmatprep.subr.mxu0 0.0
    %4009 = vmatpush1.msra.mxu0 0.0
    %4010 = vmatprep.subr.mxu0 0.0
    %4011 = vmatpush1.msra.mxu0 0.0
    %4012 = vmatprep.subr.mxu0 0.0
    %4013 = vmatpush1.msra.mxu0 0.0
    %4014 = vmatprep.subr.mxu0 0.0
    %4015 = vmatpush1.msra.mxu0 0.0
    %4016 = vmatprep.subr.mxu0 0.0
    %4017 = vmatpush1.msra.mxu0 0.0
    %4018 = vmatprep.subr.mxu0 0.0
    %4019 = vmatpush1.msra.mxu0 0.0
    %4020 = vmatprep.subr.mxu0 0.0
    %4021 = vmatpush1.msra.mxu0 0.0
    %4022 = vmatprep.subr.mxu0 0.0
    %4023 = vmatpush1.msra.mxu0 0.0
    %4024 = vmatprep.subr.mxu0 0.0
    %4025 = vmatpush1.msra.mxu0 0.0
    %4026 = vmatprep.subr.mxu0 0.0
    %4027 = vmatpush1.msra.mxu0 0.0
    %4028 = vmatprep.subr.mxu0 0.0
    %4029 = vmatpush1.msra.mxu0 0.0
    %4030 = vmatprep.subr.mxu0 0.0
    %4031 = vmatpush1.msra.mxu0 0.0
    %4032 = vmatprep.mubr.f32.mxu0 0.0
    %4033 = vmatmul.mubr.f32.gmra.mrb[0].mxu0 %v3966
    %v4034 = vpop.f32.mrb[0].mxu0
    %v4035 = vadd.f32 0.0, %v4034
    %v4036 = vpop.f32.mrb[0].mxu0
    %4037 = vdwg.mxu0
    %v4038 = vadd.f32 %v3958, %v4035
    %v4039 = vrcp.pop %v3806
    %v4040 = vmul.f32 %v4038, %v4039
    %v4042 = vsel %vm448, %v4040, 0
    %4044 = vmatprep.subr.mxu0 0.0
    %4045 = vmatpush1.msra.mxu0 %v59
    %4046 = vmatprep.subr.mxu0 0.0
    %4047 = vmatpush1.msra.mxu0 0.0
    %4048 = vmatprep.subr.mxu0 0.0
    %4049 = vmatpush1.msra.mxu0 0.0
    %4050 = vmatprep.subr.mxu0 0.0
    %4051 = vmatpush1.msra.mxu0 0.0
    %4052 = vmatprep.subr.mxu0 0.0
    %4053 = vmatpush1.msra.mxu0 0.0
    %4054 = vmatprep.subr.mxu0 0.0
    %4055 = vmatpush1.msra.mxu0 0.0
    %4056 = vmatprep.subr.mxu0 0.0
    %4057 = vmatpush1.msra.mxu0 0.0
    %4058 = vmatprep.subr.mxu0 0.0
    %4059 = vmatpush1.msra.mxu0 0.0
    %4060 = vmatprep.subr.mxu0 0.0
    %4061 = vmatpush1.msra.mxu0 0.0
    %4062 = vmatprep.subr.mxu0 0.0
    %4063 = vmatpush1.msra.mxu0 0.0
    %4064 = vmatprep.subr.mxu0 0.0
    %4065 = vmatpush1.msra.mxu0 0.0
    %4066 = vmatprep.subr.mxu0 0.0
    %4067 = vmatpush1.msra.mxu0 0.0
    %4068 = vmatprep.subr.mxu0 0.0
    %4069 = vmatpush1.msra.mxu0 0.0
    %4070 = vmatprep.subr.mxu0 0.0
    %4071 = vmatpush1.msra.mxu0 0.0
    %4072 = vmatprep.subr.mxu0 0.0
    %4073 = vmatpush1.msra.mxu0 0.0
    %4074 = vmatprep.subr.mxu0 0.0
    %4075 = vmatpush1.msra.mxu0 0.0
    %4076 = vmatprep.subr.mxu0 0.0
    %4077 = vmatpush1.msra.mxu0 0.0
    %4078 = vmatprep.subr.mxu0 0.0
    %4079 = vmatpush1.msra.mxu0 0.0
    %4080 = vmatprep.subr.mxu0 0.0
    %4081 = vmatpush1.msra.mxu0 0.0
    %4082 = vmatprep.subr.mxu0 0.0
    %4083 = vmatpush1.msra.mxu0 0.0
    %4084 = vmatprep.subr.mxu0 0.0
    %4085 = vmatpush1.msra.mxu0 0.0
    %4086 = vmatprep.subr.mxu0 0.0
    %4087 = vmatpush1.msra.mxu0 0.0
    %4088 = vmatprep.subr.mxu0 0.0
    %4089 = vmatpush1.msra.mxu0 0.0
    %4090 = vmatprep.subr.mxu0 0.0
    %4091 = vmatpush1.msra.mxu0 0.0
    %4092 = vmatprep.subr.mxu0 0.0
    %4093 = vmatpush1.msra.mxu0 0.0
    %4094 = vmatprep.subr.mxu0 0.0
    %4095 = vmatpush1.msra.mxu0 0.0
    %4096 = vmatprep.subr.mxu0 0.0
    %4097 = vmatpush1.msra.mxu0 0.0
    %4098 = vmatprep.subr.mxu0 0.0
    %4099 = vmatpush1.msra.mxu0 0.0
    %4100 = vmatprep.subr.mxu0 0.0
    %4101 = vmatpush1.msra.mxu0 0.0
    %4102 = vmatprep.subr.mxu0 0.0
    %4103 = vmatpush1.msra.mxu0 0.0
    %4104 = vmatprep.subr.mxu0 0.0
    %4105 = vmatpush1.msra.mxu0 0.0
    %4106 = vmatprep.subr.mxu0 0.0
    %4107 = vmatpush1.msra.mxu0 0.0
    %4108 = vmatprep.mubr.f32.mxu0 0.0
    %4109 = vmatmul.mubr.f32.gmra.mrb[0].mxu0 %v4042
    %v4110 = vpop.f32.mrb[0].mxu0
    %v4111 = vadd.f32 0.0, %v4110
    %v4112 = vpop.f32.mrb[0].mxu0
    %4113 = vdwg.mxu0
    %v4115 = vsel %vm448, %v3549, 0
    %4117 = vmatprep.subr.mxu0 0.0
    %4118 = vmatpush1.msra.mxu0 %v58
    %4119 = vmatprep.subr.mxu0 0.0
    %4120 = vmatpush1.msra.mxu0 0.0
    %4121 = vmatprep.subr.mxu0 0.0
    %4122 = vmatpush1.msra.mxu0 0.0
    %4123 = vmatprep.subr.mxu0 0.0
    %4124 = vmatpush1.msra.mxu0 0.0
    %4125 = vmatprep.subr.mxu0 0.0
    %4126 = vmatpush1.msra.mxu0 0.0
    %4127 = vmatprep.subr.mxu0 0.0
    %4128 = vmatpush1.msra.mxu0 0.0
    %4129 = vmatprep.subr.mxu0 0.0
    %4130 = vmatpush1.msra.mxu0 0.0
    %4131 = vmatprep.subr.mxu0 0.0
    %4132 = vmatpush1.msra.mxu0 0.0
    %4133 = vmatprep.subr.mxu0 0.0
    %4134 = vmatpush1.msra.mxu0 0.0
    %4135 = vmatprep.subr.mxu0 0.0
    %4136 = vmatpush1.msra.mxu0 0.0
    %4137 = vmatprep.subr.mxu0 0.0
    %4138 = vmatpush1.msra.mxu0 0.0
    %4139 = vmatprep.subr.mxu0 0.0
    %4140 = vmatpush1.msra.mxu0 0.0
    %4141 = vmatprep.subr.mxu0 0.0
    %4142 = vmatpush1.msra.mxu0 0.0
    %4143 = vmatprep.subr.mxu0 0.0
    %4144 = vmatpush1.msra.mxu0 0.0
    %4145 = vmatprep.subr.mxu0 0.0
    %4146 = vmatpush1.msra.mxu0 0.0
    %4147 = vmatprep.subr.mxu0 0.0
    %4148 = vmatpush1.msra.mxu0 0.0
    %4149 = vmatprep.subr.mxu0 0.0
    %4150 = vmatpush1.msra.mxu0 0.0
    %4151 = vmatprep.subr.mxu0 0.0
    %4152 = vmatpush1.msra.mxu0 0.0
    %4153 = vmatprep.subr.mxu0 0.0
    %4154 = vmatpush1.msra.mxu0 0.0
    %4155 = vmatprep.subr.mxu0 0.0
    %4156 = vmatpush1.msra.mxu0 0.0
    %4157 = vmatprep.subr.mxu0 0.0
    %4158 = vmatpush1.msra.mxu0 0.0
    %4159 = vmatprep.subr.mxu0 0.0
    %4160 = vmatpush1.msra.mxu0 0.0
    %4161 = vmatprep.subr.mxu0 0.0
    %4162 = vmatpush1.msra.mxu0 0.0
    %4163 = vmatprep.subr.mxu0 0.0
    %4164 = vmatpush1.msra.mxu0 0.0
    %4165 = vmatprep.subr.mxu0 0.0
    %4166 = vmatpush1.msra.mxu0 0.0
    %4167 = vmatprep.subr.mxu0 0.0
    %4168 = vmatpush1.msra.mxu0 0.0
    %4169 = vmatprep.subr.mxu0 0.0
    %4170 = vmatpush1.msra.mxu0 0.0
    %4171 = vmatprep.subr.mxu0 0.0
    %4172 = vmatpush1.msra.mxu0 0.0
    %4173 = vmatprep.subr.mxu0 0.0
    %4174 = vmatpush1.msra.mxu0 0.0
    %4175 = vmatprep.subr.mxu0 0.0
    %4176 = vmatpush1.msra.mxu0 0.0
    %4177 = vmatprep.subr.mxu0 0.0
    %4178 = vmatpush1.msra.mxu0 0.0
    %4179 = vmatprep.subr.mxu0 0.0
    %4180 = vmatpush1.msra.mxu0 0.0
    %4181 = vmatprep.mubr.f32.mxu0 0.0
    %4182 = vmatmul.mubr.f32.gmra.mrb[0].mxu0 %v4115
    %v4183 = vpop.f32.mrb[0].mxu0
    %v4184 = vadd.f32 %v4111, %v4183
    %v4185 = vpop.f32.mrb[0].mxu0
    %4186 = vdwg.mxu0
    %4187 = vrot.lane.b32.xlu0 %v3068, 112
    %v4188 = vpop.permute.xlu0 %4187
    %4189 = vrot.lane.b32.xlu0 %v2709, 112
    %v4190 = vpop.permute.xlu0 %4189
    %v4191 = vsel %vm448, %v4188, 0
    %v4193 = vsel %vm448, %v4190, 0
    %4195 = vmatprep.subr.mxu0 0.0
    %4196 = vmatpush1.xpose.msra.mxu0 %v4193
    %4197 = vmatprep.subr.mxu0 0.0
    %4198 = vmatpush1.xpose.msra.mxu0 0.0
    %4199 = vmatprep.subr.mxu0 0.0
    %4200 = vmatpush1.xpose.msra.mxu0 0.0
    %4201 = vmatprep.subr.mxu0 0.0
    %4202 = vmatpush1.xpose.msra.mxu0 0.0
    %4203 = vmatprep.subr.mxu0 0.0
    %4204 = vmatpush1.xpose.msra.mxu0 0.0
    %4205 = vmatprep.subr.mxu0 0.0
    %4206 = vmatpush1.xpose.msra.mxu0 0.0
    %4207 = vmatprep.subr.mxu0 0.0
    %4208 = vmatpush1.xpose.msra.mxu0 0.0
    %4209 = vmatprep.subr.mxu0 0.0
    %4210 = vmatpush1.xpose.msra.mxu0 0.0
    %4211 = vmatprep.subr.mxu0 0.0
    %4212 = vmatpush1.xpose.msra.mxu0 0.0
    %4213 = vmatprep.subr.mxu0 0.0
    %4214 = vmatpush1.xpose.msra.mxu0 0.0
    %4215 = vmatprep.subr.mxu0 0.0
    %4216 = vmatpush1.xpose.msra.mxu0 0.0
    %4217 = vmatprep.subr.mxu0 0.0
    %4218 = vmatpush1.xpose.msra.mxu0 0.0
    %4219 = vmatprep.subr.mxu0 0.0
    %4220 = vmatpush1.xpose.msra.mxu0 0.0
    %4221 = vmatprep.subr.mxu0 0.0
    %4222 = vmatpush1.xpose.msra.mxu0 0.0
    %4223 = vmatprep.subr.mxu0 0.0
    %4224 = vmatpush1.xpose.msra.mxu0 0.0
    %4225 = vmatprep.subr.mxu0 0.0
    %4226 = vmatpush1.xpose.msra.mxu0 0.0
    %4227 = vmatprep.subr.mxu0 0.0
    %4228 = vmatpush1.xpose.msra.mxu0 0.0
    %4229 = vmatprep.subr.mxu0 0.0
    %4230 = vmatpush1.xpose.msra.mxu0 0.0
    %4231 = vmatprep.subr.mxu0 0.0
    %4232 = vmatpush1.xpose.msra.mxu0 0.0
    %4233 = vmatprep.subr.mxu0 0.0
    %4234 = vmatpush1.xpose.msra.mxu0 0.0
    %4235 = vmatprep.subr.mxu0 0.0
    %4236 = vmatpush1.xpose.msra.mxu0 0.0
    %4237 = vmatprep.subr.mxu0 0.0
    %4238 = vmatpush1.xpose.msra.mxu0 0.0
    %4239 = vmatprep.subr.mxu0 0.0
    %4240 = vmatpush1.xpose.msra.mxu0 0.0
    %4241 = vmatprep.subr.mxu0 0.0
    %4242 = vmatpush1.xpose.msra.mxu0 0.0
    %4243 = vmatprep.subr.mxu0 0.0
    %4244 = vmatpush1.xpose.msra.mxu0 0.0
    %4245 = vmatprep.subr.mxu0 0.0
    %4246 = vmatpush1.xpose.msra.mxu0 0.0
    %4247 = vmatprep.subr.mxu0 0.0
    %4248 = vmatpush1.xpose.msra.mxu0 0.0
    %4249 = vmatprep.subr.mxu0 0.0
    %4250 = vmatpush1.xpose.msra.mxu0 0.0
    %4251 = vmatprep.subr.mxu0 0.0
    %4252 = vmatpush1.xpose.msra.mxu0 0.0
    %4253 = vmatprep.subr.mxu0 0.0
    %4254 = vmatpush1.xpose.msra.mxu0 0.0
    %4255 = vmatprep.subr.mxu0 0.0
    %4256 = vmatpush1.xpose.msra.mxu0 0.0
    %4257 = vmatprep.subr.mxu0 0.0
    %4258 = vmatpush1.xpose.msra.mxu0 0.0
    %4259 = vmatprep.mubr.f32.mxu0 0.0
    %4260 = vmatmul.mubr.f32.gmra.mrb[0].mxu0 %v4191
    %v4261 = vpop.f32.mrb[0].mxu0
    %v4262 = vadd.f32 0.0, %v4261
    %v4263 = vpop.f32.mrb[0].mxu0
    %4264 = vdwg.mxu0
    %4265 = vrot.lane.b32.xlu0 %v2995, 112
    %v4266 = vpop.permute.xlu0 %4265
    %v4267 = vsel %vm448, %v4266, 0
    %4269 = vmatprep.subr.mxu0 0.0
    %4270 = vmatpush1.xpose.msra.mxu0 %v4267
    %4271 = vmatprep.subr.mxu0 0.0
    %4272 = vmatpush1.xpose.msra.mxu0 0.0
    %4273 = vmatprep.subr.mxu0 0.0
    %4274 = vmatpush1.xpose.msra.mxu0 0.0
    %4275 = vmatprep.subr.mxu0 0.0
    %4276 = vmatpush1.xpose.msra.mxu0 0.0
    %4277 = vmatprep.subr.mxu0 0.0
    %4278 = vmatpush1.xpose.msra.mxu0 0.0
    %4279 = vmatprep.subr.mxu0 0.0
    %4280 = vmatpush1.xpose.msra.mxu0 0.0
    %4281 = vmatprep.subr.mxu0 0.0
    %4282 = vmatpush1.xpose.msra.mxu0 0.0
    %4283 = vmatprep.subr.mxu0 0.0
    %4284 = vmatpush1.xpose.msra.mxu0 0.0
    %4285 = vmatprep.subr.mxu0 0.0
    %4286 = vmatpush1.xpose.msra.mxu0 0.0
    %4287 = vmatprep.subr.mxu0 0.0
    %4288 = vmatpush1.xpose.msra.mxu0 0.0
    %4289 = vmatprep.subr.mxu0 0.0
    %4290 = vmatpush1.xpose.msra.mxu0 0.0
    %4291 = vmatprep.subr.mxu0 0.0
    %4292 = vmatpush1.xpose.msra.mxu0 0.0
    %4293 = vmatprep.subr.mxu0 0.0
    %4294 = vmatpush1.xpose.msra.mxu0 0.0
    %4295 = vmatprep.subr.mxu0 0.0
    %4296 = vmatpush1.xpose.msra.mxu0 0.0
    %4297 = vmatprep.subr.mxu0 0.0
    %4298 = vmatpush1.xpose.msra.mxu0 0.0
    %4299 = vmatprep.subr.mxu0 0.0
    %4300 = vmatpush1.xpose.msra.mxu0 0.0
    %4301 = vmatprep.subr.mxu0 0.0
    %4302 = vmatpush1.xpose.msra.mxu0 0.0
    %4303 = vmatprep.subr.mxu0 0.0
    %4304 = vmatpush1.xpose.msra.mxu0 0.0
    %4305 = vmatprep.subr.mxu0 0.0
    %4306 = vmatpush1.xpose.msra.mxu0 0.0
    %4307 = vmatprep.subr.mxu0 0.0
    %4308 = vmatpush1.xpose.msra.mxu0 0.0
    %4309 = vmatprep.subr.mxu0 0.0
    %4310 = vmatpush1.xpose.msra.mxu0 0.0
    %4311 = vmatprep.subr.mxu0 0.0
    %4312 = vmatpush1.xpose.msra.mxu0 0.0
    %4313 = vmatprep.subr.mxu0 0.0
    %4314 = vmatpush1.xpose.msra.mxu0 0.0
    %4315 = vmatprep.subr.mxu0 0.0
    %4316 = vmatpush1.xpose.msra.mxu0 0.0
    %4317 = vmatprep.subr.mxu0 0.0
    %4318 = vmatpush1.xpose.msra.mxu0 0.0
    %4319 = vmatprep.subr.mxu0 0.0
    %4320 = vmatpush1.xpose.msra.mxu0 0.0
    %4321 = vmatprep.subr.mxu0 0.0
    %4322 = vmatpush1.xpose.msra.mxu0 0.0
    %4323 = vmatprep.subr.mxu0 0.0
    %4324 = vmatpush1.xpose.msra.mxu0 0.0
    %4325 = vmatprep.subr.mxu0 0.0
    %4326 = vmatpush1.xpose.msra.mxu0 0.0
    %4327 = vmatprep.subr.mxu0 0.0
    %4328 = vmatpush1.xpose.msra.mxu0 0.0
    %4329 = vmatprep.subr.mxu0 0.0
    %4330 = vmatpush1.xpose.msra.mxu0 0.0
    %4331 = vmatprep.subr.mxu0 0.0
    %4332 = vmatpush1.xpose.msra.mxu0 0.0
    %4333 = vmatprep.mubr.f32.mxu0 0.0
    %4334 = vmatmul.mubr.f32.gmra.mrb[0].mxu0 %v4191
    %v4335 = vpop.f32.mrb[0].mxu0
    %v4336 = vadd.f32 0.0, %v4335
    %v4337 = vpop.f32.mrb[0].mxu0
    %4338 = vdwg.mxu0
    %4339 = vrot.lane.b32.xlu0 %v2852, 112
    %v4340 = vpop.permute.xlu0 %4339
    %v4341 = vsel %vm448, %v4340, 0
    %4343 = vmatprep.subr.mxu0 0.0
    %4344 = vmatpush1.xpose.msra.mxu0 %v4341
    %4345 = vmatprep.subr.mxu0 0.0
    %4346 = vmatpush1.xpose.msra.mxu0 0.0
    %4347 = vmatprep.subr.mxu0 0.0
    %4348 = vmatpush1.xpose.msra.mxu0 0.0
    %4349 = vmatprep.subr.mxu0 0.0
    %4350 = vmatpush1.xpose.msra.mxu0 0.0
    %4351 = vmatprep.subr.mxu0 0.0
    %4352 = vmatpush1.xpose.msra.mxu0 0.0
    %4353 = vmatprep.subr.mxu0 0.0
    %4354 = vmatpush1.xpose.msra.mxu0 0.0
    %4355 = vmatprep.subr.mxu0 0.0
    %4356 = vmatpush1.xpose.msra.mxu0 0.0
    %4357 = vmatprep.subr.mxu0 0.0
    %4358 = vmatpush1.xpose.msra.mxu0 0.0
    %4359 = vmatprep.subr.mxu0 0.0
    %4360 = vmatpush1.xpose.msra.mxu0 0.0
    %4361 = vmatprep.subr.mxu0 0.0
    %4362 = vmatpush1.xpose.msra.mxu0 0.0
    %4363 = vmatprep.subr.mxu0 0.0
    %4364 = vmatpush1.xpose.msra.mxu0 0.0
    %4365 = vmatprep.subr.mxu0 0.0
    %4366 = vmatpush1.xpose.msra.mxu0 0.0
    %4367 = vmatprep.subr.mxu0 0.0
    %4368 = vmatpush1.xpose.msra.mxu0 0.0
    %4369 = vmatprep.subr.mxu0 0.0
    %4370 = vmatpush1.xpose.msra.mxu0 0.0
    %4371 = vmatprep.subr.mxu0 0.0
    %4372 = vmatpush1.xpose.msra.mxu0 0.0
    %4373 = vmatprep.subr.mxu0 0.0
    %4374 = vmatpush1.xpose.msra.mxu0 0.0
    %4375 = vmatprep.subr.mxu0 0.0
    %4376 = vmatpush1.xpose.msra.mxu0 0.0
    %4377 = vmatprep.subr.mxu0 0.0
    %4378 = vmatpush1.xpose.msra.mxu0 0.0
    %4379 = vmatprep.subr.mxu0 0.0
    %4380 = vmatpush1.xpose.msra.mxu0 0.0
    %4381 = vmatprep.subr.mxu0 0.0
    %4382 = vmatpush1.xpose.msra.mxu0 0.0
    %4383 = vmatprep.subr.mxu0 0.0
    %4384 = vmatpush1.xpose.msra.mxu0 0.0
    %4385 = vmatprep.subr.mxu0 0.0
    %4386 = vmatpush1.xpose.msra.mxu0 0.0
    %4387 = vmatprep.subr.mxu0 0.0
    %4388 = vmatpush1.xpose.msra.mxu0 0.0
    %4389 = vmatprep.subr.mxu0 0.0
    %4390 = vmatpush1.xpose.msra.mxu0 0.0
    %4391 = vmatprep.subr.mxu0 0.0
    %4392 = vmatpush1.xpose.msra.mxu0 0.0
    %4393 = vmatprep.subr.mxu0 0.0
    %4394 = vmatpush1.xpose.msra.mxu0 0.0
    %4395 = vmatprep.subr.mxu0 0.0
    %4396 = vmatpush1.xpose.msra.mxu0 0.0
    %4397 = vmatprep.subr.mxu0 0.0
    %4398 = vmatpush1.xpose.msra.mxu0 0.0
    %4399 = vmatprep.subr.mxu0 0.0
    %4400 = vmatpush1.xpose.msra.mxu0 0.0
    %4401 = vmatprep.subr.mxu0 0.0
    %4402 = vmatpush1.xpose.msra.mxu0 0.0
    %4403 = vmatprep.subr.mxu0 0.0
    %4404 = vmatpush1.xpose.msra.mxu0 0.0
    %4405 = vmatprep.subr.mxu0 0.0
    %4406 = vmatpush1.xpose.msra.mxu0 0.0
    %4407 = vmatprep.mubr.f32.mxu0 0.0
    %4408 = vmatmul.mubr.f32.gmra.mrb[0].mxu0 %v4191
    %v4409 = vpop.f32.mrb[0].mxu0
    %v4410 = vadd.f32 %v67, %v4409
    %v4411 = vpop.f32.mrb[0].mxu0
    %4412 = vdwg.mxu0
    %v4413 = vsel %vm671, %v4262, -inf
    %4414 = vmax.xlane.f32.xlu0 %v4413
    %v4415 = vpop.xlane.xlu0 %4414
    %v4416 = vsel %vm671, %v4336, -inf
    %4417 = vmax.xlane.f32.xlu0 %v4416
    %v4418 = vpop.xlane.xlu0 %4417
    %v4419 = vsel %vm448, %v4410, -inf
    %4420 = vmax.xlane.f32.xlu0 %v4419
    %v4421 = vpop.xlane.xlu0 %4420
    %v4422 = vmax.f32 %v4418, %v4421
    %v4423 = vmax.f32 %v4415, %v4422
    %v4424 = vsub.f32 %v4262, %v4423
    %v4425 = vmul.f32 %v4424, 1.442695
    %v4426 = vpow.pop %v4425
    %v4427 = vsub.f32 %v4336, %v4423
    %v4428 = vmul.f32 %v4427, 1.442695
    %v4429 = vpow.pop %v4428
    %v4430 = vsub.f32 %v4410, %v4423
    %v4431 = vmul.f32 %v4430, 1.442695
    %v4432 = vpow.pop %v4431
    %v4433 = vsel %vm671, %v4426, 0.0
    %4434 = vadd.xlane.f32.xlu0 %v4433
    %v4435 = vpop.xlane.xlu0 %4434
    %v4436 = vsel %vm671, %v4429, 0.0
    %4437 = vadd.xlane.f32.xlu0 %v4436
    %v4438 = vpop.xlane.xlu0 %4437
    %v4439 = vadd.f32 %v4435, %v4438
    %v4440 = vsel %vm448, %v4432, 0.0
    %4441 = vadd.xlane.f32.xlu0 %v4440
    %v4442 = vpop.xlane.xlu0 %4441
    %v4443 = vadd.f32 %v4439, %v4442
    %4444 = vrot.lane.b32.xlu0 %v3065, 112
    %v4445 = vpop.permute.xlu0 %4444
    %v4447 = vsel %vm671, %v4429, 0
    %v4449 = vsel %vm706, %v4445, 0
    %4451 = vmatprep.subr.mxu0 0.0
    %4452 = vmatpush1.msra.mxu0 %v4449
    %4453 = vmatprep.subr.mxu0 0.0
    %4454 = vmatpush1.msra.mxu0 0.0
    %4455 = vmatprep.subr.mxu0 0.0
    %4456 = vmatpush1.msra.mxu0 0.0
    %4457 = vmatprep.subr.mxu0 0.0
    %4458 = vmatpush1.msra.mxu0 0.0
    %4459 = vmatprep.subr.mxu0 0.0
    %4460 = vmatpush1.msra.mxu0 0.0
    %4461 = vmatprep.subr.mxu0 0.0
    %4462 = vmatpush1.msra.mxu0 0.0
    %4463 = vmatprep.subr.mxu0 0.0
    %4464 = vmatpush1.msra.mxu0 0.0
    %4465 = vmatprep.subr.mxu0 0.0
    %4466 = vmatpush1.msra.mxu0 0.0
    %4467 = vmatprep.subr.mxu0 0.0
    %4468 = vmatpush1.msra.mxu0 0.0
    %4469 = vmatprep.subr.mxu0 0.0
    %4470 = vmatpush1.msra.mxu0 0.0
    %4471 = vmatprep.subr.mxu0 0.0
    %4472 = vmatpush1.msra.mxu0 0.0
    %4473 = vmatprep.subr.mxu0 0.0
    %4474 = vmatpush1.msra.mxu0 0.0
    %4475 = vmatprep.subr.mxu0 0.0
    %4476 = vmatpush1.msra.mxu0 0.0
    %4477 = vmatprep.subr.mxu0 0.0
    %4478 = vmatpush1.msra.mxu0 0.0
    %4479 = vmatprep.subr.mxu0 0.0
    %4480 = vmatpush1.msra.mxu0 0.0
    %4481 = vmatprep.subr.mxu0 0.0
    %4482 = vmatpush1.msra.mxu0 0.0
    %4483 = vmatprep.subr.mxu0 0.0
    %4484 = vmatpush1.msra.mxu0 0.0
    %4485 = vmatprep.subr.mxu0 0.0
    %4486 = vmatpush1.msra.mxu0 0.0
    %4487 = vmatprep.subr.mxu0 0.0
    %4488 = vmatpush1.msra.mxu0 0.0
    %4489 = vmatprep.subr.mxu0 0.0
    %4490 = vmatpush1.msra.mxu0 0.0
    %4491 = vmatprep.subr.mxu0 0.0
    %4492 = vmatpush1.msra.mxu0 0.0
    %4493 = vmatprep.subr.mxu0 0.0
    %4494 = vmatpush1.msra.mxu0 0.0
    %4495 = vmatprep.subr.mxu0 0.0
    %4496 = vmatpush1.msra.mxu0 0.0
    %4497 = vmatprep.subr.mxu0 0.0
    %4498 = vmatpush1.msra.mxu0 0.0
    %4499 = vmatprep.subr.mxu0 0.0
    %4500 = vmatpush1.msra.mxu0 0.0
    %4501 = vmatprep.subr.mxu0 0.0
    %4502 = vmatpush1.msra.mxu0 0.0
    %4503 = vmatprep.subr.mxu0 0.0
    %4504 = vmatpush1.msra.mxu0 0.0
    %4505 = vmatprep.subr.mxu0 0.0
    %4506 = vmatpush1.msra.mxu0 0.0
    %4507 = vmatprep.subr.mxu0 0.0
    %4508 = vmatpush1.msra.mxu0 0.0
    %4509 = vmatprep.subr.mxu0 0.0
    %4510 = vmatpush1.msra.mxu0 0.0
    %4511 = vmatprep.subr.mxu0 0.0
    %4512 = vmatpush1.msra.mxu0 0.0
    %4513 = vmatprep.subr.mxu0 0.0
    %4514 = vmatpush1.msra.mxu0 0.0
    %4515 = vmatprep.mubr.f32.mxu0 0.0
    %4516 = vmatmul.mubr.f32.gmra.mrb[0].mxu0 %v4447
    %v4517 = vpop.f32.mrb[0].mxu0
    %v4518 = vadd.f32 0.0, %v4517
    %v4519 = vpop.f32.mrb[0].mxu0
    %4520 = vdwg.mxu0
    %4521 = vrot.lane.b32.xlu0 %v2711, 112
    %v4522 = vpop.permute.xlu0 %4521
    %v4524 = vsel %vm671, %v4426, 0
    %v4526 = vsel %vm706, %v4522, 0
    %4528 = vmatprep.subr.mxu0 0.0
    %4529 = vmatpush1.msra.mxu0 %v4526
    %4530 = vmatprep.subr.mxu0 0.0
    %4531 = vmatpush1.msra.mxu0 0.0
    %4532 = vmatprep.subr.mxu0 0.0
    %4533 = vmatpush1.msra.mxu0 0.0
    %4534 = vmatprep.subr.mxu0 0.0
    %4535 = vmatpush1.msra.mxu0 0.0
    %4536 = vmatprep.subr.mxu0 0.0
    %4537 = vmatpush1.msra.mxu0 0.0
    %4538 = vmatprep.subr.mxu0 0.0
    %4539 = vmatpush1.msra.mxu0 0.0
    %4540 = vmatprep.subr.mxu0 0.0
    %4541 = vmatpush1.msra.mxu0 0.0
    %4542 = vmatprep.subr.mxu0 0.0
    %4543 = vmatpush1.msra.mxu0 0.0
    %4544 = vmatprep.subr.mxu0 0.0
    %4545 = vmatpush1.msra.mxu0 0.0
    %4546 = vmatprep.subr.mxu0 0.0
    %4547 = vmatpush1.msra.mxu0 0.0
    %4548 = vmatprep.subr.mxu0 0.0
    %4549 = vmatpush1.msra.mxu0 0.0
    %4550 = vmatprep.subr.mxu0 0.0
    %4551 = vmatpush1.msra.mxu0 0.0
    %4552 = vmatprep.subr.mxu0 0.0
    %4553 = vmatpush1.msra.mxu0 0.0
    %4554 = vmatprep.subr.mxu0 0.0
    %4555 = vmatpush1.msra.mxu0 0.0
    %4556 = vmatprep.subr.mxu0 0.0
    %4557 = vmatpush1.msra.mxu0 0.0
    %4558 = vmatprep.subr.mxu0 0.0
    %4559 = vmatpush1.msra.mxu0 0.0
    %4560 = vmatprep.subr.mxu0 0.0
    %4561 = vmatpush1.msra.mxu0 0.0
    %4562 = vmatprep.subr.mxu0 0.0
    %4563 = vmatpush1.msra.mxu0 0.0
    %4564 = vmatprep.subr.mxu0 0.0
    %4565 = vmatpush1.msra.mxu0 0.0
    %4566 = vmatprep.subr.mxu0 0.0
    %4567 = vmatpush1.msra.mxu0 0.0
    %4568 = vmatprep.subr.mxu0 0.0
    %4569 = vmatpush1.msra.mxu0 0.0
    %4570 = vmatprep.subr.mxu0 0.0
    %4571 = vmatpush1.msra.mxu0 0.0
    %4572 = vmatprep.subr.mxu0 0.0
    %4573 = vmatpush1.msra.mxu0 0.0
    %4574 = vmatprep.subr.mxu0 0.0
    %4575 = vmatpush1.msra.mxu0 0.0
    %4576 = vmatprep.subr.mxu0 0.0
    %4577 = vmatpush1.msra.mxu0 0.0
    %4578 = vmatprep.subr.mxu0 0.0
    %4579 = vmatpush1.msra.mxu0 0.0
    %4580 = vmatprep.subr.mxu0 0.0
    %4581 = vmatpush1.msra.mxu0 0.0
    %4582 = vmatprep.subr.mxu0 0.0
    %4583 = vmatpush1.msra.mxu0 0.0
    %4584 = vmatprep.subr.mxu0 0.0
    %4585 = vmatpush1.msra.mxu0 0.0
    %4586 = vmatprep.subr.mxu0 0.0
    %4587 = vmatpush1.msra.mxu0 0.0
    %4588 = vmatprep.subr.mxu0 0.0
    %4589 = vmatpush1.msra.mxu0 0.0
    %4590 = vmatprep.subr.mxu0 0.0
    %4591 = vmatpush1.msra.mxu0 0.0
    %4592 = vmatprep.mubr.f32.mxu0 0.0
    %4593 = vmatmul.mubr.f32.gmra.mrb[0].mxu0 %v4524
    %v4594 = vpop.f32.mrb[0].mxu0
    %v4595 = vadd.f32 %v4518, %v4594
    %v4596 = vpop.f32.mrb[0].mxu0
    %4597 = vdwg.mxu0
    %4598 = vrot.lane.b32.xlu0 %v2922, 112
    %v4599 = vpop.permute.xlu0 %4598
    %v4602 = vsel %vm448, %v4432, 0
    %4604 = vmatprep.subr.mxu0 0.0
    %4605 = vmatpush1.msra.mxu0 %v4599
    %4606 = vmatprep.subr.mxu0 0.0
    %4607 = vmatpush1.msra.mxu0 0.0
    %4608 = vmatprep.subr.mxu0 0.0
    %4609 = vmatpush1.msra.mxu0 0.0
    %4610 = vmatprep.subr.mxu0 0.0
    %4611 = vmatpush1.msra.mxu0 0.0
    %4612 = vmatprep.subr.mxu0 0.0
    %4613 = vmatpush1.msra.mxu0 0.0
    %4614 = vmatprep.subr.mxu0 0.0
    %4615 = vmatpush1.msra.mxu0 0.0
    %4616 = vmatprep.subr.mxu0 0.0
    %4617 = vmatpush1.msra.mxu0 0.0
    %4618 = vmatprep.subr.mxu0 0.0
    %4619 = vmatpush1.msra.mxu0 0.0
    %4620 = vmatprep.subr.mxu0 0.0
    %4621 = vmatpush1.msra.mxu0 0.0
    %4622 = vmatprep.subr.mxu0 0.0
    %4623 = vmatpush1.msra.mxu0 0.0
    %4624 = vmatprep.subr.mxu0 0.0
    %4625 = vmatpush1.msra.mxu0 0.0
    %4626 = vmatprep.subr.mxu0 0.0
    %4627 = vmatpush1.msra.mxu0 0.0
    %4628 = vmatprep.subr.mxu0 0.0
    %4629 = vmatpush1.msra.mxu0 0.0
    %4630 = vmatprep.subr.mxu0 0.0
    %4631 = vmatpush1.msra.mxu0 0.0
    %4632 = vmatprep.subr.mxu0 0.0
    %4633 = vmatpush1.msra.mxu0 0.0
    %4634 = vmatprep.subr.mxu0 0.0
    %4635 = vmatpush1.msra.mxu0 0.0
    %4636 = vmatprep.subr.mxu0 0.0
    %4637 = vmatpush1.msra.mxu0 0.0
    %4638 = vmatprep.subr.mxu0 0.0
    %4639 = vmatpush1.msra.mxu0 0.0
    %4640 = vmatprep.subr.mxu0 0.0
    %4641 = vmatpush1.msra.mxu0 0.0
    %4642 = vmatprep.subr.mxu0 0.0
    %4643 = vmatpush1.msra.mxu0 0.0
    %4644 = vmatprep.subr.mxu0 0.0
    %4645 = vmatpush1.msra.mxu0 0.0
    %4646 = vmatprep.subr.mxu0 0.0
    %4647 = vmatpush1.msra.mxu0 0.0
    %4648 = vmatprep.subr.mxu0 0.0
    %4649 = vmatpush1.msra.mxu0 0.0
    %4650 = vmatprep.subr.mxu0 0.0
    %4651 = vmatpush1.msra.mxu0 0.0
    %4652 = vmatprep.subr.mxu0 0.0
    %4653 = vmatpush1.msra.mxu0 0.0
    %4654 = vmatprep.subr.mxu0 0.0
    %4655 = vmatpush1.msra.mxu0 0.0
    %4656 = vmatprep.subr.mxu0 0.0
    %4657 = vmatpush1.msra.mxu0 0.0
    %4658 = vmatprep.subr.mxu0 0.0
    %4659 = vmatpush1.msra.mxu0 0.0
    %4660 = vmatprep.subr.mxu0 0.0
    %4661 = vmatpush1.msra.mxu0 0.0
    %4662 = vmatprep.subr.mxu0 0.0
    %4663 = vmatpush1.msra.mxu0 0.0
    %4664 = vmatprep.subr.mxu0 0.0
    %4665 = vmatpush1.msra.mxu0 0.0
    %4666 = vmatprep.subr.mxu0 0.0
    %4667 = vmatpush1.msra.mxu0 0.0
    %4668 = vmatprep.mubr.f32.mxu0 0.0
    %4669 = vmatmul.mubr.f32.gmra.mrb[0].mxu0 %v4602
    %v4670 = vpop.f32.mrb[0].mxu0
    %v4671 = vadd.f32 0.0, %v4670
    %v4672 = vpop.f32.mrb[0].mxu0
    %4673 = vdwg.mxu0
    %v4674 = vadd.f32 %v4595, %v4671
    %v4675 = vrcp.pop %v4443
    %v4676 = vmul.f32 %v4674, %v4675
    %v4678 = vsel %vm448, %v4676, 0
    %4680 = vmatprep.subr.mxu0 0.0
    %4681 = vmatpush1.msra.mxu0 %v60
    %4682 = vmatprep.subr.mxu0 0.0
    %4683 = vmatpush1.msra.mxu0 0.0
    %4684 = vmatprep.subr.mxu0 0.0
    %4685 = vmatpush1.msra.mxu0 0.0
    %4686 = vmatprep.subr.mxu0 0.0
    %4687 = vmatpush1.msra.mxu0 0.0
    %4688 = vmatprep.subr.mxu0 0.0
    %4689 = vmatpush1.msra.mxu0 0.0
    %4690 = vmatprep.subr.mxu0 0.0
    %4691 = vmatpush1.msra.mxu0 0.0
    %4692 = vmatprep.subr.mxu0 0.0
    %4693 = vmatpush1.msra.mxu0 0.0
    %4694 = vmatprep.subr.mxu0 0.0
    %4695 = vmatpush1.msra.mxu0 0.0
    %4696 = vmatprep.subr.mxu0 0.0
    %4697 = vmatpush1.msra.mxu0 0.0
    %4698 = vmatprep.subr.mxu0 0.0
    %4699 = vmatpush1.msra.mxu0 0.0
    %4700 = vmatprep.subr.mxu0 0.0
    %4701 = vmatpush1.msra.mxu0 0.0
    %4702 = vmatprep.subr.mxu0 0.0
    %4703 = vmatpush1.msra.mxu0 0.0
    %4704 = vmatprep.subr.mxu0 0.0
    %4705 = vmatpush1.msra.mxu0 0.0
    %4706 = vmatprep.subr.mxu0 0.0
    %4707 = vmatpush1.msra.mxu0 0.0
    %4708 = vmatprep.subr.mxu0 0.0
    %4709 = vmatpush1.msra.mxu0 0.0
    %4710 = vmatprep.subr.mxu0 0.0
    %4711 = vmatpush1.msra.mxu0 0.0
    %4712 = vmatprep.subr.mxu0 0.0
    %4713 = vmatpush1.msra.mxu0 0.0
    %4714 = vmatprep.subr.mxu0 0.0
    %4715 = vmatpush1.msra.mxu0 0.0
    %4716 = vmatprep.subr.mxu0 0.0
    %4717 = vmatpush1.msra.mxu0 0.0
    %4718 = vmatprep.subr.mxu0 0.0
    %4719 = vmatpush1.msra.mxu0 0.0
    %4720 = vmatprep.subr.mxu0 0.0
    %4721 = vmatpush1.msra.mxu0 0.0
    %4722 = vmatprep.subr.mxu0 0.0
    %4723 = vmatpush1.msra.mxu0 0.0
    %4724 = vmatprep.subr.mxu0 0.0
    %4725 = vmatpush1.msra.mxu0 0.0
    %4726 = vmatprep.subr.mxu0 0.0
    %4727 = vmatpush1.msra.mxu0 0.0
    %4728 = vmatprep.subr.mxu0 0.0
    %4729 = vmatpush1.msra.mxu0 0.0
    %4730 = vmatprep.subr.mxu0 0.0
    %4731 = vmatpush1.msra.mxu0 0.0
    %4732 = vmatprep.subr.mxu0 0.0
    %4733 = vmatpush1.msra.mxu0 0.0
    %4734 = vmatprep.subr.mxu0 0.0
    %4735 = vmatpush1.msra.mxu0 0.0
    %4736 = vmatprep.subr.mxu0 0.0
    %4737 = vmatpush1.msra.mxu0 0.0
    %4738 = vmatprep.subr.mxu0 0.0
    %4739 = vmatpush1.msra.mxu0 0.0
    %4740 = vmatprep.subr.mxu0 0.0
    %4741 = vmatpush1.msra.mxu0 0.0
    %4742 = vmatprep.subr.mxu0 0.0
    %4743 = vmatpush1.msra.mxu0 0.0
    %4744 = vmatprep.mubr.f32.mxu0 0.0
    %4745 = vmatmul.mubr.f32.gmra.mrb[0].mxu0 %v4678
    %v4746 = vpop.f32.mrb[0].mxu0
    %v4747 = vadd.f32 0.0, %v4746
    %v4748 = vpop.f32.mrb[0].mxu0
    %4749 = vdwg.mxu0
    %v4750 = vadd.f32 %v4184, %v4747
    %4751 = vrot.lane.b32.xlu0 %v3068, 104
    %v4752 = vpop.permute.xlu0 %4751
    %4753 = vrot.lane.b32.xlu0 %v2709, 104
    %v4754 = vpop.permute.xlu0 %4753
    %v4755 = vsel %vm448, %v4752, 0
    %v4757 = vsel %vm448, %v4754, 0
    %4759 = vmatprep.subr.mxu0 0.0
    %4760 = vmatpush1.xpose.msra.mxu0 %v4757
    %4761 = vmatprep.subr.mxu0 0.0
    %4762 = vmatpush1.xpose.msra.mxu0 0.0
    %4763 = vmatprep.subr.mxu0 0.0
    %4764 = vmatpush1.xpose.msra.mxu0 0.0
    %4765 = vmatprep.subr.mxu0 0.0
    %4766 = vmatpush1.xpose.msra.mxu0 0.0
    %4767 = vmatprep.subr.mxu0 0.0
    %4768 = vmatpush1.xpose.msra.mxu0 0.0
    %4769 = vmatprep.subr.mxu0 0.0
    %4770 = vmatpush1.xpose.msra.mxu0 0.0
    %4771 = vmatprep.subr.mxu0 0.0
    %4772 = vmatpush1.xpose.msra.mxu0 0.0
    %4773 = vmatprep.subr.mxu0 0.0
    %4774 = vmatpush1.xpose.msra.mxu0 0.0
    %4775 = vmatprep.subr.mxu0 0.0
    %4776 = vmatpush1.xpose.msra.mxu0 0.0
    %4777 = vmatprep.subr.mxu0 0.0
    %4778 = vmatpush1.xpose.msra.mxu0 0.0
    %4779 = vmatprep.subr.mxu0 0.0
    %4780 = vmatpush1.xpose.msra.mxu0 0.0
    %4781 = vmatprep.subr.mxu0 0.0
    %4782 = vmatpush1.xpose.msra.mxu0 0.0
    %4783 = vmatprep.subr.mxu0 0.0
    %4784 = vmatpush1.xpose.msra.mxu0 0.0
    %4785 = vmatprep.subr.mxu0 0.0
    %4786 = vmatpush1.xpose.msra.mxu0 0.0
    %4787 = vmatprep.subr.mxu0 0.0
    %4788 = vmatpush1.xpose.msra.mxu0 0.0
    %4789 = vmatprep.subr.mxu0 0.0
    %4790 = vmatpush1.xpose.msra.mxu0 0.0
    %4791 = vmatprep.subr.mxu0 0.0
    %4792 = vmatpush1.xpose.msra.mxu0 0.0
    %4793 = vmatprep.subr.mxu0 0.0
    %4794 = vmatpush1.xpose.msra.mxu0 0.0
    %4795 = vmatprep.subr.mxu0 0.0
    %4796 = vmatpush1.xpose.msra.mxu0 0.0
    %4797 = vmatprep.subr.mxu0 0.0
    %4798 = vmatpush1.xpose.msra.mxu0 0.0
    %4799 = vmatprep.subr.mxu0 0.0
    %4800 = vmatpush1.xpose.msra.mxu0 0.0
    %4801 = vmatprep.subr.mxu0 0.0
    %4802 = vmatpush1.xpose.msra.mxu0 0.0
    %4803 = vmatprep.subr.mxu0 0.0
    %4804 = vmatpush1.xpose.msra.mxu0 0.0
    %4805 = vmatprep.subr.mxu0 0.0
    %4806 = vmatpush1.xpose.msra.mxu0 0.0
    %4807 = vmatprep.subr.mxu0 0.0
    %4808 = vmatpush1.xpose.msra.mxu0 0.0
    %4809 = vmatprep.subr.mxu0 0.0
    %4810 = vmatpush1.xpose.msra.mxu0 0.0
    %4811 = vmatprep.subr.mxu0 0.0
    %4812 = vmatpush1.xpose.msra.mxu0 0.0
    %4813 = vmatprep.subr.mxu0 0.0
    %4814 = vmatpush1.xpose.msra.mxu0 0.0
    %4815 = vmatprep.subr.mxu0 0.0
    %4816 = vmatpush1.xpose.msra.mxu0 0.0
    %4817 = vmatprep.subr.mxu0 0.0
    %4818 = vmatpush1.xpose.msra.mxu0 0.0
    %4819 = vmatprep.subr.mxu0 0.0
    %4820 = vmatpush1.xpose.msra.mxu0 0.0
    %4821 = vmatprep.subr.mxu0 0.0
    %4822 = vmatpush1.xpose.msra.mxu0 0.0
    %4823 = vmatprep.mubr.f32.mxu0 0.0
    %4824 = vmatmul.mubr.f32.gmra.mrb[0].mxu0 %v4755
    %v4825 = vpop.f32.mrb[0].mxu0
    %v4826 = vadd.f32 0.0, %v4825
    %v4827 = vpop.f32.mrb[0].mxu0
    %4828 = vdwg.mxu0
    %4829 = vrot.lane.b32.xlu0 %v2995, 104
    %v4830 = vpop.permute.xlu0 %4829
    %v4831 = vsel %vm448, %v4830, 0
    %4833 = vmatprep.subr.mxu0 0.0
    %4834 = vmatpush1.xpose.msra.mxu0 %v4831
    %4835 = vmatprep.subr.mxu0 0.0
    %4836 = vmatpush1.xpose.msra.mxu0 0.0
    %4837 = vmatprep.subr.mxu0 0.0
    %4838 = vmatpush1.xpose.msra.mxu0 0.0
    %4839 = vmatprep.subr.mxu0 0.0
    %4840 = vmatpush1.xpose.msra.mxu0 0.0
    %4841 = vmatprep.subr.mxu0 0.0
    %4842 = vmatpush1.xpose.msra.mxu0 0.0
    %4843 = vmatprep.subr.mxu0 0.0
    %4844 = vmatpush1.xpose.msra.mxu0 0.0
    %4845 = vmatprep.subr.mxu0 0.0
    %4846 = vmatpush1.xpose.msra.mxu0 0.0
    %4847 = vmatprep.subr.mxu0 0.0
    %4848 = vmatpush1.xpose.msra.mxu0 0.0
    %4849 = vmatprep.subr.mxu0 0.0
    %4850 = vmatpush1.xpose.msra.mxu0 0.0
    %4851 = vmatprep.subr.mxu0 0.0
    %4852 = vmatpush1.xpose.msra.mxu0 0.0
    %4853 = vmatprep.subr.mxu0 0.0
    %4854 = vmatpush1.xpose.msra.mxu0 0.0
    %4855 = vmatprep.subr.mxu0 0.0
    %4856 = vmatpush1.xpose.msra.mxu0 0.0
    %4857 = vmatprep.subr.mxu0 0.0
    %4858 = vmatpush1.xpose.msra.mxu0 0.0
    %4859 = vmatprep.subr.mxu0 0.0
    %4860 = vmatpush1.xpose.msra.mxu0 0.0
    %4861 = vmatprep.subr.mxu0 0.0
    %4862 = vmatpush1.xpose.msra.mxu0 0.0
    %4863 = vmatprep.subr.mxu0 0.0
    %4864 = vmatpush1.xpose.msra.mxu0 0.0
    %4865 = vmatprep.subr.mxu0 0.0
    %4866 = vmatpush1.xpose.msra.mxu0 0.0
    %4867 = vmatprep.subr.mxu0 0.0
    %4868 = vmatpush1.xpose.msra.mxu0 0.0
    %4869 = vmatprep.subr.mxu0 0.0
    %4870 = vmatpush1.xpose.msra.mxu0 0.0
    %4871 = vmatprep.subr.mxu0 0.0
    %4872 = vmatpush1.xpose.msra.mxu0 0.0
    %4873 = vmatprep.subr.mxu0 0.0
    %4874 = vmatpush1.xpose.msra.mxu0 0.0
    %4875 = vmatprep.subr.mxu0 0.0
    %4876 = vmatpush1.xpose.msra.mxu0 0.0
    %4877 = vmatprep.subr.mxu0 0.0
    %4878 = vmatpush1.xpose.msra.mxu0 0.0
    %4879 = vmatprep.subr.mxu0 0.0
    %4880 = vmatpush1.xpose.msra.mxu0 0.0
    %4881 = vmatprep.subr.mxu0 0.0
    %4882 = vmatpush1.xpose.msra.mxu0 0.0
    %4883 = vmatprep.subr.mxu0 0.0
    %4884 = vmatpush1.xpose.msra.mxu0 0.0
    %4885 = vmatprep.subr.mxu0 0.0
    %4886 = vmatpush1.xpose.msra.mxu0 0.0
    %4887 = vmatprep.subr.mxu0 0.0
    %4888 = vmatpush1.xpose.msra.mxu0 0.0
    %4889 = vmatprep.subr.mxu0 0.0
    %4890 = vmatpush1.xpose.msra.mxu0 0.0
    %4891 = vmatprep.subr.mxu0 0.0
    %4892 = vmatpush1.xpose.msra.mxu0 0.0
    %4893 = vmatprep.subr.mxu0 0.0
    %4894 = vmatpush1.xpose.msra.mxu0 0.0
    %4895 = vmatprep.subr.mxu0 0.0
    %4896 = vmatpush1.xpose.msra.mxu0 0.0
    %4897 = vmatprep.mubr.f32.mxu0 0.0
    %4898 = vmatmul.mubr.f32.gmra.mrb[0].mxu0 %v4755
    %v4899 = vpop.f32.mrb[0].mxu0
    %v4900 = vadd.f32 0.0, %v4899
    %v4901 = vpop.f32.mrb[0].mxu0
    %4902 = vdwg.mxu0
    %4903 = vrot.lane.b32.xlu0 %v2852, 104
    %v4904 = vpop.permute.xlu0 %4903
    %v4905 = vsel %vm448, %v4904, 0
    %4907 = vmatprep.subr.mxu0 0.0
    %4908 = vmatpush1.xpose.msra.mxu0 %v4905
    %4909 = vmatprep.subr.mxu0 0.0
    %4910 = vmatpush1.xpose.msra.mxu0 0.0
    %4911 = vmatprep.subr.mxu0 0.0
    %4912 = vmatpush1.xpose.msra.mxu0 0.0
    %4913 = vmatprep.subr.mxu0 0.0
    %4914 = vmatpush1.xpose.msra.mxu0 0.0
    %4915 = vmatprep.subr.mxu0 0.0
    %4916 = vmatpush1.xpose.msra.mxu0 0.0
    %4917 = vmatprep.subr.mxu0 0.0
    %4918 = vmatpush1.xpose.msra.mxu0 0.0
    %4919 = vmatprep.subr.mxu0 0.0
    %4920 = vmatpush1.xpose.msra.mxu0 0.0
    %4921 = vmatprep.subr.mxu0 0.0
    %4922 = vmatpush1.xpose.msra.mxu0 0.0
    %4923 = vmatprep.subr.mxu0 0.0
    %4924 = vmatpush1.xpose.msra.mxu0 0.0
    %4925 = vmatprep.subr.mxu0 0.0
    %4926 = vmatpush1.xpose.msra.mxu0 0.0
    %4927 = vmatprep.subr.mxu0 0.0
    %4928 = vmatpush1.xpose.msra.mxu0 0.0
    %4929 = vmatprep.subr.mxu0 0.0
    %4930 = vmatpush1.xpose.msra.mxu0 0.0
    %4931 = vmatprep.subr.mxu0 0.0
    %4932 = vmatpush1.xpose.msra.mxu0 0.0
    %4933 = vmatprep.subr.mxu0 0.0
    %4934 = vmatpush1.xpose.msra.mxu0 0.0
    %4935 = vmatprep.subr.mxu0 0.0
    %4936 = vmatpush1.xpose.msra.mxu0 0.0
    %4937 = vmatprep.subr.mxu0 0.0
    %4938 = vmatpush1.xpose.msra.mxu0 0.0
    %4939 = vmatprep.subr.mxu0 0.0
    %4940 = vmatpush1.xpose.msra.mxu0 0.0
    %4941 = vmatprep.subr.mxu0 0.0
    %4942 = vmatpush1.xpose.msra.mxu0 0.0
    %4943 = vmatprep.subr.mxu0 0.0
    %4944 = vmatpush1.xpose.msra.mxu0 0.0
    %4945 = vmatprep.subr.mxu0 0.0
    %4946 = vmatpush1.xpose.msra.mxu0 0.0
    %4947 = vmatprep.subr.mxu0 0.0
    %4948 = vmatpush1.xpose.msra.mxu0 0.0
    %4949 = vmatprep.subr.mxu0 0.0
    %4950 = vmatpush1.xpose.msra.mxu0 0.0
    %4951 = vmatprep.subr.mxu0 0.0
    %4952 = vmatpush1.xpose.msra.mxu0 0.0
    %4953 = vmatprep.subr.mxu0 0.0
    %4954 = vmatpush1.xpose.msra.mxu0 0.0
    %4955 = vmatprep.subr.mxu0 0.0
    %4956 = vmatpush1.xpose.msra.mxu0 0.0
    %4957 = vmatprep.subr.mxu0 0.0
    %4958 = vmatpush1.xpose.msra.mxu0 0.0
    %4959 = vmatprep.subr.mxu0 0.0
    %4960 = vmatpush1.xpose.msra.mxu0 0.0
    %4961 = vmatprep.subr.mxu0 0.0
    %4962 = vmatpush1.xpose.msra.mxu0 0.0
    %4963 = vmatprep.subr.mxu0 0.0
    %4964 = vmatpush1.xpose.msra.mxu0 0.0
    %4965 = vmatprep.subr.mxu0 0.0
    %4966 = vmatpush1.xpose.msra.mxu0 0.0
    %4967 = vmatprep.subr.mxu0 0.0
    %4968 = vmatpush1.xpose.msra.mxu0 0.0
    %4969 = vmatprep.subr.mxu0 0.0
    %4970 = vmatpush1.xpose.msra.mxu0 0.0
    %4971 = vmatprep.mubr.f32.mxu0 0.0
    %4972 = vmatmul.mubr.f32.gmra.mrb[0].mxu0 %v4755
    %v4973 = vpop.f32.mrb[0].mxu0
    %v4974 = vadd.f32 %v67, %v4973
    %v4975 = vpop.f32.mrb[0].mxu0
    %4976 = vdwg.mxu0
    %v4977 = vsel %vm671, %v4826, -inf
    %4978 = vmax.xlane.f32.xlu0 %v4977
    %v4979 = vpop.xlane.xlu0 %4978
    %v4980 = vsel %vm671, %v4900, -inf
    %4981 = vmax.xlane.f32.xlu0 %v4980
    %v4982 = vpop.xlane.xlu0 %4981
    %v4983 = vsel %vm448, %v4974, -inf
    %4984 = vmax.xlane.f32.xlu0 %v4983
    %v4985 = vpop.xlane.xlu0 %4984
    %v4986 = vmax.f32 %v4982, %v4985
    %v4987 = vmax.f32 %v4979, %v4986
    %v4988 = vsub.f32 %v4826, %v4987
    %v4989 = vmul.f32 %v4988, 1.442695
    %v4990 = vpow.pop %v4989
    %v4991 = vsub.f32 %v4900, %v4987
    %v4992 = vmul.f32 %v4991, 1.442695
    %v4993 = vpow.pop %v4992
    %v4994 = vsub.f32 %v4974, %v4987
    %v4995 = vmul.f32 %v4994, 1.442695
    %v4996 = vpow.pop %v4995
    %v4997 = vsel %vm671, %v4990, 0.0
    %4998 = vadd.xlane.f32.xlu0 %v4997
    %v4999 = vpop.xlane.xlu0 %4998
    %v5000 = vsel %vm671, %v4993, 0.0
    %5001 = vadd.xlane.f32.xlu0 %v5000
    %v5002 = vpop.xlane.xlu0 %5001
    %v5003 = vadd.f32 %v4999, %v5002
    %v5004 = vsel %vm448, %v4996, 0.0
    %5005 = vadd.xlane.f32.xlu0 %v5004
    %v5006 = vpop.xlane.xlu0 %5005
    %v5007 = vadd.f32 %v5003, %v5006
    %5008 = vrot.lane.b32.xlu0 %v3065, 104
    %v5009 = vpop.permute.xlu0 %5008
    %v5011 = vsel %vm671, %v4993, 0
    %v5013 = vsel %vm706, %v5009, 0
    %5015 = vmatprep.subr.mxu0 0.0
    %5016 = vmatpush1.msra.mxu0 %v5013
    %5017 = vmatprep.subr.mxu0 0.0
    %5018 = vmatpush1.msra.mxu0 0.0
    %5019 = vmatprep.subr.mxu0 0.0
    %5020 = vmatpush1.msra.mxu0 0.0
    %5021 = vmatprep.subr.mxu0 0.0
    %5022 = vmatpush1.msra.mxu0 0.0
    %5023 = vmatprep.subr.mxu0 0.0
    %5024 = vmatpush1.msra.mxu0 0.0
    %5025 = vmatprep.subr.mxu0 0.0
    %5026 = vmatpush1.msra.mxu0 0.0
    %5027 = vmatprep.subr.mxu0 0.0
    %5028 = vmatpush1.msra.mxu0 0.0
    %5029 = vmatprep.subr.mxu0 0.0
    %5030 = vmatpush1.msra.mxu0 0.0
    %5031 = vmatprep.subr.mxu0 0.0
    %5032 = vmatpush1.msra.mxu0 0.0
    %5033 = vmatprep.subr.mxu0 0.0
    %5034 = vmatpush1.msra.mxu0 0.0
    %5035 = vmatprep.subr.mxu0 0.0
    %5036 = vmatpush1.msra.mxu0 0.0
    %5037 = vmatprep.subr.mxu0 0.0
    %5038 = vmatpush1.msra.mxu0 0.0
    %5039 = vmatprep.subr.mxu0 0.0
    %5040 = vmatpush1.msra.mxu0 0.0
    %5041 = vmatprep.subr.mxu0 0.0
    %5042 = vmatpush1.msra.mxu0 0.0
    %5043 = vmatprep.subr.mxu0 0.0
    %5044 = vmatpush1.msra.mxu0 0.0
    %5045 = vmatprep.subr.mxu0 0.0
    %5046 = vmatpush1.msra.mxu0 0.0
    %5047 = vmatprep.subr.mxu0 0.0
    %5048 = vmatpush1.msra.mxu0 0.0
    %5049 = vmatprep.subr.mxu0 0.0
    %5050 = vmatpush1.msra.mxu0 0.0
    %5051 = vmatprep.subr.mxu0 0.0
    %5052 = vmatpush1.msra.mxu0 0.0
    %5053 = vmatprep.subr.mxu0 0.0
    %5054 = vmatpush1.msra.mxu0 0.0
    %5055 = vmatprep.subr.mxu0 0.0
    %5056 = vmatpush1.msra.mxu0 0.0
    %5057 = vmatprep.subr.mxu0 0.0
    %5058 = vmatpush1.msra.mxu0 0.0
    %5059 = vmatprep.subr.mxu0 0.0
    %5060 = vmatpush1.msra.mxu0 0.0
    %5061 = vmatprep.subr.mxu0 0.0
    %5062 = vmatpush1.msra.mxu0 0.0
    %5063 = vmatprep.subr.mxu0 0.0
    %5064 = vmatpush1.msra.mxu0 0.0
    %5065 = vmatprep.subr.mxu0 0.0
    %5066 = vmatpush1.msra.mxu0 0.0
    %5067 = vmatprep.subr.mxu0 0.0
    %5068 = vmatpush1.msra.mxu0 0.0
    %5069 = vmatprep.subr.mxu0 0.0
    %5070 = vmatpush1.msra.mxu0 0.0
    %5071 = vmatprep.subr.mxu0 0.0
    %5072 = vmatpush1.msra.mxu0 0.0
    %5073 = vmatprep.subr.mxu0 0.0
    %5074 = vmatpush1.msra.mxu0 0.0
    %5075 = vmatprep.subr.mxu0 0.0
    %5076 = vmatpush1.msra.mxu0 0.0
    %5077 = vmatprep.subr.mxu0 0.0
    %5078 = vmatpush1.msra.mxu0 0.0
    %5079 = vmatprep.mubr.f32.mxu0 0.0
    %5080 = vmatmul.mubr.f32.gmra.mrb[0].mxu0 %v5011
    %v5081 = vpop.f32.mrb[0].mxu0
    %v5082 = vadd.f32 0.0, %v5081
    %v5083 = vpop.f32.mrb[0].mxu0
    %5084 = vdwg.mxu0
    %5085 = vrot.lane.b32.xlu0 %v2711, 104
    %v5086 = vpop.permute.xlu0 %5085
    %v5088 = vsel %vm671, %v4990, 0
    %v5090 = vsel %vm706, %v5086, 0
    %5092 = vmatprep.subr.mxu0 0.0
    %5093 = vmatpush1.msra.mxu0 %v5090
    %5094 = vmatprep.subr.mxu0 0.0
    %5095 = vmatpush1.msra.mxu0 0.0
    %5096 = vmatprep.subr.mxu0 0.0
    %5097 = vmatpush1.msra.mxu0 0.0
    %5098 = vmatprep.subr.mxu0 0.0
    %5099 = vmatpush1.msra.mxu0 0.0
    %5100 = vmatprep.subr.mxu0 0.0
    %5101 = vmatpush1.msra.mxu0 0.0
    %5102 = vmatprep.subr.mxu0 0.0
    %5103 = vmatpush1.msra.mxu0 0.0
    %5104 = vmatprep.subr.mxu0 0.0
    %5105 = vmatpush1.msra.mxu0 0.0
    %5106 = vmatprep.subr.mxu0 0.0
    %5107 = vmatpush1.msra.mxu0 0.0
    %5108 = vmatprep.subr.mxu0 0.0
    %5109 = vmatpush1.msra.mxu0 0.0
    %5110 = vmatprep.subr.mxu0 0.0
    %5111 = vmatpush1.msra.mxu0 0.0
    %5112 = vmatprep.subr.mxu0 0.0
    %5113 = vmatpush1.msra.mxu0 0.0
    %5114 = vmatprep.subr.mxu0 0.0
    %5115 = vmatpush1.msra.mxu0 0.0
    %5116 = vmatprep.subr.mxu0 0.0
    %5117 = vmatpush1.msra.mxu0 0.0
    %5118 = vmatprep.subr.mxu0 0.0
    %5119 = vmatpush1.msra.mxu0 0.0
    %5120 = vmatprep.subr.mxu0 0.0
    %5121 = vmatpush1.msra.mxu0 0.0
    %5122 = vmatprep.subr.mxu0 0.0
    %5123 = vmatpush1.msra.mxu0 0.0
    %5124 = vmatprep.subr.mxu0 0.0
    %5125 = vmatpush1.msra.mxu0 0.0
    %5126 = vmatprep.subr.mxu0 0.0
    %5127 = vmatpush1.msra.mxu0 0.0
    %5128 = vmatprep.subr.mxu0 0.0
    %5129 = vmatpush1.msra.mxu0 0.0
    %5130 = vmatprep.subr.mxu0 0.0
    %5131 = vmatpush1.msra.mxu0 0.0
    %5132 = vmatprep.subr.mxu0 0.0
    %5133 = vmatpush1.msra.mxu0 0.0
    %5134 = vmatprep.subr.mxu0 0.0
    %5135 = vmatpush1.msra.mxu0 0.0
    %5136 = vmatprep.subr.mxu0 0.0
    %5137 = vmatpush1.msra.mxu0 0.0
    %5138 = vmatprep.subr.mxu0 0.0
    %5139 = vmatpush1.msra.mxu0 0.0
    %5140 = vmatprep.subr.mxu0 0.0
    %5141 = vmatpush1.msra.mxu0 0.0
    %5142 = vmatprep.subr.mxu0 0.0
    %5143 = vmatpush1.msra.mxu0 0.0
    %5144 = vmatprep.subr.mxu0 0.0
    %5145 = vmatpush1.msra.mxu0 0.0
    %5146 = vmatprep.subr.mxu0 0.0
    %5147 = vmatpush1.msra.mxu0 0.0
    %5148 = vmatprep.subr.mxu0 0.0
    %5149 = vmatpush1.msra.mxu0 0.0
    %5150 = vmatprep.subr.mxu0 0.0
    %5151 = vmatpush1.msra.mxu0 0.0
    %5152 = vmatprep.subr.mxu0 0.0
    %5153 = vmatpush1.msra.mxu0 0.0
    %5154 = vmatprep.subr.mxu0 0.0
    %5155 = vmatpush1.msra.mxu0 0.0
    %5156 = vmatprep.mubr.f32.mxu0 0.0
    %5157 = vmatmul.mubr.f32.gmra.mrb[0].mxu0 %v5088
    %v5158 = vpop.f32.mrb[0].mxu0
    %v5159 = vadd.f32 %v5082, %v5158
    %v5160 = vpop.f32.mrb[0].mxu0
    %5161 = vdwg.mxu0
    %5162 = vrot.lane.b32.xlu0 %v2922, 104
    %v5163 = vpop.permute.xlu0 %5162
    %v5166 = vsel %vm448, %v4996, 0
    %5168 = vmatprep.subr.mxu0 0.0
    %5169 = vmatpush1.msra.mxu0 %v5163
    %5170 = vmatprep.subr.mxu0 0.0
    %5171 = vmatpush1.msra.mxu0 0.0
    %5172 = vmatprep.subr.mxu0 0.0
    %5173 = vmatpush1.msra.mxu0 0.0
    %5174 = vmatprep.subr.mxu0 0.0
    %5175 = vmatpush1.msra.mxu0 0.0
    %5176 = vmatprep.subr.mxu0 0.0
    %5177 = vmatpush1.msra.mxu0 0.0
    %5178 = vmatprep.subr.mxu0 0.0
    %5179 = vmatpush1.msra.mxu0 0.0
    %5180 = vmatprep.subr.mxu0 0.0
    %5181 = vmatpush1.msra.mxu0 0.0
    %5182 = vmatprep.subr.mxu0 0.0
    %5183 = vmatpush1.msra.mxu0 0.0
    %5184 = vmatprep.subr.mxu0 0.0
    %5185 = vmatpush1.msra.mxu0 0.0
    %5186 = vmatprep.subr.mxu0 0.0
    %5187 = vmatpush1.msra.mxu0 0.0
    %5188 = vmatprep.subr.mxu0 0.0
    %5189 = vmatpush1.msra.mxu0 0.0
    %5190 = vmatprep.subr.mxu0 0.0
    %5191 = vmatpush1.msra.mxu0 0.0
    %5192 = vmatprep.subr.mxu0 0.0
    %5193 = vmatpush1.msra.mxu0 0.0
    %5194 = vmatprep.subr.mxu0 0.0
    %5195 = vmatpush1.msra.mxu0 0.0
    %5196 = vmatprep.subr.mxu0 0.0
    %5197 = vmatpush1.msra.mxu0 0.0
    %5198 = vmatprep.subr.mxu0 0.0
    %5199 = vmatpush1.msra.mxu0 0.0
    %5200 = vmatprep.subr.mxu0 0.0
    %5201 = vmatpush1.msra.mxu0 0.0
    %5202 = vmatprep.subr.mxu0 0.0
    %5203 = vmatpush1.msra.mxu0 0.0
    %5204 = vmatprep.subr.mxu0 0.0
    %5205 = vmatpush1.msra.mxu0 0.0
    %5206 = vmatprep.subr.mxu0 0.0
    %5207 = vmatpush1.msra.mxu0 0.0
    %5208 = vmatprep.subr.mxu0 0.0
    %5209 = vmatpush1.msra.mxu0 0.0
    %5210 = vmatprep.subr.mxu0 0.0
    %5211 = vmatpush1.msra.mxu0 0.0
    %5212 = vmatprep.subr.mxu0 0.0
    %5213 = vmatpush1.msra.mxu0 0.0
    %5214 = vmatprep.subr.mxu0 0.0
    %5215 = vmatpush1.msra.mxu0 0.0
    %5216 = vmatprep.subr.mxu0 0.0
    %5217 = vmatpush1.msra.mxu0 0.0
    %5218 = vmatprep.subr.mxu0 0.0
    %5219 = vmatpush1.msra.mxu0 0.0
    %5220 = vmatprep.subr.mxu0 0.0
    %5221 = vmatpush1.msra.mxu0 0.0
    %5222 = vmatprep.subr.mxu0 0.0
    %5223 = vmatpush1.msra.mxu0 0.0
    %5224 = vmatprep.subr.mxu0 0.0
    %5225 = vmatpush1.msra.mxu0 0.0
    %5226 = vmatprep.subr.mxu0 0.0
    %5227 = vmatpush1.msra.mxu0 0.0
    %5228 = vmatprep.subr.mxu0 0.0
    %5229 = vmatpush1.msra.mxu0 0.0
    %5230 = vmatprep.subr.mxu0 0.0
    %5231 = vmatpush1.msra.mxu0 0.0
    %5232 = vmatprep.mubr.f32.mxu0 0.0
    %5233 = vmatmul.mubr.f32.gmra.mrb[0].mxu0 %v5166
    %v5234 = vpop.f32.mrb[0].mxu0
    %v5235 = vadd.f32 0.0, %v5234
    %v5236 = vpop.f32.mrb[0].mxu0
    %5237 = vdwg.mxu0
    %v5238 = vadd.f32 %v5159, %v5235
    %v5239 = vrcp.pop %v5007
    %v5240 = vmul.f32 %v5238, %v5239
    %v5242 = vsel %vm448, %v5240, 0
    %5244 = vmatprep.subr.mxu0 0.0
    %5245 = vmatpush1.msra.mxu0 %v61
    %5246 = vmatprep.subr.mxu0 0.0
    %5247 = vmatpush1.msra.mxu0 0.0
    %5248 = vmatprep.subr.mxu0 0.0
    %5249 = vmatpush1.msra.mxu0 0.0
    %5250 = vmatprep.subr.mxu0 0.0
    %5251 = vmatpush1.msra.mxu0 0.0
    %5252 = vmatprep.subr.mxu0 0.0
    %5253 = vmatpush1.msra.mxu0 0.0
    %5254 = vmatprep.subr.mxu0 0.0
    %5255 = vmatpush1.msra.mxu0 0.0
    %5256 = vmatprep.subr.mxu0 0.0
    %5257 = vmatpush1.msra.mxu0 0.0
    %5258 = vmatprep.subr.mxu0 0.0
    %5259 = vmatpush1.msra.mxu0 0.0
    %5260 = vmatprep.subr.mxu0 0.0
    %5261 = vmatpush1.msra.mxu0 0.0
    %5262 = vmatprep.subr.mxu0 0.0
    %5263 = vmatpush1.msra.mxu0 0.0
    %5264 = vmatprep.subr.mxu0 0.0
    %5265 = vmatpush1.msra.mxu0 0.0
    %5266 = vmatprep.subr.mxu0 0.0
    %5267 = vmatpush1.msra.mxu0 0.0
    %5268 = vmatprep.subr.mxu0 0.0
    %5269 = vmatpush1.msra.mxu0 0.0
    %5270 = vmatprep.subr.mxu0 0.0
    %5271 = vmatpush1.msra.mxu0 0.0
    %5272 = vmatprep.subr.mxu0 0.0
    %5273 = vmatpush1.msra.mxu0 0.0
    %5274 = vmatprep.subr.mxu0 0.0
    %5275 = vmatpush1.msra.mxu0 0.0
    %5276 = vmatprep.subr.mxu0 0.0
    %5277 = vmatpush1.msra.mxu0 0.0
    %5278 = vmatprep.subr.mxu0 0.0
    %5279 = vmatpush1.msra.mxu0 0.0
    %5280 = vmatprep.subr.mxu0 0.0
    %5281 = vmatpush1.msra.mxu0 0.0
    %5282 = vmatprep.subr.mxu0 0.0
    %5283 = vmatpush1.msra.mxu0 0.0
    %5284 = vmatprep.subr.mxu0 0.0
    %5285 = vmatpush1.msra.mxu0 0.0
    %5286 = vmatprep.subr.mxu0 0.0
    %5287 = vmatpush1.msra.mxu0 0.0
    %5288 = vmatprep.subr.mxu0 0.0
    %5289 = vmatpush1.msra.mxu0 0.0
    %5290 = vmatprep.subr.mxu0 0.0
    %5291 = vmatpush1.msra.mxu0 0.0
    %5292 = vmatprep.subr.mxu0 0.0
    %5293 = vmatpush1.msra.mxu0 0.0
    %5294 = vmatprep.subr.mxu0 0.0
    %5295 = vmatpush1.msra.mxu0 0.0
    %5296 = vmatprep.subr.mxu0 0.0
    %5297 = vmatpush1.msra.mxu0 0.0
    %5298 = vmatprep.subr.mxu0 0.0
    %5299 = vmatpush1.msra.mxu0 0.0
    %5300 = vmatprep.subr.mxu0 0.0
    %5301 = vmatpush1.msra.mxu0 0.0
    %5302 = vmatprep.subr.mxu0 0.0
    %5303 = vmatpush1.msra.mxu0 0.0
    %5304 = vmatprep.subr.mxu0 0.0
    %5305 = vmatpush1.msra.mxu0 0.0
    %5306 = vmatprep.subr.mxu0 0.0
    %5307 = vmatpush1.msra.mxu0 0.0
    %5308 = vmatprep.mubr.f32.mxu0 0.0
    %5309 = vmatmul.mubr.f32.gmra.mrb[0].mxu0 %v5242
    %v5310 = vpop.f32.mrb[0].mxu0
    %v5311 = vadd.f32 0.0, %v5310
    %v5312 = vpop.f32.mrb[0].mxu0
    %5313 = vdwg.mxu0
    %v5314 = vadd.f32 %v4750, %v5311
    %v5315 = vadd.f32 %v5314, %v2701
    %5316 = vst.msk [vmem:[#allocation2] sm:$0xff] %vm78, %v2703
    %5317 = vst.msk [vmem:[#allocation2 + $0x8] sm:$0xff] %vm78, %v5315
    // Predicated region
    $region50: #{_forward_impl.1} parent=1 // pred_check
      _
    $region51: #{_forward_impl.1} parent=1 // pred_check_branch
      %5319 = sbr.rel (0) target = $region53
    $region52: #{_forward_impl.1} parent=1 // pred_region
      %s5321 = ssub.s32 256, 256
      %5322 = vsyncadd [#allocation3], %s5321
      %s5323 = sshll.u32 [#allocation2], 4
      %s5324 = int_to_ptr.vmem [resolvable:$true] %s5323
      %5329 = dma.vmem_to_hbm [thread:$0]  %s5324, 256, %s12, [#allocation3], 128, 128, 8
    $region53: #{_forward_impl.1} parent=1 // pred_fallthru
      _
    // Predicated region
    $region54: #{_forward_impl.1} parent=1 // pred_check
      _
    $region55: #{_forward_impl.1} parent=1 // pred_check_branch
      %5331 = sbr.rel (0) target = $region57
    $region56: #{_forward_impl.1} parent=1 // pred_region
      %5332 = dma.done [#allocation3], 256
    $region57: #{_forward_impl.1} parent=1 // pred_fallthru
      _
    %5333 = vsyncpa [#allocation3], 1

</llo_original>
